<compile_context>
chip_gen: v7x
topology: tpu7x:2x2x1
jax: 0.10.0
libtpu: 0.0.40
codegen_flags: <defaults>
</compile_context>

<pallas_src>
import functools

import jax
import jax.numpy as jnp
from jax.experimental import pallas as pl
from jax.experimental.pallas import tpu as pltpu


def _round_up(x, m):
    return ((x + m - 1) // m) * m


# ---------------------------------------------------------------------------
# In-kernel helper: 3x3 'same' stride-1 conv from a band-padded flat activation
# ---------------------------------------------------------------------------
def _conv3x3_from_pad(pad_ref, w_bf16, mask_l, mask_r, H, W, PAD):
    """pad_ref : VMEM scratch (PAD + H*W + PAD, C) f32.  Rows [PAD, PAD+H*W)
                 hold the activation in flat (h*W + w) order; the PAD-row bands
                 above and below are zero (they provide the row halo).
       w_bf16  : (9*C, Cout) bf16 weights in (kh, kw, cin) row-major order.
       mask_l/mask_r : (H*W, 1) f32, 1.0 where the dw=-1 / dw=+1 tap is valid
                 (column halo handled by masking the wrapped-row values).
       Returns (H*W, Cout) float32."""
    HW = H * W
    taps = []
    for dh in (-1, 0, 1):
        for dw in (-1, 0, 1):
            t = pad_ref[pl.ds(PAD + dh * W + dw, HW), :]       # (HW, C) f32
            if dw == -1:
                t = t * mask_l
            elif dw == 1:
                t = t * mask_r
            taps.append(t)
    patches = jnp.concatenate(taps, axis=-1).astype(jnp.bfloat16)   # (HW, 9C)
    return jnp.dot(patches, w_bf16, preferred_element_type=jnp.float32)


# ---------------------------------------------------------------------------
# Kernels
# ---------------------------------------------------------------------------
def _input_conv_kernel(x_ref, w_ref, m_ref, o_ref, pad_ref, *, H, W, PAD):
    HW = H * W
    C = x_ref.shape[-1]
    masks = m_ref[...]
    mask_l, mask_r = masks[:, 0:1], masks[:, 1:2]
    zero_band = jnp.zeros((PAD, C), jnp.float32)
    pad_ref[pl.ds(0, PAD), :] = zero_band
    pad_ref[pl.ds(PAD + HW, PAD), :] = zero_band
    pad_ref[pl.ds(PAD, HW), :] = x_ref[0]
    out = _conv3x3_from_pad(pad_ref, w_ref[...], mask_l, mask_r, H, W, PAD)
    o_ref[0] = out.astype(o_ref.dtype)


def _resnet_block_kernel(x_ref, w1_ref, w2_ref, sc1_ref, sh1_ref, sc2_ref,
                         sh2_ref, m_ref, o_ref, pad_ref, *, H, W, PAD):
    """Fused pre-activation ResNet block: BN1,ReLU,conv1,BN2,ReLU,conv2 + x."""
    HW = H * W
    C = x_ref.shape[-1]
    masks = m_ref[...]
    mask_l, mask_r = masks[:, 0:1], masks[:, 1:2]
    zero_band = jnp.zeros((PAD, C), jnp.float32)
    pad_ref[pl.ds(0, PAD), :] = zero_band
    pad_ref[pl.ds(PAD + HW, PAD), :] = zero_band

    x = x_ref[0]                                               # (HW, C) f32

    # BN1 + ReLU + conv1 (intermediate stays on-chip)
    y1 = jnp.maximum(x * sc1_ref[...] + sh1_ref[...], 0.0)
    pad_ref[pl.ds(PAD, HW), :] = y1
    h1 = _conv3x3_from_pad(pad_ref, w1_ref[...], mask_l, mask_r, H, W, PAD)

    # BN2 + ReLU + conv2 + identity residual (in == out features)
    y2 = jnp.maximum(h1 * sc2_ref[...] + sh2_ref[...], 0.0)
    pad_ref[pl.ds(PAD, HW), :] = y2
    h2 = _conv3x3_from_pad(pad_ref, w2_ref[...], mask_l, mask_r, H, W, PAD)

    o_ref[0] = (h2 + x).astype(o_ref.dtype)


def _downsample_kernel(x_ref, w_ref, sc_ref, sh_ref, o_ref):
    """Fused BN + ReLU + (k=2, s=2) conv.

    x_ref block is (2, Wo, 2*C): rows 2*ho and 2*ho+1 of one image with the
    even/odd input columns packed along the lanes ([even C | odd C])."""
    rows = jnp.concatenate([x_ref[0], x_ref[1]], axis=-1)       # (Wo, 4*C) f32
    y = jnp.maximum(rows * sc_ref[...] + sh_ref[...], 0.0)      # BN + ReLU
    o_ref[0] = jnp.dot(y.astype(jnp.bfloat16), w_ref[...],
                       preferred_element_type=jnp.float32).astype(o_ref.dtype)


# ---------------------------------------------------------------------------
# Wrappers
# ---------------------------------------------------------------------------
def _edge_masks(H, W):
    """(H*W, 2) f32: col 0 = dw=-1 tap valid, col 1 = dw=+1 tap valid."""
    w_idx = jnp.arange(H * W, dtype=jnp.int32) % W
    return jnp.stack([(w_idx >= 1).astype(jnp.float32),
                      (w_idx <= W - 2).astype(jnp.float32)], axis=1)


def input_conv(x_flat, w, H, W):
    N, HW, Cin = x_flat.shape
    Cout = w.shape[-1]
    PAD = _round_up(W + 1, 8)
    wf = w.reshape(9 * Cin, Cout).astype(jnp.bfloat16)
    masks = _edge_masks(H, W)
    kernel = functools.partial(_input_conv_kernel, H=H, W=W, PAD=PAD)
    return pl.pallas_call(
        kernel,
        out_shape=jax.ShapeDtypeStruct((N, HW, Cout), jnp.float32),
        grid=(N,),
        in_specs=[
            pl.BlockSpec((1, HW, Cin), lambda n: (n, 0, 0)),
            pl.BlockSpec((9 * Cin, Cout), lambda n: (0, 0)),
            pl.BlockSpec((HW, 2), lambda n: (0, 0)),
        ],
        out_specs=pl.BlockSpec((1, HW, Cout), lambda n: (n, 0, 0)),
        scratch_shapes=[pltpu.VMEM((HW + 2 * PAD, Cin), jnp.float32)],
        compiler_params=pltpu.CompilerParams(dimension_semantics=("parallel",)),
    )(x_flat, wf, masks)


def resnet_block(x_flat, p, H, W):
    N, HW, C = x_flat.shape
    PAD = _round_up(W + 1, 8)
    w1 = p["conv1"].reshape(9 * C, C).astype(jnp.bfloat16)
    w2 = p["conv2"].reshape(9 * C, C).astype(jnp.bfloat16)
    sc1, sh1 = (a.reshape(1, C) for a in p["bn1"])
    sc2, sh2 = (a.reshape(1, C) for a in p["bn2"])
    masks = _edge_masks(H, W)
    kernel = functools.partial(_resnet_block_kernel, H=H, W=W, PAD=PAD)
    act_spec = pl.BlockSpec((1, HW, C), lambda n: (n, 0, 0))
    w_spec = pl.BlockSpec((9 * C, C), lambda n: (0, 0))
    bn_spec = pl.BlockSpec((1, C), lambda n: (0, 0))
    return pl.pallas_call(
        kernel,
        out_shape=jax.ShapeDtypeStruct((N, HW, C), jnp.float32),
        grid=(N,),
        in_specs=[act_spec, w_spec, w_spec, bn_spec, bn_spec, bn_spec, bn_spec,
                  pl.BlockSpec((HW, 2), lambda n: (0, 0))],
        out_specs=act_spec,
        scratch_shapes=[pltpu.VMEM((HW + 2 * PAD, C), jnp.float32)],
        compiler_params=pltpu.CompilerParams(dimension_semantics=("parallel",)),
    )(x_flat, w1, w2, sc1, sh1, sc2, sh2, masks)


def downsample(x_flat, p, H, W):
    N, HW, C = x_flat.shape
    Cout = p["conv"].shape[-1]
    Ho, Wo = H // 2, W // 2
    # Free row-major view (no data movement): (N, H*W, C) -> (N*H, Wo, 2*C);
    # each lane group of C channels is one of the even/odd input columns.
    xv = x_flat.reshape(N * H, Wo, 2 * C)
    wf = p["conv"].reshape(4 * C, Cout).astype(jnp.bfloat16)
    scale, shift = p["bn"]
    sc4 = jnp.tile(scale, 4).reshape(1, 4 * C)
    sh4 = jnp.tile(shift, 4).reshape(1, 4 * C)
    out = pl.pallas_call(
        _downsample_kernel,
        out_shape=jax.ShapeDtypeStruct((N * Ho, Wo, Cout), jnp.float32),
        grid=(N, Ho),
        in_specs=[
            pl.BlockSpec((2, Wo, 2 * C), lambda n, h: (n * Ho + h, 0, 0)),
            pl.BlockSpec((4 * C, Cout), lambda n, h: (0, 0)),
            pl.BlockSpec((1, 4 * C), lambda n, h: (0, 0)),
            pl.BlockSpec((1, 4 * C), lambda n, h: (0, 0)),
        ],
        out_specs=pl.BlockSpec((1, Wo, Cout), lambda n, h: (n * Ho + h, 0, 0)),
        compiler_params=pltpu.CompilerParams(
            dimension_semantics=("parallel", "parallel")),
    )(xv, wf, sc4, sh4)
    return out.reshape(N, Ho * Wo, Cout)


# ---------------------------------------------------------------------------
# Parameter initialization (deterministic, synthetic)
# ---------------------------------------------------------------------------
def _conv_w(key, kh, kw, cin, cout):
    fan = kh * kw * cin
    return jax.random.normal(key, (kh, kw, cin, cout), jnp.float32) / jnp.sqrt(fan)


def _bn_params(key, c, eps=1e-5):
    k1, k2, k3, k4 = jax.random.split(key, 4)
    gamma = jax.random.uniform(k1, (c,), jnp.float32, 0.5, 1.5)
    beta = jax.random.uniform(k2, (c,), jnp.float32, -0.1, 0.1)
    mean = jax.random.uniform(k3, (c,), jnp.float32, -0.1, 0.1)
    var = jax.random.uniform(k4, (c,), jnp.float32, 0.5, 1.5)
    scale = gamma / jnp.sqrt(var + eps)
    shift = beta - mean * scale
    return scale, shift


def init_encoder_params(key, num_input, num_filters, depth, reps, input_kernel=3):
    assert input_kernel == 3, "kernels specialised to the default 3x3 input conv"
    num_planes = [num_filters * (i + 1) for i in range(depth)]
    keys = iter(jax.random.split(key, 256))
    params = {
        "input_w": _conv_w(next(keys), 3, 3, num_input, num_filters),
        "blocks": [],
        "downs": [],
    }
    for i, f in enumerate(num_planes):
        block = []
        for _ in range(reps):
            block.append({
                "bn1": _bn_params(next(keys), f),
                "conv1": _conv_w(next(keys), 3, 3, f, f),
                "bn2": _bn_params(next(keys), f),
                "conv2": _conv_w(next(keys), 3, 3, f, f),
            })
        params["blocks"].append(block)
        if i < depth - 1:
            params["downs"].append({
                "bn": _bn_params(next(keys), f),
                "conv": _conv_w(next(keys), 2, 2, f, num_planes[i + 1]),
            })
    return params


# ---------------------------------------------------------------------------
# Forward pass (mirrors UResNetEncoder.forward)
# ---------------------------------------------------------------------------
def uresnet_encoder_forward(params, x_nhwc):
    N, H, W, Cin = x_nhwc.shape
    x = x_nhwc.reshape(N, H * W, Cin)                  # free flat spatial view
    x = input_conv(x, params["input_w"], H, W)         # input_layer
    encoder_tensors = [x.reshape(N, H, W, -1)]
    depth = len(params["blocks"])
    h, w = H, W
    for i in range(depth):
        for bp in params["blocks"][i]:                 # encoding_block[i]
            x = resnet_block(x, bp, h, w)
        encoder_tensors.append(x.reshape(N, h, w, -1))
        if i < depth - 1:                              # encoding_conv[i]
            x = downsample(x, params["downs"][i], h, w)
            h, w = h // 2, w // 2
    return {"encoder_tensors": encoder_tensors,
            "final_tensor": x.reshape(N, h, w, -1)}


# ---------------------------------------------------------------------------
if __name__ == "__main__":
    key = jax.random.PRNGKey(0)
    kx, kp = jax.random.split(key)

    # small synthetic config: num_input=4, num_filters=8, depth=3, reps=2
    N, C_IN, H, W = 2, 4, 16, 16
    x_nchw = jax.random.normal(kx, (N, C_IN, H, W), jnp.float32)
    x_nhwc = jnp.transpose(x_nchw, (0, 2, 3, 1))       # NCHW -> NHWC

    params = init_encoder_params(kp, num_input=C_IN, num_filters=8,
                                 depth=3, reps=2, input_kernel=3)

    fwd = jax.jit(uresnet_encoder_forward)
    out = fwd(params, x_nhwc)
    jax.block_until_ready(out)

    # TODO(synk): sparse (MinkowskiEngine) coordinate bookkeeping has no dense
    # equivalent; this implements the dense 2-D analog of the layer graph.
    # TODO(synk): at production resolutions add a halo-aware H-tile "parallel"
    # grid axis so blocks fit v7x's 64 MiB VMEM and both TensorCores engage.
    print("KERNEL_OK")
</pallas_src>

<mosaic_0001>
module attributes {stable_mosaic.version = 11 : i64} {
  func.func @_input_conv_kernel(%arg0: i32, %arg1: memref<1x256x4xf32, #tpu.memory_space<vmem>>, %arg2: memref<36x8xbf16, #tpu.memory_space<vmem>>, %arg3: memref<256x2xf32, #tpu.memory_space<vmem>>, %arg4: memref<1x256x8xf32, #tpu.memory_space<vmem>>, %arg5: memref<304x4xf32, #tpu.memory_space<vmem>>) attributes {dimension_semantics = [#tpu.dimension_semantics<parallel>], iteration_bounds = array<i64: 2>, scalar_prefetch = 0 : i64, scratch_operands = 1 : i64, tpu.core_type = #tpu.core_type<tc>, window_params = [{transform_indices = @transform_0, window_bounds = array<i64: 1, 256, 4>}, {pipeline_mode = #tpu.pipeline_mode<synchronous>, transform_indices = @transform_1, window_bounds = array<i64: 36, 8>}, {pipeline_mode = #tpu.pipeline_mode<synchronous>, transform_indices = @transform_2, window_bounds = array<i64: 256, 2>}, {transform_indices = @transform_3, window_bounds = array<i64: 1, 256, 8>}]} {
    %c0 = arith.constant 0 : index
    %c0_0 = arith.constant 0 : index
    %0 = vector.load %arg3[%c0, %c0_0] : memref<256x2xf32, #tpu.memory_space<vmem>>, vector<256x2xf32>
    %1 = vector.extract_strided_slice %0 {offsets = [0, 0], sizes = [256, 1], strides = [1, 1]} : vector<256x2xf32> to vector<256x1xf32>
    %2 = vector.extract_strided_slice %0 {offsets = [0, 1], sizes = [256, 1], strides = [1, 1]} : vector<256x2xf32> to vector<256x1xf32>
    %cst = arith.constant 0.000000e+00 : f32
    %3 = vector.broadcast %cst : f32 to vector<24x4xf32>
    %c0_1 = arith.constant 0 : index
    %c0_2 = arith.constant 0 : index
    %4 = vector.load %arg5[%c0_1, %c0_2] : memref<304x4xf32, #tpu.memory_space<vmem>>, vector<24x4xf32>
    tpu.vector_store %arg5[%c0_1, %c0_2], %3 {strides = array<i32>} : memref<304x4xf32, #tpu.memory_space<vmem>>, vector<24x4xf32>,
    %c280 = arith.constant 280 : index
    %c0_3 = arith.constant 0 : index
    %5 = vector.load %arg5[%c280, %c0_3] : memref<304x4xf32, #tpu.memory_space<vmem>>, vector<24x4xf32>
    tpu.vector_store %arg5[%c280, %c0_3], %3 {strides = array<i32>} : memref<304x4xf32, #tpu.memory_space<vmem>>, vector<24x4xf32>,
    %c0_4 = arith.constant 0 : index
    %c0_5 = arith.constant 0 : index
    %c0_6 = arith.constant 0 : index
    %6 = vector.load %arg1[%c0_4, %c0_5, %c0_6] : memref<1x256x4xf32, #tpu.memory_space<vmem>>, vector<1x256x4xf32>
    %7 = vector.shape_cast %6 : vector<1x256x4xf32> to vector<256x4xf32>
    %c24 = arith.constant 24 : index
    %c0_7 = arith.constant 0 : index
    %8 = vector.load %arg5[%c24, %c0_7] : memref<304x4xf32, #tpu.memory_space<vmem>>, vector<256x4xf32>
    tpu.vector_store %arg5[%c24, %c0_7], %7 {strides = array<i32>} : memref<304x4xf32, #tpu.memory_space<vmem>>, vector<256x4xf32>,
    %c0_8 = arith.constant 0 : index
    %c0_9 = arith.constant 0 : index
    %9 = vector.load %arg2[%c0_8, %c0_9] : memref<36x8xbf16, #tpu.memory_space<vmem>>, vector<36x8xbf16>
    %c7 = arith.constant 7 : index
    %c0_10 = arith.constant 0 : index
    %10 = vector.load %arg5[%c7, %c0_10] : memref<304x4xf32, #tpu.memory_space<vmem>>, vector<256x4xf32>
    %11 = vector.broadcast %1 : vector<256x1xf32> to vector<256x4xf32>
    %12 = arith.mulf %10, %11 : vector<256x4xf32>
    %c8 = arith.constant 8 : index
    %c0_11 = arith.constant 0 : index
    %13 = vector.load %arg5[%c8, %c0_11] : memref<304x4xf32, #tpu.memory_space<vmem>>, vector<256x4xf32>
    %c9 = arith.constant 9 : index
    %c0_12 = arith.constant 0 : index
    %14 = vector.load %arg5[%c9, %c0_12] : memref<304x4xf32, #tpu.memory_space<vmem>>, vector<256x4xf32>
    %15 = vector.broadcast %2 : vector<256x1xf32> to vector<256x4xf32>
    %16 = arith.mulf %14, %15 : vector<256x4xf32>
    %c23 = arith.constant 23 : index
    %c0_13 = arith.constant 0 : index
    %17 = vector.load %arg5[%c23, %c0_13] : memref<304x4xf32, #tpu.memory_space<vmem>>, vector<256x4xf32>
    %18 = vector.broadcast %1 : vector<256x1xf32> to vector<256x4xf32>
    %19 = arith.mulf %17, %18 : vector<256x4xf32>
    %c24_14 = arith.constant 24 : index
    %c0_15 = arith.constant 0 : index
    %20 = vector.load %arg5[%c24_14, %c0_15] : memref<304x4xf32, #tpu.memory_space<vmem>>, vector<256x4xf32>
    %c25 = arith.constant 25 : index
    %c0_16 = arith.constant 0 : index
    %21 = vector.load %arg5[%c25, %c0_16] : memref<304x4xf32, #tpu.memory_space<vmem>>, vector<256x4xf32>
    %22 = vector.broadcast %2 : vector<256x1xf32> to vector<256x4xf32>
    %23 = arith.mulf %21, %22 : vector<256x4xf32>
    %c39 = arith.constant 39 : index
    %c0_17 = arith.constant 0 : index
    %24 = vector.load %arg5[%c39, %c0_17] : memref<304x4xf32, #tpu.memory_space<vmem>>, vector<256x4xf32>
    %25 = vector.broadcast %1 : vector<256x1xf32> to vector<256x4xf32>
    %26 = arith.mulf %24, %25 : vector<256x4xf32>
    %c40 = arith.constant 40 : index
    %c0_18 = arith.constant 0 : index
    %27 = vector.load %arg5[%c40, %c0_18] : memref<304x4xf32, #tpu.memory_space<vmem>>, vector<256x4xf32>
    %c41 = arith.constant 41 : index
    %c0_19 = arith.constant 0 : index
    %28 = vector.load %arg5[%c41, %c0_19] : memref<304x4xf32, #tpu.memory_space<vmem>>, vector<256x4xf32>
    %29 = vector.broadcast %2 : vector<256x1xf32> to vector<256x4xf32>
    %30 = arith.mulf %28, %29 : vector<256x4xf32>
    %31 = tpu.concatenate %12, %13, %16, %19, %20, %23, %26, %27, %30 in 1 : vector<256x4xf32>, vector<256x4xf32>, vector<256x4xf32>, vector<256x4xf32>, vector<256x4xf32>, vector<256x4xf32>, vector<256x4xf32>, vector<256x4xf32>, vector<256x4xf32> -> vector<256x36xf32>
    %32 = arith.truncf %31 : vector<256x36xf32> to vector<256x36xbf16>
    %cst_20 = arith.constant dense<0.000000e+00> : vector<256x8xf32>
    %33 = tpu.matmul %32, %9, %cst_20 {dimension_numbers = #tpu.dot_dimension_numbers<[1], [0], [0], [1], [0, 0, 1, 1], [], []>} : vector<256x36xbf16>, vector<36x8xbf16>, vector<256x8xf32> -> vector<256x8xf32>
    %c0_21 = arith.constant 0 : index
    %c0_22 = arith.constant 0 : index
    %c0_23 = arith.constant 0 : index
    %34 = vector.load %arg4[%c0_21, %c0_22, %c0_23] : memref<1x256x8xf32, #tpu.memory_space<vmem>>, vector<1x256x8xf32>
    %35 = vector.shape_cast %34 : vector<1x256x8xf32> to vector<256x8xf32>
    %36 = vector.shape_cast %33 : vector<256x8xf32> to vector<1x256x8xf32>
    tpu.vector_store %arg4[%c0_21, %c0_22, %c0_23], %36 {strides = array<i32>} : memref<1x256x8xf32, #tpu.memory_space<vmem>>, vector<1x256x8xf32>,
    return
  }
  func.func @transform_0(%arg0: i32) -> (i32, i32, i32) {
    %c0_i32 = arith.constant 0 : i32
    %c0_i32_0 = arith.constant 0 : i32
    %c0_i32_1 = arith.constant 0 : i32
    return %arg0, %c0_i32, %c0_i32_0 : i32, i32, i32
  }
  func.func @transform_1(%arg0: i32) -> (i32, i32) {
    %c0_i32 = arith.constant 0 : i32
    %c0_i32_0 = arith.constant 0 : i32
    %c0_i32_1 = arith.constant 0 : i32
    return %c0_i32, %c0_i32_0 : i32, i32
  }
  func.func @transform_2(%arg0: i32) -> (i32, i32) {
    %c0_i32 = arith.constant 0 : i32
    %c0_i32_0 = arith.constant 0 : i32
    %c0_i32_1 = arith.constant 0 : i32
    return %c0_i32, %c0_i32_0 : i32, i32
  }
  func.func @transform_3(%arg0: i32) -> (i32, i32, i32) {
    %c0_i32 = arith.constant 0 : i32
    %c0_i32_0 = arith.constant 0 : i32
    %c0_i32_1 = arith.constant 0 : i32
    return %arg0, %c0_i32, %c0_i32_0 : i32, i32, i32
  }
}

module attributes {stable_mosaic.version = 11 : i64} {
  func.func @_resnet_block_kernel(%arg0: i32, %arg1: memref<1x256x8xf32, #tpu.memory_space<vmem>>, %arg2: memref<72x8xbf16, #tpu.memory_space<vmem>>, %arg3: memref<72x8xbf16, #tpu.memory_space<vmem>>, %arg4: memref<1x8xf32, #tpu.memory_space<vmem>>, %arg5: memref<1x8xf32, #tpu.memory_space<vmem>>, %arg6: memref<1x8xf32, #tpu.memory_space<vmem>>, %arg7: memref<1x8xf32, #tpu.memory_space<vmem>>, %arg8: memref<256x2xf32, #tpu.memory_space<vmem>>, %arg9: memref<1x256x8xf32, #tpu.memory_space<vmem>>, %arg10: memref<304x8xf32, #tpu.memory_space<vmem>>) attributes {dimension_semantics = [#tpu.dimension_semantics<parallel>], iteration_bounds = array<i64: 2>, scalar_prefetch = 0 : i64, scratch_operands = 1 : i64, tpu.core_type = #tpu.core_type<tc>, window_params = [{transform_indices = @transform_0, window_bounds = array<i64: 1, 256, 8>}, {pipeline_mode = #tpu.pipeline_mode<synchronous>, transform_indices = @transform_1, window_bounds = array<i64: 72, 8>}, {pipeline_mode = #tpu.pipeline_mode<synchronous>, transform_indices = @transform_2, window_bounds = array<i64: 72, 8>}, {pipeline_mode = #tpu.pipeline_mode<synchronous>, transform_indices = @transform_3, window_bounds = array<i64: 1, 8>}, {pipeline_mode = #tpu.pipeline_mode<synchronous>, transform_indices = @transform_4, window_bounds = array<i64: 1, 8>}, {pipeline_mode = #tpu.pipeline_mode<synchronous>, transform_indices = @transform_5, window_bounds = array<i64: 1, 8>}, {pipeline_mode = #tpu.pipeline_mode<synchronous>, transform_indices = @transform_6, window_bounds = array<i64: 1, 8>}, {pipeline_mode = #tpu.pipeline_mode<synchronous>, transform_indices = @transform_7, window_bounds = array<i64: 256, 2>}, {transform_indices = @transform_8, window_bounds = array<i64: 1, 256, 8>}]} {
    %c0 = arith.constant 0 : index
    %c0_0 = arith.constant 0 : index
    %0 = vector.load %arg8[%c0, %c0_0] : memref<256x2xf32, #tpu.memory_space<vmem>>, vector<256x2xf32>
    %1 = vector.extract_strided_slice %0 {offsets = [0, 0], sizes = [256, 1], strides = [1, 1]} : vector<256x2xf32> to vector<256x1xf32>
    %2 = vector.extract_strided_slice %0 {offsets = [0, 1], sizes = [256, 1], strides = [1, 1]} : vector<256x2xf32> to vector<256x1xf32>
    %cst = arith.constant 0.000000e+00 : f32
    %3 = vector.broadcast %cst : f32 to vector<24x8xf32>
    %c0_1 = arith.constant 0 : index
    %c0_2 = arith.constant 0 : index
    %4 = vector.load %arg10[%c0_1, %c0_2] : memref<304x8xf32, #tpu.memory_space<vmem>>, vector<24x8xf32>
    tpu.vector_store %arg10[%c0_1, %c0_2], %3 {strides = array<i32>} : memref<304x8xf32, #tpu.memory_space<vmem>>, vector<24x8xf32>,
    %c280 = arith.constant 280 : index
    %c0_3 = arith.constant 0 : index
    %5 = vector.load %arg10[%c280, %c0_3] : memref<304x8xf32, #tpu.memory_space<vmem>>, vector<24x8xf32>
    tpu.vector_store %arg10[%c280, %c0_3], %3 {strides = array<i32>} : memref<304x8xf32, #tpu.memory_space<vmem>>, vector<24x8xf32>,
    %c0_4 = arith.constant 0 : index
    %c0_5 = arith.constant 0 : index
    %c0_6 = arith.constant 0 : index
    %6 = vector.load %arg1[%c0_4, %c0_5, %c0_6] : memref<1x256x8xf32, #tpu.memory_space<vmem>>, vector<1x256x8xf32>
    %7 = vector.shape_cast %6 : vector<1x256x8xf32> to vector<256x8xf32>
    %c0_7 = arith.constant 0 : index
    %c0_8 = arith.constant 0 : index
    %8 = vector.load %arg4[%c0_7, %c0_8] : memref<1x8xf32, #tpu.memory_space<vmem>>, vector<1x8xf32>
    %9 = vector.broadcast %8 : vector<1x8xf32> to vector<256x8xf32>
    %10 = arith.mulf %7, %9 : vector<256x8xf32>
    %c0_9 = arith.constant 0 : index
    %c0_10 = arith.constant 0 : index
    %11 = vector.load %arg5[%c0_9, %c0_10] : memref<1x8xf32, #tpu.memory_space<vmem>>, vector<1x8xf32>
    %12 = vector.broadcast %11 : vector<1x8xf32> to vector<256x8xf32>
    %13 = arith.addf %10, %12 : vector<256x8xf32>
    %cst_11 = arith.constant 0.000000e+00 : f32
    %14 = vector.broadcast %cst_11 : f32 to vector<256x8xf32>
    %15 = arith.maximumf %13, %14 : vector<256x8xf32>
    %c24 = arith.constant 24 : index
    %c0_12 = arith.constant 0 : index
    %16 = vector.load %arg10[%c24, %c0_12] : memref<304x8xf32, #tpu.memory_space<vmem>>, vector<256x8xf32>
    tpu.vector_store %arg10[%c24, %c0_12], %15 {strides = array<i32>} : memref<304x8xf32, #tpu.memory_space<vmem>>, vector<256x8xf32>,
    %c0_13 = arith.constant 0 : index
    %c0_14 = arith.constant 0 : index
    %17 = vector.load %arg2[%c0_13, %c0_14] : memref<72x8xbf16, #tpu.memory_space<vmem>>, vector<72x8xbf16>
    %c7 = arith.constant 7 : index
    %c0_15 = arith.constant 0 : index
    %18 = vector.load %arg10[%c7, %c0_15] : memref<304x8xf32, #tpu.memory_space<vmem>>, vector<256x8xf32>
    %19 = vector.broadcast %1 : vector<256x1xf32> to vector<256x8xf32>
    %20 = arith.mulf %18, %19 : vector<256x8xf32>
    %c8 = arith.constant 8 : index
    %c0_16 = arith.constant 0 : index
    %21 = vector.load %arg10[%c8, %c0_16] : memref<304x8xf32, #tpu.memory_space<vmem>>, vector<256x8xf32>
    %c9 = arith.constant 9 : index
    %c0_17 = arith.constant 0 : index
    %22 = vector.load %arg10[%c9, %c0_17] : memref<304x8xf32, #tpu.memory_space<vmem>>, vector<256x8xf32>
    %23 = vector.broadcast %2 : vector<256x1xf32> to vector<256x8xf32>
    %24 = arith.mulf %22, %23 : vector<256x8xf32>
    %c23 = arith.constant 23 : index
    %c0_18 = arith.constant 0 : index
    %25 = vector.load %arg10[%c23, %c0_18] : memref<304x8xf32, #tpu.memory_space<vmem>>, vector<256x8xf32>
    %26 = vector.broadcast %1 : vector<256x1xf32> to vector<256x8xf32>
    %27 = arith.mulf %25, %26 : vector<256x8xf32>
    %c24_19 = arith.constant 24 : index
    %c0_20 = arith.constant 0 : index
    %28 = vector.load %arg10[%c24_19, %c0_20] : memref<304x8xf32, #tpu.memory_space<vmem>>, vector<256x8xf32>
    %c25 = arith.constant 25 : index
    %c0_21 = arith.constant 0 : index
    %29 = vector.load %arg10[%c25, %c0_21] : memref<304x8xf32, #tpu.memory_space<vmem>>, vector<256x8xf32>
    %30 = vector.broadcast %2 : vector<256x1xf32> to vector<256x8xf32>
    %31 = arith.mulf %29, %30 : vector<256x8xf32>
    %c39 = arith.constant 39 : index
    %c0_22 = arith.constant 0 : index
    %32 = vector.load %arg10[%c39, %c0_22] : memref<304x8xf32, #tpu.memory_space<vmem>>, vector<256x8xf32>
    %33 = vector.broadcast %1 : vector<256x1xf32> to vector<256x8xf32>
    %34 = arith.mulf %32, %33 : vector<256x8xf32>
    %c40 = arith.constant 40 : index
    %c0_23 = arith.constant 0 : index
    %35 = vector.load %arg10[%c40, %c0_23] : memref<304x8xf32, #tpu.memory_space<vmem>>, vector<256x8xf32>
    %c41 = arith.constant 41 : index
    %c0_24 = arith.constant 0 : index
    %36 = vector.load %arg10[%c41, %c0_24] : memref<304x8xf32, #tpu.memory_space<vmem>>, vector<256x8xf32>
    %37 = vector.broadcast %2 : vector<256x1xf32> to vector<256x8xf32>
    %38 = arith.mulf %36, %37 : vector<256x8xf32>
    %39 = tpu.concatenate %20, %21, %24, %27, %28, %31, %34, %35, %38 in 1 : vector<256x8xf32>, vector<256x8xf32>, vector<256x8xf32>, vector<256x8xf32>, vector<256x8xf32>, vector<256x8xf32>, vector<256x8xf32>, vector<256x8xf32>, vector<256x8xf32> -> vector<256x72xf32>
    %40 = arith.truncf %39 : vector<256x72xf32> to vector<256x72xbf16>
    %cst_25 = arith.constant dense<0.000000e+00> : vector<256x8xf32>
    %41 = tpu.matmul %40, %17, %cst_25 {dimension_numbers = #tpu.dot_dimension_numbers<[1], [0], [0], [1], [0, 0, 1, 1], [], []>} : vector<256x72xbf16>, vector<72x8xbf16>, vector<256x8xf32> -> vector<256x8xf32>
    %c0_26 = arith.constant 0 : index
    %c0_27 = arith.constant 0 : index
    %42 = vector.load %arg6[%c0_26, %c0_27] : memref<1x8xf32, #tpu.memory_space<vmem>>, vector<1x8xf32>
    %43 = vector.broadcast %42 : vector<1x8xf32> to vector<256x8xf32>
    %44 = arith.mulf %41, %43 : vector<256x8xf32>
    %c0_28 = arith.constant 0 : index
    %c0_29 = arith.constant 0 : index
    %45 = vector.load %arg7[%c0_28, %c0_29] : memref<1x8xf32, #tpu.memory_space<vmem>>, vector<1x8xf32>
    %46 = vector.broadcast %45 : vector<1x8xf32> to vector<256x8xf32>
    %47 = arith.addf %44, %46 : vector<256x8xf32>
    %cst_30 = arith.constant 0.000000e+00 : f32
    %48 = vector.broadcast %cst_30 : f32 to vector<256x8xf32>
    %49 = arith.maximumf %47, %48 : vector<256x8xf32>
    %c24_31 = arith.constant 24 : index
    %c0_32 = arith.constant 0 : index
    %50 = vector.load %arg10[%c24_31, %c0_32] : memref<304x8xf32, #tpu.memory_space<vmem>>, vector<256x8xf32>
    tpu.vector_store %arg10[%c24_31, %c0_32], %49 {strides = array<i32>} : memref<304x8xf32, #tpu.memory_space<vmem>>, vector<256x8xf32>,
    %c0_33 = arith.constant 0 : index
    %c0_34 = arith.constant 0 : index
    %51 = vector.load %arg3[%c0_33, %c0_34] : memref<72x8xbf16, #tpu.memory_space<vmem>>, vector<72x8xbf16>
    %c7_35 = arith.constant 7 : index
    %c0_36 = arith.constant 0 : index
    %52 = vector.load %arg10[%c7_35, %c0_36] : memref<304x8xf32, #tpu.memory_space<vmem>>, vector<256x8xf32>
    %53 = vector.broadcast %1 : vector<256x1xf32> to vector<256x8xf32>
    %54 = arith.mulf %52, %53 : vector<256x8xf32>
    %c8_37 = arith.constant 8 : index
    %c0_38 = arith.constant 0 : index
    %55 = vector.load %arg10[%c8_37, %c0_38] : memref<304x8xf32, #tpu.memory_space<vmem>>, vector<256x8xf32>
    %c9_39 = arith.constant 9 : index
    %c0_40 = arith.constant 0 : index
    %56 = vector.load %arg10[%c9_39, %c0_40] : memref<304x8xf32, #tpu.memory_space<vmem>>, vector<256x8xf32>
    %57 = vector.broadcast %2 : vector<256x1xf32> to vector<256x8xf32>
    %58 = arith.mulf %56, %57 : vector<256x8xf32>
    %c23_41 = arith.constant 23 : index
    %c0_42 = arith.constant 0 : index
    %59 = vector.load %arg10[%c23_41, %c0_42] : memref<304x8xf32, #tpu.memory_space<vmem>>, vector<256x8xf32>
    %60 = vector.broadcast %1 : vector<256x1xf32> to vector<256x8xf32>
    %61 = arith.mulf %59, %60 : vector<256x8xf32>
    %c24_43 = arith.constant 24 : index
    %c0_44 = arith.constant 0 : index
    %62 = vector.load %arg10[%c24_43, %c0_44] : memref<304x8xf32, #tpu.memory_space<vmem>>, vector<256x8xf32>
    %c25_45 = arith.constant 25 : index
    %c0_46 = arith.constant 0 : index
    %63 = vector.load %arg10[%c25_45, %c0_46] : memref<304x8xf32, #tpu.memory_space<vmem>>, vector<256x8xf32>
    %64 = vector.broadcast %2 : vector<256x1xf32> to vector<256x8xf32>
    %65 = arith.mulf %63, %64 : vector<256x8xf32>
    %c39_47 = arith.constant 39 : index
    %c0_48 = arith.constant 0 : index
    %66 = vector.load %arg10[%c39_47, %c0_48] : memref<304x8xf32, #tpu.memory_space<vmem>>, vector<256x8xf32>
    %67 = vector.broadcast %1 : vector<256x1xf32> to vector<256x8xf32>
    %68 = arith.mulf %66, %67 : vector<256x8xf32>
    %c40_49 = arith.constant 40 : index
    %c0_50 = arith.constant 0 : index
    %69 = vector.load %arg10[%c40_49, %c0_50] : memref<304x8xf32, #tpu.memory_space<vmem>>, vector<256x8xf32>
    %c41_51 = arith.constant 41 : index
    %c0_52 = arith.constant 0 : index
    %70 = vector.load %arg10[%c41_51, %c0_52] : memref<304x8xf32, #tpu.memory_space<vmem>>, vector<256x8xf32>
    %71 = vector.broadcast %2 : vector<256x1xf32> to vector<256x8xf32>
    %72 = arith.mulf %70, %71 : vector<256x8xf32>
    %73 = tpu.concatenate %54, %55, %58, %61, %62, %65, %68, %69, %72 in 1 : vector<256x8xf32>, vector<256x8xf32>, vector<256x8xf32>, vector<256x8xf32>, vector<256x8xf32>, vector<256x8xf32>, vector<256x8xf32>, vector<256x8xf32>, vector<256x8xf32> -> vector<256x72xf32>
    %74 = arith.truncf %73 : vector<256x72xf32> to vector<256x72xbf16>
    %cst_53 = arith.constant dense<0.000000e+00> : vector<256x8xf32>
    %75 = tpu.matmul %74, %51, %cst_53 {dimension_numbers = #tpu.dot_dimension_numbers<[1], [0], [0], [1], [0, 0, 1, 1], [], []>} : vector<256x72xbf16>, vector<72x8xbf16>, vector<256x8xf32> -> vector<256x8xf32>
    %76 = arith.addf %75, %7 : vector<256x8xf32>
    %c0_54 = arith.constant 0 : index
    %c0_55 = arith.constant 0 : index
    %c0_56 = arith.constant 0 : index
    %77 = vector.load %arg9[%c0_54, %c0_55, %c0_56] : memref<1x256x8xf32, #tpu.memory_space<vmem>>, vector<1x256x8xf32>
    %78 = vector.shape_cast %77 : vector<1x256x8xf32> to vector<256x8xf32>
    %79 = vector.shape_cast %76 : vector<256x8xf32> to vector<1x256x8xf32>
    tpu.vector_store %arg9[%c0_54, %c0_55, %c0_56], %79 {strides = array<i32>} : memref<1x256x8xf32, #tpu.memory_space<vmem>>, vector<1x256x8xf32>,
    return
  }
  func.func @transform_0(%arg0: i32) -> (i32, i32, i32) {
    %c0_i32 = arith.constant 0 : i32
    %c0_i32_0 = arith.constant 0 : i32
    %c0_i32_1 = arith.constant 0 : i32
    return %arg0, %c0_i32, %c0_i32_0 : i32, i32, i32
  }
  func.func @transform_1(%arg0: i32) -> (i32, i32) {
    %c0_i32 = arith.constant 0 : i32
    %c0_i32_0 = arith.constant 0 : i32
    %c0_i32_1 = arith.constant 0 : i32
    return %c0_i32, %c0_i32_0 : i32, i32
  }
  func.func @transform_2(%arg0: i32) -> (i32, i32) {
    %c0_i32 = arith.constant 0 : i32
    %c0_i32_0 = arith.constant 0 : i32
    %c0_i32_1 = arith.constant 0 : i32
    return %c0_i32, %c0_i32_0 : i32, i32
  }
  func.func @transform_3(%arg0: i32) -> (i32, i32) {
    %c0_i32 = arith.constant 0 : i32
    %c0_i32_0 = arith.constant 0 : i32
    %c0_i32_1 = arith.constant 0 : i32
    return %c0_i32, %c0_i32_0 : i32, i32
  }
  func.func @transform_4(%arg0: i32) -> (i32, i32) {
    %c0_i32 = arith.constant 0 : i32
    %c0_i32_0 = arith.constant 0 : i32
    %c0_i32_1 = arith.constant 0 : i32
    return %c0_i32, %c0_i32_0 : i32, i32
  }
  func.func @transform_5(%arg0: i32) -> (i32, i32) {
    %c0_i32 = arith.constant 0 : i32
    %c0_i32_0 = arith.constant 0 : i32
    %c0_i32_1 = arith.constant 0 : i32
    return %c0_i32, %c0_i32_0 : i32, i32
  }
  func.func @transform_6(%arg0: i32) -> (i32, i32) {
    %c0_i32 = arith.constant 0 : i32
    %c0_i32_0 = arith.constant 0 : i32
    %c0_i32_1 = arith.constant 0 : i32
    return %c0_i32, %c0_i32_0 : i32, i32
  }
  func.func @transform_7(%arg0: i32) -> (i32, i32) {
    %c0_i32 = arith.constant 0 : i32
    %c0_i32_0 = arith.constant 0 : i32
    %c0_i32_1 = arith.constant 0 : i32
    return %c0_i32, %c0_i32_0 : i32, i32
  }
  func.func @transform_8(%arg0: i32) -> (i32, i32, i32) {
    %c0_i32 = arith.constant 0 : i32
    %c0_i32_0 = arith.constant 0 : i32
    %c0_i32_1 = arith.constant 0 : i32
    return %arg0, %c0_i32, %c0_i32_0 : i32, i32, i32
  }
}

module attributes {stable_mosaic.version = 11 : i64} {
  func.func @_downsample_kernel(%arg0: i32, %arg1: i32, %arg2: memref<2x8x16xf32, #tpu.memory_space<vmem>>, %arg3: memref<32x16xbf16, #tpu.memory_space<vmem>>, %arg4: memref<1x32xf32, #tpu.memory_space<vmem>>, %arg5: memref<1x32xf32, #tpu.memory_space<vmem>>, %arg6: memref<1x8x16xf32, #tpu.memory_space<vmem>>) attributes {dimension_semantics = [#tpu.dimension_semantics<parallel>, #tpu.dimension_semantics<parallel>], iteration_bounds = array<i64: 2, 8>, scalar_prefetch = 0 : i64, scratch_operands = 0 : i64, tpu.core_type = #tpu.core_type<tc>, window_params = [{transform_indices = @transform_0, window_bounds = array<i64: 2, 8, 16>}, {pipeline_mode = #tpu.pipeline_mode<synchronous>, transform_indices = @transform_1, window_bounds = array<i64: 32, 16>}, {pipeline_mode = #tpu.pipeline_mode<synchronous>, transform_indices = @transform_2, window_bounds = array<i64: 1, 32>}, {pipeline_mode = #tpu.pipeline_mode<synchronous>, transform_indices = @transform_3, window_bounds = array<i64: 1, 32>}, {transform_indices = @transform_4, window_bounds = array<i64: 1, 8, 16>}]} {
    %c0 = arith.constant 0 : index
    %c0_0 = arith.constant 0 : index
    %c0_1 = arith.constant 0 : index
    %0 = vector.load %arg2[%c0, %c0_0, %c0_1] : memref<2x8x16xf32, #tpu.memory_space<vmem>>, vector<1x8x16xf32>
    %1 = vector.shape_cast %0 : vector<1x8x16xf32> to vector<8x16xf32>
    %c1 = arith.constant 1 : index
    %c0_2 = arith.constant 0 : index
    %c0_3 = arith.constant 0 : index
    %2 = vector.load %arg2[%c1, %c0_2, %c0_3] : memref<2x8x16xf32, #tpu.memory_space<vmem>>, vector<1x8x16xf32>
    %3 = vector.shape_cast %2 : vector<1x8x16xf32> to vector<8x16xf32>
    %4 = tpu.concatenate %1, %3 in 1 : vector<8x16xf32>, vector<8x16xf32> -> vector<8x32xf32>
    %c0_4 = arith.constant 0 : index
    %c0_5 = arith.constant 0 : index
    %5 = vector.load %arg4[%c0_4, %c0_5] : memref<1x32xf32, #tpu.memory_space<vmem>>, vector<1x32xf32>
    %6 = vector.broadcast %5 : vector<1x32xf32> to vector<8x32xf32>
    %7 = arith.mulf %4, %6 : vector<8x32xf32>
    %c0_6 = arith.constant 0 : index
    %c0_7 = arith.constant 0 : index
    %8 = vector.load %arg5[%c0_6, %c0_7] : memref<1x32xf32, #tpu.memory_space<vmem>>, vector<1x32xf32>
    %9 = vector.broadcast %8 : vector<1x32xf32> to vector<8x32xf32>
    %10 = arith.addf %7, %9 : vector<8x32xf32>
    %cst = arith.constant 0.000000e+00 : f32
    %11 = vector.broadcast %cst : f32 to vector<8x32xf32>
    %12 = arith.maximumf %10, %11 : vector<8x32xf32>
    %13 = arith.truncf %12 : vector<8x32xf32> to vector<8x32xbf16>
    %c0_8 = arith.constant 0 : index
    %c0_9 = arith.constant 0 : index
    %14 = vector.load %arg3[%c0_8, %c0_9] : memref<32x16xbf16, #tpu.memory_space<vmem>>, vector<32x16xbf16>
    %cst_10 = arith.constant dense<0.000000e+00> : vector<8x16xf32>
    %15 = tpu.matmul %13, %14, %cst_10 {dimension_numbers = #tpu.dot_dimension_numbers<[1], [0], [0], [1], [0, 0, 1, 1], [], []>} : vector<8x32xbf16>, vector<32x16xbf16>, vector<8x16xf32> -> vector<8x16xf32>
    %c0_11 = arith.constant 0 : index
    %c0_12 = arith.constant 0 : index
    %c0_13 = arith.constant 0 : index
    %16 = vector.load %arg6[%c0_11, %c0_12, %c0_13] : memref<1x8x16xf32, #tpu.memory_space<vmem>>, vector<1x8x16xf32>
    %17 = vector.shape_cast %16 : vector<1x8x16xf32> to vector<8x16xf32>
    %18 = vector.shape_cast %15 : vector<8x16xf32> to vector<1x8x16xf32>
    tpu.vector_store %arg6[%c0_11, %c0_12, %c0_13], %18 {strides = array<i32>} : memref<1x8x16xf32, #tpu.memory_space<vmem>>, vector<1x8x16xf32>,
    return
  }
  func.func @transform_0(%arg0: i32, %arg1: i32) -> (i32, i32, i32) {
    %c8_i32 = arith.constant 8 : i32
    %0 = arith.muli %arg0, %c8_i32 : i32
    %1 = arith.addi %0, %arg1 : i32
    %c0_i32 = arith.constant 0 : i32
    %c0_i32_0 = arith.constant 0 : i32
    %c0_i32_1 = arith.constant 0 : i32
    return %1, %c0_i32, %c0_i32_0 : i32, i32, i32
  }
  func.func @transform_1(%arg0: i32, %arg1: i32) -> (i32, i32) {
    %c0_i32 = arith.constant 0 : i32
    %c0_i32_0 = arith.constant 0 : i32
    %c0_i32_1 = arith.constant 0 : i32
    return %c0_i32, %c0_i32_0 : i32, i32
  }
  func.func @transform_2(%arg0: i32, %arg1: i32) -> (i32, i32) {
    %c0_i32 = arith.constant 0 : i32
    %c0_i32_0 = arith.constant 0 : i32
    %c0_i32_1 = arith.constant 0 : i32
    return %c0_i32, %c0_i32_0 : i32, i32
  }
  func.func @transform_3(%arg0: i32, %arg1: i32) -> (i32, i32) {
    %c0_i32 = arith.constant 0 : i32
    %c0_i32_0 = arith.constant 0 : i32
    %c0_i32_1 = arith.constant 0 : i32
    return %c0_i32, %c0_i32_0 : i32, i32
  }
  func.func @transform_4(%arg0: i32, %arg1: i32) -> (i32, i32, i32) {
    %c8_i32 = arith.constant 8 : i32
    %0 = arith.muli %arg0, %c8_i32 : i32
    %1 = arith.addi %0, %arg1 : i32
    %c0_i32 = arith.constant 0 : i32
    %c0_i32_0 = arith.constant 0 : i32
    %c0_i32_1 = arith.constant 0 : i32
    return %1, %c0_i32, %c0_i32_0 : i32, i32, i32
  }
}

module attributes {stable_mosaic.version = 11 : i64} {
  func.func @_resnet_block_kernel(%arg0: i32, %arg1: memref<1x64x16xf32, #tpu.memory_space<vmem>>, %arg2: memref<144x16xbf16, #tpu.memory_space<vmem>>, %arg3: memref<144x16xbf16, #tpu.memory_space<vmem>>, %arg4: memref<1x16xf32, #tpu.memory_space<vmem>>, %arg5: memref<1x16xf32, #tpu.memory_space<vmem>>, %arg6: memref<1x16xf32, #tpu.memory_space<vmem>>, %arg7: memref<1x16xf32, #tpu.memory_space<vmem>>, %arg8: memref<64x2xf32, #tpu.memory_space<vmem>>, %arg9: memref<1x64x16xf32, #tpu.memory_space<vmem>>, %arg10: memref<96x16xf32, #tpu.memory_space<vmem>>) attributes {dimension_semantics = [#tpu.dimension_semantics<parallel>], iteration_bounds = array<i64: 2>, scalar_prefetch = 0 : i64, scratch_operands = 1 : i64, tpu.core_type = #tpu.core_type<tc>, window_params = [{transform_indices = @transform_0, window_bounds = array<i64: 1, 64, 16>}, {pipeline_mode = #tpu.pipeline_mode<synchronous>, transform_indices = @transform_1, window_bounds = array<i64: 144, 16>}, {pipeline_mode = #tpu.pipeline_mode<synchronous>, transform_indices = @transform_2, window_bounds = array<i64: 144, 16>}, {pipeline_mode = #tpu.pipeline_mode<synchronous>, transform_indices = @transform_3, window_bounds = array<i64: 1, 16>}, {pipeline_mode = #tpu.pipeline_mode<synchronous>, transform_indices = @transform_4, window_bounds = array<i64: 1, 16>}, {pipeline_mode = #tpu.pipeline_mode<synchronous>, transform_indices = @transform_5, window_bounds = array<i64: 1, 16>}, {pipeline_mode = #tpu.pipeline_mode<synchronous>, transform_indices = @transform_6, window_bounds = array<i64: 1, 16>}, {pipeline_mode = #tpu.pipeline_mode<synchronous>, transform_indices = @transform_7, window_bounds = array<i64: 64, 2>}, {transform_indices = @transform_8, window_bounds = array<i64: 1, 64, 16>}]} {
    %c0 = arith.constant 0 : index
    %c0_0 = arith.constant 0 : index
    %0 = vector.load %arg8[%c0, %c0_0] : memref<64x2xf32, #tpu.memory_space<vmem>>, vector<64x2xf32>
    %1 = vector.extract_strided_slice %0 {offsets = [0, 0], sizes = [64, 1], strides = [1, 1]} : vector<64x2xf32> to vector<64x1xf32>
    %2 = vector.extract_strided_slice %0 {offsets = [0, 1], sizes = [64, 1], strides = [1, 1]} : vector<64x2xf32> to vector<64x1xf32>
    %cst = arith.constant 0.000000e+00 : f32
    %3 = vector.broadcast %cst : f32 to vector<16x16xf32>
    %c0_1 = arith.constant 0 : index
    %c0_2 = arith.constant 0 : index
    %4 = vector.load %arg10[%c0_1, %c0_2] : memref<96x16xf32, #tpu.memory_space<vmem>>, vector<16x16xf32>
    tpu.vector_store %arg10[%c0_1, %c0_2], %3 {strides = array<i32>} : memref<96x16xf32, #tpu.memory_space<vmem>>, vector<16x16xf32>,
    %c80 = arith.constant 80 : index
    %c0_3 = arith.constant 0 : index
    %5 = vector.load %arg10[%c80, %c0_3] : memref<96x16xf32, #tpu.memory_space<vmem>>, vector<16x16xf32>
    tpu.vector_store %arg10[%c80, %c0_3], %3 {strides = array<i32>} : memref<96x16xf32, #tpu.memory_space<vmem>>, vector<16x16xf32>,
    %c0_4 = arith.constant 0 : index
    %c0_5 = arith.constant 0 : index
    %c0_6 = arith.constant 0 : index
    %6 = vector.load %arg1[%c0_4, %c0_5, %c0_6] : memref<1x64x16xf32, #tpu.memory_space<vmem>>, vector<1x64x16xf32>
    %7 = vector.shape_cast %6 : vector<1x64x16xf32> to vector<64x16xf32>
    %c0_7 = arith.constant 0 : index
    %c0_8 = arith.constant 0 : index
    %8 = vector.load %arg4[%c0_7, %c0_8] : memref<1x16xf32, #tpu.memory_space<vmem>>, vector<1x16xf32>
    %9 = vector.broadcast %8 : vector<1x16xf32> to vector<64x16xf32>
    %10 = arith.mulf %7, %9 : vector<64x16xf32>
    %c0_9 = arith.constant 0 : index
    %c0_10 = arith.constant 0 : index
    %11 = vector.load %arg5[%c0_9, %c0_10] : memref<1x16xf32, #tpu.memory_space<vmem>>, vector<1x16xf32>
    %12 = vector.broadcast %11 : vector<1x16xf32> to vector<64x16xf32>
    %13 = arith.addf %10, %12 : vector<64x16xf32>
    %cst_11 = arith.constant 0.000000e+00 : f32
    %14 = vector.broadcast %cst_11 : f32 to vector<64x16xf32>
    %15 = arith.maximumf %13, %14 : vector<64x16xf32>
    %c16 = arith.constant 16 : index
    %c0_12 = arith.constant 0 : index
    %16 = vector.load %arg10[%c16, %c0_12] : memref<96x16xf32, #tpu.memory_space<vmem>>, vector<64x16xf32>
    tpu.vector_store %arg10[%c16, %c0_12], %15 {strides = array<i32>} : memref<96x16xf32, #tpu.memory_space<vmem>>, vector<64x16xf32>,
    %c0_13 = arith.constant 0 : index
    %c0_14 = arith.constant 0 : index
    %17 = vector.load %arg2[%c0_13, %c0_14] : memref<144x16xbf16, #tpu.memory_space<vmem>>, vector<144x16xbf16>
    %c7 = arith.constant 7 : index
    %c0_15 = arith.constant 0 : index
    %18 = vector.load %arg10[%c7, %c0_15] : memref<96x16xf32, #tpu.memory_space<vmem>>, vector<64x16xf32>
    %19 = vector.broadcast %1 : vector<64x1xf32> to vector<64x16xf32>
    %20 = arith.mulf %18, %19 : vector<64x16xf32>
    %c8 = arith.constant 8 : index
    %c0_16 = arith.constant 0 : index
    %21 = vector.load %arg10[%c8, %c0_16] : memref<96x16xf32, #tpu.memory_space<vmem>>, vector<64x16xf32>
    %c9 = arith.constant 9 : index
    %c0_17 = arith.constant 0 : index
    %22 = vector.load %arg10[%c9, %c0_17] : memref<96x16xf32, #tpu.memory_space<vmem>>, vector<64x16xf32>
    %23 = vector.broadcast %2 : vector<64x1xf32> to vector<64x16xf32>
    %24 = arith.mulf %22, %23 : vector<64x16xf32>
    %c15 = arith.constant 15 : index
    %c0_18 = arith.constant 0 : index
    %25 = vector.load %arg10[%c15, %c0_18] : memref<96x16xf32, #tpu.memory_space<vmem>>, vector<64x16xf32>
    %26 = vector.broadcast %1 : vector<64x1xf32> to vector<64x16xf32>
    %27 = arith.mulf %25, %26 : vector<64x16xf32>
    %c16_19 = arith.constant 16 : index
    %c0_20 = arith.constant 0 : index
    %28 = vector.load %arg10[%c16_19, %c0_20] : memref<96x16xf32, #tpu.memory_space<vmem>>, vector<64x16xf32>
    %c17 = arith.constant 17 : index
    %c0_21 = arith.constant 0 : index
    %29 = vector.load %arg10[%c17, %c0_21] : memref<96x16xf32, #tpu.memory_space<vmem>>, vector<64x16xf32>
    %30 = vector.broadcast %2 : vector<64x1xf32> to vector<64x16xf32>
    %31 = arith.mulf %29, %30 : vector<64x16xf32>
    %c23 = arith.constant 23 : index
    %c0_22 = arith.constant 0 : index
    %32 = vector.load %arg10[%c23, %c0_22] : memref<96x16xf32, #tpu.memory_space<vmem>>, vector<64x16xf32>
    %33 = vector.broadcast %1 : vector<64x1xf32> to vector<64x16xf32>
    %34 = arith.mulf %32, %33 : vector<64x16xf32>
    %c24 = arith.constant 24 : index
    %c0_23 = arith.constant 0 : index
    %35 = vector.load %arg10[%c24, %c0_23] : memref<96x16xf32, #tpu.memory_space<vmem>>, vector<64x16xf32>
    %c25 = arith.constant 25 : index
    %c0_24 = arith.constant 0 : index
    %36 = vector.load %arg10[%c25, %c0_24] : memref<96x16xf32, #tpu.memory_space<vmem>>, vector<64x16xf32>
    %37 = vector.broadcast %2 : vector<64x1xf32> to vector<64x16xf32>
    %38 = arith.mulf %36, %37 : vector<64x16xf32>
    %39 = tpu.concatenate %20, %21, %24, %27, %28, %31, %34, %35, %38 in 1 : vector<64x16xf32>, vector<64x16xf32>, vector<64x16xf32>, vector<64x16xf32>, vector<64x16xf32>, vector<64x16xf32>, vector<64x16xf32>, vector<64x16xf32>, vector<64x16xf32> -> vector<64x144xf32>
    %40 = arith.truncf %39 : vector<64x144xf32> to vector<64x144xbf16>
    %cst_25 = arith.constant dense<0.000000e+00> : vector<64x16xf32>
    %41 = tpu.matmul %40, %17, %cst_25 {dimension_numbers = #tpu.dot_dimension_numbers<[1], [0], [0], [1], [0, 0, 1, 1], [], []>} : vector<64x144xbf16>, vector<144x16xbf16>, vector<64x16xf32> -> vector<64x16xf32>
    %c0_26 = arith.constant 0 : index
    %c0_27 = arith.constant 0 : index
    %42 = vector.load %arg6[%c0_26, %c0_27] : memref<1x16xf32, #tpu.memory_space<vmem>>, vector<1x16xf32>
    %43 = vector.broadcast %42 : vector<1x16xf32> to vector<64x16xf32>
    %44 = arith.mulf %41, %43 : vector<64x16xf32>
    %c0_28 = arith.constant 0 : index
    %c0_29 = arith.constant 0 : index
    %45 = vector.load %arg7[%c0_28, %c0_29] : memref<1x16xf32, #tpu.memory_space<vmem>>, vector<1x16xf32>
    %46 = vector.broadcast %45 : vector<1x16xf32> to vector<64x16xf32>
    %47 = arith.addf %44, %46 : vector<64x16xf32>
    %cst_30 = arith.constant 0.000000e+00 : f32
    %48 = vector.broadcast %cst_30 : f32 to vector<64x16xf32>
    %49 = arith.maximumf %47, %48 : vector<64x16xf32>
    %c16_31 = arith.constant 16 : index
    %c0_32 = arith.constant 0 : index
    %50 = vector.load %arg10[%c16_31, %c0_32] : memref<96x16xf32, #tpu.memory_space<vmem>>, vector<64x16xf32>
    tpu.vector_store %arg10[%c16_31, %c0_32], %49 {strides = array<i32>} : memref<96x16xf32, #tpu.memory_space<vmem>>, vector<64x16xf32>,
    %c0_33 = arith.constant 0 : index
    %c0_34 = arith.constant 0 : index
    %51 = vector.load %arg3[%c0_33, %c0_34] : memref<144x16xbf16, #tpu.memory_space<vmem>>, vector<144x16xbf16>
    %c7_35 = arith.constant 7 : index
    %c0_36 = arith.constant 0 : index
    %52 = vector.load %arg10[%c7_35, %c0_36] : memref<96x16xf32, #tpu.memory_space<vmem>>, vector<64x16xf32>
    %53 = vector.broadcast %1 : vector<64x1xf32> to vector<64x16xf32>
    %54 = arith.mulf %52, %53 : vector<64x16xf32>
    %c8_37 = arith.constant 8 : index
    %c0_38 = arith.constant 0 : index
    %55 = vector.load %arg10[%c8_37, %c0_38] : memref<96x16xf32, #tpu.memory_space<vmem>>, vector<64x16xf32>
    %c9_39 = arith.constant 9 : index
    %c0_40 = arith.constant 0 : index
    %56 = vector.load %arg10[%c9_39, %c0_40] : memref<96x16xf32, #tpu.memory_space<vmem>>, vector<64x16xf32>
    %57 = vector.broadcast %2 : vector<64x1xf32> to vector<64x16xf32>
    %58 = arith.mulf %56, %57 : vector<64x16xf32>
    %c15_41 = arith.constant 15 : index
    %c0_42 = arith.constant 0 : index
    %59 = vector.load %arg10[%c15_41, %c0_42] : memref<96x16xf32, #tpu.memory_space<vmem>>, vector<64x16xf32>
    %60 = vector.broadcast %1 : vector<64x1xf32> to vector<64x16xf32>
    %61 = arith.mulf %59, %60 : vector<64x16xf32>
    %c16_43 = arith.constant 16 : index
    %c0_44 = arith.constant 0 : index
    %62 = vector.load %arg10[%c16_43, %c0_44] : memref<96x16xf32, #tpu.memory_space<vmem>>, vector<64x16xf32>
    %c17_45 = arith.constant 17 : index
    %c0_46 = arith.constant 0 : index
    %63 = vector.load %arg10[%c17_45, %c0_46] : memref<96x16xf32, #tpu.memory_space<vmem>>, vector<64x16xf32>
    %64 = vector.broadcast %2 : vector<64x1xf32> to vector<64x16xf32>
    %65 = arith.mulf %63, %64 : vector<64x16xf32>
    %c23_47 = arith.constant 23 : index
    %c0_48 = arith.constant 0 : index
    %66 = vector.load %arg10[%c23_47, %c0_48] : memref<96x16xf32, #tpu.memory_space<vmem>>, vector<64x16xf32>
    %67 = vector.broadcast %1 : vector<64x1xf32> to vector<64x16xf32>
    %68 = arith.mulf %66, %67 : vector<64x16xf32>
    %c24_49 = arith.constant 24 : index
    %c0_50 = arith.constant 0 : index
    %69 = vector.load %arg10[%c24_49, %c0_50] : memref<96x16xf32, #tpu.memory_space<vmem>>, vector<64x16xf32>
    %c25_51 = arith.constant 25 : index
    %c0_52 = arith.constant 0 : index
    %70 = vector.load %arg10[%c25_51, %c0_52] : memref<96x16xf32, #tpu.memory_space<vmem>>, vector<64x16xf32>
    %71 = vector.broadcast %2 : vector<64x1xf32> to vector<64x16xf32>
    %72 = arith.mulf %70, %71 : vector<64x16xf32>
    %73 = tpu.concatenate %54, %55, %58, %61, %62, %65, %68, %69, %72 in 1 : vector<64x16xf32>, vector<64x16xf32>, vector<64x16xf32>, vector<64x16xf32>, vector<64x16xf32>, vector<64x16xf32>, vector<64x16xf32>, vector<64x16xf32>, vector<64x16xf32> -> vector<64x144xf32>
    %74 = arith.truncf %73 : vector<64x144xf32> to vector<64x144xbf16>
    %cst_53 = arith.constant dense<0.000000e+00> : vector<64x16xf32>
    %75 = tpu.matmul %74, %51, %cst_53 {dimension_numbers = #tpu.dot_dimension_numbers<[1], [0], [0], [1], [0, 0, 1, 1], [], []>} : vector<64x144xbf16>, vector<144x16xbf16>, vector<64x16xf32> -> vector<64x16xf32>
    %76 = arith.addf %75, %7 : vector<64x16xf32>
    %c0_54 = arith.constant 0 : index
    %c0_55 = arith.constant 0 : index
    %c0_56 = arith.constant 0 : index
    %77 = vector.load %arg9[%c0_54, %c0_55, %c0_56] : memref<1x64x16xf32, #tpu.memory_space<vmem>>, vector<1x64x16xf32>
    %78 = vector.shape_cast %77 : vector<1x64x16xf32> to vector<64x16xf32>
    %79 = vector.shape_cast %76 : vector<64x16xf32> to vector<1x64x16xf32>
    tpu.vector_store %arg9[%c0_54, %c0_55, %c0_56], %79 {strides = array<i32>} : memref<1x64x16xf32, #tpu.memory_space<vmem>>, vector<1x64x16xf32>,
    return
  }
  func.func @transform_0(%arg0: i32) -> (i32, i32, i32) {
    %c0_i32 = arith.constant 0 : i32
    %c0_i32_0 = arith.constant 0 : i32
    %c0_i32_1 = arith.constant 0 : i32
    return %arg0, %c0_i32, %c0_i32_0 : i32, i32, i32
  }
  func.func @transform_1(%arg0: i32) -> (i32, i32) {
    %c0_i32 = arith.constant 0 : i32
    %c0_i32_0 = arith.constant 0 : i32
    %c0_i32_1 = arith.constant 0 : i32
    return %c0_i32, %c0_i32_0 : i32, i32
  }
  func.func @transform_2(%arg0: i32) -> (i32, i32) {
    %c0_i32 = arith.constant 0 : i32
    %c0_i32_0 = arith.constant 0 : i32
    %c0_i32_1 = arith.constant 0 : i32
    return %c0_i32, %c0_i32_0 : i32, i32
  }
  func.func @transform_3(%arg0: i32) -> (i32, i32) {
    %c0_i32 = arith.constant 0 : i32
    %c0_i32_0 = arith.constant 0 : i32
    %c0_i32_1 = arith.constant 0 : i32
    return %c0_i32, %c0_i32_0 : i32, i32
  }
  func.func @transform_4(%arg0: i32) -> (i32, i32) {
    %c0_i32 = arith.constant 0 : i32
    %c0_i32_0 = arith.constant 0 : i32
    %c0_i32_1 = arith.constant 0 : i32
    return %c0_i32, %c0_i32_0 : i32, i32
  }
  func.func @transform_5(%arg0: i32) -> (i32, i32) {
    %c0_i32 = arith.constant 0 : i32
    %c0_i32_0 = arith.constant 0 : i32
    %c0_i32_1 = arith.constant 0 : i32
    return %c0_i32, %c0_i32_0 : i32, i32
  }
  func.func @transform_6(%arg0: i32) -> (i32, i32) {
    %c0_i32 = arith.constant 0 : i32
    %c0_i32_0 = arith.constant 0 : i32
    %c0_i32_1 = arith.constant 0 : i32
    return %c0_i32, %c0_i32_0 : i32, i32
  }
  func.func @transform_7(%arg0: i32) -> (i32, i32) {
    %c0_i32 = arith.constant 0 : i32
    %c0_i32_0 = arith.constant 0 : i32
    %c0_i32_1 = arith.constant 0 : i32
    return %c0_i32, %c0_i32_0 : i32, i32
  }
  func.func @transform_8(%arg0: i32) -> (i32, i32, i32) {
    %c0_i32 = arith.constant 0 : i32
    %c0_i32_0 = arith.constant 0 : i32
    %c0_i32_1 = arith.constant 0 : i32
    return %arg0, %c0_i32, %c0_i32_0 : i32, i32, i32
  }
}

module attributes {stable_mosaic.version = 11 : i64} {
  func.func @_downsample_kernel(%arg0: i32, %arg1: i32, %arg2: memref<2x4x32xf32, #tpu.memory_space<vmem>>, %arg3: memref<64x24xbf16, #tpu.memory_space<vmem>>, %arg4: memref<1x64xf32, #tpu.memory_space<vmem>>, %arg5: memref<1x64xf32, #tpu.memory_space<vmem>>, %arg6: memref<1x4x24xf32, #tpu.memory_space<vmem>>) attributes {dimension_semantics = [#tpu.dimension_semantics<parallel>, #tpu.dimension_semantics<parallel>], iteration_bounds = array<i64: 2, 4>, scalar_prefetch = 0 : i64, scratch_operands = 0 : i64, tpu.core_type = #tpu.core_type<tc>, window_params = [{transform_indices = @transform_0, window_bounds = array<i64: 2, 4, 32>}, {pipeline_mode = #tpu.pipeline_mode<synchronous>, transform_indices = @transform_1, window_bounds = array<i64: 64, 24>}, {pipeline_mode = #tpu.pipeline_mode<synchronous>, transform_indices = @transform_2, window_bounds = array<i64: 1, 64>}, {pipeline_mode = #tpu.pipeline_mode<synchronous>, transform_indices = @transform_3, window_bounds = array<i64: 1, 64>}, {transform_indices = @transform_4, window_bounds = array<i64: 1, 4, 24>}]} {
    %c0 = arith.constant 0 : index
    %c0_0 = arith.constant 0 : index
    %c0_1 = arith.constant 0 : index
    %0 = vector.load %arg2[%c0, %c0_0, %c0_1] : memref<2x4x32xf32, #tpu.memory_space<vmem>>, vector<1x4x32xf32>
    %1 = vector.shape_cast %0 : vector<1x4x32xf32> to vector<4x32xf32>
    %c1 = arith.constant 1 : index
    %c0_2 = arith.constant 0 : index
    %c0_3 = arith.constant 0 : index
    %2 = vector.load %arg2[%c1, %c0_2, %c0_3] : memref<2x4x32xf32, #tpu.memory_space<vmem>>, vector<1x4x32xf32>
    %3 = vector.shape_cast %2 : vector<1x4x32xf32> to vector<4x32xf32>
    %4 = tpu.concatenate %1, %3 in 1 : vector<4x32xf32>, vector<4x32xf32> -> vector<4x64xf32>
    %c0_4 = arith.constant 0 : index
    %c0_5 = arith.constant 0 : index
    %5 = vector.load %arg4[%c0_4, %c0_5] : memref<1x64xf32, #tpu.memory_space<vmem>>, vector<1x64xf32>
    %6 = vector.broadcast %5 : vector<1x64xf32> to vector<4x64xf32>
    %7 = arith.mulf %4, %6 : vector<4x64xf32>
    %c0_6 = arith.constant 0 : index
    %c0_7 = arith.constant 0 : index
    %8 = vector.load %arg5[%c0_6, %c0_7] : memref<1x64xf32, #tpu.memory_space<vmem>>, vector<1x64xf32>
    %9 = vector.broadcast %8 : vector<1x64xf32> to vector<4x64xf32>
    %10 = arith.addf %7, %9 : vector<4x64xf32>
    %cst = arith.constant 0.000000e+00 : f32
    %11 = vector.broadcast %cst : f32 to vector<4x64xf32>
    %12 = arith.maximumf %10, %11 : vector<4x64xf32>
    %13 = arith.truncf %12 : vector<4x64xf32> to vector<4x64xbf16>
    %c0_8 = arith.constant 0 : index
    %c0_9 = arith.constant 0 : index
    %14 = vector.load %arg3[%c0_8, %c0_9] : memref<64x24xbf16, #tpu.memory_space<vmem>>, vector<64x24xbf16>
    %cst_10 = arith.constant dense<0.000000e+00> : vector<4x24xf32>
    %15 = tpu.matmul %13, %14, %cst_10 {dimension_numbers = #tpu.dot_dimension_numbers<[1], [0], [0], [1], [0, 0, 1, 1], [], []>} : vector<4x64xbf16>, vector<64x24xbf16>, vector<4x24xf32> -> vector<4x24xf32>
    %c0_11 = arith.constant 0 : index
    %c0_12 = arith.constant 0 : index
    %c0_13 = arith.constant 0 : index
    %16 = vector.load %arg6[%c0_11, %c0_12, %c0_13] : memref<1x4x24xf32, #tpu.memory_space<vmem>>, vector<1x4x24xf32>
    %17 = vector.shape_cast %16 : vector<1x4x24xf32> to vector<4x24xf32>
    %18 = vector.shape_cast %15 : vector<4x24xf32> to vector<1x4x24xf32>
    tpu.vector_store %arg6[%c0_11, %c0_12, %c0_13], %18 {strides = array<i32>} : memref<1x4x24xf32, #tpu.memory_space<vmem>>, vector<1x4x24xf32>,
    return
  }
  func.func @transform_0(%arg0: i32, %arg1: i32) -> (i32, i32, i32) {
    %c4_i32 = arith.constant 4 : i32
    %0 = arith.muli %arg0, %c4_i32 : i32
    %1 = arith.addi %0, %arg1 : i32
    %c0_i32 = arith.constant 0 : i32
    %c0_i32_0 = arith.constant 0 : i32
    %c0_i32_1 = arith.constant 0 : i32
    return %1, %c0_i32, %c0_i32_0 : i32, i32, i32
  }
  func.func @transform_1(%arg0: i32, %arg1: i32) -> (i32, i32) {
    %c0_i32 = arith.constant 0 : i32
    %c0_i32_0 = arith.constant 0 : i32
    %c0_i32_1 = arith.constant 0 : i32
    return %c0_i32, %c0_i32_0 : i32, i32
  }
  func.func @transform_2(%arg0: i32, %arg1: i32) -> (i32, i32) {
    %c0_i32 = arith.constant 0 : i32
    %c0_i32_0 = arith.constant 0 : i32
    %c0_i32_1 = arith.constant 0 : i32
    return %c0_i32, %c0_i32_0 : i32, i32
  }
  func.func @transform_3(%arg0: i32, %arg1: i32) -> (i32, i32) {
    %c0_i32 = arith.constant 0 : i32
    %c0_i32_0 = arith.constant 0 : i32
    %c0_i32_1 = arith.constant 0 : i32
    return %c0_i32, %c0_i32_0 : i32, i32
  }
  func.func @transform_4(%arg0: i32, %arg1: i32) -> (i32, i32, i32) {
    %c4_i32 = arith.constant 4 : i32
    %0 = arith.muli %arg0, %c4_i32 : i32
    %1 = arith.addi %0, %arg1 : i32
    %c0_i32 = arith.constant 0 : i32
    %c0_i32_0 = arith.constant 0 : i32
    %c0_i32_1 = arith.constant 0 : i32
    return %1, %c0_i32, %c0_i32_0 : i32, i32, i32
  }
}

module attributes {stable_mosaic.version = 11 : i64} {
  func.func @_resnet_block_kernel(%arg0: i32, %arg1: memref<1x16x24xf32, #tpu.memory_space<vmem>>, %arg2: memref<216x24xbf16, #tpu.memory_space<vmem>>, %arg3: memref<216x24xbf16, #tpu.memory_space<vmem>>, %arg4: memref<1x24xf32, #tpu.memory_space<vmem>>, %arg5: memref<1x24xf32, #tpu.memory_space<vmem>>, %arg6: memref<1x24xf32, #tpu.memory_space<vmem>>, %arg7: memref<1x24xf32, #tpu.memory_space<vmem>>, %arg8: memref<16x2xf32, #tpu.memory_space<vmem>>, %arg9: memref<1x16x24xf32, #tpu.memory_space<vmem>>, %arg10: memref<32x24xf32, #tpu.memory_space<vmem>>) attributes {dimension_semantics = [#tpu.dimension_semantics<parallel>], iteration_bounds = array<i64: 2>, scalar_prefetch = 0 : i64, scratch_operands = 1 : i64, tpu.core_type = #tpu.core_type<tc>, window_params = [{transform_indices = @transform_0, window_bounds = array<i64: 1, 16, 24>}, {pipeline_mode = #tpu.pipeline_mode<synchronous>, transform_indices = @transform_1, window_bounds = array<i64: 216, 24>}, {pipeline_mode = #tpu.pipeline_mode<synchronous>, transform_indices = @transform_2, window_bounds = array<i64: 216, 24>}, {pipeline_mode = #tpu.pipeline_mode<synchronous>, transform_indices = @transform_3, window_bounds = array<i64: 1, 24>}, {pipeline_mode = #tpu.pipeline_mode<synchronous>, transform_indices = @transform_4, window_bounds = array<i64: 1, 24>}, {pipeline_mode = #tpu.pipeline_mode<synchronous>, transform_indices = @transform_5, window_bounds = array<i64: 1, 24>}, {pipeline_mode = #tpu.pipeline_mode<synchronous>, transform_indices = @transform_6, window_bounds = array<i64: 1, 24>}, {pipeline_mode = #tpu.pipeline_mode<synchronous>, transform_indices = @transform_7, window_bounds = array<i64: 16, 2>}, {transform_indices = @transform_8, window_bounds = array<i64: 1, 16, 24>}]} {
    %c0 = arith.constant 0 : index
    %c0_0 = arith.constant 0 : index
    %0 = vector.load %arg8[%c0, %c0_0] : memref<16x2xf32, #tpu.memory_space<vmem>>, vector<16x2xf32>
    %1 = vector.extract_strided_slice %0 {offsets = [0, 0], sizes = [16, 1], strides = [1, 1]} : vector<16x2xf32> to vector<16x1xf32>
    %2 = vector.extract_strided_slice %0 {offsets = [0, 1], sizes = [16, 1], strides = [1, 1]} : vector<16x2xf32> to vector<16x1xf32>
    %cst = arith.constant 0.000000e+00 : f32
    %3 = vector.broadcast %cst : f32 to vector<8x24xf32>
    %c0_1 = arith.constant 0 : index
    %c0_2 = arith.constant 0 : index
    %4 = vector.load %arg10[%c0_1, %c0_2] : memref<32x24xf32, #tpu.memory_space<vmem>>, vector<8x24xf32>
    tpu.vector_store %arg10[%c0_1, %c0_2], %3 {strides = array<i32>} : memref<32x24xf32, #tpu.memory_space<vmem>>, vector<8x24xf32>,
    %c24 = arith.constant 24 : index
    %c0_3 = arith.constant 0 : index
    %5 = vector.load %arg10[%c24, %c0_3] : memref<32x24xf32, #tpu.memory_space<vmem>>, vector<8x24xf32>
    tpu.vector_store %arg10[%c24, %c0_3], %3 {strides = array<i32>} : memref<32x24xf32, #tpu.memory_space<vmem>>, vector<8x24xf32>,
    %c0_4 = arith.constant 0 : index
    %c0_5 = arith.constant 0 : index
    %c0_6 = arith.constant 0 : index
    %6 = vector.load %arg1[%c0_4, %c0_5, %c0_6] : memref<1x16x24xf32, #tpu.memory_space<vmem>>, vector<1x16x24xf32>
    %7 = vector.shape_cast %6 : vector<1x16x24xf32> to vector<16x24xf32>
    %c0_7 = arith.constant 0 : index
    %c0_8 = arith.constant 0 : index
    %8 = vector.load %arg4[%c0_7, %c0_8] : memref<1x24xf32, #tpu.memory_space<vmem>>, vector<1x24xf32>
    %9 = vector.broadcast %8 : vector<1x24xf32> to vector<16x24xf32>
    %10 = arith.mulf %7, %9 : vector<16x24xf32>
    %c0_9 = arith.constant 0 : index
    %c0_10 = arith.constant 0 : index
    %11 = vector.load %arg5[%c0_9, %c0_10] : memref<1x24xf32, #tpu.memory_space<vmem>>, vector<1x24xf32>
    %12 = vector.broadcast %11 : vector<1x24xf32> to vector<16x24xf32>
    %13 = arith.addf %10, %12 : vector<16x24xf32>
    %cst_11 = arith.constant 0.000000e+00 : f32
    %14 = vector.broadcast %cst_11 : f32 to vector<16x24xf32>
    %15 = arith.maximumf %13, %14 : vector<16x24xf32>
    %c8 = arith.constant 8 : index
    %c0_12 = arith.constant 0 : index
    %16 = vector.load %arg10[%c8, %c0_12] : memref<32x24xf32, #tpu.memory_space<vmem>>, vector<16x24xf32>
    tpu.vector_store %arg10[%c8, %c0_12], %15 {strides = array<i32>} : memref<32x24xf32, #tpu.memory_space<vmem>>, vector<16x24xf32>,
    %c0_13 = arith.constant 0 : index
    %c0_14 = arith.constant 0 : index
    %17 = vector.load %arg2[%c0_13, %c0_14] : memref<216x24xbf16, #tpu.memory_space<vmem>>, vector<216x24xbf16>
    %c3 = arith.constant 3 : index
    %c0_15 = arith.constant 0 : index
    %18 = vector.load %arg10[%c3, %c0_15] : memref<32x24xf32, #tpu.memory_space<vmem>>, vector<16x24xf32>
    %19 = vector.broadcast %1 : vector<16x1xf32> to vector<16x24xf32>
    %20 = arith.mulf %18, %19 : vector<16x24xf32>
    %c4 = arith.constant 4 : index
    %c0_16 = arith.constant 0 : index
    %21 = vector.load %arg10[%c4, %c0_16] : memref<32x24xf32, #tpu.memory_space<vmem>>, vector<16x24xf32>
    %c5 = arith.constant 5 : index
    %c0_17 = arith.constant 0 : index
    %22 = vector.load %arg10[%c5, %c0_17] : memref<32x24xf32, #tpu.memory_space<vmem>>, vector<16x24xf32>
    %23 = vector.broadcast %2 : vector<16x1xf32> to vector<16x24xf32>
    %24 = arith.mulf %22, %23 : vector<16x24xf32>
    %c7 = arith.constant 7 : index
    %c0_18 = arith.constant 0 : index
    %25 = vector.load %arg10[%c7, %c0_18] : memref<32x24xf32, #tpu.memory_space<vmem>>, vector<16x24xf32>
    %26 = vector.broadcast %1 : vector<16x1xf32> to vector<16x24xf32>
    %27 = arith.mulf %25, %26 : vector<16x24xf32>
    %c8_19 = arith.constant 8 : index
    %c0_20 = arith.constant 0 : index
    %28 = vector.load %arg10[%c8_19, %c0_20] : memref<32x24xf32, #tpu.memory_space<vmem>>, vector<16x24xf32>
    %c9 = arith.constant 9 : index
    %c0_21 = arith.constant 0 : index
    %29 = vector.load %arg10[%c9, %c0_21] : memref<32x24xf32, #tpu.memory_space<vmem>>, vector<16x24xf32>
    %30 = vector.broadcast %2 : vector<16x1xf32> to vector<16x24xf32>
    %31 = arith.mulf %29, %30 : vector<16x24xf32>
    %c11 = arith.constant 11 : index
    %c0_22 = arith.constant 0 : index
    %32 = vector.load %arg10[%c11, %c0_22] : memref<32x24xf32, #tpu.memory_space<vmem>>, vector<16x24xf32>
    %33 = vector.broadcast %1 : vector<16x1xf32> to vector<16x24xf32>
    %34 = arith.mulf %32, %33 : vector<16x24xf32>
    %c12 = arith.constant 12 : index
    %c0_23 = arith.constant 0 : index
    %35 = vector.load %arg10[%c12, %c0_23] : memref<32x24xf32, #tpu.memory_space<vmem>>, vector<16x24xf32>
    %c13 = arith.constant 13 : index
    %c0_24 = arith.constant 0 : index
    %36 = vector.load %arg10[%c13, %c0_24] : memref<32x24xf32, #tpu.memory_space<vmem>>, vector<16x24xf32>
    %37 = vector.broadcast %2 : vector<16x1xf32> to vector<16x24xf32>
    %38 = arith.mulf %36, %37 : vector<16x24xf32>
    %39 = tpu.concatenate %20, %21, %24, %27, %28, %31, %34, %35, %38 in 1 : vector<16x24xf32>, vector<16x24xf32>, vector<16x24xf32>, vector<16x24xf32>, vector<16x24xf32>, vector<16x24xf32>, vector<16x24xf32>, vector<16x24xf32>, vector<16x24xf32> -> vector<16x216xf32>
    %40 = arith.truncf %39 : vector<16x216xf32> to vector<16x216xbf16>
    %cst_25 = arith.constant dense<0.000000e+00> : vector<16x24xf32>
    %41 = tpu.matmul %40, %17, %cst_25 {dimension_numbers = #tpu.dot_dimension_numbers<[1], [0], [0], [1], [0, 0, 1, 1], [], []>} : vector<16x216xbf16>, vector<216x24xbf16>, vector<16x24xf32> -> vector<16x24xf32>
    %c0_26 = arith.constant 0 : index
    %c0_27 = arith.constant 0 : index
    %42 = vector.load %arg6[%c0_26, %c0_27] : memref<1x24xf32, #tpu.memory_space<vmem>>, vector<1x24xf32>
    %43 = vector.broadcast %42 : vector<1x24xf32> to vector<16x24xf32>
    %44 = arith.mulf %41, %43 : vector<16x24xf32>
    %c0_28 = arith.constant 0 : index
    %c0_29 = arith.constant 0 : index
    %45 = vector.load %arg7[%c0_28, %c0_29] : memref<1x24xf32, #tpu.memory_space<vmem>>, vector<1x24xf32>
    %46 = vector.broadcast %45 : vector<1x24xf32> to vector<16x24xf32>
    %47 = arith.addf %44, %46 : vector<16x24xf32>
    %cst_30 = arith.constant 0.000000e+00 : f32
    %48 = vector.broadcast %cst_30 : f32 to vector<16x24xf32>
    %49 = arith.maximumf %47, %48 : vector<16x24xf32>
    %c8_31 = arith.constant 8 : index
    %c0_32 = arith.constant 0 : index
    %50 = vector.load %arg10[%c8_31, %c0_32] : memref<32x24xf32, #tpu.memory_space<vmem>>, vector<16x24xf32>
    tpu.vector_store %arg10[%c8_31, %c0_32], %49 {strides = array<i32>} : memref<32x24xf32, #tpu.memory_space<vmem>>, vector<16x24xf32>,
    %c0_33 = arith.constant 0 : index
    %c0_34 = arith.constant 0 : index
    %51 = vector.load %arg3[%c0_33, %c0_34] : memref<216x24xbf16, #tpu.memory_space<vmem>>, vector<216x24xbf16>
    %c3_35 = arith.constant 3 : index
    %c0_36 = arith.constant 0 : index
    %52 = vector.load %arg10[%c3_35, %c0_36] : memref<32x24xf32, #tpu.memory_space<vmem>>, vector<16x24xf32>
    %53 = vector.broadcast %1 : vector<16x1xf32> to vector<16x24xf32>
    %54 = arith.mulf %52, %53 : vector<16x24xf32>
    %c4_37 = arith.constant 4 : index
    %c0_38 = arith.constant 0 : index
    %55 = vector.load %arg10[%c4_37, %c0_38] : memref<32x24xf32, #tpu.memory_space<vmem>>, vector<16x24xf32>
    %c5_39 = arith.constant 5 : index
    %c0_40 = arith.constant 0 : index
    %56 = vector.load %arg10[%c5_39, %c0_40] : memref<32x24xf32, #tpu.memory_space<vmem>>, vector<16x24xf32>
    %57 = vector.broadcast %2 : vector<16x1xf32> to vector<16x24xf32>
    %58 = arith.mulf %56, %57 : vector<16x24xf32>
    %c7_41 = arith.constant 7 : index
    %c0_42 = arith.constant 0 : index
    %59 = vector.load %arg10[%c7_41, %c0_42] : memref<32x24xf32, #tpu.memory_space<vmem>>, vector<16x24xf32>
    %60 = vector.broadcast %1 : vector<16x1xf32> to vector<16x24xf32>
    %61 = arith.mulf %59, %60 : vector<16x24xf32>
    %c8_43 = arith.constant 8 : index
    %c0_44 = arith.constant 0 : index
    %62 = vector.load %arg10[%c8_43, %c0_44] : memref<32x24xf32, #tpu.memory_space<vmem>>, vector<16x24xf32>
    %c9_45 = arith.constant 9 : index
    %c0_46 = arith.constant 0 : index
    %63 = vector.load %arg10[%c9_45, %c0_46] : memref<32x24xf32, #tpu.memory_space<vmem>>, vector<16x24xf32>
    %64 = vector.broadcast %2 : vector<16x1xf32> to vector<16x24xf32>
    %65 = arith.mulf %63, %64 : vector<16x24xf32>
    %c11_47 = arith.constant 11 : index
    %c0_48 = arith.constant 0 : index
    %66 = vector.load %arg10[%c11_47, %c0_48] : memref<32x24xf32, #tpu.memory_space<vmem>>, vector<16x24xf32>
    %67 = vector.broadcast %1 : vector<16x1xf32> to vector<16x24xf32>
    %68 = arith.mulf %66, %67 : vector<16x24xf32>
    %c12_49 = arith.constant 12 : index
    %c0_50 = arith.constant 0 : index
    %69 = vector.load %arg10[%c12_49, %c0_50] : memref<32x24xf32, #tpu.memory_space<vmem>>, vector<16x24xf32>
    %c13_51 = arith.constant 13 : index
    %c0_52 = arith.constant 0 : index
    %70 = vector.load %arg10[%c13_51, %c0_52] : memref<32x24xf32, #tpu.memory_space<vmem>>, vector<16x24xf32>
    %71 = vector.broadcast %2 : vector<16x1xf32> to vector<16x24xf32>
    %72 = arith.mulf %70, %71 : vector<16x24xf32>
    %73 = tpu.concatenate %54, %55, %58, %61, %62, %65, %68, %69, %72 in 1 : vector<16x24xf32>, vector<16x24xf32>, vector<16x24xf32>, vector<16x24xf32>, vector<16x24xf32>, vector<16x24xf32>, vector<16x24xf32>, vector<16x24xf32>, vector<16x24xf32> -> vector<16x216xf32>
    %74 = arith.truncf %73 : vector<16x216xf32> to vector<16x216xbf16>
    %cst_53 = arith.constant dense<0.000000e+00> : vector<16x24xf32>
    %75 = tpu.matmul %74, %51, %cst_53 {dimension_numbers = #tpu.dot_dimension_numbers<[1], [0], [0], [1], [0, 0, 1, 1], [], []>} : vector<16x216xbf16>, vector<216x24xbf16>, vector<16x24xf32> -> vector<16x24xf32>
    %76 = arith.addf %75, %7 : vector<16x24xf32>
    %c0_54 = arith.constant 0 : index
    %c0_55 = arith.constant 0 : index
    %c0_56 = arith.constant 0 : index
    %77 = vector.load %arg9[%c0_54, %c0_55, %c0_56] : memref<1x16x24xf32, #tpu.memory_space<vmem>>, vector<1x16x24xf32>
    %78 = vector.shape_cast %77 : vector<1x16x24xf32> to vector<16x24xf32>
    %79 = vector.shape_cast %76 : vector<16x24xf32> to vector<1x16x24xf32>
    tpu.vector_store %arg9[%c0_54, %c0_55, %c0_56], %79 {strides = array<i32>} : memref<1x16x24xf32, #tpu.memory_space<vmem>>, vector<1x16x24xf32>,
    return
  }
  func.func @transform_0(%arg0: i32) -> (i32, i32, i32) {
    %c0_i32 = arith.constant 0 : i32
    %c0_i32_0 = arith.constant 0 : i32
    %c0_i32_1 = arith.constant 0 : i32
    return %arg0, %c0_i32, %c0_i32_0 : i32, i32, i32
  }
  func.func @transform_1(%arg0: i32) -> (i32, i32) {
    %c0_i32 = arith.constant 0 : i32
    %c0_i32_0 = arith.constant 0 : i32
    %c0_i32_1 = arith.constant 0 : i32
    return %c0_i32, %c0_i32_0 : i32, i32
  }
  func.func @transform_2(%arg0: i32) -> (i32, i32) {
    %c0_i32 = arith.constant 0 : i32
    %c0_i32_0 = arith.constant 0 : i32
    %c0_i32_1 = arith.constant 0 : i32
    return %c0_i32, %c0_i32_0 : i32, i32
  }
  func.func @transform_3(%arg0: i32) -> (i32, i32) {
    %c0_i32 = arith.constant 0 : i32
    %c0_i32_0 = arith.constant 0 : i32
    %c0_i32_1 = arith.constant 0 : i32
    return %c0_i32, %c0_i32_0 : i32, i32
  }
  func.func @transform_4(%arg0: i32) -> (i32, i32) {
    %c0_i32 = arith.constant 0 : i32
    %c0_i32_0 = arith.constant 0 : i32
    %c0_i32_1 = arith.constant 0 : i32
    return %c0_i32, %c0_i32_0 : i32, i32
  }
  func.func @transform_5(%arg0: i32) -> (i32, i32) {
    %c0_i32 = arith.constant 0 : i32
    %c0_i32_0 = arith.constant 0 : i32
    %c0_i32_1 = arith.constant 0 : i32
    return %c0_i32, %c0_i32_0 : i32, i32
  }
  func.func @transform_6(%arg0: i32) -> (i32, i32) {
    %c0_i32 = arith.constant 0 : i32
    %c0_i32_0 = arith.constant 0 : i32
    %c0_i32_1 = arith.constant 0 : i32
    return %c0_i32, %c0_i32_0 : i32, i32
  }
  func.func @transform_7(%arg0: i32) -> (i32, i32) {
    %c0_i32 = arith.constant 0 : i32
    %c0_i32_0 = arith.constant 0 : i32
    %c0_i32_1 = arith.constant 0 : i32
    return %c0_i32, %c0_i32_0 : i32, i32
  }
  func.func @transform_8(%arg0: i32) -> (i32, i32, i32) {
    %c0_i32 = arith.constant 0 : i32
    %c0_i32_0 = arith.constant 0 : i32
    %c0_i32_1 = arith.constant 0 : i32
    return %arg0, %c0_i32, %c0_i32_0 : i32, i32, i32
  }
}

</mosaic_0001>

<llo_original>
// kernel: tile.23
$region0: #{tile.23}
  #allocation0 [shape = 's32[1]{0}', space=sflag, size = 0x4, scoped, tag = 'scoped memory for tile.23']
  %s0 = inlined_call_operand.vmem [shape: f32[8], index: 0, kind: input, shape index: {}]
  %s1 = inlined_call_operand.vmem [shape: f32[4,8], index: 1, kind: output, shape index: {}]
  // Predicated region
  $region2: #{tile.23} parent=0 // pred_check
    _
  $region3: #{tile.23} parent=0 // pred_check_branch
    %3 = sbr.rel (0) target = $region5
  $region4: #{tile.23} parent=0 // pred_region
    _
  $region5: #{tile.23} parent=0 // pred_fallthru
    _
  %v4 = vld [vmem:[%s0] ss:$0 sm:$0xff]
  %5 = vst [vmem:[%s1] sm:$0xf] %v4

// kernel: tile.24
$region0: #{tile.24}
  %s0 = inlined_call_operand.vmem [shape: f32[4,8], index: 0, kind: input, shape index: {}]
  %s1 = inlined_call_operand.vmem [shape: f32[1,32], index: 1, kind: output, shape index: {}]
  $region1: #{tile.24} parent=0
    #allocation0 [shape = 'u8[4096]{0}', space=vmem, size = 0x1000, scoped, tag = 'scoped mem for output reshape']
    #allocation1 [shape = 'u8[4096]{0}', space=vmem, size = 0x1000, scoped, tag = 'scoped mem for input reshape']
    %s3 = sshllo.u32 0, 4
    %v4 = vld [vmem:[%s0] sm:%s3]
    %5 = vst [vmem:[#allocation1] sm:%s3] %v4
    %v6 = vld [vmem:[#allocation1] sm:$0x1]
    %vm7 = vcmask 64512
    %8 = vst.msk [vmem:[#allocation0] sm:$0x1] %vm7, %v6
    %s9 = scalar_lea.vmem [#allocation1], 3
    %v10 = vld [vmem:[%s9] sm:$0x1]
    %11 = vrot.lane.b32.xlu0 %v10, 24
    %v12 = vpop.permute.xlu0 %11
    %vm13 = vcmask 261312
    %14 = vst.msk [vmem:[#allocation0] sm:$0x1] %vm13, %v12
    %s15 = scalar_lea.vmem [#allocation1], 2
    %v16 = vld [vmem:[%s15] sm:$0x1]
    %17 = vrot.lane.b32.xlu0 %v16, 16
    %v18 = vpop.permute.xlu0 %17
    %vm19 = vcmask 195712
    %20 = vst.msk [vmem:[#allocation0] sm:$0x1] %vm19, %v18
    %s21 = scalar_lea.vmem [#allocation1], 1
    %v22 = vld [vmem:[%s21] sm:$0x1]
    %23 = vrot.lane.b32.xlu0 %v22, 8
    %v24 = vpop.permute.xlu0 %23
    %vm25 = vcmask 130112
    %26 = vst.msk [vmem:[#allocation0] sm:$0x1] %vm25, %v24
    %s28 = sshllo.u32 0, 1
    %v30 = vld [vmem:[#allocation0] sm:%s28]
    %s31 = sshllo.u32 0, 1
    %32 = vst [vmem:[%s1] sm:%s31] %v30

// kernel: uresnet_encoder_forward.12
$region0: #{uresnet_encoder_forward.12}
  #allocation0 [shape = 'u32[]', space=smem, size = 0x4, offset = 0x4, fixed_abs, tag = 'smem constant byte address 0x4 - core index']
  #allocation1 [shape = 'u32[144,128]{1,0:T(1,128)}', space=vmem, size = 0x12000, scoped, tag = 'internal scratch']
  %s0 = inlined_call_operand.vmem [shape: f32[32,8,16], index: 0, kind: input, shape index: {}]
  %s1 = inlined_call_operand.vmem [shape: bf16[32,16], index: 1, kind: input, shape index: {}]
  %s2 = inlined_call_operand.vmem [shape: f32[1,32], index: 2, kind: input, shape index: {}]
  %s3 = inlined_call_operand.vmem [shape: f32[1,32], index: 3, kind: input, shape index: {}]
  %s4 = inlined_call_operand.vmem [shape: f32[16,8,16], index: 4, kind: output, shape index: {}]
  %s5 = sld [smem:[#allocation0]]
  $region49: #{uresnet_encoder_forward.12} parent=0
    _
  %s7 = ssub.s32 1, %s5
  %s8 = scalar_select 0, %s7, %s5
  loop: start=0, step=1, limit=18
  $region2: #{uresnet_encoder_forward.12} parent=0 // loop_pre_header
    _
  $region3: #{uresnet_encoder_forward.12} parent=0 // loop_header
    %s10 = sphi 0, %s14
    %p11 = scmp.ge.s32.totalorder %s10, 18
    %s17 = sphi 0, %s29
    %s18 = sphi 0, %s25
    %s19 = sphi 0, %s17
    %s20 = sphi 0, %s18
    %s21 = sphi 0, %s19
    %s22 = sphi 0, %s20
    %s36 = sphi 0, %s38
    %s39 = sphi 0, %s36
    %s40 = sphi 0, %s39
    %s56 = sphi 0, %s40
    %s60 = sphi 0, %s60
    %s62 = sphi 0, %s60
    %s63 = sphi 0, %s62
    %s77 = sphi 0, %s63
    %s81 = sphi 0, %s81
    %s83 = sphi 0, %s81
    %s84 = sphi 0, %s83
    %s98 = sphi 0, %s84
    %s102 = sphi 0, %s102
    %s104 = sphi 0, %s102
    %s105 = sphi 0, %s104
    %s119 = sphi 0, %s105
    %s129 = sphi 0, %s131
    %s132 = sphi 0, %s129
    %s133 = sphi 0, %s132
    %s149 = sphi 0, %s133
  $region4: #{uresnet_encoder_forward.12} parent=0 // loop_header_branch
    %13 = sbr.rel (%p11) target = $region8
  $region5: #{uresnet_encoder_forward.12} parent=0 // loop_body
    %s15 = ssub.s32 %s10, 1
    %s16 = ssub.s32 %s10, 2
    %s23 = sadd.s32 1, %s18
    %p24 = scmp.ge.s32.totalorder %s23, 8
    %s25 = scalar_select %p24, 0, %s23
    %s26 = sadd.s32 1, %s17
    %s27 = scalar_select %p24, %s26, %s17
    %p28 = scmp.ge.s32.totalorder %s27, 2
    %s29 = scalar_select %p28, 0, %s27
    %s30 = smul.u32 %s17, 8
    %s31 = sadd.s32 %s30, %s18
    %s32 = smul.u32 %s29, 8
    %s33 = sadd.s32 %s32, %s25
    %s34 = ssub.s32 %s31, %s33
    %p35 = scmp.eq.s32.totalorder %s34, 0
    %s37 = sadd.s32 %s36, 1
    %s38 = scalar_select %p35, %s36, %s37
    %p41 = pneg %p35
    %p42 = scmp.eq.s32.totalorder %s10, 15
    %p43 = por %p41, %p42
    %p44 = scmp.ne.s32.totalorder %s36, %s39
    %p45 = scmp.eq.s32.totalorder %s10, 0
    %p46 = por %p44, %p45
    %p47 = scmp.ne.s32.totalorder %s36, %s39
    %p48 = scmp.eq.s32.totalorder %s15, 15
    %p49 = por %p47, %p48
    %p50 = scmp.ne.s32.totalorder %s39, %s40
    %p51 = scmp.eq.s32.totalorder %s15, 0
    %p52 = por %p50, %p51
    %p53 = scmp.ne.s32.totalorder %s39, %s40
    %p54 = scmp.eq.s32.totalorder %s16, 15
    %p55 = por %p53, %p54
    %p57 = scmp.ne.s32.totalorder %s40, %s56
    %p58 = scmp.eq.s32.totalorder %s16, 0
    %p59 = por %p57, %p58
    %s61 = sadd.s32 %s60, 1
    %p64 = scmp.eq.s32.totalorder %s10, 15
    %p65 = scmp.ne.s32.totalorder %s60, %s62
    %p66 = scmp.eq.s32.totalorder %s10, 0
    %p67 = por %p65, %p66
    %p68 = scmp.ne.s32.totalorder %s60, %s62
    %p69 = scmp.eq.s32.totalorder %s15, 15
    %p70 = por %p68, %p69
    %p71 = scmp.ne.s32.totalorder %s62, %s63
    %p72 = scmp.eq.s32.totalorder %s15, 0
    %p73 = por %p71, %p72
    %p74 = scmp.ne.s32.totalorder %s62, %s63
    %p75 = scmp.eq.s32.totalorder %s16, 15
    %p76 = por %p74, %p75
    %p78 = scmp.ne.s32.totalorder %s63, %s77
    %p79 = scmp.eq.s32.totalorder %s16, 0
    %p80 = por %p78, %p79
    %s82 = sadd.s32 %s81, 1
    %p85 = scmp.eq.s32.totalorder %s10, 15
    %p86 = scmp.ne.s32.totalorder %s81, %s83
    %p87 = scmp.eq.s32.totalorder %s10, 0
    %p88 = por %p86, %p87
    %p89 = scmp.ne.s32.totalorder %s81, %s83
    %p90 = scmp.eq.s32.totalorder %s15, 15
    %p91 = por %p89, %p90
    %p92 = scmp.ne.s32.totalorder %s83, %s84
    %p93 = scmp.eq.s32.totalorder %s15, 0
    %p94 = por %p92, %p93
    %p95 = scmp.ne.s32.totalorder %s83, %s84
    %p96 = scmp.eq.s32.totalorder %s16, 15
    %p97 = por %p95, %p96
    %p99 = scmp.ne.s32.totalorder %s84, %s98
    %p100 = scmp.eq.s32.totalorder %s16, 0
    %p101 = por %p99, %p100
    %s103 = sadd.s32 %s102, 1
    %p106 = scmp.eq.s32.totalorder %s10, 15
    %p107 = scmp.ne.s32.totalorder %s102, %s104
    %p108 = scmp.eq.s32.totalorder %s10, 0
    %p109 = por %p107, %p108
    %p110 = scmp.ne.s32.totalorder %s102, %s104
    %p111 = scmp.eq.s32.totalorder %s15, 15
    %p112 = por %p110, %p111
    %p113 = scmp.ne.s32.totalorder %s104, %s105
    %p114 = scmp.eq.s32.totalorder %s15, 0
    %p115 = por %p113, %p114
    %p116 = scmp.ne.s32.totalorder %s104, %s105
    %p117 = scmp.eq.s32.totalorder %s16, 15
    %p118 = por %p116, %p117
    %p120 = scmp.ne.s32.totalorder %s105, %s119
    %p121 = scmp.eq.s32.totalorder %s16, 0
    %p122 = por %p120, %p121
    %s123 = smul.u32 %s17, 8
    %s124 = sadd.s32 %s123, %s18
    %s125 = smul.u32 %s29, 8
    %s126 = sadd.s32 %s125, %s25
    %s127 = ssub.s32 %s124, %s126
    %p128 = scmp.eq.s32.totalorder %s127, 0
    %s130 = sadd.s32 %s129, 1
    %s131 = scalar_select %p128, %s129, %s130
    %p134 = pneg %p128
    %p135 = scmp.eq.s32.totalorder %s10, 15
    %p136 = por %p134, %p135
    %p137 = scmp.ne.s32.totalorder %s129, %s132
    %p138 = scmp.eq.s32.totalorder %s10, 0
    %p139 = por %p137, %p138
    %p140 = scmp.ne.s32.totalorder %s129, %s132
    %p141 = scmp.eq.s32.totalorder %s15, 15
    %p142 = por %p140, %p141
    %p143 = scmp.ne.s32.totalorder %s132, %s133
    %p144 = scmp.eq.s32.totalorder %s15, 0
    %p145 = por %p143, %p144
    %p146 = scmp.ne.s32.totalorder %s132, %s133
    %p147 = scmp.eq.s32.totalorder %s16, 15
    %p148 = por %p146, %p147
    %p150 = scmp.ne.s32.totalorder %s133, %s149
    %p151 = scmp.eq.s32.totalorder %s16, 0
    %p152 = por %p150, %p151
    %p153 = scmp.le.s32.totalorder 1, %s10
    %p154 = scmp.lt.s32.totalorder %s10, 17
    %p155 = pnand %p153, %p154
    %p156 = pneg %p155
    // Predicated region
    $region9: #{uresnet_encoder_forward.12} parent=5 // pred_check
      _
    $region10: #{uresnet_encoder_forward.12} parent=5 // pred_check_branch
      %158 = sbr.rel (%p155) target = $region12
    $region11: #{uresnet_encoder_forward.12} parent=5 // pred_region
      %s159 = ssub.s32 %s10, 1
      // Predicated region
      $region13: #{uresnet_encoder_forward.12} parent=11 // pred_check
        %p160 = pneg %p73
      $region14: #{uresnet_encoder_forward.12} parent=11 // pred_check_branch
        %162 = sbr.rel (%p160) target = $region16
      $region15: #{uresnet_encoder_forward.12} parent=11 // pred_region
        _
      $region16: #{uresnet_encoder_forward.12} parent=11 // pred_fallthru
        _
      // Predicated region
      $region17: #{uresnet_encoder_forward.12} parent=11 // pred_check
        %p163 = pneg %p94
      $region18: #{uresnet_encoder_forward.12} parent=11 // pred_check_branch
        %165 = sbr.rel (%p163) target = $region20
      $region19: #{uresnet_encoder_forward.12} parent=11 // pred_region
        _
      $region20: #{uresnet_encoder_forward.12} parent=11 // pred_fallthru
        _
      // Predicated region
      $region21: #{uresnet_encoder_forward.12} parent=11 // pred_check
        %p166 = pneg %p115
      $region22: #{uresnet_encoder_forward.12} parent=11 // pred_check_branch
        %168 = sbr.rel (%p166) target = $region24
      $region23: #{uresnet_encoder_forward.12} parent=11 // pred_region
        _
      $region24: #{uresnet_encoder_forward.12} parent=11 // pred_fallthru
        _
    $region12: #{uresnet_encoder_forward.12} parent=5 // pred_fallthru
      _
    %p169 = scmp.lt.s32.totalorder %s10, 16
    // Predicated region
    $region25: #{uresnet_encoder_forward.12} parent=5 // pred_check
      %p170 = pneg %p169
    $region26: #{uresnet_encoder_forward.12} parent=5 // pred_check_branch
      %172 = sbr.rel (%p170) target = $region28
    $region27: #{uresnet_encoder_forward.12} parent=5 // pred_region
      // Predicated region
      $region29: #{uresnet_encoder_forward.12} parent=27 // pred_check
        %p173 = pneg %p46
      $region30: #{uresnet_encoder_forward.12} parent=27 // pred_check_branch
        %175 = sbr.rel (%p173) target = $region32
      $region31: #{uresnet_encoder_forward.12} parent=27 // pred_region
        %s176 = smul.u32 %s17, 8
        %s177 = sadd.s32 %s176, %s18
        %s178 = smul.u32 2, %s177
        %p179 = scmp.lt.s32.totalorder %s178, 31
        %s180 = scalar_select %p179, %s178, 31
        %s181 = smul.addr %s180, 8
        %s182 = scalar_lea.vmem %s0, %s181
        %s183 = smul.u32 %s17, 8
        %s184 = sadd.s32 %s183, %s18
        %s185 = smul.u32 2, %s184
      $region32: #{uresnet_encoder_forward.12} parent=27 // pred_fallthru
        _
    $region28: #{uresnet_encoder_forward.12} parent=5 // pred_fallthru
      _
    %p186 = scmp.le.s32.totalorder 1, %s10
    %p187 = scmp.lt.s32.totalorder %s10, 17
    %p188 = pnand %p186, %p187
    %p189 = pneg %p188
    // Predicated region
    $region33: #{uresnet_encoder_forward.12} parent=5 // pred_check
      _
    $region34: #{uresnet_encoder_forward.12} parent=5 // pred_check_branch
      %191 = sbr.rel (%p188) target = $region36
    $region35: #{uresnet_encoder_forward.12} parent=5 // pred_region
      %s192 = ssub.s32 %s10, 1
      %s193 = smul.u32 %s19, 8
      %s194 = sadd.s32 %s193, %s20
      %s195 = smul.u32 2, %s194
      %p196 = scmp.lt.s32.totalorder %s195, 31
      %s197 = scalar_select %p196, %s195, 31
      %s198 = smul.addr %s197, 8
      %s199 = scalar_lea.vmem %s0, %s198
      %p200 = pneg %p52
      %p201 = pneg %p49
      %p202 = pneg %p73
      %p203 = pneg %p70
      %p204 = pneg %p94
      %p205 = pneg %p91
      %p206 = pneg %p115
      %p207 = pneg %p112
      %p208 = pneg %p145
      %p209 = pneg %p142
      %s210 = smul.u32 %s19, 8
      %s211 = sadd.s32 %s210, %s20
      %p212 = scmp.lt.s32.totalorder %s211, 15
      %s213 = scalar_select %p212, %s211, 15
      %s214 = smul.addr %s213, 8
      %s215 = scalar_lea.vmem %s4, %s214
      %s216 = smul.u32 %s19, 8
      %s217 = sadd.s32 %s216, %s20
      %s218 = smul.u32 2, %s217
      %p219 = scmp.lt.s32.totalorder %s218, 31
      %s220 = scalar_select %p219, %s218, 31
      %s221 = smul.addr %s220, 8
      %s222 = scalar_lea.vmem %s0, %s221
      %s223 = smul.u32 %s19, 8
      %s224 = sadd.s32 %s223, %s20
      %s225 = smul.u32 2, %s224
      %s226 = smul.u32 %s19, 8
      %s227 = sadd.s32 %s226, %s20
      %p228 = scmp.lt.s32.totalorder %s227, 15
      %s229 = scalar_select %p228, %s227, 15
      %s230 = smul.addr %s229, 8
      %s231 = scalar_lea.vmem %s4, %s230
      %s232 = smul.u32 %s19, 8
      %s233 = sadd.s32 %s232, %s20
      %v235 = vld [vmem:[%s222] sm:$0xff]
      %s236 = scalar_lea.vmem %s222, 8
      %v237 = vld [vmem:[%s236] sm:$0xff]
      %239 = vrot.lane.b32.xlu0 %v237, 16
      %v240 = vpop.permute.xlu0 %239
      %vm242 = vcmask 130048
      %v243 = vsel %vm242, %v235, %v240
      %v244 = vld [vmem:[%s2] sm:$0x1]
      %v246 = vlaneseq
      %v247 = vshrl.u32 %v246, 7
      %v248 = vsub.s32 0, %v247
      %v249 = vrot.slane %v244, %v248
      %v251 = vmul.f32 %v243, %v249
      %v252 = vld [vmem:[%s3] sm:$0x1]
      %v254 = vlaneseq
      %v255 = vshrl.u32 %v254, 7
      %v256 = vsub.s32 0, %v255
      %v257 = vrot.slane %v252, %v256
      %v259 = vadd.f32 %v251, %v257
      %v260 = vmax.f32 %v259, 0.0
      %v261 = vpack.c.bf16 %v260, %v260
      %v262 = vld [vmem:[%s1] sm:$0xf]
      %v263 = vld [vmem:[%s1 + $0x4] sm:$0xf]
      %v264 = vld [vmem:[%s1 + $0x8] sm:$0xf]
      %v265 = vld [vmem:[%s1 + $0xc] sm:$0xf]
      %v270 = vunpack.c.l.b16 %v262
      %v271 = vunpack.c.l.b16 %v263
      %v272 = vunpack.c.l.b16 %v264
      %v273 = vunpack.c.l.b16 %v265
      %v274 = vpack.c.b16 %v271, %v270
      %v275 = vpack.c.b16 %v273, %v272
      %vm278 = vcmask 261120
      %v280 = vsel %vm278, %v261, 0
      %282 = vmatprep.subr.bf16.mxu0 0
      %283 = vmatpush1.bf16.msra.mxu0 %v274
      %284 = vmatprep.subr.bf16.mxu0 0
      %285 = vmatpush1.bf16.msra.mxu0 %v275
      %286 = vmatprep.subr.bf16.mxu0 0
      %287 = vmatpush1.bf16.msra.mxu0 0
      %288 = vmatprep.subr.bf16.mxu0 0
      %289 = vmatpush1.bf16.msra.mxu0 0
      %290 = vmatprep.subr.bf16.mxu0 0
      %291 = vmatpush1.bf16.msra.mxu0 0
      %292 = vmatprep.subr.bf16.mxu0 0
      %293 = vmatpush1.bf16.msra.mxu0 0
      %294 = vmatprep.subr.bf16.mxu0 0
      %295 = vmatpush1.bf16.msra.mxu0 0
      %296 = vmatprep.subr.bf16.mxu0 0
      %297 = vmatpush1.bf16.msra.mxu0 0
      %298 = vmatprep.subr.bf16.mxu0 0
      %299 = vmatpush1.bf16.msra.mxu0 0
      %300 = vmatprep.subr.bf16.mxu0 0
      %301 = vmatpush1.bf16.msra.mxu0 0
      %302 = vmatprep.subr.bf16.mxu0 0
      %303 = vmatpush1.bf16.msra.mxu0 0
      %304 = vmatprep.subr.bf16.mxu0 0
      %305 = vmatpush1.bf16.msra.mxu0 0
      %306 = vmatprep.subr.bf16.mxu0 0
      %307 = vmatpush1.bf16.msra.mxu0 0
      %308 = vmatprep.subr.bf16.mxu0 0
      %309 = vmatpush1.bf16.msra.mxu0 0
      %310 = vmatprep.subr.bf16.mxu0 0
      %311 = vmatpush1.bf16.msra.mxu0 0
      %312 = vmatprep.subr.bf16.mxu0 0
      %313 = vmatpush1.bf16.msra.mxu0 0
      %314 = vmatprep.mubr.bf16.mxu0 0
      %315 = vmatmul.mubr.bf16.gmra.mrb[0].mxu0 %v280
      %v316 = vpop.f32.mrb[0].mxu0
      %v317 = vadd.f32 0.0, %v316
      %v318 = vpop.f32.mrb[0].mxu0
      %v319 = vpop.f32.mrb[0].mxu0
      %v320 = vpop.f32.mrb[0].mxu0
      %321 = vdwg.mxu0
      %322 = vst.msk [vmem:[%s231] sm:$0xff] %vm242, %v317
      %s323 = smul.u32 %s19, 8
      %s324 = sadd.s32 %s323, %s20
      %p325 = scmp.lt.s32.totalorder %s324, 15
      %s326 = scalar_select %p325, %s324, 15
      %s327 = smul.addr %s326, 8
      %s328 = scalar_lea.vmem %s4, %s327
      // Predicated region
      $region37: #{uresnet_encoder_forward.12} parent=35 // pred_check
        %p329 = pneg %p142
      $region38: #{uresnet_encoder_forward.12} parent=35 // pred_check_branch
        %331 = sbr.rel (%p329) target = $region40
      $region39: #{uresnet_encoder_forward.12} parent=35 // pred_region
        %s332 = smul.u32 %s19, 8
        %s333 = sadd.s32 %s332, %s20
      $region40: #{uresnet_encoder_forward.12} parent=35 // pred_fallthru
        _
    $region36: #{uresnet_encoder_forward.12} parent=5 // pred_fallthru
      _
    %p334 = scmp.le.s32.totalorder 2, %s10
    // Predicated region
    $region41: #{uresnet_encoder_forward.12} parent=5 // pred_check
      %p335 = pneg %p334
    $region42: #{uresnet_encoder_forward.12} parent=5 // pred_check_branch
      %337 = sbr.rel (%p335) target = $region44
    $region43: #{uresnet_encoder_forward.12} parent=5 // pred_region
      %s338 = ssub.s32 %s10, 2
      // Predicated region
      $region45: #{uresnet_encoder_forward.12} parent=43 // pred_check
        %p339 = pneg %p148
      $region46: #{uresnet_encoder_forward.12} parent=43 // pred_check_branch
        %341 = sbr.rel (%p339) target = $region48
      $region47: #{uresnet_encoder_forward.12} parent=43 // pred_region
        %s342 = smul.u32 %s21, 8
        %s343 = sadd.s32 %s342, %s22
        %p344 = scmp.lt.s32.totalorder %s343, 15
        %s345 = scalar_select %p344, %s343, 15
        %s346 = smul.addr %s345, 8
        %s347 = scalar_lea.vmem %s4, %s346
      $region48: #{uresnet_encoder_forward.12} parent=43 // pred_fallthru
        _
    $region44: #{uresnet_encoder_forward.12} parent=5 // pred_fallthru
      _
  $region6: #{uresnet_encoder_forward.12} parent=0 // loop_footer
    %s14 = sadd.s32 1, %s10
  $region7: #{uresnet_encoder_forward.12} parent=0 // loop_footer_branch
    %9 = sbr.rel target = $region3
  $region8: #{uresnet_encoder_forward.12} parent=0 // loop_exit
    _

// kernel: tile.33
$region0: #{tile.33}
  #allocation0 [shape = 's32[1]{0}', space=sflag, size = 0x4, scoped, tag = 'scoped memory for tile.33']
  %s0 = inlined_call_operand.vmem [shape: f32[16], index: 0, kind: input, shape index: {}]
  %s1 = inlined_call_operand.vmem [shape: f32[4,16], index: 1, kind: output, shape index: {}]
  // Predicated region
  $region2: #{tile.33} parent=0 // pred_check
    _
  $region3: #{tile.33} parent=0 // pred_check_branch
    %3 = sbr.rel (0) target = $region5
  $region4: #{tile.33} parent=0 // pred_region
    _
  $region5: #{tile.33} parent=0 // pred_fallthru
    _
  %v4 = vld [vmem:[%s0] ss:$0 sm:$0xff]
  %5 = vst [vmem:[%s1] sm:$0xf] %v4

// kernel: tile.34
$region0: #{tile.34}
  %s0 = inlined_call_operand.vmem [shape: f32[4,16], index: 0, kind: input, shape index: {}]
  %s1 = inlined_call_operand.vmem [shape: f32[1,64], index: 1, kind: output, shape index: {}]
  $region1: #{tile.34} parent=0
    #allocation0 [shape = 'u8[4096]{0}', space=vmem, size = 0x1000, scoped, tag = 'scoped mem for output reshape']
    #allocation1 [shape = 'u8[4096]{0}', space=vmem, size = 0x1000, scoped, tag = 'scoped mem for input reshape']
    %s3 = sshllo.u32 0, 4
    %v4 = vld [vmem:[%s0] sm:%s3]
    %5 = vst [vmem:[#allocation1] sm:%s3] %v4
    %v6 = vld [vmem:[#allocation1] sm:$0x1]
    %vm7 = vcmask 130048
    %8 = vst.msk [vmem:[#allocation0] sm:$0x1] %vm7, %v6
    %s9 = scalar_lea.vmem [#allocation1], 3
    %v10 = vld [vmem:[%s9] sm:$0x1]
    %11 = vrot.lane.b32.xlu0 %v10, 48
    %v12 = vpop.permute.xlu0 %11
    %vm13 = vcmask 523648
    %14 = vst.msk [vmem:[#allocation0] sm:$0x1] %vm13, %v12
    %s15 = scalar_lea.vmem [#allocation1], 2
    %v16 = vld [vmem:[%s15] sm:$0x1]
    %17 = vrot.lane.b32.xlu0 %v16, 32
    %v18 = vpop.permute.xlu0 %17
    %vm19 = vcmask 392448
    %20 = vst.msk [vmem:[#allocation0] sm:$0x1] %vm19, %v18
    %s21 = scalar_lea.vmem [#allocation1], 1
    %v22 = vld [vmem:[%s21] sm:$0x1]
    %23 = vrot.lane.b32.xlu0 %v22, 16
    %v24 = vpop.permute.xlu0 %23
    %vm25 = vcmask 261248
    %26 = vst.msk [vmem:[#allocation0] sm:$0x1] %vm25, %v24
    %s28 = sshllo.u32 0, 1
    %v30 = vld [vmem:[#allocation0] sm:%s28]
    %s31 = sshllo.u32 0, 1
    %32 = vst [vmem:[%s1] sm:%s31] %v30

// kernel: uresnet_encoder_forward.9
$region0: #{uresnet_encoder_forward.9}
  #allocation0 [shape = 'u32[]', space=smem, size = 0x4, offset = 0x4, fixed_abs, tag = 'smem constant byte address 0x4 - core index']
  #allocation1 [shape = 'u32[144,128]{1,0:T(1,128)}', space=vmem, size = 0x12000, scoped, tag = 'internal scratch']
  #allocation2 [shape = 'f32[304,4]{1,0:T(8,128)}', space=vmem, size = 0x26000, scoped, tag = 'scratch operand']
  %s0 = inlined_call_operand.vmem [shape: f32[2,256,4], index: 0, kind: input, shape index: {}]
  %s1 = inlined_call_operand.vmem [shape: bf16[36,8], index: 1, kind: input, shape index: {}]
  %s2 = inlined_call_operand.vmem [shape: f32[256,2], index: 2, kind: input, shape index: {}]
  %s3 = inlined_call_operand.vmem [shape: f32[2,256,8], index: 3, kind: output, shape index: {}]
  %s4 = sld [smem:[#allocation0]]
  $region45: #{uresnet_encoder_forward.9} parent=0
    _
  %s6 = ssub.s32 1, %s4
  %s7 = scalar_select 0, %s6, %s4
  loop: start=0, step=1, limit=4
  $region2: #{uresnet_encoder_forward.9} parent=0 // loop_pre_header
    _
  $region3: #{uresnet_encoder_forward.9} parent=0 // loop_header
    %s9 = sphi 0, %s13
    %p10 = scmp.ge.s32.totalorder %s9, 4
    %s19 = sphi 0, %s21
    %s22 = sphi 0, %s19
    %s23 = sphi 0, %s22
    %s39 = sphi 0, %s23
    %s43 = sphi 0, %s43
    %s45 = sphi 0, %s43
    %s46 = sphi 0, %s45
    %s60 = sphi 0, %s46
    %s64 = sphi 0, %s64
    %s66 = sphi 0, %s64
    %s67 = sphi 0, %s66
    %s81 = sphi 0, %s67
    %s87 = sphi 0, %s89
    %s90 = sphi 0, %s87
    %s91 = sphi 0, %s90
    %s107 = sphi 0, %s91
  $region4: #{uresnet_encoder_forward.9} parent=0 // loop_header_branch
    %12 = sbr.rel (%p10) target = $region8
  $region5: #{uresnet_encoder_forward.9} parent=0 // loop_body
    %s14 = ssub.s32 %s9, 1
    %s15 = ssub.s32 %s9, 2
    %s16 = sadd.s32 %s9, 1
    %s17 = ssub.s32 %s9, %s16
    %p18 = scmp.eq.s32.totalorder %s17, 0
    %s20 = sadd.s32 %s19, 1
    %s21 = scalar_select %p18, %s19, %s20
    %p24 = pneg %p18
    %p25 = scmp.eq.s32.totalorder %s9, 1
    %p26 = por %p24, %p25
    %p27 = scmp.ne.s32.totalorder %s19, %s22
    %p28 = scmp.eq.s32.totalorder %s9, 0
    %p29 = por %p27, %p28
    %p30 = scmp.ne.s32.totalorder %s19, %s22
    %p31 = scmp.eq.s32.totalorder %s14, 1
    %p32 = por %p30, %p31
    %p33 = scmp.ne.s32.totalorder %s22, %s23
    %p34 = scmp.eq.s32.totalorder %s14, 0
    %p35 = por %p33, %p34
    %p36 = scmp.ne.s32.totalorder %s22, %s23
    %p37 = scmp.eq.s32.totalorder %s15, 1
    %p38 = por %p36, %p37
    %p40 = scmp.ne.s32.totalorder %s23, %s39
    %p41 = scmp.eq.s32.totalorder %s15, 0
    %p42 = por %p40, %p41
    %s44 = sadd.s32 %s43, 1
    %p47 = scmp.eq.s32.totalorder %s9, 1
    %p48 = scmp.ne.s32.totalorder %s43, %s45
    %p49 = scmp.eq.s32.totalorder %s9, 0
    %p50 = por %p48, %p49
    %p51 = scmp.ne.s32.totalorder %s43, %s45
    %p52 = scmp.eq.s32.totalorder %s14, 1
    %p53 = por %p51, %p52
    %p54 = scmp.ne.s32.totalorder %s45, %s46
    %p55 = scmp.eq.s32.totalorder %s14, 0
    %p56 = por %p54, %p55
    %p57 = scmp.ne.s32.totalorder %s45, %s46
    %p58 = scmp.eq.s32.totalorder %s15, 1
    %p59 = por %p57, %p58
    %p61 = scmp.ne.s32.totalorder %s46, %s60
    %p62 = scmp.eq.s32.totalorder %s15, 0
    %p63 = por %p61, %p62
    %s65 = sadd.s32 %s64, 1
    %p68 = scmp.eq.s32.totalorder %s9, 1
    %p69 = scmp.ne.s32.totalorder %s64, %s66
    %p70 = scmp.eq.s32.totalorder %s9, 0
    %p71 = por %p69, %p70
    %p72 = scmp.ne.s32.totalorder %s64, %s66
    %p73 = scmp.eq.s32.totalorder %s14, 1
    %p74 = por %p72, %p73
    %p75 = scmp.ne.s32.totalorder %s66, %s67
    %p76 = scmp.eq.s32.totalorder %s14, 0
    %p77 = por %p75, %p76
    %p78 = scmp.ne.s32.totalorder %s66, %s67
    %p79 = scmp.eq.s32.totalorder %s15, 1
    %p80 = por %p78, %p79
    %p82 = scmp.ne.s32.totalorder %s67, %s81
    %p83 = scmp.eq.s32.totalorder %s15, 0
    %p84 = por %p82, %p83
    %s85 = ssub.s32 %s9, %s16
    %p86 = scmp.eq.s32.totalorder %s85, 0
    %s88 = sadd.s32 %s87, 1
    %s89 = scalar_select %p86, %s87, %s88
    %p92 = pneg %p86
    %p93 = scmp.eq.s32.totalorder %s9, 1
    %p94 = por %p92, %p93
    %p95 = scmp.ne.s32.totalorder %s87, %s90
    %p96 = scmp.eq.s32.totalorder %s9, 0
    %p97 = por %p95, %p96
    %p98 = scmp.ne.s32.totalorder %s87, %s90
    %p99 = scmp.eq.s32.totalorder %s14, 1
    %p100 = por %p98, %p99
    %p101 = scmp.ne.s32.totalorder %s90, %s91
    %p102 = scmp.eq.s32.totalorder %s14, 0
    %p103 = por %p101, %p102
    %p104 = scmp.ne.s32.totalorder %s90, %s91
    %p105 = scmp.eq.s32.totalorder %s15, 1
    %p106 = por %p104, %p105
    %p108 = scmp.ne.s32.totalorder %s91, %s107
    %p109 = scmp.eq.s32.totalorder %s15, 0
    %p110 = por %p108, %p109
    %p111 = scmp.le.s32.totalorder 1, %s9
    %p112 = scmp.lt.s32.totalorder %s9, 3
    %p113 = pnand %p111, %p112
    %p114 = pneg %p113
    // Predicated region
    $region9: #{uresnet_encoder_forward.9} parent=5 // pred_check
      _
    $region10: #{uresnet_encoder_forward.9} parent=5 // pred_check_branch
      %116 = sbr.rel (%p113) target = $region12
    $region11: #{uresnet_encoder_forward.9} parent=5 // pred_region
      %s117 = ssub.s32 %s9, 1
      // Predicated region
      $region13: #{uresnet_encoder_forward.9} parent=11 // pred_check
        %p118 = pneg %p56
      $region14: #{uresnet_encoder_forward.9} parent=11 // pred_check_branch
        %120 = sbr.rel (%p118) target = $region16
      $region15: #{uresnet_encoder_forward.9} parent=11 // pred_region
        _
      $region16: #{uresnet_encoder_forward.9} parent=11 // pred_fallthru
        _
      // Predicated region
      $region17: #{uresnet_encoder_forward.9} parent=11 // pred_check
        %p121 = pneg %p77
      $region18: #{uresnet_encoder_forward.9} parent=11 // pred_check_branch
        %123 = sbr.rel (%p121) target = $region20
      $region19: #{uresnet_encoder_forward.9} parent=11 // pred_region
        _
      $region20: #{uresnet_encoder_forward.9} parent=11 // pred_fallthru
        _
    $region12: #{uresnet_encoder_forward.9} parent=5 // pred_fallthru
      _
    %p124 = scmp.lt.s32.totalorder %s9, 2
    // Predicated region
    $region21: #{uresnet_encoder_forward.9} parent=5 // pred_check
      %p125 = pneg %p124
    $region22: #{uresnet_encoder_forward.9} parent=5 // pred_check_branch
      %127 = sbr.rel (%p125) target = $region24
    $region23: #{uresnet_encoder_forward.9} parent=5 // pred_region
      // Predicated region
      $region25: #{uresnet_encoder_forward.9} parent=23 // pred_check
        %p128 = pneg %p29
      $region26: #{uresnet_encoder_forward.9} parent=23 // pred_check_branch
        %130 = sbr.rel (%p128) target = $region28
      $region27: #{uresnet_encoder_forward.9} parent=23 // pred_region
        %p131 = scmp.lt.s32.totalorder %s9, 1
        %s132 = scalar_select %p131, %s9, 1
        %s133 = smul.addr %s132, 32
        %s134 = smul.addr %s133, 8
        %s135 = scalar_lea.vmem %s0, %s134
      $region28: #{uresnet_encoder_forward.9} parent=23 // pred_fallthru
        _
    $region24: #{uresnet_encoder_forward.9} parent=5 // pred_fallthru
      _
    %p136 = scmp.le.s32.totalorder 1, %s9
    %p137 = scmp.lt.s32.totalorder %s9, 3
    %p138 = pnand %p136, %p137
    %p139 = pneg %p138
    // Predicated region
    $region29: #{uresnet_encoder_forward.9} parent=5 // pred_check
      _
    $region30: #{uresnet_encoder_forward.9} parent=5 // pred_check_branch
      %141 = sbr.rel (%p138) target = $region32
    $region31: #{uresnet_encoder_forward.9} parent=5 // pred_region
      %s142 = ssub.s32 %s9, 1
      %p143 = scmp.lt.s32.totalorder %s14, 1
      %s144 = scalar_select %p143, %s14, 1
      %s145 = smul.addr %s144, 32
      %s146 = smul.addr %s145, 8
      %s147 = scalar_lea.vmem %s0, %s146
      %p148 = pneg %p35
      %p149 = pneg %p32
      %p150 = pneg %p56
      %p151 = pneg %p53
      %p152 = pneg %p77
      %p153 = pneg %p74
      %p154 = pneg %p103
      %p155 = pneg %p100
      %p156 = scmp.lt.s32.totalorder %s14, 1
      %s157 = scalar_select %p156, %s14, 1
      %s158 = smul.addr %s157, 32
      %s159 = smul.addr %s158, 8
      %s160 = scalar_lea.vmem %s3, %s159
      %p161 = scmp.lt.s32.totalorder %s14, 1
      %s162 = scalar_select %p161, %s14, 1
      %s163 = smul.addr %s162, 32
      %s164 = smul.addr %s163, 8
      %s165 = scalar_lea.vmem %s0, %s164
      %p166 = scmp.lt.s32.totalorder %s14, 1
      %s167 = scalar_select %p166, %s14, 1
      %s168 = smul.addr %s167, 32
      %s169 = smul.addr %s168, 8
      %s170 = scalar_lea.vmem %s3, %s169
      %v172 = vld [vmem:[%s2] sm:$0xff]
      %v173 = vld [vmem:[%s2 + $0x8] sm:$0xff]
      %v174 = vld [vmem:[%s2 + $0x10] sm:$0xff]
      %v175 = vld [vmem:[%s2 + $0x18] sm:$0xff]
      %v176 = vld [vmem:[%s2 + $0x20] sm:$0xff]
      %v177 = vld [vmem:[%s2 + $0x28] sm:$0xff]
      %v178 = vld [vmem:[%s2 + $0x30] sm:$0xff]
      %v179 = vld [vmem:[%s2 + $0x38] sm:$0xff]
      %v180 = vld [vmem:[%s2 + $0x40] sm:$0xff]
      %v181 = vld [vmem:[%s2 + $0x48] sm:$0xff]
      %v182 = vld [vmem:[%s2 + $0x50] sm:$0xff]
      %v183 = vld [vmem:[%s2 + $0x58] sm:$0xff]
      %v184 = vld [vmem:[%s2 + $0x60] sm:$0xff]
      %v185 = vld [vmem:[%s2 + $0x68] sm:$0xff]
      %v186 = vld [vmem:[%s2 + $0x70] sm:$0xff]
      %v187 = vld [vmem:[%s2 + $0x78] sm:$0xff]
      %v188 = vld [vmem:[%s2 + $0x80] sm:$0xff]
      %v189 = vld [vmem:[%s2 + $0x88] sm:$0xff]
      %v190 = vld [vmem:[%s2 + $0x90] sm:$0xff]
      %v191 = vld [vmem:[%s2 + $0x98] sm:$0xff]
      %v192 = vld [vmem:[%s2 + $0xa0] sm:$0xff]
      %v193 = vld [vmem:[%s2 + $0xa8] sm:$0xff]
      %v194 = vld [vmem:[%s2 + $0xb0] sm:$0xff]
      %v195 = vld [vmem:[%s2 + $0xb8] sm:$0xff]
      %v196 = vld [vmem:[%s2 + $0xc0] sm:$0xff]
      %v197 = vld [vmem:[%s2 + $0xc8] sm:$0xff]
      %v198 = vld [vmem:[%s2 + $0xd0] sm:$0xff]
      %v199 = vld [vmem:[%s2 + $0xd8] sm:$0xff]
      %v200 = vld [vmem:[%s2 + $0xe0] sm:$0xff]
      %v201 = vld [vmem:[%s2 + $0xe8] sm:$0xff]
      %v202 = vld [vmem:[%s2 + $0xf0] sm:$0xff]
      %v203 = vld [vmem:[%s2 + $0xf8] sm:$0xff]
      %vm204 = vcmask 31744
      %205 = vst.msk [vmem:[#allocation2] sm:$0xff] %vm204, 0.0
      %206 = vst.msk [vmem:[#allocation2 + $0x8] sm:$0xff] %vm204, 0.0
      %207 = vst.msk [vmem:[#allocation2 + $0x10] sm:$0xff] %vm204, 0.0
      %208 = vst.msk [vmem:[#allocation2 + $0x118] sm:$0xff] %vm204, 0.0
      %209 = vst.msk [vmem:[#allocation2 + $0x120] sm:$0xff] %vm204, 0.0
      %210 = vst.msk [vmem:[#allocation2 + $0x128] sm:$0xff] %vm204, 0.0
      %v211 = vld [vmem:[%s165] sm:$0xff]
      %v212 = vld [vmem:[%s165 + $0x8] sm:$0xff]
      %v213 = vld [vmem:[%s165 + $0x10] sm:$0xff]
      %v214 = vld [vmem:[%s165 + $0x18] sm:$0xff]
      %v215 = vld [vmem:[%s165 + $0x20] sm:$0xff]
      %v216 = vld [vmem:[%s165 + $0x28] sm:$0xff]
      %v217 = vld [vmem:[%s165 + $0x30] sm:$0xff]
      %v218 = vld [vmem:[%s165 + $0x38] sm:$0xff]
      %v219 = vld [vmem:[%s165 + $0x40] sm:$0xff]
      %v220 = vld [vmem:[%s165 + $0x48] sm:$0xff]
      %v221 = vld [vmem:[%s165 + $0x50] sm:$0xff]
      %v222 = vld [vmem:[%s165 + $0x58] sm:$0xff]
      %v223 = vld [vmem:[%s165 + $0x60] sm:$0xff]
      %v224 = vld [vmem:[%s165 + $0x68] sm:$0xff]
      %v225 = vld [vmem:[%s165 + $0x70] sm:$0xff]
      %v226 = vld [vmem:[%s165 + $0x78] sm:$0xff]
      %v227 = vld [vmem:[%s165 + $0x80] sm:$0xff]
      %v228 = vld [vmem:[%s165 + $0x88] sm:$0xff]
      %v229 = vld [vmem:[%s165 + $0x90] sm:$0xff]
      %v230 = vld [vmem:[%s165 + $0x98] sm:$0xff]
      %v231 = vld [vmem:[%s165 + $0xa0] sm:$0xff]
      %v232 = vld [vmem:[%s165 + $0xa8] sm:$0xff]
      %v233 = vld [vmem:[%s165 + $0xb0] sm:$0xff]
      %v234 = vld [vmem:[%s165 + $0xb8] sm:$0xff]
      %v235 = vld [vmem:[%s165 + $0xc0] sm:$0xff]
      %v236 = vld [vmem:[%s165 + $0xc8] sm:$0xff]
      %v237 = vld [vmem:[%s165 + $0xd0] sm:$0xff]
      %v238 = vld [vmem:[%s165 + $0xd8] sm:$0xff]
      %v239 = vld [vmem:[%s165 + $0xe0] sm:$0xff]
      %v240 = vld [vmem:[%s165 + $0xe8] sm:$0xff]
      %v241 = vld [vmem:[%s165 + $0xf0] sm:$0xff]
      %v242 = vld [vmem:[%s165 + $0xf8] sm:$0xff]
      %243 = vst.msk [vmem:[#allocation2 + $0x18] sm:$0xff] %vm204, %v211
      %244 = vst.msk [vmem:[#allocation2 + $0x20] sm:$0xff] %vm204, %v212
      %245 = vst.msk [vmem:[#allocation2 + $0x28] sm:$0xff] %vm204, %v213
      %246 = vst.msk [vmem:[#allocation2 + $0x30] sm:$0xff] %vm204, %v214
      %247 = vst.msk [vmem:[#allocation2 + $0x38] sm:$0xff] %vm204, %v215
      %248 = vst.msk [vmem:[#allocation2 + $0x40] sm:$0xff] %vm204, %v216
      %249 = vst.msk [vmem:[#allocation2 + $0x48] sm:$0xff] %vm204, %v217
      %250 = vst.msk [vmem:[#allocation2 + $0x50] sm:$0xff] %vm204, %v218
      %251 = vst.msk [vmem:[#allocation2 + $0x58] sm:$0xff] %vm204, %v219
      %252 = vst.msk [vmem:[#allocation2 + $0x60] sm:$0xff] %vm204, %v220
      %253 = vst.msk [vmem:[#allocation2 + $0x68] sm:$0xff] %vm204, %v221
      %254 = vst.msk [vmem:[#allocation2 + $0x70] sm:$0xff] %vm204, %v222
      %255 = vst.msk [vmem:[#allocation2 + $0x78] sm:$0xff] %vm204, %v223
      %256 = vst.msk [vmem:[#allocation2 + $0x80] sm:$0xff] %vm204, %v224
      %257 = vst.msk [vmem:[#allocation2 + $0x88] sm:$0xff] %vm204, %v225
      %258 = vst.msk [vmem:[#allocation2 + $0x90] sm:$0xff] %vm204, %v226
      %259 = vst.msk [vmem:[#allocation2 + $0x98] sm:$0xff] %vm204, %v227
      %260 = vst.msk [vmem:[#allocation2 + $0xa0] sm:$0xff] %vm204, %v228
      %261 = vst.msk [vmem:[#allocation2 + $0xa8] sm:$0xff] %vm204, %v229
      %262 = vst.msk [vmem:[#allocation2 + $0xb0] sm:$0xff] %vm204, %v230
      %263 = vst.msk [vmem:[#allocation2 + $0xb8] sm:$0xff] %vm204, %v231
      %264 = vst.msk [vmem:[#allocation2 + $0xc0] sm:$0xff] %vm204, %v232
      %265 = vst.msk [vmem:[#allocation2 + $0xc8] sm:$0xff] %vm204, %v233
      %266 = vst.msk [vmem:[#allocation2 + $0xd0] sm:$0xff] %vm204, %v234
      %267 = vst.msk [vmem:[#allocation2 + $0xd8] sm:$0xff] %vm204, %v235
      %268 = vst.msk [vmem:[#allocation2 + $0xe0] sm:$0xff] %vm204, %v236
      %269 = vst.msk [vmem:[#allocation2 + $0xe8] sm:$0xff] %vm204, %v237
      %270 = vst.msk [vmem:[#allocation2 + $0xf0] sm:$0xff] %vm204, %v238
      %271 = vst.msk [vmem:[#allocation2 + $0xf8] sm:$0xff] %vm204, %v239
      %272 = vst.msk [vmem:[#allocation2 + $0x100] sm:$0xff] %vm204, %v240
      %273 = vst.msk [vmem:[#allocation2 + $0x108] sm:$0xff] %vm204, %v241
      %274 = vst.msk [vmem:[#allocation2 + $0x110] sm:$0xff] %vm204, %v242
      %v275 = vld [vmem:[%s1] sm:$0xf]
      %v276 = vld [vmem:[%s1 + $0x4] sm:$0xf]
      %v277 = vld [vmem:[%s1 + $0x8] sm:$0xf]
      %v278 = vld [vmem:[%s1 + $0xc] sm:$0xf]
      %v279 = vld [vmem:[%s1 + $0x10] sm:$0x3]
      %v280 = vld [vmem:[#allocation2 + $0x7] sm:$0xff]
      %v281 = vld [vmem:[#allocation2 + $0xf] sm:$0xff]
      %v282 = vld [vmem:[#allocation2 + $0x17] sm:$0xff]
      %v283 = vld [vmem:[#allocation2 + $0x1f] sm:$0xff]
      %v284 = vld [vmem:[#allocation2 + $0x27] sm:$0xff]
      %v285 = vld [vmem:[#allocation2 + $0x2f] sm:$0xff]
      %v286 = vld [vmem:[#allocation2 + $0x37] sm:$0xff]
      %v287 = vld [vmem:[#allocation2 + $0x3f] sm:$0xff]
      %v288 = vld [vmem:[#allocation2 + $0x47] sm:$0xff]
      %v289 = vld [vmem:[#allocation2 + $0x4f] sm:$0xff]
      %v290 = vld [vmem:[#allocation2 + $0x57] sm:$0xff]
      %v291 = vld [vmem:[#allocation2 + $0x5f] sm:$0xff]
      %v292 = vld [vmem:[#allocation2 + $0x67] sm:$0xff]
      %v293 = vld [vmem:[#allocation2 + $0x6f] sm:$0xff]
      %v294 = vld [vmem:[#allocation2 + $0x77] sm:$0xff]
      %v295 = vld [vmem:[#allocation2 + $0x7f] sm:$0xff]
      %v296 = vld [vmem:[#allocation2 + $0x87] sm:$0xff]
      %v297 = vld [vmem:[#allocation2 + $0x8f] sm:$0xff]
      %v298 = vld [vmem:[#allocation2 + $0x97] sm:$0xff]
      %v299 = vld [vmem:[#allocation2 + $0x9f] sm:$0xff]
      %v300 = vld [vmem:[#allocation2 + $0xa7] sm:$0xff]
      %v301 = vld [vmem:[#allocation2 + $0xaf] sm:$0xff]
      %v302 = vld [vmem:[#allocation2 + $0xb7] sm:$0xff]
      %v303 = vld [vmem:[#allocation2 + $0xbf] sm:$0xff]
      %v304 = vld [vmem:[#allocation2 + $0xc7] sm:$0xff]
      %v305 = vld [vmem:[#allocation2 + $0xcf] sm:$0xff]
      %v306 = vld [vmem:[#allocation2 + $0xd7] sm:$0xff]
      %v307 = vld [vmem:[#allocation2 + $0xdf] sm:$0xff]
      %v308 = vld [vmem:[#allocation2 + $0xe7] sm:$0xff]
      %v309 = vld [vmem:[#allocation2 + $0xef] sm:$0xff]
      %v310 = vld [vmem:[#allocation2 + $0xf7] sm:$0xff]
      %v311 = vld [vmem:[#allocation2 + $0xff] sm:$0xff]
      %313 = vset.pattern.permute.xlu0 0
      %314 = vperm.xlu0 %313, %v172
      %v315 = vpop.permute.xlu0 %314
      %318 = vset.pattern.permute.xlu0 0
      %319 = vperm.xlu0 %318, %v173
      %v320 = vpop.permute.xlu0 %319
      %323 = vset.pattern.permute.xlu0 0
      %324 = vperm.xlu0 %323, %v174
      %v325 = vpop.permute.xlu0 %324
      %328 = vset.pattern.permute.xlu0 0
      %329 = vperm.xlu0 %328, %v175
      %v330 = vpop.permute.xlu0 %329
      %333 = vset.pattern.permute.xlu0 0
      %334 = vperm.xlu0 %333, %v176
      %v335 = vpop.permute.xlu0 %334
      %338 = vset.pattern.permute.xlu0 0
      %339 = vperm.xlu0 %338, %v177
      %v340 = vpop.permute.xlu0 %339
      %343 = vset.pattern.permute.xlu0 0
      %344 = vperm.xlu0 %343, %v178
      %v345 = vpop.permute.xlu0 %344
      %348 = vset.pattern.permute.xlu0 0
      %349 = vperm.xlu0 %348, %v179
      %v350 = vpop.permute.xlu0 %349
      %353 = vset.pattern.permute.xlu0 0
      %354 = vperm.xlu0 %353, %v180
      %v355 = vpop.permute.xlu0 %354
      %358 = vset.pattern.permute.xlu0 0
      %359 = vperm.xlu0 %358, %v181
      %v360 = vpop.permute.xlu0 %359
      %363 = vset.pattern.permute.xlu0 0
      %364 = vperm.xlu0 %363, %v182
      %v365 = vpop.permute.xlu0 %364
      %368 = vset.pattern.permute.xlu0 0
      %369 = vperm.xlu0 %368, %v183
      %v370 = vpop.permute.xlu0 %369
      %373 = vset.pattern.permute.xlu0 0
      %374 = vperm.xlu0 %373, %v184
      %v375 = vpop.permute.xlu0 %374
      %378 = vset.pattern.permute.xlu0 0
      %379 = vperm.xlu0 %378, %v185
      %v380 = vpop.permute.xlu0 %379
      %383 = vset.pattern.permute.xlu0 0
      %384 = vperm.xlu0 %383, %v186
      %v385 = vpop.permute.xlu0 %384
      %388 = vset.pattern.permute.xlu0 0
      %389 = vperm.xlu0 %388, %v187
      %v390 = vpop.permute.xlu0 %389
      %393 = vset.pattern.permute.xlu0 0
      %394 = vperm.xlu0 %393, %v188
      %v395 = vpop.permute.xlu0 %394
      %398 = vset.pattern.permute.xlu0 0
      %399 = vperm.xlu0 %398, %v189
      %v400 = vpop.permute.xlu0 %399
      %403 = vset.pattern.permute.xlu0 0
      %404 = vperm.xlu0 %403, %v190
      %v405 = vpop.permute.xlu0 %404
      %408 = vset.pattern.permute.xlu0 0
      %409 = vperm.xlu0 %408, %v191
      %v410 = vpop.permute.xlu0 %409
      %413 = vset.pattern.permute.xlu0 0
      %414 = vperm.xlu0 %413, %v192
      %v415 = vpop.permute.xlu0 %414
      %418 = vset.pattern.permute.xlu0 0
      %419 = vperm.xlu0 %418, %v193
      %v420 = vpop.permute.xlu0 %419
      %423 = vset.pattern.permute.xlu0 0
      %424 = vperm.xlu0 %423, %v194
      %v425 = vpop.permute.xlu0 %424
      %428 = vset.pattern.permute.xlu0 0
      %429 = vperm.xlu0 %428, %v195
      %v430 = vpop.permute.xlu0 %429
      %433 = vset.pattern.permute.xlu0 0
      %434 = vperm.xlu0 %433, %v196
      %v435 = vpop.permute.xlu0 %434
      %438 = vset.pattern.permute.xlu0 0
      %439 = vperm.xlu0 %438, %v197
      %v440 = vpop.permute.xlu0 %439
      %443 = vset.pattern.permute.xlu0 0
      %444 = vperm.xlu0 %443, %v198
      %v445 = vpop.permute.xlu0 %444
      %448 = vset.pattern.permute.xlu0 0
      %449 = vperm.xlu0 %448, %v199
      %v450 = vpop.permute.xlu0 %449
      %453 = vset.pattern.permute.xlu0 0
      %454 = vperm.xlu0 %453, %v200
      %v455 = vpop.permute.xlu0 %454
      %458 = vset.pattern.permute.xlu0 0
      %459 = vperm.xlu0 %458, %v201
      %v460 = vpop.permute.xlu0 %459
      %463 = vset.pattern.permute.xlu0 0
      %464 = vperm.xlu0 %463, %v202
      %v465 = vpop.permute.xlu0 %464
      %468 = vset.pattern.permute.xlu0 0
      %469 = vperm.xlu0 %468, %v203
      %v470 = vpop.permute.xlu0 %469
      %v472 = vmul.f32 %v280, %v315
      %v473 = vmul.f32 %v281, %v320
      %v474 = vmul.f32 %v282, %v325
      %v475 = vmul.f32 %v283, %v330
      %v476 = vmul.f32 %v284, %v335
      %v477 = vmul.f32 %v285, %v340
      %v478 = vmul.f32 %v286, %v345
      %v479 = vmul.f32 %v287, %v350
      %v480 = vmul.f32 %v288, %v355
      %v481 = vmul.f32 %v289, %v360
      %v482 = vmul.f32 %v290, %v365
      %v483 = vmul.f32 %v291, %v370
      %v484 = vmul.f32 %v292, %v375
      %v485 = vmul.f32 %v293, %v380
      %v486 = vmul.f32 %v294, %v385
      %v487 = vmul.f32 %v295, %v390
      %v488 = vmul.f32 %v296, %v395
      %v489 = vmul.f32 %v297, %v400
      %v490 = vmul.f32 %v298, %v405
      %v491 = vmul.f32 %v299, %v410
      %v492 = vmul.f32 %v300, %v415
      %v493 = vmul.f32 %v301, %v420
      %v494 = vmul.f32 %v302, %v425
      %v495 = vmul.f32 %v303, %v430
      %v496 = vmul.f32 %v304, %v435
      %v497 = vmul.f32 %v305, %v440
      %v498 = vmul.f32 %v306, %v445
      %v499 = vmul.f32 %v307, %v450
      %v500 = vmul.f32 %v308, %v455
      %v501 = vmul.f32 %v309, %v460
      %v502 = vmul.f32 %v310, %v465
      %v503 = vmul.f32 %v311, %v470
      %v504 = vld [vmem:[#allocation2 + $0x8] sm:$0xff]
      %v505 = vld [vmem:[#allocation2 + $0x10] sm:$0xff]
      %v506 = vld [vmem:[#allocation2 + $0x18] sm:$0xff]
      %v507 = vld [vmem:[#allocation2 + $0x20] sm:$0xff]
      %v508 = vld [vmem:[#allocation2 + $0x28] sm:$0xff]
      %v509 = vld [vmem:[#allocation2 + $0x30] sm:$0xff]
      %v510 = vld [vmem:[#allocation2 + $0x38] sm:$0xff]
      %v511 = vld [vmem:[#allocation2 + $0x40] sm:$0xff]
      %v512 = vld [vmem:[#allocation2 + $0x48] sm:$0xff]
      %v513 = vld [vmem:[#allocation2 + $0x50] sm:$0xff]
      %v514 = vld [vmem:[#allocation2 + $0x58] sm:$0xff]
      %v515 = vld [vmem:[#allocation2 + $0x60] sm:$0xff]
      %v516 = vld [vmem:[#allocation2 + $0x68] sm:$0xff]
      %v517 = vld [vmem:[#allocation2 + $0x70] sm:$0xff]
      %v518 = vld [vmem:[#allocation2 + $0x78] sm:$0xff]
      %v519 = vld [vmem:[#allocation2 + $0x80] sm:$0xff]
      %v520 = vld [vmem:[#allocation2 + $0x88] sm:$0xff]
      %v521 = vld [vmem:[#allocation2 + $0x90] sm:$0xff]
      %v522 = vld [vmem:[#allocation2 + $0x98] sm:$0xff]
      %v523 = vld [vmem:[#allocation2 + $0xa0] sm:$0xff]
      %v524 = vld [vmem:[#allocation2 + $0xa8] sm:$0xff]
      %v525 = vld [vmem:[#allocation2 + $0xb0] sm:$0xff]
      %v526 = vld [vmem:[#allocation2 + $0xb8] sm:$0xff]
      %v527 = vld [vmem:[#allocation2 + $0xc0] sm:$0xff]
      %v528 = vld [vmem:[#allocation2 + $0xc8] sm:$0xff]
      %v529 = vld [vmem:[#allocation2 + $0xd0] sm:$0xff]
      %v530 = vld [vmem:[#allocation2 + $0xd8] sm:$0xff]
      %v531 = vld [vmem:[#allocation2 + $0xe0] sm:$0xff]
      %v532 = vld [vmem:[#allocation2 + $0xe8] sm:$0xff]
      %v533 = vld [vmem:[#allocation2 + $0xf0] sm:$0xff]
      %v534 = vld [vmem:[#allocation2 + $0xf8] sm:$0xff]
      %v535 = vld [vmem:[#allocation2 + $0x100] sm:$0xff]
      %v536 = vld [vmem:[#allocation2 + $0x9] sm:$0xff]
      %v537 = vld [vmem:[#allocation2 + $0x11] sm:$0xff]
      %v538 = vld [vmem:[#allocation2 + $0x19] sm:$0xff]
      %v539 = vld [vmem:[#allocation2 + $0x21] sm:$0xff]
      %v540 = vld [vmem:[#allocation2 + $0x29] sm:$0xff]
      %v541 = vld [vmem:[#allocation2 + $0x31] sm:$0xff]
      %v542 = vld [vmem:[#allocation2 + $0x39] sm:$0xff]
      %v543 = vld [vmem:[#allocation2 + $0x41] sm:$0xff]
      %v544 = vld [vmem:[#allocation2 + $0x49] sm:$0xff]
      %v545 = vld [vmem:[#allocation2 + $0x51] sm:$0xff]
      %v546 = vld [vmem:[#allocation2 + $0x59] sm:$0xff]
      %v547 = vld [vmem:[#allocation2 + $0x61] sm:$0xff]
      %v548 = vld [vmem:[#allocation2 + $0x69] sm:$0xff]
      %v549 = vld [vmem:[#allocation2 + $0x71] sm:$0xff]
      %v550 = vld [vmem:[#allocation2 + $0x79] sm:$0xff]
      %v551 = vld [vmem:[#allocation2 + $0x81] sm:$0xff]
      %v552 = vld [vmem:[#allocation2 + $0x89] sm:$0xff]
      %v553 = vld [vmem:[#allocation2 + $0x91] sm:$0xff]
      %v554 = vld [vmem:[#allocation2 + $0x99] sm:$0xff]
      %v555 = vld [vmem:[#allocation2 + $0xa1] sm:$0xff]
      %v556 = vld [vmem:[#allocation2 + $0xa9] sm:$0xff]
      %v557 = vld [vmem:[#allocation2 + $0xb1] sm:$0xff]
      %v558 = vld [vmem:[#allocation2 + $0xb9] sm:$0xff]
      %v559 = vld [vmem:[#allocation2 + $0xc1] sm:$0xff]
      %v560 = vld [vmem:[#allocation2 + $0xc9] sm:$0xff]
      %v561 = vld [vmem:[#allocation2 + $0xd1] sm:$0xff]
      %v562 = vld [vmem:[#allocation2 + $0xd9] sm:$0xff]
      %v563 = vld [vmem:[#allocation2 + $0xe1] sm:$0xff]
      %v564 = vld [vmem:[#allocation2 + $0xe9] sm:$0xff]
      %v565 = vld [vmem:[#allocation2 + $0xf1] sm:$0xff]
      %v566 = vld [vmem:[#allocation2 + $0xf9] sm:$0xff]
      %v567 = vld [vmem:[#allocation2 + $0x101] sm:$0xff]
      %568 = vset.pattern.permute.xlu0 1
      %569 = vperm.xlu0 %568, %v172
      %v570 = vpop.permute.xlu0 %569
      %572 = vset.pattern.permute.xlu0 1
      %573 = vperm.xlu0 %572, %v173
      %v574 = vpop.permute.xlu0 %573
      %576 = vset.pattern.permute.xlu0 1
      %577 = vperm.xlu0 %576, %v174
      %v578 = vpop.permute.xlu0 %577
      %580 = vset.pattern.permute.xlu0 1
      %581 = vperm.xlu0 %580, %v175
      %v582 = vpop.permute.xlu0 %581
      %584 = vset.pattern.permute.xlu0 1
      %585 = vperm.xlu0 %584, %v176
      %v586 = vpop.permute.xlu0 %585
      %588 = vset.pattern.permute.xlu0 1
      %589 = vperm.xlu0 %588, %v177
      %v590 = vpop.permute.xlu0 %589
      %592 = vset.pattern.permute.xlu0 1
      %593 = vperm.xlu0 %592, %v178
      %v594 = vpop.permute.xlu0 %593
      %596 = vset.pattern.permute.xlu0 1
      %597 = vperm.xlu0 %596, %v179
      %v598 = vpop.permute.xlu0 %597
      %600 = vset.pattern.permute.xlu0 1
      %601 = vperm.xlu0 %600, %v180
      %v602 = vpop.permute.xlu0 %601
      %604 = vset.pattern.permute.xlu0 1
      %605 = vperm.xlu0 %604, %v181
      %v606 = vpop.permute.xlu0 %605
      %608 = vset.pattern.permute.xlu0 1
      %609 = vperm.xlu0 %608, %v182
      %v610 = vpop.permute.xlu0 %609
      %612 = vset.pattern.permute.xlu0 1
      %613 = vperm.xlu0 %612, %v183
      %v614 = vpop.permute.xlu0 %613
      %616 = vset.pattern.permute.xlu0 1
      %617 = vperm.xlu0 %616, %v184
      %v618 = vpop.permute.xlu0 %617
      %620 = vset.pattern.permute.xlu0 1
      %621 = vperm.xlu0 %620, %v185
      %v622 = vpop.permute.xlu0 %621
      %624 = vset.pattern.permute.xlu0 1
      %625 = vperm.xlu0 %624, %v186
      %v626 = vpop.permute.xlu0 %625
      %628 = vset.pattern.permute.xlu0 1
      %629 = vperm.xlu0 %628, %v187
      %v630 = vpop.permute.xlu0 %629
      %632 = vset.pattern.permute.xlu0 1
      %633 = vperm.xlu0 %632, %v188
      %v634 = vpop.permute.xlu0 %633
      %636 = vset.pattern.permute.xlu0 1
      %637 = vperm.xlu0 %636, %v189
      %v638 = vpop.permute.xlu0 %637
      %640 = vset.pattern.permute.xlu0 1
      %641 = vperm.xlu0 %640, %v190
      %v642 = vpop.permute.xlu0 %641
      %644 = vset.pattern.permute.xlu0 1
      %645 = vperm.xlu0 %644, %v191
      %v646 = vpop.permute.xlu0 %645
      %648 = vset.pattern.permute.xlu0 1
      %649 = vperm.xlu0 %648, %v192
      %v650 = vpop.permute.xlu0 %649
      %652 = vset.pattern.permute.xlu0 1
      %653 = vperm.xlu0 %652, %v193
      %v654 = vpop.permute.xlu0 %653
      %656 = vset.pattern.permute.xlu0 1
      %657 = vperm.xlu0 %656, %v194
      %v658 = vpop.permute.xlu0 %657
      %660 = vset.pattern.permute.xlu0 1
      %661 = vperm.xlu0 %660, %v195
      %v662 = vpop.permute.xlu0 %661
      %664 = vset.pattern.permute.xlu0 1
      %665 = vperm.xlu0 %664, %v196
      %v666 = vpop.permute.xlu0 %665
      %668 = vset.pattern.permute.xlu0 1
      %669 = vperm.xlu0 %668, %v197
      %v670 = vpop.permute.xlu0 %669
      %672 = vset.pattern.permute.xlu0 1
      %673 = vperm.xlu0 %672, %v198
      %v674 = vpop.permute.xlu0 %673
      %676 = vset.pattern.permute.xlu0 1
      %677 = vperm.xlu0 %676, %v199
      %v678 = vpop.permute.xlu0 %677
      %680 = vset.pattern.permute.xlu0 1
      %681 = vperm.xlu0 %680, %v200
      %v682 = vpop.permute.xlu0 %681
      %684 = vset.pattern.permute.xlu0 1
      %685 = vperm.xlu0 %684, %v201
      %v686 = vpop.permute.xlu0 %685
      %688 = vset.pattern.permute.xlu0 1
      %689 = vperm.xlu0 %688, %v202
      %v690 = vpop.permute.xlu0 %689
      %692 = vset.pattern.permute.xlu0 1
      %693 = vperm.xlu0 %692, %v203
      %v694 = vpop.permute.xlu0 %693
      %v696 = vmul.f32 %v536, %v570
      %v697 = vmul.f32 %v537, %v574
      %v698 = vmul.f32 %v538, %v578
      %v699 = vmul.f32 %v539, %v582
      %v700 = vmul.f32 %v540, %v586
      %v701 = vmul.f32 %v541, %v590
      %v702 = vmul.f32 %v542, %v594
      %v703 = vmul.f32 %v543, %v598
      %v704 = vmul.f32 %v544, %v602
      %v705 = vmul.f32 %v545, %v606
      %v706 = vmul.f32 %v546, %v610
      %v707 = vmul.f32 %v547, %v614
      %v708 = vmul.f32 %v548, %v618
      %v709 = vmul.f32 %v549, %v622
      %v710 = vmul.f32 %v550, %v626
      %v711 = vmul.f32 %v551, %v630
      %v712 = vmul.f32 %v552, %v634
      %v713 = vmul.f32 %v553, %v638
      %v714 = vmul.f32 %v554, %v642
      %v715 = vmul.f32 %v555, %v646
      %v716 = vmul.f32 %v556, %v650
      %v717 = vmul.f32 %v557, %v654
      %v718 = vmul.f32 %v558, %v658
      %v719 = vmul.f32 %v559, %v662
      %v720 = vmul.f32 %v560, %v666
      %v721 = vmul.f32 %v561, %v670
      %v722 = vmul.f32 %v562, %v674
      %v723 = vmul.f32 %v563, %v678
      %v724 = vmul.f32 %v564, %v682
      %v725 = vmul.f32 %v565, %v686
      %v726 = vmul.f32 %v566, %v690
      %v727 = vmul.f32 %v567, %v694
      %v728 = vld [vmem:[#allocation2 + $0x17] sm:$0xff]
      %v729 = vld [vmem:[#allocation2 + $0x1f] sm:$0xff]
      %v730 = vld [vmem:[#allocation2 + $0x27] sm:$0xff]
      %v731 = vld [vmem:[#allocation2 + $0x2f] sm:$0xff]
      %v732 = vld [vmem:[#allocation2 + $0x37] sm:$0xff]
      %v733 = vld [vmem:[#allocation2 + $0x3f] sm:$0xff]
      %v734 = vld [vmem:[#allocation2 + $0x47] sm:$0xff]
      %v735 = vld [vmem:[#allocation2 + $0x4f] sm:$0xff]
      %v736 = vld [vmem:[#allocation2 + $0x57] sm:$0xff]
      %v737 = vld [vmem:[#allocation2 + $0x5f] sm:$0xff]
      %v738 = vld [vmem:[#allocation2 + $0x67] sm:$0xff]
      %v739 = vld [vmem:[#allocation2 + $0x6f] sm:$0xff]
      %v740 = vld [vmem:[#allocation2 + $0x77] sm:$0xff]
      %v741 = vld [vmem:[#allocation2 + $0x7f] sm:$0xff]
      %v742 = vld [vmem:[#allocation2 + $0x87] sm:$0xff]
      %v743 = vld [vmem:[#allocation2 + $0x8f] sm:$0xff]
      %v744 = vld [vmem:[#allocation2 + $0x97] sm:$0xff]
      %v745 = vld [vmem:[#allocation2 + $0x9f] sm:$0xff]
      %v746 = vld [vmem:[#allocation2 + $0xa7] sm:$0xff]
      %v747 = vld [vmem:[#allocation2 + $0xaf] sm:$0xff]
      %v748 = vld [vmem:[#allocation2 + $0xb7] sm:$0xff]
      %v749 = vld [vmem:[#allocation2 + $0xbf] sm:$0xff]
      %v750 = vld [vmem:[#allocation2 + $0xc7] sm:$0xff]
      %v751 = vld [vmem:[#allocation2 + $0xcf] sm:$0xff]
      %v752 = vld [vmem:[#allocation2 + $0xd7] sm:$0xff]
      %v753 = vld [vmem:[#allocation2 + $0xdf] sm:$0xff]
      %v754 = vld [vmem:[#allocation2 + $0xe7] sm:$0xff]
      %v755 = vld [vmem:[#allocation2 + $0xef] sm:$0xff]
      %v756 = vld [vmem:[#allocation2 + $0xf7] sm:$0xff]
      %v757 = vld [vmem:[#allocation2 + $0xff] sm:$0xff]
      %v758 = vld [vmem:[#allocation2 + $0x107] sm:$0xff]
      %v759 = vld [vmem:[#allocation2 + $0x10f] sm:$0xff]
      %v760 = vmul.f32 %v728, %v315
      %v761 = vmul.f32 %v729, %v320
      %v762 = vmul.f32 %v730, %v325
      %v763 = vmul.f32 %v731, %v330
      %v764 = vmul.f32 %v732, %v335
      %v765 = vmul.f32 %v733, %v340
      %v766 = vmul.f32 %v734, %v345
      %v767 = vmul.f32 %v735, %v350
      %v768 = vmul.f32 %v736, %v355
      %v769 = vmul.f32 %v737, %v360
      %v770 = vmul.f32 %v738, %v365
      %v771 = vmul.f32 %v739, %v370
      %v772 = vmul.f32 %v740, %v375
      %v773 = vmul.f32 %v741, %v380
      %v774 = vmul.f32 %v742, %v385
      %v775 = vmul.f32 %v743, %v390
      %v776 = vmul.f32 %v744, %v395
      %v777 = vmul.f32 %v745, %v400
      %v778 = vmul.f32 %v746, %v405
      %v779 = vmul.f32 %v747, %v410
      %v780 = vmul.f32 %v748, %v415
      %v781 = vmul.f32 %v749, %v420
      %v782 = vmul.f32 %v750, %v425
      %v783 = vmul.f32 %v751, %v430
      %v784 = vmul.f32 %v752, %v435
      %v785 = vmul.f32 %v753, %v440
      %v786 = vmul.f32 %v754, %v445
      %v787 = vmul.f32 %v755, %v450
      %v788 = vmul.f32 %v756, %v455
      %v789 = vmul.f32 %v757, %v460
      %v790 = vmul.f32 %v758, %v465
      %v791 = vmul.f32 %v759, %v470
      %v792 = vld [vmem:[#allocation2 + $0x18] sm:$0xff]
      %v793 = vld [vmem:[#allocation2 + $0x20] sm:$0xff]
      %v794 = vld [vmem:[#allocation2 + $0x28] sm:$0xff]
      %v795 = vld [vmem:[#allocation2 + $0x30] sm:$0xff]
      %v796 = vld [vmem:[#allocation2 + $0x38] sm:$0xff]
      %v797 = vld [vmem:[#allocation2 + $0x40] sm:$0xff]
      %v798 = vld [vmem:[#allocation2 + $0x48] sm:$0xff]
      %v799 = vld [vmem:[#allocation2 + $0x50] sm:$0xff]
      %v800 = vld [vmem:[#allocation2 + $0x58] sm:$0xff]
      %v801 = vld [vmem:[#allocation2 + $0x60] sm:$0xff]
      %v802 = vld [vmem:[#allocation2 + $0x68] sm:$0xff]
      %v803 = vld [vmem:[#allocation2 + $0x70] sm:$0xff]
      %v804 = vld [vmem:[#allocation2 + $0x78] sm:$0xff]
      %v805 = vld [vmem:[#allocation2 + $0x80] sm:$0xff]
      %v806 = vld [vmem:[#allocation2 + $0x88] sm:$0xff]
      %v807 = vld [vmem:[#allocation2 + $0x90] sm:$0xff]
      %v808 = vld [vmem:[#allocation2 + $0x98] sm:$0xff]
      %v809 = vld [vmem:[#allocation2 + $0xa0] sm:$0xff]
      %v810 = vld [vmem:[#allocation2 + $0xa8] sm:$0xff]
      %v811 = vld [vmem:[#allocation2 + $0xb0] sm:$0xff]
      %v812 = vld [vmem:[#allocation2 + $0xb8] sm:$0xff]
      %v813 = vld [vmem:[#allocation2 + $0xc0] sm:$0xff]
      %v814 = vld [vmem:[#allocation2 + $0xc8] sm:$0xff]
      %v815 = vld [vmem:[#allocation2 + $0xd0] sm:$0xff]
      %v816 = vld [vmem:[#allocation2 + $0xd8] sm:$0xff]
      %v817 = vld [vmem:[#allocation2 + $0xe0] sm:$0xff]
      %v818 = vld [vmem:[#allocation2 + $0xe8] sm:$0xff]
      %v819 = vld [vmem:[#allocation2 + $0xf0] sm:$0xff]
      %v820 = vld [vmem:[#allocation2 + $0xf8] sm:$0xff]
      %v821 = vld [vmem:[#allocation2 + $0x100] sm:$0xff]
      %v822 = vld [vmem:[#allocation2 + $0x108] sm:$0xff]
      %v823 = vld [vmem:[#allocation2 + $0x110] sm:$0xff]
      %v824 = vld [vmem:[#allocation2 + $0x19] sm:$0xff]
      %v825 = vld [vmem:[#allocation2 + $0x21] sm:$0xff]
      %v826 = vld [vmem:[#allocation2 + $0x29] sm:$0xff]
      %v827 = vld [vmem:[#allocation2 + $0x31] sm:$0xff]
      %v828 = vld [vmem:[#allocation2 + $0x39] sm:$0xff]
      %v829 = vld [vmem:[#allocation2 + $0x41] sm:$0xff]
      %v830 = vld [vmem:[#allocation2 + $0x49] sm:$0xff]
      %v831 = vld [vmem:[#allocation2 + $0x51] sm:$0xff]
      %v832 = vld [vmem:[#allocation2 + $0x59] sm:$0xff]
      %v833 = vld [vmem:[#allocation2 + $0x61] sm:$0xff]
      %v834 = vld [vmem:[#allocation2 + $0x69] sm:$0xff]
      %v835 = vld [vmem:[#allocation2 + $0x71] sm:$0xff]
      %v836 = vld [vmem:[#allocation2 + $0x79] sm:$0xff]
      %v837 = vld [vmem:[#allocation2 + $0x81] sm:$0xff]
      %v838 = vld [vmem:[#allocation2 + $0x89] sm:$0xff]
      %v839 = vld [vmem:[#allocation2 + $0x91] sm:$0xff]
      %v840 = vld [vmem:[#allocation2 + $0x99] sm:$0xff]
      %v841 = vld [vmem:[#allocation2 + $0xa1] sm:$0xff]
      %v842 = vld [vmem:[#allocation2 + $0xa9] sm:$0xff]
      %v843 = vld [vmem:[#allocation2 + $0xb1] sm:$0xff]
      %v844 = vld [vmem:[#allocation2 + $0xb9] sm:$0xff]
      %v845 = vld [vmem:[#allocation2 + $0xc1] sm:$0xff]
      %v846 = vld [vmem:[#allocation2 + $0xc9] sm:$0xff]
      %v847 = vld [vmem:[#allocation2 + $0xd1] sm:$0xff]
      %v848 = vld [vmem:[#allocation2 + $0xd9] sm:$0xff]
      %v849 = vld [vmem:[#allocation2 + $0xe1] sm:$0xff]
      %v850 = vld [vmem:[#allocation2 + $0xe9] sm:$0xff]
      %v851 = vld [vmem:[#allocation2 + $0xf1] sm:$0xff]
      %v852 = vld [vmem:[#allocation2 + $0xf9] sm:$0xff]
      %v853 = vld [vmem:[#allocation2 + $0x101] sm:$0xff]
      %v854 = vld [vmem:[#allocation2 + $0x109] sm:$0xff]
      %v855 = vld [vmem:[#allocation2 + $0x111] sm:$0xff]
      %v856 = vmul.f32 %v824, %v570
      %v857 = vmul.f32 %v825, %v574
      %v858 = vmul.f32 %v826, %v578
      %v859 = vmul.f32 %v827, %v582
      %v860 = vmul.f32 %v828, %v586
      %v861 = vmul.f32 %v829, %v590
      %v862 = vmul.f32 %v830, %v594
      %v863 = vmul.f32 %v831, %v598
      %v864 = vmul.f32 %v832, %v602
      %v865 = vmul.f32 %v833, %v606
      %v866 = vmul.f32 %v834, %v610
      %v867 = vmul.f32 %v835, %v614
      %v868 = vmul.f32 %v836, %v618
      %v869 = vmul.f32 %v837, %v622
      %v870 = vmul.f32 %v838, %v626
      %v871 = vmul.f32 %v839, %v630
      %v872 = vmul.f32 %v840, %v634
      %v873 = vmul.f32 %v841, %v638
      %v874 = vmul.f32 %v842, %v642
      %v875 = vmul.f32 %v843, %v646
      %v876 = vmul.f32 %v844, %v650
      %v877 = vmul.f32 %v845, %v654
      %v878 = vmul.f32 %v846, %v658
      %v879 = vmul.f32 %v847, %v662
      %v880 = vmul.f32 %v848, %v666
      %v881 = vmul.f32 %v849, %v670
      %v882 = vmul.f32 %v850, %v674
      %v883 = vmul.f32 %v851, %v678
      %v884 = vmul.f32 %v852, %v682
      %v885 = vmul.f32 %v853, %v686
      %v886 = vmul.f32 %v854, %v690
      %v887 = vmul.f32 %v855, %v694
      %v888 = vld [vmem:[#allocation2 + $0x117] sm:$0xff]
      %v889 = vld [vmem:[#allocation2 + $0x11f] sm:$0xff]
      %v890 = vmul.f32 %v730, %v315
      %v891 = vmul.f32 %v731, %v320
      %v892 = vmul.f32 %v732, %v325
      %v893 = vmul.f32 %v733, %v330
      %v894 = vmul.f32 %v734, %v335
      %v895 = vmul.f32 %v735, %v340
      %v896 = vmul.f32 %v736, %v345
      %v897 = vmul.f32 %v737, %v350
      %v898 = vmul.f32 %v738, %v355
      %v899 = vmul.f32 %v739, %v360
      %v900 = vmul.f32 %v740, %v365
      %v901 = vmul.f32 %v741, %v370
      %v902 = vmul.f32 %v742, %v375
      %v903 = vmul.f32 %v743, %v380
      %v904 = vmul.f32 %v744, %v385
      %v905 = vmul.f32 %v745, %v390
      %v906 = vmul.f32 %v746, %v395
      %v907 = vmul.f32 %v747, %v400
      %v908 = vmul.f32 %v748, %v405
      %v909 = vmul.f32 %v749, %v410
      %v910 = vmul.f32 %v750, %v415
      %v911 = vmul.f32 %v751, %v420
      %v912 = vmul.f32 %v752, %v425
      %v913 = vmul.f32 %v753, %v430
      %v914 = vmul.f32 %v754, %v435
      %v915 = vmul.f32 %v755, %v440
      %v916 = vmul.f32 %v756, %v445
      %v917 = vmul.f32 %v757, %v450
      %v918 = vmul.f32 %v758, %v455
      %v919 = vmul.f32 %v759, %v460
      %v920 = vmul.f32 %v888, %v465
      %v921 = vmul.f32 %v889, %v470
      %v922 = vld [vmem:[#allocation2 + $0x118] sm:$0xff]
      %v923 = vld [vmem:[#allocation2 + $0x120] sm:$0xff]
      %v924 = vld [vmem:[#allocation2 + $0x119] sm:$0xff]
      %v925 = vld [vmem:[#allocation2 + $0x121] sm:$0xff]
      %v926 = vmul.f32 %v826, %v570
      %v927 = vmul.f32 %v827, %v574
      %v928 = vmul.f32 %v828, %v578
      %v929 = vmul.f32 %v829, %v582
      %v930 = vmul.f32 %v830, %v586
      %v931 = vmul.f32 %v831, %v590
      %v932 = vmul.f32 %v832, %v594
      %v933 = vmul.f32 %v833, %v598
      %v934 = vmul.f32 %v834, %v602
      %v935 = vmul.f32 %v835, %v606
      %v936 = vmul.f32 %v836, %v610
      %v937 = vmul.f32 %v837, %v614
      %v938 = vmul.f32 %v838, %v618
      %v939 = vmul.f32 %v839, %v622
      %v940 = vmul.f32 %v840, %v626
      %v941 = vmul.f32 %v841, %v630
      %v942 = vmul.f32 %v842, %v634
      %v943 = vmul.f32 %v843, %v638
      %v944 = vmul.f32 %v844, %v642
      %v945 = vmul.f32 %v845, %v646
      %v946 = vmul.f32 %v846, %v650
      %v947 = vmul.f32 %v847, %v654
      %v948 = vmul.f32 %v848, %v658
      %v949 = vmul.f32 %v849, %v662
      %v950 = vmul.f32 %v850, %v666
      %v951 = vmul.f32 %v851, %v670
      %v952 = vmul.f32 %v852, %v674
      %v953 = vmul.f32 %v853, %v678
      %v954 = vmul.f32 %v854, %v682
      %v955 = vmul.f32 %v855, %v686
      %v956 = vmul.f32 %v924, %v690
      %v957 = vmul.f32 %v925, %v694
      %990 = vrot.lane.b32.xlu0 %v504, 4
      %v991 = vpop.permute.xlu0 %990
      %992 = vrot.lane.b32.xlu0 %v505, 4
      %v993 = vpop.permute.xlu0 %992
      %994 = vrot.lane.b32.xlu0 %v506, 4
      %v995 = vpop.permute.xlu0 %994
      %996 = vrot.lane.b32.xlu0 %v507, 4
      %v997 = vpop.permute.xlu0 %996
      %998 = vrot.lane.b32.xlu0 %v508, 4
      %v999 = vpop.permute.xlu0 %998
      %1000 = vrot.lane.b32.xlu0 %v509, 4
      %v1001 = vpop.permute.xlu0 %1000
      %1002 = vrot.lane.b32.xlu0 %v510, 4
      %v1003 = vpop.permute.xlu0 %1002
      %1004 = vrot.lane.b32.xlu0 %v511, 4
      %v1005 = vpop.permute.xlu0 %1004
      %1006 = vrot.lane.b32.xlu0 %v512, 4
      %v1007 = vpop.permute.xlu0 %1006
      %1008 = vrot.lane.b32.xlu0 %v513, 4
      %v1009 = vpop.permute.xlu0 %1008
      %1010 = vrot.lane.b32.xlu0 %v514, 4
      %v1011 = vpop.permute.xlu0 %1010
      %1012 = vrot.lane.b32.xlu0 %v515, 4
      %v1013 = vpop.permute.xlu0 %1012
      %1014 = vrot.lane.b32.xlu0 %v516, 4
      %v1015 = vpop.permute.xlu0 %1014
      %1016 = vrot.lane.b32.xlu0 %v517, 4
      %v1017 = vpop.permute.xlu0 %1016
      %1018 = vrot.lane.b32.xlu0 %v518, 4
      %v1019 = vpop.permute.xlu0 %1018
      %1020 = vrot.lane.b32.xlu0 %v519, 4
      %v1021 = vpop.permute.xlu0 %1020
      %1022 = vrot.lane.b32.xlu0 %v520, 4
      %v1023 = vpop.permute.xlu0 %1022
      %1024 = vrot.lane.b32.xlu0 %v521, 4
      %v1025 = vpop.permute.xlu0 %1024
      %1026 = vrot.lane.b32.xlu0 %v522, 4
      %v1027 = vpop.permute.xlu0 %1026
      %1028 = vrot.lane.b32.xlu0 %v523, 4
      %v1029 = vpop.permute.xlu0 %1028
      %1030 = vrot.lane.b32.xlu0 %v524, 4
      %v1031 = vpop.permute.xlu0 %1030
      %1032 = vrot.lane.b32.xlu0 %v525, 4
      %v1033 = vpop.permute.xlu0 %1032
      %1034 = vrot.lane.b32.xlu0 %v526, 4
      %v1035 = vpop.permute.xlu0 %1034
      %1036 = vrot.lane.b32.xlu0 %v527, 4
      %v1037 = vpop.permute.xlu0 %1036
      %1038 = vrot.lane.b32.xlu0 %v528, 4
      %v1039 = vpop.permute.xlu0 %1038
      %1040 = vrot.lane.b32.xlu0 %v529, 4
      %v1041 = vpop.permute.xlu0 %1040
      %1042 = vrot.lane.b32.xlu0 %v530, 4
      %v1043 = vpop.permute.xlu0 %1042
      %1044 = vrot.lane.b32.xlu0 %v531, 4
      %v1045 = vpop.permute.xlu0 %1044
      %1046 = vrot.lane.b32.xlu0 %v532, 4
      %v1047 = vpop.permute.xlu0 %1046
      %1048 = vrot.lane.b32.xlu0 %v533, 4
      %v1049 = vpop.permute.xlu0 %1048
      %1050 = vrot.lane.b32.xlu0 %v534, 4
      %v1051 = vpop.permute.xlu0 %1050
      %1052 = vrot.lane.b32.xlu0 %v535, 4
      %v1053 = vpop.permute.xlu0 %1052
      %1118 = vrot.lane.b32.xlu0 %v696, 8
      %v1119 = vpop.permute.xlu0 %1118
      %1120 = vrot.lane.b32.xlu0 %v697, 8
      %v1121 = vpop.permute.xlu0 %1120
      %1122 = vrot.lane.b32.xlu0 %v698, 8
      %v1123 = vpop.permute.xlu0 %1122
      %1124 = vrot.lane.b32.xlu0 %v699, 8
      %v1125 = vpop.permute.xlu0 %1124
      %1126 = vrot.lane.b32.xlu0 %v700, 8
      %v1127 = vpop.permute.xlu0 %1126
      %1128 = vrot.lane.b32.xlu0 %v701, 8
      %v1129 = vpop.permute.xlu0 %1128
      %1130 = vrot.lane.b32.xlu0 %v702, 8
      %v1131 = vpop.permute.xlu0 %1130
      %1132 = vrot.lane.b32.xlu0 %v703, 8
      %v1133 = vpop.permute.xlu0 %1132
      %1134 = vrot.lane.b32.xlu0 %v704, 8
      %v1135 = vpop.permute.xlu0 %1134
      %1136 = vrot.lane.b32.xlu0 %v705, 8
      %v1137 = vpop.permute.xlu0 %1136
      %1138 = vrot.lane.b32.xlu0 %v706, 8
      %v1139 = vpop.permute.xlu0 %1138
      %1140 = vrot.lane.b32.xlu0 %v707, 8
      %v1141 = vpop.permute.xlu0 %1140
      %1142 = vrot.lane.b32.xlu0 %v708, 8
      %v1143 = vpop.permute.xlu0 %1142
      %1144 = vrot.lane.b32.xlu0 %v709, 8
      %v1145 = vpop.permute.xlu0 %1144
      %1146 = vrot.lane.b32.xlu0 %v710, 8
      %v1147 = vpop.permute.xlu0 %1146
      %1148 = vrot.lane.b32.xlu0 %v711, 8
      %v1149 = vpop.permute.xlu0 %1148
      %1150 = vrot.lane.b32.xlu0 %v712, 8
      %v1151 = vpop.permute.xlu0 %1150
      %1152 = vrot.lane.b32.xlu0 %v713, 8
      %v1153 = vpop.permute.xlu0 %1152
      %1154 = vrot.lane.b32.xlu0 %v714, 8
      %v1155 = vpop.permute.xlu0 %1154
      %1156 = vrot.lane.b32.xlu0 %v715, 8
      %v1157 = vpop.permute.xlu0 %1156
      %1158 = vrot.lane.b32.xlu0 %v716, 8
      %v1159 = vpop.permute.xlu0 %1158
      %1160 = vrot.lane.b32.xlu0 %v717, 8
      %v1161 = vpop.permute.xlu0 %1160
      %1162 = vrot.lane.b32.xlu0 %v718, 8
      %v1163 = vpop.permute.xlu0 %1162
      %1164 = vrot.lane.b32.xlu0 %v719, 8
      %v1165 = vpop.permute.xlu0 %1164
      %1166 = vrot.lane.b32.xlu0 %v720, 8
      %v1167 = vpop.permute.xlu0 %1166
      %1168 = vrot.lane.b32.xlu0 %v721, 8
      %v1169 = vpop.permute.xlu0 %1168
      %1170 = vrot.lane.b32.xlu0 %v722, 8
      %v1171 = vpop.permute.xlu0 %1170
      %1172 = vrot.lane.b32.xlu0 %v723, 8
      %v1173 = vpop.permute.xlu0 %1172
      %1174 = vrot.lane.b32.xlu0 %v724, 8
      %v1175 = vpop.permute.xlu0 %1174
      %1176 = vrot.lane.b32.xlu0 %v725, 8
      %v1177 = vpop.permute.xlu0 %1176
      %1178 = vrot.lane.b32.xlu0 %v726, 8
      %v1179 = vpop.permute.xlu0 %1178
      %1180 = vrot.lane.b32.xlu0 %v727, 8
      %v1181 = vpop.permute.xlu0 %1180
      %1246 = vrot.lane.b32.xlu0 %v760, 12
      %v1247 = vpop.permute.xlu0 %1246
      %1248 = vrot.lane.b32.xlu0 %v761, 12
      %v1249 = vpop.permute.xlu0 %1248
      %1250 = vrot.lane.b32.xlu0 %v762, 12
      %v1251 = vpop.permute.xlu0 %1250
      %1252 = vrot.lane.b32.xlu0 %v763, 12
      %v1253 = vpop.permute.xlu0 %1252
      %1254 = vrot.lane.b32.xlu0 %v764, 12
      %v1255 = vpop.permute.xlu0 %1254
      %1256 = vrot.lane.b32.xlu0 %v765, 12
      %v1257 = vpop.permute.xlu0 %1256
      %1258 = vrot.lane.b32.xlu0 %v766, 12
      %v1259 = vpop.permute.xlu0 %1258
      %1260 = vrot.lane.b32.xlu0 %v767, 12
      %v1261 = vpop.permute.xlu0 %1260
      %1262 = vrot.lane.b32.xlu0 %v768, 12
      %v1263 = vpop.permute.xlu0 %1262
      %1264 = vrot.lane.b32.xlu0 %v769, 12
      %v1265 = vpop.permute.xlu0 %1264
      %1266 = vrot.lane.b32.xlu0 %v770, 12
      %v1267 = vpop.permute.xlu0 %1266
      %1268 = vrot.lane.b32.xlu0 %v771, 12
      %v1269 = vpop.permute.xlu0 %1268
      %1270 = vrot.lane.b32.xlu0 %v772, 12
      %v1271 = vpop.permute.xlu0 %1270
      %1272 = vrot.lane.b32.xlu0 %v773, 12
      %v1273 = vpop.permute.xlu0 %1272
      %1274 = vrot.lane.b32.xlu0 %v774, 12
      %v1275 = vpop.permute.xlu0 %1274
      %1276 = vrot.lane.b32.xlu0 %v775, 12
      %v1277 = vpop.permute.xlu0 %1276
      %1278 = vrot.lane.b32.xlu0 %v776, 12
      %v1279 = vpop.permute.xlu0 %1278
      %1280 = vrot.lane.b32.xlu0 %v777, 12
      %v1281 = vpop.permute.xlu0 %1280
      %1282 = vrot.lane.b32.xlu0 %v778, 12
      %v1283 = vpop.permute.xlu0 %1282
      %1284 = vrot.lane.b32.xlu0 %v779, 12
      %v1285 = vpop.permute.xlu0 %1284
      %1286 = vrot.lane.b32.xlu0 %v780, 12
      %v1287 = vpop.permute.xlu0 %1286
      %1288 = vrot.lane.b32.xlu0 %v781, 12
      %v1289 = vpop.permute.xlu0 %1288
      %1290 = vrot.lane.b32.xlu0 %v782, 12
      %v1291 = vpop.permute.xlu0 %1290
      %1292 = vrot.lane.b32.xlu0 %v783, 12
      %v1293 = vpop.permute.xlu0 %1292
      %1294 = vrot.lane.b32.xlu0 %v784, 12
      %v1295 = vpop.permute.xlu0 %1294
      %1296 = vrot.lane.b32.xlu0 %v785, 12
      %v1297 = vpop.permute.xlu0 %1296
      %1298 = vrot.lane.b32.xlu0 %v786, 12
      %v1299 = vpop.permute.xlu0 %1298
      %1300 = vrot.lane.b32.xlu0 %v787, 12
      %v1301 = vpop.permute.xlu0 %1300
      %1302 = vrot.lane.b32.xlu0 %v788, 12
      %v1303 = vpop.permute.xlu0 %1302
      %1304 = vrot.lane.b32.xlu0 %v789, 12
      %v1305 = vpop.permute.xlu0 %1304
      %1306 = vrot.lane.b32.xlu0 %v790, 12
      %v1307 = vpop.permute.xlu0 %1306
      %1308 = vrot.lane.b32.xlu0 %v791, 12
      %v1309 = vpop.permute.xlu0 %1308
      %1374 = vrot.lane.b32.xlu0 %v792, 16
      %v1375 = vpop.permute.xlu0 %1374
      %1376 = vrot.lane.b32.xlu0 %v793, 16
      %v1377 = vpop.permute.xlu0 %1376
      %1378 = vrot.lane.b32.xlu0 %v794, 16
      %v1379 = vpop.permute.xlu0 %1378
      %1380 = vrot.lane.b32.xlu0 %v795, 16
      %v1381 = vpop.permute.xlu0 %1380
      %1382 = vrot.lane.b32.xlu0 %v796, 16
      %v1383 = vpop.permute.xlu0 %1382
      %1384 = vrot.lane.b32.xlu0 %v797, 16
      %v1385 = vpop.permute.xlu0 %1384
      %1386 = vrot.lane.b32.xlu0 %v798, 16
      %v1387 = vpop.permute.xlu0 %1386
      %1388 = vrot.lane.b32.xlu0 %v799, 16
      %v1389 = vpop.permute.xlu0 %1388
      %1390 = vrot.lane.b32.xlu0 %v800, 16
      %v1391 = vpop.permute.xlu0 %1390
      %1392 = vrot.lane.b32.xlu0 %v801, 16
      %v1393 = vpop.permute.xlu0 %1392
      %1394 = vrot.lane.b32.xlu0 %v802, 16
      %v1395 = vpop.permute.xlu0 %1394
      %1396 = vrot.lane.b32.xlu0 %v803, 16
      %v1397 = vpop.permute.xlu0 %1396
      %1398 = vrot.lane.b32.xlu0 %v804, 16
      %v1399 = vpop.permute.xlu0 %1398
      %1400 = vrot.lane.b32.xlu0 %v805, 16
      %v1401 = vpop.permute.xlu0 %1400
      %1402 = vrot.lane.b32.xlu0 %v806, 16
      %v1403 = vpop.permute.xlu0 %1402
      %1404 = vrot.lane.b32.xlu0 %v807, 16
      %v1405 = vpop.permute.xlu0 %1404
      %1406 = vrot.lane.b32.xlu0 %v808, 16
      %v1407 = vpop.permute.xlu0 %1406
      %1408 = vrot.lane.b32.xlu0 %v809, 16
      %v1409 = vpop.permute.xlu0 %1408
      %1410 = vrot.lane.b32.xlu0 %v810, 16
      %v1411 = vpop.permute.xlu0 %1410
      %1412 = vrot.lane.b32.xlu0 %v811, 16
      %v1413 = vpop.permute.xlu0 %1412
      %1414 = vrot.lane.b32.xlu0 %v812, 16
      %v1415 = vpop.permute.xlu0 %1414
      %1416 = vrot.lane.b32.xlu0 %v813, 16
      %v1417 = vpop.permute.xlu0 %1416
      %1418 = vrot.lane.b32.xlu0 %v814, 16
      %v1419 = vpop.permute.xlu0 %1418
      %1420 = vrot.lane.b32.xlu0 %v815, 16
      %v1421 = vpop.permute.xlu0 %1420
      %1422 = vrot.lane.b32.xlu0 %v816, 16
      %v1423 = vpop.permute.xlu0 %1422
      %1424 = vrot.lane.b32.xlu0 %v817, 16
      %v1425 = vpop.permute.xlu0 %1424
      %1426 = vrot.lane.b32.xlu0 %v818, 16
      %v1427 = vpop.permute.xlu0 %1426
      %1428 = vrot.lane.b32.xlu0 %v819, 16
      %v1429 = vpop.permute.xlu0 %1428
      %1430 = vrot.lane.b32.xlu0 %v820, 16
      %v1431 = vpop.permute.xlu0 %1430
      %1432 = vrot.lane.b32.xlu0 %v821, 16
      %v1433 = vpop.permute.xlu0 %1432
      %1434 = vrot.lane.b32.xlu0 %v822, 16
      %v1435 = vpop.permute.xlu0 %1434
      %1436 = vrot.lane.b32.xlu0 %v823, 16
      %v1437 = vpop.permute.xlu0 %1436
      %1502 = vrot.lane.b32.xlu0 %v856, 20
      %v1503 = vpop.permute.xlu0 %1502
      %1504 = vrot.lane.b32.xlu0 %v857, 20
      %v1505 = vpop.permute.xlu0 %1504
      %1506 = vrot.lane.b32.xlu0 %v858, 20
      %v1507 = vpop.permute.xlu0 %1506
      %1508 = vrot.lane.b32.xlu0 %v859, 20
      %v1509 = vpop.permute.xlu0 %1508
      %1510 = vrot.lane.b32.xlu0 %v860, 20
      %v1511 = vpop.permute.xlu0 %1510
      %1512 = vrot.lane.b32.xlu0 %v861, 20
      %v1513 = vpop.permute.xlu0 %1512
      %1514 = vrot.lane.b32.xlu0 %v862, 20
      %v1515 = vpop.permute.xlu0 %1514
      %1516 = vrot.lane.b32.xlu0 %v863, 20
      %v1517 = vpop.permute.xlu0 %1516
      %1518 = vrot.lane.b32.xlu0 %v864, 20
      %v1519 = vpop.permute.xlu0 %1518
      %1520 = vrot.lane.b32.xlu0 %v865, 20
      %v1521 = vpop.permute.xlu0 %1520
      %1522 = vrot.lane.b32.xlu0 %v866, 20
      %v1523 = vpop.permute.xlu0 %1522
      %1524 = vrot.lane.b32.xlu0 %v867, 20
      %v1525 = vpop.permute.xlu0 %1524
      %1526 = vrot.lane.b32.xlu0 %v868, 20
      %v1527 = vpop.permute.xlu0 %1526
      %1528 = vrot.lane.b32.xlu0 %v869, 20
      %v1529 = vpop.permute.xlu0 %1528
      %1530 = vrot.lane.b32.xlu0 %v870, 20
      %v1531 = vpop.permute.xlu0 %1530
      %1532 = vrot.lane.b32.xlu0 %v871, 20
      %v1533 = vpop.permute.xlu0 %1532
      %1534 = vrot.lane.b32.xlu0 %v872, 20
      %v1535 = vpop.permute.xlu0 %1534
      %1536 = vrot.lane.b32.xlu0 %v873, 20
      %v1537 = vpop.permute.xlu0 %1536
      %1538 = vrot.lane.b32.xlu0 %v874, 20
      %v1539 = vpop.permute.xlu0 %1538
      %1540 = vrot.lane.b32.xlu0 %v875, 20
      %v1541 = vpop.permute.xlu0 %1540
      %1542 = vrot.lane.b32.xlu0 %v876, 20
      %v1543 = vpop.permute.xlu0 %1542
      %1544 = vrot.lane.b32.xlu0 %v877, 20
      %v1545 = vpop.permute.xlu0 %1544
      %1546 = vrot.lane.b32.xlu0 %v878, 20
      %v1547 = vpop.permute.xlu0 %1546
      %1548 = vrot.lane.b32.xlu0 %v879, 20
      %v1549 = vpop.permute.xlu0 %1548
      %1550 = vrot.lane.b32.xlu0 %v880, 20
      %v1551 = vpop.permute.xlu0 %1550
      %1552 = vrot.lane.b32.xlu0 %v881, 20
      %v1553 = vpop.permute.xlu0 %1552
      %1554 = vrot.lane.b32.xlu0 %v882, 20
      %v1555 = vpop.permute.xlu0 %1554
      %1556 = vrot.lane.b32.xlu0 %v883, 20
      %v1557 = vpop.permute.xlu0 %1556
      %1558 = vrot.lane.b32.xlu0 %v884, 20
      %v1559 = vpop.permute.xlu0 %1558
      %1560 = vrot.lane.b32.xlu0 %v885, 20
      %v1561 = vpop.permute.xlu0 %1560
      %1562 = vrot.lane.b32.xlu0 %v886, 20
      %v1563 = vpop.permute.xlu0 %1562
      %1564 = vrot.lane.b32.xlu0 %v887, 20
      %v1565 = vpop.permute.xlu0 %1564
      %1630 = vrot.lane.b32.xlu0 %v890, 24
      %v1631 = vpop.permute.xlu0 %1630
      %1632 = vrot.lane.b32.xlu0 %v891, 24
      %v1633 = vpop.permute.xlu0 %1632
      %1634 = vrot.lane.b32.xlu0 %v892, 24
      %v1635 = vpop.permute.xlu0 %1634
      %1636 = vrot.lane.b32.xlu0 %v893, 24
      %v1637 = vpop.permute.xlu0 %1636
      %1638 = vrot.lane.b32.xlu0 %v894, 24
      %v1639 = vpop.permute.xlu0 %1638
      %1640 = vrot.lane.b32.xlu0 %v895, 24
      %v1641 = vpop.permute.xlu0 %1640
      %1642 = vrot.lane.b32.xlu0 %v896, 24
      %v1643 = vpop.permute.xlu0 %1642
      %1644 = vrot.lane.b32.xlu0 %v897, 24
      %v1645 = vpop.permute.xlu0 %1644
      %1646 = vrot.lane.b32.xlu0 %v898, 24
      %v1647 = vpop.permute.xlu0 %1646
      %1648 = vrot.lane.b32.xlu0 %v899, 24
      %v1649 = vpop.permute.xlu0 %1648
      %1650 = vrot.lane.b32.xlu0 %v900, 24
      %v1651 = vpop.permute.xlu0 %1650
      %1652 = vrot.lane.b32.xlu0 %v901, 24
      %v1653 = vpop.permute.xlu0 %1652
      %1654 = vrot.lane.b32.xlu0 %v902, 24
      %v1655 = vpop.permute.xlu0 %1654
      %1656 = vrot.lane.b32.xlu0 %v903, 24
      %v1657 = vpop.permute.xlu0 %1656
      %1658 = vrot.lane.b32.xlu0 %v904, 24
      %v1659 = vpop.permute.xlu0 %1658
      %1660 = vrot.lane.b32.xlu0 %v905, 24
      %v1661 = vpop.permute.xlu0 %1660
      %1662 = vrot.lane.b32.xlu0 %v906, 24
      %v1663 = vpop.permute.xlu0 %1662
      %1664 = vrot.lane.b32.xlu0 %v907, 24
      %v1665 = vpop.permute.xlu0 %1664
      %1666 = vrot.lane.b32.xlu0 %v908, 24
      %v1667 = vpop.permute.xlu0 %1666
      %1668 = vrot.lane.b32.xlu0 %v909, 24
      %v1669 = vpop.permute.xlu0 %1668
      %1670 = vrot.lane.b32.xlu0 %v910, 24
      %v1671 = vpop.permute.xlu0 %1670
      %1672 = vrot.lane.b32.xlu0 %v911, 24
      %v1673 = vpop.permute.xlu0 %1672
      %1674 = vrot.lane.b32.xlu0 %v912, 24
      %v1675 = vpop.permute.xlu0 %1674
      %1676 = vrot.lane.b32.xlu0 %v913, 24
      %v1677 = vpop.permute.xlu0 %1676
      %1678 = vrot.lane.b32.xlu0 %v914, 24
      %v1679 = vpop.permute.xlu0 %1678
      %1680 = vrot.lane.b32.xlu0 %v915, 24
      %v1681 = vpop.permute.xlu0 %1680
      %1682 = vrot.lane.b32.xlu0 %v916, 24
      %v1683 = vpop.permute.xlu0 %1682
      %1684 = vrot.lane.b32.xlu0 %v917, 24
      %v1685 = vpop.permute.xlu0 %1684
      %1686 = vrot.lane.b32.xlu0 %v918, 24
      %v1687 = vpop.permute.xlu0 %1686
      %1688 = vrot.lane.b32.xlu0 %v919, 24
      %v1689 = vpop.permute.xlu0 %1688
      %1690 = vrot.lane.b32.xlu0 %v920, 24
      %v1691 = vpop.permute.xlu0 %1690
      %1692 = vrot.lane.b32.xlu0 %v921, 24
      %v1693 = vpop.permute.xlu0 %1692
      %1728 = vrot.lane.b32.xlu0 %v794, 28
      %v1729 = vpop.permute.xlu0 %1728
      %1730 = vrot.lane.b32.xlu0 %v795, 28
      %v1731 = vpop.permute.xlu0 %1730
      %1732 = vrot.lane.b32.xlu0 %v796, 28
      %v1733 = vpop.permute.xlu0 %1732
      %1734 = vrot.lane.b32.xlu0 %v797, 28
      %v1735 = vpop.permute.xlu0 %1734
      %1736 = vrot.lane.b32.xlu0 %v798, 28
      %v1737 = vpop.permute.xlu0 %1736
      %1738 = vrot.lane.b32.xlu0 %v799, 28
      %v1739 = vpop.permute.xlu0 %1738
      %1740 = vrot.lane.b32.xlu0 %v800, 28
      %v1741 = vpop.permute.xlu0 %1740
      %1742 = vrot.lane.b32.xlu0 %v801, 28
      %v1743 = vpop.permute.xlu0 %1742
      %1744 = vrot.lane.b32.xlu0 %v802, 28
      %v1745 = vpop.permute.xlu0 %1744
      %1746 = vrot.lane.b32.xlu0 %v803, 28
      %v1747 = vpop.permute.xlu0 %1746
      %1748 = vrot.lane.b32.xlu0 %v804, 28
      %v1749 = vpop.permute.xlu0 %1748
      %1750 = vrot.lane.b32.xlu0 %v805, 28
      %v1751 = vpop.permute.xlu0 %1750
      %1752 = vrot.lane.b32.xlu0 %v806, 28
      %v1753 = vpop.permute.xlu0 %1752
      %1754 = vrot.lane.b32.xlu0 %v807, 28
      %v1755 = vpop.permute.xlu0 %1754
      %1756 = vrot.lane.b32.xlu0 %v808, 28
      %v1757 = vpop.permute.xlu0 %1756
      %1758 = vrot.lane.b32.xlu0 %v809, 28
      %v1759 = vpop.permute.xlu0 %1758
      %1760 = vrot.lane.b32.xlu0 %v810, 28
      %v1761 = vpop.permute.xlu0 %1760
      %1762 = vrot.lane.b32.xlu0 %v811, 28
      %v1763 = vpop.permute.xlu0 %1762
      %1764 = vrot.lane.b32.xlu0 %v812, 28
      %v1765 = vpop.permute.xlu0 %1764
      %1766 = vrot.lane.b32.xlu0 %v813, 28
      %v1767 = vpop.permute.xlu0 %1766
      %1768 = vrot.lane.b32.xlu0 %v814, 28
      %v1769 = vpop.permute.xlu0 %1768
      %1770 = vrot.lane.b32.xlu0 %v815, 28
      %v1771 = vpop.permute.xlu0 %1770
      %1772 = vrot.lane.b32.xlu0 %v816, 28
      %v1773 = vpop.permute.xlu0 %1772
      %1774 = vrot.lane.b32.xlu0 %v817, 28
      %v1775 = vpop.permute.xlu0 %1774
      %1776 = vrot.lane.b32.xlu0 %v818, 28
      %v1777 = vpop.permute.xlu0 %1776
      %1778 = vrot.lane.b32.xlu0 %v819, 28
      %v1779 = vpop.permute.xlu0 %1778
      %1780 = vrot.lane.b32.xlu0 %v820, 28
      %v1781 = vpop.permute.xlu0 %1780
      %1782 = vrot.lane.b32.xlu0 %v821, 28
      %v1783 = vpop.permute.xlu0 %1782
      %1784 = vrot.lane.b32.xlu0 %v822, 28
      %v1785 = vpop.permute.xlu0 %1784
      %1786 = vrot.lane.b32.xlu0 %v823, 28
      %v1787 = vpop.permute.xlu0 %1786
      %1788 = vrot.lane.b32.xlu0 %v922, 28
      %v1789 = vpop.permute.xlu0 %1788
      %1790 = vrot.lane.b32.xlu0 %v923, 28
      %v1791 = vpop.permute.xlu0 %1790
      %1856 = vrot.lane.b32.xlu0 %v926, 32
      %v1857 = vpop.permute.xlu0 %1856
      %1858 = vrot.lane.b32.xlu0 %v927, 32
      %v1859 = vpop.permute.xlu0 %1858
      %1860 = vrot.lane.b32.xlu0 %v928, 32
      %v1861 = vpop.permute.xlu0 %1860
      %1862 = vrot.lane.b32.xlu0 %v929, 32
      %v1863 = vpop.permute.xlu0 %1862
      %1864 = vrot.lane.b32.xlu0 %v930, 32
      %v1865 = vpop.permute.xlu0 %1864
      %1866 = vrot.lane.b32.xlu0 %v931, 32
      %v1867 = vpop.permute.xlu0 %1866
      %1868 = vrot.lane.b32.xlu0 %v932, 32
      %v1869 = vpop.permute.xlu0 %1868
      %1870 = vrot.lane.b32.xlu0 %v933, 32
      %v1871 = vpop.permute.xlu0 %1870
      %1872 = vrot.lane.b32.xlu0 %v934, 32
      %v1873 = vpop.permute.xlu0 %1872
      %1874 = vrot.lane.b32.xlu0 %v935, 32
      %v1875 = vpop.permute.xlu0 %1874
      %1876 = vrot.lane.b32.xlu0 %v936, 32
      %v1877 = vpop.permute.xlu0 %1876
      %1878 = vrot.lane.b32.xlu0 %v937, 32
      %v1879 = vpop.permute.xlu0 %1878
      %1880 = vrot.lane.b32.xlu0 %v938, 32
      %v1881 = vpop.permute.xlu0 %1880
      %1882 = vrot.lane.b32.xlu0 %v939, 32
      %v1883 = vpop.permute.xlu0 %1882
      %1884 = vrot.lane.b32.xlu0 %v940, 32
      %v1885 = vpop.permute.xlu0 %1884
      %1886 = vrot.lane.b32.xlu0 %v941, 32
      %v1887 = vpop.permute.xlu0 %1886
      %1888 = vrot.lane.b32.xlu0 %v942, 32
      %v1889 = vpop.permute.xlu0 %1888
      %1890 = vrot.lane.b32.xlu0 %v943, 32
      %v1891 = vpop.permute.xlu0 %1890
      %1892 = vrot.lane.b32.xlu0 %v944, 32
      %v1893 = vpop.permute.xlu0 %1892
      %1894 = vrot.lane.b32.xlu0 %v945, 32
      %v1895 = vpop.permute.xlu0 %1894
      %1896 = vrot.lane.b32.xlu0 %v946, 32
      %v1897 = vpop.permute.xlu0 %1896
      %1898 = vrot.lane.b32.xlu0 %v947, 32
      %v1899 = vpop.permute.xlu0 %1898
      %1900 = vrot.lane.b32.xlu0 %v948, 32
      %v1901 = vpop.permute.xlu0 %1900
      %1902 = vrot.lane.b32.xlu0 %v949, 32
      %v1903 = vpop.permute.xlu0 %1902
      %1904 = vrot.lane.b32.xlu0 %v950, 32
      %v1905 = vpop.permute.xlu0 %1904
      %1906 = vrot.lane.b32.xlu0 %v951, 32
      %v1907 = vpop.permute.xlu0 %1906
      %1908 = vrot.lane.b32.xlu0 %v952, 32
      %v1909 = vpop.permute.xlu0 %1908
      %1910 = vrot.lane.b32.xlu0 %v953, 32
      %v1911 = vpop.permute.xlu0 %1910
      %1912 = vrot.lane.b32.xlu0 %v954, 32
      %v1913 = vpop.permute.xlu0 %1912
      %1914 = vrot.lane.b32.xlu0 %v955, 32
      %v1915 = vpop.permute.xlu0 %1914
      %1916 = vrot.lane.b32.xlu0 %v956, 32
      %v1917 = vpop.permute.xlu0 %1916
      %1918 = vrot.lane.b32.xlu0 %v957, 32
      %v1919 = vpop.permute.xlu0 %1918
      %v1952 = vsel %vm204, %v472, %v991
      %v1953 = vsel %vm204, %v473, %v993
      %v1954 = vsel %vm204, %v474, %v995
      %v1955 = vsel %vm204, %v475, %v997
      %v1956 = vsel %vm204, %v476, %v999
      %v1957 = vsel %vm204, %v477, %v1001
      %v1958 = vsel %vm204, %v478, %v1003
      %v1959 = vsel %vm204, %v479, %v1005
      %v1960 = vsel %vm204, %v480, %v1007
      %v1961 = vsel %vm204, %v481, %v1009
      %v1962 = vsel %vm204, %v482, %v1011
      %v1963 = vsel %vm204, %v483, %v1013
      %v1964 = vsel %vm204, %v484, %v1015
      %v1965 = vsel %vm204, %v485, %v1017
      %v1966 = vsel %vm204, %v486, %v1019
      %v1967 = vsel %vm204, %v487, %v1021
      %v1968 = vsel %vm204, %v488, %v1023
      %v1969 = vsel %vm204, %v489, %v1025
      %v1970 = vsel %vm204, %v490, %v1027
      %v1971 = vsel %vm204, %v491, %v1029
      %v1972 = vsel %vm204, %v492, %v1031
      %v1973 = vsel %vm204, %v493, %v1033
      %v1974 = vsel %vm204, %v494, %v1035
      %v1975 = vsel %vm204, %v495, %v1037
      %v1976 = vsel %vm204, %v496, %v1039
      %v1977 = vsel %vm204, %v497, %v1041
      %v1978 = vsel %vm204, %v498, %v1043
      %v1979 = vsel %vm204, %v499, %v1045
      %v1980 = vsel %vm204, %v500, %v1047
      %v1981 = vsel %vm204, %v501, %v1049
      %v1982 = vsel %vm204, %v502, %v1051
      %v1983 = vsel %vm204, %v503, %v1053
      %vm1984 = vcmask 64512
      %v1985 = vsel %vm1984, %v1952, %v1119
      %v1986 = vsel %vm1984, %v1953, %v1121
      %v1987 = vsel %vm1984, %v1954, %v1123
      %v1988 = vsel %vm1984, %v1955, %v1125
      %v1989 = vsel %vm1984, %v1956, %v1127
      %v1990 = vsel %vm1984, %v1957, %v1129
      %v1991 = vsel %vm1984, %v1958, %v1131
      %v1992 = vsel %vm1984, %v1959, %v1133
      %v1993 = vsel %vm1984, %v1960, %v1135
      %v1994 = vsel %vm1984, %v1961, %v1137
      %v1995 = vsel %vm1984, %v1962, %v1139
      %v1996 = vsel %vm1984, %v1963, %v1141
      %v1997 = vsel %vm1984, %v1964, %v1143
      %v1998 = vsel %vm1984, %v1965, %v1145
      %v1999 = vsel %vm1984, %v1966, %v1147
      %v2000 = vsel %vm1984, %v1967, %v1149
      %v2001 = vsel %vm1984, %v1968, %v1151
      %v2002 = vsel %vm1984, %v1969, %v1153
      %v2003 = vsel %vm1984, %v1970, %v1155
      %v2004 = vsel %vm1984, %v1971, %v1157
      %v2005 = vsel %vm1984, %v1972, %v1159
      %v2006 = vsel %vm1984, %v1973, %v1161
      %v2007 = vsel %vm1984, %v1974, %v1163
      %v2008 = vsel %vm1984, %v1975, %v1165
      %v2009 = vsel %vm1984, %v1976, %v1167
      %v2010 = vsel %vm1984, %v1977, %v1169
      %v2011 = vsel %vm1984, %v1978, %v1171
      %v2012 = vsel %vm1984, %v1979, %v1173
      %v2013 = vsel %vm1984, %v1980, %v1175
      %v2014 = vsel %vm1984, %v1981, %v1177
      %v2015 = vsel %vm1984, %v1982, %v1179
      %v2016 = vsel %vm1984, %v1983, %v1181
      %vm2017 = vcmask 97280
      %v2018 = vsel %vm2017, %v1985, %v1247
      %v2019 = vsel %vm2017, %v1986, %v1249
      %v2020 = vsel %vm2017, %v1987, %v1251
      %v2021 = vsel %vm2017, %v1988, %v1253
      %v2022 = vsel %vm2017, %v1989, %v1255
      %v2023 = vsel %vm2017, %v1990, %v1257
      %v2024 = vsel %vm2017, %v1991, %v1259
      %v2025 = vsel %vm2017, %v1992, %v1261
      %v2026 = vsel %vm2017, %v1993, %v1263
      %v2027 = vsel %vm2017, %v1994, %v1265
      %v2028 = vsel %vm2017, %v1995, %v1267
      %v2029 = vsel %vm2017, %v1996, %v1269
      %v2030 = vsel %vm2017, %v1997, %v1271
      %v2031 = vsel %vm2017, %v1998, %v1273
      %v2032 = vsel %vm2017, %v1999, %v1275
      %v2033 = vsel %vm2017, %v2000, %v1277
      %v2034 = vsel %vm2017, %v2001, %v1279
      %v2035 = vsel %vm2017, %v2002, %v1281
      %v2036 = vsel %vm2017, %v2003, %v1283
      %v2037 = vsel %vm2017, %v2004, %v1285
      %v2038 = vsel %vm2017, %v2005, %v1287
      %v2039 = vsel %vm2017, %v2006, %v1289
      %v2040 = vsel %vm2017, %v2007, %v1291
      %v2041 = vsel %vm2017, %v2008, %v1293
      %v2042 = vsel %vm2017, %v2009, %v1295
      %v2043 = vsel %vm2017, %v2010, %v1297
      %v2044 = vsel %vm2017, %v2011, %v1299
      %v2045 = vsel %vm2017, %v2012, %v1301
      %v2046 = vsel %vm2017, %v2013, %v1303
      %v2047 = vsel %vm2017, %v2014, %v1305
      %v2048 = vsel %vm2017, %v2015, %v1307
      %v2049 = vsel %vm2017, %v2016, %v1309
      %vm2050 = vcmask 130048
      %v2051 = vsel %vm2050, %v2018, %v1375
      %v2052 = vsel %vm2050, %v2019, %v1377
      %v2053 = vsel %vm2050, %v2020, %v1379
      %v2054 = vsel %vm2050, %v2021, %v1381
      %v2055 = vsel %vm2050, %v2022, %v1383
      %v2056 = vsel %vm2050, %v2023, %v1385
      %v2057 = vsel %vm2050, %v2024, %v1387
      %v2058 = vsel %vm2050, %v2025, %v1389
      %v2059 = vsel %vm2050, %v2026, %v1391
      %v2060 = vsel %vm2050, %v2027, %v1393
      %v2061 = vsel %vm2050, %v2028, %v1395
      %v2062 = vsel %vm2050, %v2029, %v1397
      %v2063 = vsel %vm2050, %v2030, %v1399
      %v2064 = vsel %vm2050, %v2031, %v1401
      %v2065 = vsel %vm2050, %v2032, %v1403
      %v2066 = vsel %vm2050, %v2033, %v1405
      %v2067 = vsel %vm2050, %v2034, %v1407
      %v2068 = vsel %vm2050, %v2035, %v1409
      %v2069 = vsel %vm2050, %v2036, %v1411
      %v2070 = vsel %vm2050, %v2037, %v1413
      %v2071 = vsel %vm2050, %v2038, %v1415
      %v2072 = vsel %vm2050, %v2039, %v1417
      %v2073 = vsel %vm2050, %v2040, %v1419
      %v2074 = vsel %vm2050, %v2041, %v1421
      %v2075 = vsel %vm2050, %v2042, %v1423
      %v2076 = vsel %vm2050, %v2043, %v1425
      %v2077 = vsel %vm2050, %v2044, %v1427
      %v2078 = vsel %vm2050, %v2045, %v1429
      %v2079 = vsel %vm2050, %v2046, %v1431
      %v2080 = vsel %vm2050, %v2047, %v1433
      %v2081 = vsel %vm2050, %v2048, %v1435
      %v2082 = vsel %vm2050, %v2049, %v1437
      %vm2083 = vcmask 162816
      %v2084 = vsel %vm2083, %v2051, %v1503
      %v2085 = vsel %vm2083, %v2052, %v1505
      %v2086 = vsel %vm2083, %v2053, %v1507
      %v2087 = vsel %vm2083, %v2054, %v1509
      %v2088 = vsel %vm2083, %v2055, %v1511
      %v2089 = vsel %vm2083, %v2056, %v1513
      %v2090 = vsel %vm2083, %v2057, %v1515
      %v2091 = vsel %vm2083, %v2058, %v1517
      %v2092 = vsel %vm2083, %v2059, %v1519
      %v2093 = vsel %vm2083, %v2060, %v1521
      %v2094 = vsel %vm2083, %v2061, %v1523
      %v2095 = vsel %vm2083, %v2062, %v1525
      %v2096 = vsel %vm2083, %v2063, %v1527
      %v2097 = vsel %vm2083, %v2064, %v1529
      %v2098 = vsel %vm2083, %v2065, %v1531
      %v2099 = vsel %vm2083, %v2066, %v1533
      %v2100 = vsel %vm2083, %v2067, %v1535
      %v2101 = vsel %vm2083, %v2068, %v1537
      %v2102 = vsel %vm2083, %v2069, %v1539
      %v2103 = vsel %vm2083, %v2070, %v1541
      %v2104 = vsel %vm2083, %v2071, %v1543
      %v2105 = vsel %vm2083, %v2072, %v1545
      %v2106 = vsel %vm2083, %v2073, %v1547
      %v2107 = vsel %vm2083, %v2074, %v1549
      %v2108 = vsel %vm2083, %v2075, %v1551
      %v2109 = vsel %vm2083, %v2076, %v1553
      %v2110 = vsel %vm2083, %v2077, %v1555
      %v2111 = vsel %vm2083, %v2078, %v1557
      %v2112 = vsel %vm2083, %v2079, %v1559
      %v2113 = vsel %vm2083, %v2080, %v1561
      %v2114 = vsel %vm2083, %v2081, %v1563
      %v2115 = vsel %vm2083, %v2082, %v1565
      %vm2116 = vcmask 195584
      %v2117 = vsel %vm2116, %v2084, %v1631
      %v2118 = vsel %vm2116, %v2085, %v1633
      %v2119 = vsel %vm2116, %v2086, %v1635
      %v2120 = vsel %vm2116, %v2087, %v1637
      %v2121 = vsel %vm2116, %v2088, %v1639
      %v2122 = vsel %vm2116, %v2089, %v1641
      %v2123 = vsel %vm2116, %v2090, %v1643
      %v2124 = vsel %vm2116, %v2091, %v1645
      %v2125 = vsel %vm2116, %v2092, %v1647
      %v2126 = vsel %vm2116, %v2093, %v1649
      %v2127 = vsel %vm2116, %v2094, %v1651
      %v2128 = vsel %vm2116, %v2095, %v1653
      %v2129 = vsel %vm2116, %v2096, %v1655
      %v2130 = vsel %vm2116, %v2097, %v1657
      %v2131 = vsel %vm2116, %v2098, %v1659
      %v2132 = vsel %vm2116, %v2099, %v1661
      %v2133 = vsel %vm2116, %v2100, %v1663
      %v2134 = vsel %vm2116, %v2101, %v1665
      %v2135 = vsel %vm2116, %v2102, %v1667
      %v2136 = vsel %vm2116, %v2103, %v1669
      %v2137 = vsel %vm2116, %v2104, %v1671
      %v2138 = vsel %vm2116, %v2105, %v1673
      %v2139 = vsel %vm2116, %v2106, %v1675
      %v2140 = vsel %vm2116, %v2107, %v1677
      %v2141 = vsel %vm2116, %v2108, %v1679
      %v2142 = vsel %vm2116, %v2109, %v1681
      %v2143 = vsel %vm2116, %v2110, %v1683
      %v2144 = vsel %vm2116, %v2111, %v1685
      %v2145 = vsel %vm2116, %v2112, %v1687
      %v2146 = vsel %vm2116, %v2113, %v1689
      %v2147 = vsel %vm2116, %v2114, %v1691
      %v2148 = vsel %vm2116, %v2115, %v1693
      %vm2149 = vcmask 228352
      %v2150 = vsel %vm2149, %v2117, %v1729
      %v2151 = vsel %vm2149, %v2118, %v1731
      %v2152 = vsel %vm2149, %v2119, %v1733
      %v2153 = vsel %vm2149, %v2120, %v1735
      %v2154 = vsel %vm2149, %v2121, %v1737
      %v2155 = vsel %vm2149, %v2122, %v1739
      %v2156 = vsel %vm2149, %v2123, %v1741
      %v2157 = vsel %vm2149, %v2124, %v1743
      %v2158 = vsel %vm2149, %v2125, %v1745
      %v2159 = vsel %vm2149, %v2126, %v1747
      %v2160 = vsel %vm2149, %v2127, %v1749
      %v2161 = vsel %vm2149, %v2128, %v1751
      %v2162 = vsel %vm2149, %v2129, %v1753
      %v2163 = vsel %vm2149, %v2130, %v1755
      %v2164 = vsel %vm2149, %v2131, %v1757
      %v2165 = vsel %vm2149, %v2132, %v1759
      %v2166 = vsel %vm2149, %v2133, %v1761
      %v2167 = vsel %vm2149, %v2134, %v1763
      %v2168 = vsel %vm2149, %v2135, %v1765
      %v2169 = vsel %vm2149, %v2136, %v1767
      %v2170 = vsel %vm2149, %v2137, %v1769
      %v2171 = vsel %vm2149, %v2138, %v1771
      %v2172 = vsel %vm2149, %v2139, %v1773
      %v2173 = vsel %vm2149, %v2140, %v1775
      %v2174 = vsel %vm2149, %v2141, %v1777
      %v2175 = vsel %vm2149, %v2142, %v1779
      %v2176 = vsel %vm2149, %v2143, %v1781
      %v2177 = vsel %vm2149, %v2144, %v1783
      %v2178 = vsel %vm2149, %v2145, %v1785
      %v2179 = vsel %vm2149, %v2146, %v1787
      %v2180 = vsel %vm2149, %v2147, %v1789
      %v2181 = vsel %vm2149, %v2148, %v1791
      %vm2182 = vcmask 261120
      %v2183 = vsel %vm2182, %v2150, %v1857
      %v2184 = vsel %vm2182, %v2151, %v1859
      %v2185 = vsel %vm2182, %v2152, %v1861
      %v2186 = vsel %vm2182, %v2153, %v1863
      %v2187 = vsel %vm2182, %v2154, %v1865
      %v2188 = vsel %vm2182, %v2155, %v1867
      %v2189 = vsel %vm2182, %v2156, %v1869
      %v2190 = vsel %vm2182, %v2157, %v1871
      %v2191 = vsel %vm2182, %v2158, %v1873
      %v2192 = vsel %vm2182, %v2159, %v1875
      %v2193 = vsel %vm2182, %v2160, %v1877
      %v2194 = vsel %vm2182, %v2161, %v1879
      %v2195 = vsel %vm2182, %v2162, %v1881
      %v2196 = vsel %vm2182, %v2163, %v1883
      %v2197 = vsel %vm2182, %v2164, %v1885
      %v2198 = vsel %vm2182, %v2165, %v1887
      %v2199 = vsel %vm2182, %v2166, %v1889
      %v2200 = vsel %vm2182, %v2167, %v1891
      %v2201 = vsel %vm2182, %v2168, %v1893
      %v2202 = vsel %vm2182, %v2169, %v1895
      %v2203 = vsel %vm2182, %v2170, %v1897
      %v2204 = vsel %vm2182, %v2171, %v1899
      %v2205 = vsel %vm2182, %v2172, %v1901
      %v2206 = vsel %vm2182, %v2173, %v1903
      %v2207 = vsel %vm2182, %v2174, %v1905
      %v2208 = vsel %vm2182, %v2175, %v1907
      %v2209 = vsel %vm2182, %v2176, %v1909
      %v2210 = vsel %vm2182, %v2177, %v1911
      %v2211 = vsel %vm2182, %v2178, %v1913
      %v2212 = vsel %vm2182, %v2179, %v1915
      %v2213 = vsel %vm2182, %v2180, %v1917
      %v2214 = vsel %vm2182, %v2181, %v1919
      %v2215 = vpack.c.bf16 %v2184, %v2183
      %v2216 = vpack.c.bf16 %v2186, %v2185
      %v2217 = vpack.c.bf16 %v2188, %v2187
      %v2218 = vpack.c.bf16 %v2190, %v2189
      %v2219 = vpack.c.bf16 %v2192, %v2191
      %v2220 = vpack.c.bf16 %v2194, %v2193
      %v2221 = vpack.c.bf16 %v2196, %v2195
      %v2222 = vpack.c.bf16 %v2198, %v2197
      %v2223 = vpack.c.bf16 %v2200, %v2199
      %v2224 = vpack.c.bf16 %v2202, %v2201
      %v2225 = vpack.c.bf16 %v2204, %v2203
      %v2226 = vpack.c.bf16 %v2206, %v2205
      %v2227 = vpack.c.bf16 %v2208, %v2207
      %v2228 = vpack.c.bf16 %v2210, %v2209
      %v2229 = vpack.c.bf16 %v2212, %v2211
      %v2230 = vpack.c.bf16 %v2214, %v2213
      %v2236 = vunpack.c.l.b16 %v275
      %v2237 = vunpack.c.l.b16 %v276
      %v2238 = vunpack.c.l.b16 %v277
      %v2239 = vunpack.c.l.b16 %v278
      %v2240 = vunpack.c.l.b16 %v279
      %v2241 = vpack.c.b16 %v2237, %v2236
      %v2242 = vpack.c.b16 %v2239, %v2238
      %v2243 = vpack.c.b16 %v2240, %v2240
      %vm2246 = vcmask 293888
      %v2248 = vsel %vm2246, %v2215, 0
      %v2251 = vsel %vm2246, %v2216, 0
      %v2254 = vsel %vm2246, %v2217, 0
      %v2257 = vsel %vm2246, %v2218, 0
      %v2260 = vsel %vm2246, %v2219, 0
      %v2263 = vsel %vm2246, %v2220, 0
      %v2266 = vsel %vm2246, %v2221, 0
      %v2269 = vsel %vm2246, %v2222, 0
      %v2272 = vsel %vm2246, %v2223, 0
      %v2275 = vsel %vm2246, %v2224, 0
      %v2278 = vsel %vm2246, %v2225, 0
      %v2281 = vsel %vm2246, %v2226, 0
      %v2284 = vsel %vm2246, %v2227, 0
      %v2287 = vsel %vm2246, %v2228, 0
      %v2290 = vsel %vm2246, %v2229, 0
      %v2293 = vsel %vm2246, %v2230, 0
      %vm2295 = vcmask 1041408
      %v2297 = vsel %vm2295, %v2243, 0
      %2299 = vmatprep.subr.bf16.mxu0 0
      %2300 = vmatpush1.bf16.msra.mxu0 %v2241
      %2301 = vmatprep.subr.bf16.mxu0 0
      %2302 = vmatpush1.bf16.msra.mxu0 %v2242
      %2303 = vmatprep.subr.bf16.mxu0 0
      %2304 = vmatpush1.bf16.msra.mxu0 %v2297
      %2305 = vmatprep.subr.bf16.mxu0 0
      %2306 = vmatpush1.bf16.msra.mxu0 0
      %2307 = vmatprep.subr.bf16.mxu0 0
      %2308 = vmatpush1.bf16.msra.mxu0 0
      %2309 = vmatprep.subr.bf16.mxu0 0
      %2310 = vmatpush1.bf16.msra.mxu0 0
      %2311 = vmatprep.subr.bf16.mxu0 0
      %2312 = vmatpush1.bf16.msra.mxu0 0
      %2313 = vmatprep.subr.bf16.mxu0 0
      %2314 = vmatpush1.bf16.msra.mxu0 0
      %2315 = vmatprep.subr.bf16.mxu0 0
      %2316 = vmatpush1.bf16.msra.mxu0 0
      %2317 = vmatprep.subr.bf16.mxu0 0
      %2318 = vmatpush1.bf16.msra.mxu0 0
      %2319 = vmatprep.subr.bf16.mxu0 0
      %2320 = vmatpush1.bf16.msra.mxu0 0
      %2321 = vmatprep.subr.bf16.mxu0 0
      %2322 = vmatpush1.bf16.msra.mxu0 0
      %2323 = vmatprep.subr.bf16.mxu0 0
      %2324 = vmatpush1.bf16.msra.mxu0 0
      %2325 = vmatprep.subr.bf16.mxu0 0
      %2326 = vmatpush1.bf16.msra.mxu0 0
      %2327 = vmatprep.subr.bf16.mxu0 0
      %2328 = vmatpush1.bf16.msra.mxu0 0
      %2329 = vmatprep.subr.bf16.mxu0 0
      %2330 = vmatpush1.bf16.msra.mxu0 0
      %2331 = vmatprep.mubr.bf16.mxu0 0
      %2332 = vmatmul.mubr.bf16.gmra.mrb[0].mxu0 %v2248
      %v2333 = vpop.f32.mrb[0].mxu0
      %v2334 = vadd.f32 0.0, %v2333
      %v2335 = vpop.f32.mrb[0].mxu0
      %v2336 = vpop.f32.mrb[0].mxu0
      %v2337 = vadd.f32 0.0, %v2336
      %v2338 = vpop.f32.mrb[0].mxu0
      %2339 = vmatprep.mubr.bf16.mxu0 0
      %2340 = vmatmul.mubr.bf16.gmra.mrb[0].mxu0 %v2251
      %v2341 = vpop.f32.mrb[0].mxu0
      %v2342 = vadd.f32 0.0, %v2341
      %v2343 = vpop.f32.mrb[0].mxu0
      %v2344 = vpop.f32.mrb[0].mxu0
      %v2345 = vadd.f32 0.0, %v2344
      %v2346 = vpop.f32.mrb[0].mxu0
      %2347 = vmatprep.mubr.bf16.mxu0 0
      %2348 = vmatmul.mubr.bf16.gmra.mrb[0].mxu0 %v2254
      %v2349 = vpop.f32.mrb[0].mxu0
      %v2350 = vadd.f32 0.0, %v2349
      %v2351 = vpop.f32.mrb[0].mxu0
      %v2352 = vpop.f32.mrb[0].mxu0
      %v2353 = vadd.f32 0.0, %v2352
      %v2354 = vpop.f32.mrb[0].mxu0
      %2355 = vmatprep.mubr.bf16.mxu0 0
      %2356 = vmatmul.mubr.bf16.gmra.mrb[0].mxu0 %v2257
      %v2357 = vpop.f32.mrb[0].mxu0
      %v2358 = vadd.f32 0.0, %v2357
      %v2359 = vpop.f32.mrb[0].mxu0
      %v2360 = vpop.f32.mrb[0].mxu0
      %v2361 = vadd.f32 0.0, %v2360
      %v2362 = vpop.f32.mrb[0].mxu0
      %2363 = vmatprep.mubr.bf16.mxu0 0
      %2364 = vmatmul.mubr.bf16.gmra.mrb[0].mxu0 %v2260
      %v2365 = vpop.f32.mrb[0].mxu0
      %v2366 = vadd.f32 0.0, %v2365
      %v2367 = vpop.f32.mrb[0].mxu0
      %v2368 = vpop.f32.mrb[0].mxu0
      %v2369 = vadd.f32 0.0, %v2368
      %v2370 = vpop.f32.mrb[0].mxu0
      %2371 = vmatprep.mubr.bf16.mxu0 0
      %2372 = vmatmul.mubr.bf16.gmra.mrb[0].mxu0 %v2263
      %v2373 = vpop.f32.mrb[0].mxu0
      %v2374 = vadd.f32 0.0, %v2373
      %v2375 = vpop.f32.mrb[0].mxu0
      %v2376 = vpop.f32.mrb[0].mxu0
      %v2377 = vadd.f32 0.0, %v2376
      %v2378 = vpop.f32.mrb[0].mxu0
      %2379 = vmatprep.mubr.bf16.mxu0 0
      %2380 = vmatmul.mubr.bf16.gmra.mrb[0].mxu0 %v2266
      %v2381 = vpop.f32.mrb[0].mxu0
      %v2382 = vadd.f32 0.0, %v2381
      %v2383 = vpop.f32.mrb[0].mxu0
      %v2384 = vpop.f32.mrb[0].mxu0
      %v2385 = vadd.f32 0.0, %v2384
      %v2386 = vpop.f32.mrb[0].mxu0
      %2387 = vmatprep.mubr.bf16.mxu0 0
      %2388 = vmatmul.mubr.bf16.gmra.mrb[0].mxu0 %v2269
      %v2389 = vpop.f32.mrb[0].mxu0
      %v2390 = vadd.f32 0.0, %v2389
      %v2391 = vpop.f32.mrb[0].mxu0
      %v2392 = vpop.f32.mrb[0].mxu0
      %v2393 = vadd.f32 0.0, %v2392
      %v2394 = vpop.f32.mrb[0].mxu0
      %2395 = vmatprep.mubr.bf16.mxu0 0
      %2396 = vmatmul.mubr.bf16.gmra.mrb[0].mxu0 %v2272
      %v2397 = vpop.f32.mrb[0].mxu0
      %v2398 = vadd.f32 0.0, %v2397
      %v2399 = vpop.f32.mrb[0].mxu0
      %v2400 = vpop.f32.mrb[0].mxu0
      %v2401 = vadd.f32 0.0, %v2400
      %v2402 = vpop.f32.mrb[0].mxu0
      %2403 = vmatprep.mubr.bf16.mxu0 0
      %2404 = vmatmul.mubr.bf16.gmra.mrb[0].mxu0 %v2275
      %v2405 = vpop.f32.mrb[0].mxu0
      %v2406 = vadd.f32 0.0, %v2405
      %v2407 = vpop.f32.mrb[0].mxu0
      %v2408 = vpop.f32.mrb[0].mxu0
      %v2409 = vadd.f32 0.0, %v2408
      %v2410 = vpop.f32.mrb[0].mxu0
      %2411 = vmatprep.mubr.bf16.mxu0 0
      %2412 = vmatmul.mubr.bf16.gmra.mrb[0].mxu0 %v2278
      %v2413 = vpop.f32.mrb[0].mxu0
      %v2414 = vadd.f32 0.0, %v2413
      %v2415 = vpop.f32.mrb[0].mxu0
      %v2416 = vpop.f32.mrb[0].mxu0
      %v2417 = vadd.f32 0.0, %v2416
      %v2418 = vpop.f32.mrb[0].mxu0
      %2419 = vmatprep.mubr.bf16.mxu0 0
      %2420 = vmatmul.mubr.bf16.gmra.mrb[0].mxu0 %v2281
      %v2421 = vpop.f32.mrb[0].mxu0
      %v2422 = vadd.f32 0.0, %v2421
      %v2423 = vpop.f32.mrb[0].mxu0
      %v2424 = vpop.f32.mrb[0].mxu0
      %v2425 = vadd.f32 0.0, %v2424
      %v2426 = vpop.f32.mrb[0].mxu0
      %2427 = vmatprep.mubr.bf16.mxu0 0
      %2428 = vmatmul.mubr.bf16.gmra.mrb[0].mxu0 %v2284
      %v2429 = vpop.f32.mrb[0].mxu0
      %v2430 = vadd.f32 0.0, %v2429
      %v2431 = vpop.f32.mrb[0].mxu0
      %v2432 = vpop.f32.mrb[0].mxu0
      %v2433 = vadd.f32 0.0, %v2432
      %v2434 = vpop.f32.mrb[0].mxu0
      %2435 = vmatprep.mubr.bf16.mxu0 0
      %2436 = vmatmul.mubr.bf16.gmra.mrb[0].mxu0 %v2287
      %v2437 = vpop.f32.mrb[0].mxu0
      %v2438 = vadd.f32 0.0, %v2437
      %v2439 = vpop.f32.mrb[0].mxu0
      %v2440 = vpop.f32.mrb[0].mxu0
      %v2441 = vadd.f32 0.0, %v2440
      %v2442 = vpop.f32.mrb[0].mxu0
      %2443 = vmatprep.mubr.bf16.mxu0 0
      %2444 = vmatmul.mubr.bf16.gmra.mrb[0].mxu0 %v2290
      %v2445 = vpop.f32.mrb[0].mxu0
      %v2446 = vadd.f32 0.0, %v2445
      %v2447 = vpop.f32.mrb[0].mxu0
      %v2448 = vpop.f32.mrb[0].mxu0
      %v2449 = vadd.f32 0.0, %v2448
      %v2450 = vpop.f32.mrb[0].mxu0
      %2451 = vmatprep.mubr.bf16.mxu0 0
      %2452 = vmatmul.mubr.bf16.gmra.mrb[0].mxu0 %v2293
      %v2453 = vpop.f32.mrb[0].mxu0
      %v2454 = vadd.f32 0.0, %v2453
      %v2455 = vpop.f32.mrb[0].mxu0
      %v2456 = vpop.f32.mrb[0].mxu0
      %v2457 = vadd.f32 0.0, %v2456
      %v2458 = vpop.f32.mrb[0].mxu0
      %2459 = vdwg.mxu0
      %2460 = vst.msk [vmem:[%s170] sm:$0xff] %vm1984, %v2334
      %2461 = vst.msk [vmem:[%s170 + $0x8] sm:$0xff] %vm1984, %v2337
      %2462 = vst.msk [vmem:[%s170 + $0x10] sm:$0xff] %vm1984, %v2342
      %2463 = vst.msk [vmem:[%s170 + $0x18] sm:$0xff] %vm1984, %v2345
      %2464 = vst.msk [vmem:[%s170 + $0x20] sm:$0xff] %vm1984, %v2350
      %2465 = vst.msk [vmem:[%s170 + $0x28] sm:$0xff] %vm1984, %v2353
      %2466 = vst.msk [vmem:[%s170 + $0x30] sm:$0xff] %vm1984, %v2358
      %2467 = vst.msk [vmem:[%s170 + $0x38] sm:$0xff] %vm1984, %v2361
      %2468 = vst.msk [vmem:[%s170 + $0x40] sm:$0xff] %vm1984, %v2366
      %2469 = vst.msk [vmem:[%s170 + $0x48] sm:$0xff] %vm1984, %v2369
      %2470 = vst.msk [vmem:[%s170 + $0x50] sm:$0xff] %vm1984, %v2374
      %2471 = vst.msk [vmem:[%s170 + $0x58] sm:$0xff] %vm1984, %v2377
      %2472 = vst.msk [vmem:[%s170 + $0x60] sm:$0xff] %vm1984, %v2382
      %2473 = vst.msk [vmem:[%s170 + $0x68] sm:$0xff] %vm1984, %v2385
      %2474 = vst.msk [vmem:[%s170 + $0x70] sm:$0xff] %vm1984, %v2390
      %2475 = vst.msk [vmem:[%s170 + $0x78] sm:$0xff] %vm1984, %v2393
      %2476 = vst.msk [vmem:[%s170 + $0x80] sm:$0xff] %vm1984, %v2398
      %2477 = vst.msk [vmem:[%s170 + $0x88] sm:$0xff] %vm1984, %v2401
      %2478 = vst.msk [vmem:[%s170 + $0x90] sm:$0xff] %vm1984, %v2406
      %2479 = vst.msk [vmem:[%s170 + $0x98] sm:$0xff] %vm1984, %v2409
      %2480 = vst.msk [vmem:[%s170 + $0xa0] sm:$0xff] %vm1984, %v2414
      %2481 = vst.msk [vmem:[%s170 + $0xa8] sm:$0xff] %vm1984, %v2417
      %2482 = vst.msk [vmem:[%s170 + $0xb0] sm:$0xff] %vm1984, %v2422
      %2483 = vst.msk [vmem:[%s170 + $0xb8] sm:$0xff] %vm1984, %v2425
      %2484 = vst.msk [vmem:[%s170 + $0xc0] sm:$0xff] %vm1984, %v2430
      %2485 = vst.msk [vmem:[%s170 + $0xc8] sm:$0xff] %vm1984, %v2433
      %2486 = vst.msk [vmem:[%s170 + $0xd0] sm:$0xff] %vm1984, %v2438
      %2487 = vst.msk [vmem:[%s170 + $0xd8] sm:$0xff] %vm1984, %v2441
      %2488 = vst.msk [vmem:[%s170 + $0xe0] sm:$0xff] %vm1984, %v2446
      %2489 = vst.msk [vmem:[%s170 + $0xe8] sm:$0xff] %vm1984, %v2449
      %2490 = vst.msk [vmem:[%s170 + $0xf0] sm:$0xff] %vm1984, %v2454
      %2491 = vst.msk [vmem:[%s170 + $0xf8] sm:$0xff] %vm1984, %v2457
      %p2492 = scmp.lt.s32.totalorder %s14, 1
      %s2493 = scalar_select %p2492, %s14, 1
      %s2494 = smul.addr %s2493, 32
      %s2495 = smul.addr %s2494, 8
      %s2496 = scalar_lea.vmem %s3, %s2495
      // Predicated region
      $region33: #{uresnet_encoder_forward.9} parent=31 // pred_check
        %p2497 = pneg %p100
      $region34: #{uresnet_encoder_forward.9} parent=31 // pred_check_branch
        %2499 = sbr.rel (%p2497) target = $region36
      $region35: #{uresnet_encoder_forward.9} parent=31 // pred_region
        _
      $region36: #{uresnet_encoder_forward.9} parent=31 // pred_fallthru
        _
    $region32: #{uresnet_encoder_forward.9} parent=5 // pred_fallthru
      _
    %p2500 = scmp.le.s32.totalorder 2, %s9
    // Predicated region
    $region37: #{uresnet_encoder_forward.9} parent=5 // pred_check
      %p2501 = pneg %p2500
    $region38: #{uresnet_encoder_forward.9} parent=5 // pred_check_branch
      %2503 = sbr.rel (%p2501) target = $region40
    $region39: #{uresnet_encoder_forward.9} parent=5 // pred_region
      %s2504 = ssub.s32 %s9, 2
      // Predicated region
      $region41: #{uresnet_encoder_forward.9} parent=39 // pred_check
        %p2505 = pneg %p106
      $region42: #{uresnet_encoder_forward.9} parent=39 // pred_check_branch
        %2507 = sbr.rel (%p2505) target = $region44
      $region43: #{uresnet_encoder_forward.9} parent=39 // pred_region
        %p2508 = scmp.lt.s32.totalorder %s15, 1
        %s2509 = scalar_select %p2508, %s15, 1
        %s2510 = smul.addr %s2509, 32
        %s2511 = smul.addr %s2510, 8
        %s2512 = scalar_lea.vmem %s3, %s2511
      $region44: #{uresnet_encoder_forward.9} parent=39 // pred_fallthru
        _
    $region40: #{uresnet_encoder_forward.9} parent=5 // pred_fallthru
      _
  $region6: #{uresnet_encoder_forward.9} parent=0 // loop_footer
    %s13 = sadd.s32 1, %s9
  $region7: #{uresnet_encoder_forward.9} parent=0 // loop_footer_branch
    %8 = sbr.rel target = $region3
  $region8: #{uresnet_encoder_forward.9} parent=0 // loop_exit
    _

// kernel: uresnet_encoder_forward.13
$region0: #{uresnet_encoder_forward.13}
  #allocation0 [shape = 'u32[]', space=smem, size = 0x4, offset = 0x4, fixed_abs, tag = 'smem constant byte address 0x4 - core index']
  #allocation1 [shape = 'u32[144,128]{1,0:T(1,128)}', space=vmem, size = 0x12000, scoped, tag = 'internal scratch']
  #allocation2 [shape = 'f32[96,16]{1,0:T(8,128)}', space=vmem, size = 0xc000, scoped, tag = 'scratch operand']
  %s0 = inlined_call_operand.vmem [shape: f32[2,64,16], index: 0, kind: input, shape index: {}]
  %s1 = inlined_call_operand.vmem [shape: bf16[144,16], index: 1, kind: input, shape index: {}]
  %s2 = inlined_call_operand.vmem [shape: bf16[144,16], index: 2, kind: input, shape index: {}]
  %s3 = inlined_call_operand.vmem [shape: f32[1,16], index: 3, kind: input, shape index: {}]
  %s4 = inlined_call_operand.vmem [shape: f32[1,16], index: 4, kind: input, shape index: {}]
  %s5 = inlined_call_operand.vmem [shape: f32[1,16], index: 5, kind: input, shape index: {}]
  %s6 = inlined_call_operand.vmem [shape: f32[1,16], index: 6, kind: input, shape index: {}]
  %s7 = inlined_call_operand.vmem [shape: f32[64,2], index: 7, kind: input, shape index: {}]
  %s8 = inlined_call_operand.vmem [shape: f32[2,64,16], index: 8, kind: output, shape index: {}]
  %s9 = sld [smem:[#allocation0]]
  $region65: #{uresnet_encoder_forward.13} parent=0
    _
  %s11 = ssub.s32 1, %s9
  %s12 = scalar_select 0, %s11, %s9
  loop: start=0, step=1, limit=4
  $region2: #{uresnet_encoder_forward.13} parent=0 // loop_pre_header
    _
  $region3: #{uresnet_encoder_forward.13} parent=0 // loop_header
    %s14 = sphi 0, %s18
    %p15 = scmp.ge.s32.totalorder %s14, 4
    %s24 = sphi 0, %s26
    %s27 = sphi 0, %s24
    %s28 = sphi 0, %s27
    %s44 = sphi 0, %s28
    %s48 = sphi 0, %s48
    %s50 = sphi 0, %s48
    %s51 = sphi 0, %s50
    %s65 = sphi 0, %s51
    %s69 = sphi 0, %s69
    %s71 = sphi 0, %s69
    %s72 = sphi 0, %s71
    %s86 = sphi 0, %s72
    %s90 = sphi 0, %s90
    %s92 = sphi 0, %s90
    %s93 = sphi 0, %s92
    %s107 = sphi 0, %s93
    %s111 = sphi 0, %s111
    %s113 = sphi 0, %s111
    %s114 = sphi 0, %s113
    %s128 = sphi 0, %s114
    %s132 = sphi 0, %s132
    %s134 = sphi 0, %s132
    %s135 = sphi 0, %s134
    %s149 = sphi 0, %s135
    %s153 = sphi 0, %s153
    %s155 = sphi 0, %s153
    %s156 = sphi 0, %s155
    %s170 = sphi 0, %s156
    %s174 = sphi 0, %s174
    %s176 = sphi 0, %s174
    %s177 = sphi 0, %s176
    %s191 = sphi 0, %s177
    %s197 = sphi 0, %s199
    %s200 = sphi 0, %s197
    %s201 = sphi 0, %s200
    %s217 = sphi 0, %s201
  $region4: #{uresnet_encoder_forward.13} parent=0 // loop_header_branch
    %17 = sbr.rel (%p15) target = $region8
  $region5: #{uresnet_encoder_forward.13} parent=0 // loop_body
    %s19 = ssub.s32 %s14, 1
    %s20 = ssub.s32 %s14, 2
    %s21 = sadd.s32 %s14, 1
    %s22 = ssub.s32 %s14, %s21
    %p23 = scmp.eq.s32.totalorder %s22, 0
    %s25 = sadd.s32 %s24, 1
    %s26 = scalar_select %p23, %s24, %s25
    %p29 = pneg %p23
    %p30 = scmp.eq.s32.totalorder %s14, 1
    %p31 = por %p29, %p30
    %p32 = scmp.ne.s32.totalorder %s24, %s27
    %p33 = scmp.eq.s32.totalorder %s14, 0
    %p34 = por %p32, %p33
    %p35 = scmp.ne.s32.totalorder %s24, %s27
    %p36 = scmp.eq.s32.totalorder %s19, 1
    %p37 = por %p35, %p36
    %p38 = scmp.ne.s32.totalorder %s27, %s28
    %p39 = scmp.eq.s32.totalorder %s19, 0
    %p40 = por %p38, %p39
    %p41 = scmp.ne.s32.totalorder %s27, %s28
    %p42 = scmp.eq.s32.totalorder %s20, 1
    %p43 = por %p41, %p42
    %p45 = scmp.ne.s32.totalorder %s28, %s44
    %p46 = scmp.eq.s32.totalorder %s20, 0
    %p47 = por %p45, %p46
    %s49 = sadd.s32 %s48, 1
    %p52 = scmp.eq.s32.totalorder %s14, 1
    %p53 = scmp.ne.s32.totalorder %s48, %s50
    %p54 = scmp.eq.s32.totalorder %s14, 0
    %p55 = por %p53, %p54
    %p56 = scmp.ne.s32.totalorder %s48, %s50
    %p57 = scmp.eq.s32.totalorder %s19, 1
    %p58 = por %p56, %p57
    %p59 = scmp.ne.s32.totalorder %s50, %s51
    %p60 = scmp.eq.s32.totalorder %s19, 0
    %p61 = por %p59, %p60
    %p62 = scmp.ne.s32.totalorder %s50, %s51
    %p63 = scmp.eq.s32.totalorder %s20, 1
    %p64 = por %p62, %p63
    %p66 = scmp.ne.s32.totalorder %s51, %s65
    %p67 = scmp.eq.s32.totalorder %s20, 0
    %p68 = por %p66, %p67
    %s70 = sadd.s32 %s69, 1
    %p73 = scmp.eq.s32.totalorder %s14, 1
    %p74 = scmp.ne.s32.totalorder %s69, %s71
    %p75 = scmp.eq.s32.totalorder %s14, 0
    %p76 = por %p74, %p75
    %p77 = scmp.ne.s32.totalorder %s69, %s71
    %p78 = scmp.eq.s32.totalorder %s19, 1
    %p79 = por %p77, %p78
    %p80 = scmp.ne.s32.totalorder %s71, %s72
    %p81 = scmp.eq.s32.totalorder %s19, 0
    %p82 = por %p80, %p81
    %p83 = scmp.ne.s32.totalorder %s71, %s72
    %p84 = scmp.eq.s32.totalorder %s20, 1
    %p85 = por %p83, %p84
    %p87 = scmp.ne.s32.totalorder %s72, %s86
    %p88 = scmp.eq.s32.totalorder %s20, 0
    %p89 = por %p87, %p88
    %s91 = sadd.s32 %s90, 1
    %p94 = scmp.eq.s32.totalorder %s14, 1
    %p95 = scmp.ne.s32.totalorder %s90, %s92
    %p96 = scmp.eq.s32.totalorder %s14, 0
    %p97 = por %p95, %p96
    %p98 = scmp.ne.s32.totalorder %s90, %s92
    %p99 = scmp.eq.s32.totalorder %s19, 1
    %p100 = por %p98, %p99
    %p101 = scmp.ne.s32.totalorder %s92, %s93
    %p102 = scmp.eq.s32.totalorder %s19, 0
    %p103 = por %p101, %p102
    %p104 = scmp.ne.s32.totalorder %s92, %s93
    %p105 = scmp.eq.s32.totalorder %s20, 1
    %p106 = por %p104, %p105
    %p108 = scmp.ne.s32.totalorder %s93, %s107
    %p109 = scmp.eq.s32.totalorder %s20, 0
    %p110 = por %p108, %p109
    %s112 = sadd.s32 %s111, 1
    %p115 = scmp.eq.s32.totalorder %s14, 1
    %p116 = scmp.ne.s32.totalorder %s111, %s113
    %p117 = scmp.eq.s32.totalorder %s14, 0
    %p118 = por %p116, %p117
    %p119 = scmp.ne.s32.totalorder %s111, %s113
    %p120 = scmp.eq.s32.totalorder %s19, 1
    %p121 = por %p119, %p120
    %p122 = scmp.ne.s32.totalorder %s113, %s114
    %p123 = scmp.eq.s32.totalorder %s19, 0
    %p124 = por %p122, %p123
    %p125 = scmp.ne.s32.totalorder %s113, %s114
    %p126 = scmp.eq.s32.totalorder %s20, 1
    %p127 = por %p125, %p126
    %p129 = scmp.ne.s32.totalorder %s114, %s128
    %p130 = scmp.eq.s32.totalorder %s20, 0
    %p131 = por %p129, %p130
    %s133 = sadd.s32 %s132, 1
    %p136 = scmp.eq.s32.totalorder %s14, 1
    %p137 = scmp.ne.s32.totalorder %s132, %s134
    %p138 = scmp.eq.s32.totalorder %s14, 0
    %p139 = por %p137, %p138
    %p140 = scmp.ne.s32.totalorder %s132, %s134
    %p141 = scmp.eq.s32.totalorder %s19, 1
    %p142 = por %p140, %p141
    %p143 = scmp.ne.s32.totalorder %s134, %s135
    %p144 = scmp.eq.s32.totalorder %s19, 0
    %p145 = por %p143, %p144
    %p146 = scmp.ne.s32.totalorder %s134, %s135
    %p147 = scmp.eq.s32.totalorder %s20, 1
    %p148 = por %p146, %p147
    %p150 = scmp.ne.s32.totalorder %s135, %s149
    %p151 = scmp.eq.s32.totalorder %s20, 0
    %p152 = por %p150, %p151
    %s154 = sadd.s32 %s153, 1
    %p157 = scmp.eq.s32.totalorder %s14, 1
    %p158 = scmp.ne.s32.totalorder %s153, %s155
    %p159 = scmp.eq.s32.totalorder %s14, 0
    %p160 = por %p158, %p159
    %p161 = scmp.ne.s32.totalorder %s153, %s155
    %p162 = scmp.eq.s32.totalorder %s19, 1
    %p163 = por %p161, %p162
    %p164 = scmp.ne.s32.totalorder %s155, %s156
    %p165 = scmp.eq.s32.totalorder %s19, 0
    %p166 = por %p164, %p165
    %p167 = scmp.ne.s32.totalorder %s155, %s156
    %p168 = scmp.eq.s32.totalorder %s20, 1
    %p169 = por %p167, %p168
    %p171 = scmp.ne.s32.totalorder %s156, %s170
    %p172 = scmp.eq.s32.totalorder %s20, 0
    %p173 = por %p171, %p172
    %s175 = sadd.s32 %s174, 1
    %p178 = scmp.eq.s32.totalorder %s14, 1
    %p179 = scmp.ne.s32.totalorder %s174, %s176
    %p180 = scmp.eq.s32.totalorder %s14, 0
    %p181 = por %p179, %p180
    %p182 = scmp.ne.s32.totalorder %s174, %s176
    %p183 = scmp.eq.s32.totalorder %s19, 1
    %p184 = por %p182, %p183
    %p185 = scmp.ne.s32.totalorder %s176, %s177
    %p186 = scmp.eq.s32.totalorder %s19, 0
    %p187 = por %p185, %p186
    %p188 = scmp.ne.s32.totalorder %s176, %s177
    %p189 = scmp.eq.s32.totalorder %s20, 1
    %p190 = por %p188, %p189
    %p192 = scmp.ne.s32.totalorder %s177, %s191
    %p193 = scmp.eq.s32.totalorder %s20, 0
    %p194 = por %p192, %p193
    %s195 = ssub.s32 %s14, %s21
    %p196 = scmp.eq.s32.totalorder %s195, 0
    %s198 = sadd.s32 %s197, 1
    %s199 = scalar_select %p196, %s197, %s198
    %p202 = pneg %p196
    %p203 = scmp.eq.s32.totalorder %s14, 1
    %p204 = por %p202, %p203
    %p205 = scmp.ne.s32.totalorder %s197, %s200
    %p206 = scmp.eq.s32.totalorder %s14, 0
    %p207 = por %p205, %p206
    %p208 = scmp.ne.s32.totalorder %s197, %s200
    %p209 = scmp.eq.s32.totalorder %s19, 1
    %p210 = por %p208, %p209
    %p211 = scmp.ne.s32.totalorder %s200, %s201
    %p212 = scmp.eq.s32.totalorder %s19, 0
    %p213 = por %p211, %p212
    %p214 = scmp.ne.s32.totalorder %s200, %s201
    %p215 = scmp.eq.s32.totalorder %s20, 1
    %p216 = por %p214, %p215
    %p218 = scmp.ne.s32.totalorder %s201, %s217
    %p219 = scmp.eq.s32.totalorder %s20, 0
    %p220 = por %p218, %p219
    %p221 = scmp.le.s32.totalorder 1, %s14
    %p222 = scmp.lt.s32.totalorder %s14, 3
    %p223 = pnand %p221, %p222
    %p224 = pneg %p223
    // Predicated region
    $region9: #{uresnet_encoder_forward.13} parent=5 // pred_check
      _
    $region10: #{uresnet_encoder_forward.13} parent=5 // pred_check_branch
      %226 = sbr.rel (%p223) target = $region12
    $region11: #{uresnet_encoder_forward.13} parent=5 // pred_region
      %s227 = ssub.s32 %s14, 1
      // Predicated region
      $region13: #{uresnet_encoder_forward.13} parent=11 // pred_check
        %p228 = pneg %p61
      $region14: #{uresnet_encoder_forward.13} parent=11 // pred_check_branch
        %230 = sbr.rel (%p228) target = $region16
      $region15: #{uresnet_encoder_forward.13} parent=11 // pred_region
        _
      $region16: #{uresnet_encoder_forward.13} parent=11 // pred_fallthru
        _
      // Predicated region
      $region17: #{uresnet_encoder_forward.13} parent=11 // pred_check
        %p231 = pneg %p82
      $region18: #{uresnet_encoder_forward.13} parent=11 // pred_check_branch
        %233 = sbr.rel (%p231) target = $region20
      $region19: #{uresnet_encoder_forward.13} parent=11 // pred_region
        _
      $region20: #{uresnet_encoder_forward.13} parent=11 // pred_fallthru
        _
      // Predicated region
      $region21: #{uresnet_encoder_forward.13} parent=11 // pred_check
        %p234 = pneg %p103
      $region22: #{uresnet_encoder_forward.13} parent=11 // pred_check_branch
        %236 = sbr.rel (%p234) target = $region24
      $region23: #{uresnet_encoder_forward.13} parent=11 // pred_region
        _
      $region24: #{uresnet_encoder_forward.13} parent=11 // pred_fallthru
        _
      // Predicated region
      $region25: #{uresnet_encoder_forward.13} parent=11 // pred_check
        %p237 = pneg %p124
      $region26: #{uresnet_encoder_forward.13} parent=11 // pred_check_branch
        %239 = sbr.rel (%p237) target = $region28
      $region27: #{uresnet_encoder_forward.13} parent=11 // pred_region
        _
      $region28: #{uresnet_encoder_forward.13} parent=11 // pred_fallthru
        _
      // Predicated region
      $region29: #{uresnet_encoder_forward.13} parent=11 // pred_check
        %p240 = pneg %p145
      $region30: #{uresnet_encoder_forward.13} parent=11 // pred_check_branch
        %242 = sbr.rel (%p240) target = $region32
      $region31: #{uresnet_encoder_forward.13} parent=11 // pred_region
        _
      $region32: #{uresnet_encoder_forward.13} parent=11 // pred_fallthru
        _
      // Predicated region
      $region33: #{uresnet_encoder_forward.13} parent=11 // pred_check
        %p243 = pneg %p166
      $region34: #{uresnet_encoder_forward.13} parent=11 // pred_check_branch
        %245 = sbr.rel (%p243) target = $region36
      $region35: #{uresnet_encoder_forward.13} parent=11 // pred_region
        _
      $region36: #{uresnet_encoder_forward.13} parent=11 // pred_fallthru
        _
      // Predicated region
      $region37: #{uresnet_encoder_forward.13} parent=11 // pred_check
        %p246 = pneg %p187
      $region38: #{uresnet_encoder_forward.13} parent=11 // pred_check_branch
        %248 = sbr.rel (%p246) target = $region40
      $region39: #{uresnet_encoder_forward.13} parent=11 // pred_region
        _
      $region40: #{uresnet_encoder_forward.13} parent=11 // pred_fallthru
        _
    $region12: #{uresnet_encoder_forward.13} parent=5 // pred_fallthru
      _
    %p249 = scmp.lt.s32.totalorder %s14, 2
    // Predicated region
    $region41: #{uresnet_encoder_forward.13} parent=5 // pred_check
      %p250 = pneg %p249
    $region42: #{uresnet_encoder_forward.13} parent=5 // pred_check_branch
      %252 = sbr.rel (%p250) target = $region44
    $region43: #{uresnet_encoder_forward.13} parent=5 // pred_region
      // Predicated region
      $region45: #{uresnet_encoder_forward.13} parent=43 // pred_check
        %p253 = pneg %p34
      $region46: #{uresnet_encoder_forward.13} parent=43 // pred_check_branch
        %255 = sbr.rel (%p253) target = $region48
      $region47: #{uresnet_encoder_forward.13} parent=43 // pred_region
        %p256 = scmp.lt.s32.totalorder %s14, 1
        %s257 = scalar_select %p256, %s14, 1
        %s258 = smul.addr %s257, 8
        %s259 = smul.addr %s258, 8
        %s260 = scalar_lea.vmem %s0, %s259
      $region48: #{uresnet_encoder_forward.13} parent=43 // pred_fallthru
        _
    $region44: #{uresnet_encoder_forward.13} parent=5 // pred_fallthru
      _
    %p261 = scmp.le.s32.totalorder 1, %s14
    %p262 = scmp.lt.s32.totalorder %s14, 3
    %p263 = pnand %p261, %p262
    %p264 = pneg %p263
    // Predicated region
    $region49: #{uresnet_encoder_forward.13} parent=5 // pred_check
      _
    $region50: #{uresnet_encoder_forward.13} parent=5 // pred_check_branch
      %266 = sbr.rel (%p263) target = $region52
    $region51: #{uresnet_encoder_forward.13} parent=5 // pred_region
      %s267 = ssub.s32 %s14, 1
      %p268 = scmp.lt.s32.totalorder %s19, 1
      %s269 = scalar_select %p268, %s19, 1
      %s270 = smul.addr %s269, 8
      %s271 = smul.addr %s270, 8
      %s272 = scalar_lea.vmem %s0, %s271
      %p273 = pneg %p40
      %p274 = pneg %p37
      %p275 = pneg %p61
      %p276 = pneg %p58
      %p277 = pneg %p82
      %p278 = pneg %p79
      %p279 = pneg %p103
      %p280 = pneg %p100
      %p281 = pneg %p124
      %p282 = pneg %p121
      %p283 = pneg %p145
      %p284 = pneg %p142
      %p285 = pneg %p166
      %p286 = pneg %p163
      %p287 = pneg %p187
      %p288 = pneg %p184
      %p289 = pneg %p213
      %p290 = pneg %p210
      %p291 = scmp.lt.s32.totalorder %s19, 1
      %s292 = scalar_select %p291, %s19, 1
      %s293 = smul.addr %s292, 8
      %s294 = smul.addr %s293, 8
      %s295 = scalar_lea.vmem %s8, %s294
      %p296 = scmp.lt.s32.totalorder %s19, 1
      %s297 = scalar_select %p296, %s19, 1
      %s298 = smul.addr %s297, 8
      %s299 = smul.addr %s298, 8
      %s300 = scalar_lea.vmem %s0, %s299
      %p301 = scmp.lt.s32.totalorder %s19, 1
      %s302 = scalar_select %p301, %s19, 1
      %s303 = smul.addr %s302, 8
      %s304 = smul.addr %s303, 8
      %s305 = scalar_lea.vmem %s8, %s304
      %v307 = vld [vmem:[%s7] sm:$0xff]
      %v308 = vld [vmem:[%s7 + $0x8] sm:$0xff]
      %v309 = vld [vmem:[%s7 + $0x10] sm:$0xff]
      %v310 = vld [vmem:[%s7 + $0x18] sm:$0xff]
      %v311 = vld [vmem:[%s7 + $0x20] sm:$0xff]
      %v312 = vld [vmem:[%s7 + $0x28] sm:$0xff]
      %v313 = vld [vmem:[%s7 + $0x30] sm:$0xff]
      %v314 = vld [vmem:[%s7 + $0x38] sm:$0xff]
      %vm315 = vcmask 130048
      %316 = vst.msk [vmem:[#allocation2] sm:$0xff] %vm315, 0.0
      %317 = vst.msk [vmem:[#allocation2 + $0x8] sm:$0xff] %vm315, 0.0
      %318 = vst.msk [vmem:[#allocation2 + $0x50] sm:$0xff] %vm315, 0.0
      %319 = vst.msk [vmem:[#allocation2 + $0x58] sm:$0xff] %vm315, 0.0
      %v320 = vld [vmem:[%s300] sm:$0xff]
      %v321 = vld [vmem:[%s300 + $0x8] sm:$0xff]
      %v322 = vld [vmem:[%s300 + $0x10] sm:$0xff]
      %v323 = vld [vmem:[%s300 + $0x18] sm:$0xff]
      %v324 = vld [vmem:[%s300 + $0x20] sm:$0xff]
      %v325 = vld [vmem:[%s300 + $0x28] sm:$0xff]
      %v326 = vld [vmem:[%s300 + $0x30] sm:$0xff]
      %v327 = vld [vmem:[%s300 + $0x38] sm:$0xff]
      %v328 = vld [vmem:[%s3] sm:$0x1]
      %v330 = vlaneseq
      %v331 = vshrl.u32 %v330, 7
      %v332 = vsub.s32 0, %v331
      %v333 = vrot.slane %v328, %v332
      %v335 = vmul.f32 %v320, %v333
      %v336 = vmul.f32 %v321, %v333
      %v337 = vmul.f32 %v322, %v333
      %v338 = vmul.f32 %v323, %v333
      %v339 = vmul.f32 %v324, %v333
      %v340 = vmul.f32 %v325, %v333
      %v341 = vmul.f32 %v326, %v333
      %v342 = vmul.f32 %v327, %v333
      %v343 = vld [vmem:[%s4] sm:$0x1]
      %v345 = vlaneseq
      %v346 = vshrl.u32 %v345, 7
      %v347 = vsub.s32 0, %v346
      %v348 = vrot.slane %v343, %v347
      %v350 = vadd.f32 %v335, %v348
      %v351 = vadd.f32 %v336, %v348
      %v352 = vadd.f32 %v337, %v348
      %v353 = vadd.f32 %v338, %v348
      %v354 = vadd.f32 %v339, %v348
      %v355 = vadd.f32 %v340, %v348
      %v356 = vadd.f32 %v341, %v348
      %v357 = vadd.f32 %v342, %v348
      %v358 = vmax.f32 %v350, 0.0
      %v359 = vmax.f32 %v351, 0.0
      %v360 = vmax.f32 %v352, 0.0
      %v361 = vmax.f32 %v353, 0.0
      %v362 = vmax.f32 %v354, 0.0
      %v363 = vmax.f32 %v355, 0.0
      %v364 = vmax.f32 %v356, 0.0
      %v365 = vmax.f32 %v357, 0.0
      %366 = vst.msk [vmem:[#allocation2 + $0x10] sm:$0xff] %vm315, %v358
      %367 = vst.msk [vmem:[#allocation2 + $0x18] sm:$0xff] %vm315, %v359
      %368 = vst.msk [vmem:[#allocation2 + $0x20] sm:$0xff] %vm315, %v360
      %369 = vst.msk [vmem:[#allocation2 + $0x28] sm:$0xff] %vm315, %v361
      %370 = vst.msk [vmem:[#allocation2 + $0x30] sm:$0xff] %vm315, %v362
      %371 = vst.msk [vmem:[#allocation2 + $0x38] sm:$0xff] %vm315, %v363
      %372 = vst.msk [vmem:[#allocation2 + $0x40] sm:$0xff] %vm315, %v364
      %373 = vst.msk [vmem:[#allocation2 + $0x48] sm:$0xff] %vm315, %v365
      %v374 = vld [vmem:[%s1] sm:$0xf]
      %v375 = vld [vmem:[%s1 + $0x4] sm:$0xf]
      %v376 = vld [vmem:[%s1 + $0x8] sm:$0xf]
      %v377 = vld [vmem:[%s1 + $0xc] sm:$0xf]
      %v378 = vld [vmem:[%s1 + $0x10] sm:$0xf]
      %v379 = vld [vmem:[%s1 + $0x14] sm:$0xf]
      %v380 = vld [vmem:[%s1 + $0x18] sm:$0xf]
      %v381 = vld [vmem:[%s1 + $0x1c] sm:$0xf]
      %v382 = vld [vmem:[%s1 + $0x20] sm:$0xf]
      %v383 = vld [vmem:[%s1 + $0x24] sm:$0xf]
      %v384 = vld [vmem:[%s1 + $0x28] sm:$0xf]
      %v385 = vld [vmem:[%s1 + $0x2c] sm:$0xf]
      %v386 = vld [vmem:[%s1 + $0x30] sm:$0xf]
      %v387 = vld [vmem:[%s1 + $0x34] sm:$0xf]
      %v388 = vld [vmem:[%s1 + $0x38] sm:$0xf]
      %v389 = vld [vmem:[%s1 + $0x3c] sm:$0xf]
      %v390 = vld [vmem:[%s1 + $0x40] sm:$0xf]
      %v391 = vld [vmem:[%s1 + $0x44] sm:$0xf]
      %v392 = vld [vmem:[#allocation2 + $0x7] sm:$0xff]
      %v393 = vld [vmem:[#allocation2 + $0xf] sm:$0xff]
      %v394 = vld [vmem:[#allocation2 + $0x17] sm:$0xff]
      %v395 = vld [vmem:[#allocation2 + $0x1f] sm:$0xff]
      %v396 = vld [vmem:[#allocation2 + $0x27] sm:$0xff]
      %v397 = vld [vmem:[#allocation2 + $0x2f] sm:$0xff]
      %v398 = vld [vmem:[#allocation2 + $0x37] sm:$0xff]
      %v399 = vld [vmem:[#allocation2 + $0x3f] sm:$0xff]
      %401 = vset.pattern.permute.xlu0 0
      %402 = vperm.xlu0 %401, %v307
      %v403 = vpop.permute.xlu0 %402
      %406 = vset.pattern.permute.xlu0 0
      %407 = vperm.xlu0 %406, %v308
      %v408 = vpop.permute.xlu0 %407
      %411 = vset.pattern.permute.xlu0 0
      %412 = vperm.xlu0 %411, %v309
      %v413 = vpop.permute.xlu0 %412
      %416 = vset.pattern.permute.xlu0 0
      %417 = vperm.xlu0 %416, %v310
      %v418 = vpop.permute.xlu0 %417
      %421 = vset.pattern.permute.xlu0 0
      %422 = vperm.xlu0 %421, %v311
      %v423 = vpop.permute.xlu0 %422
      %426 = vset.pattern.permute.xlu0 0
      %427 = vperm.xlu0 %426, %v312
      %v428 = vpop.permute.xlu0 %427
      %431 = vset.pattern.permute.xlu0 0
      %432 = vperm.xlu0 %431, %v313
      %v433 = vpop.permute.xlu0 %432
      %436 = vset.pattern.permute.xlu0 0
      %437 = vperm.xlu0 %436, %v314
      %v438 = vpop.permute.xlu0 %437
      %v440 = vmul.f32 %v392, %v403
      %v441 = vmul.f32 %v393, %v408
      %v442 = vmul.f32 %v394, %v413
      %v443 = vmul.f32 %v395, %v418
      %v444 = vmul.f32 %v396, %v423
      %v445 = vmul.f32 %v397, %v428
      %v446 = vmul.f32 %v398, %v433
      %v447 = vmul.f32 %v399, %v438
      %v448 = vld [vmem:[#allocation2 + $0x8] sm:$0xff]
      %v449 = vld [vmem:[#allocation2 + $0x10] sm:$0xff]
      %v450 = vld [vmem:[#allocation2 + $0x18] sm:$0xff]
      %v451 = vld [vmem:[#allocation2 + $0x20] sm:$0xff]
      %v452 = vld [vmem:[#allocation2 + $0x28] sm:$0xff]
      %v453 = vld [vmem:[#allocation2 + $0x30] sm:$0xff]
      %v454 = vld [vmem:[#allocation2 + $0x38] sm:$0xff]
      %v455 = vld [vmem:[#allocation2 + $0x40] sm:$0xff]
      %v456 = vld [vmem:[#allocation2 + $0x9] sm:$0xff]
      %v457 = vld [vmem:[#allocation2 + $0x11] sm:$0xff]
      %v458 = vld [vmem:[#allocation2 + $0x19] sm:$0xff]
      %v459 = vld [vmem:[#allocation2 + $0x21] sm:$0xff]
      %v460 = vld [vmem:[#allocation2 + $0x29] sm:$0xff]
      %v461 = vld [vmem:[#allocation2 + $0x31] sm:$0xff]
      %v462 = vld [vmem:[#allocation2 + $0x39] sm:$0xff]
      %v463 = vld [vmem:[#allocation2 + $0x41] sm:$0xff]
      %464 = vset.pattern.permute.xlu0 1
      %465 = vperm.xlu0 %464, %v307
      %v466 = vpop.permute.xlu0 %465
      %468 = vset.pattern.permute.xlu0 1
      %469 = vperm.xlu0 %468, %v308
      %v470 = vpop.permute.xlu0 %469
      %472 = vset.pattern.permute.xlu0 1
      %473 = vperm.xlu0 %472, %v309
      %v474 = vpop.permute.xlu0 %473
      %476 = vset.pattern.permute.xlu0 1
      %477 = vperm.xlu0 %476, %v310
      %v478 = vpop.permute.xlu0 %477
      %480 = vset.pattern.permute.xlu0 1
      %481 = vperm.xlu0 %480, %v311
      %v482 = vpop.permute.xlu0 %481
      %484 = vset.pattern.permute.xlu0 1
      %485 = vperm.xlu0 %484, %v312
      %v486 = vpop.permute.xlu0 %485
      %488 = vset.pattern.permute.xlu0 1
      %489 = vperm.xlu0 %488, %v313
      %v490 = vpop.permute.xlu0 %489
      %492 = vset.pattern.permute.xlu0 1
      %493 = vperm.xlu0 %492, %v314
      %v494 = vpop.permute.xlu0 %493
      %v496 = vmul.f32 %v456, %v466
      %v497 = vmul.f32 %v457, %v470
      %v498 = vmul.f32 %v458, %v474
      %v499 = vmul.f32 %v459, %v478
      %v500 = vmul.f32 %v460, %v482
      %v501 = vmul.f32 %v461, %v486
      %v502 = vmul.f32 %v462, %v490
      %v503 = vmul.f32 %v463, %v494
      %v504 = vld [vmem:[#allocation2 + $0xf] sm:$0xff]
      %v505 = vld [vmem:[#allocation2 + $0x17] sm:$0xff]
      %v506 = vld [vmem:[#allocation2 + $0x1f] sm:$0xff]
      %v507 = vld [vmem:[#allocation2 + $0x27] sm:$0xff]
      %v508 = vld [vmem:[#allocation2 + $0x2f] sm:$0xff]
      %v509 = vld [vmem:[#allocation2 + $0x37] sm:$0xff]
      %v510 = vld [vmem:[#allocation2 + $0x3f] sm:$0xff]
      %v511 = vld [vmem:[#allocation2 + $0x47] sm:$0xff]
      %v512 = vmul.f32 %v504, %v403
      %v513 = vmul.f32 %v505, %v408
      %v514 = vmul.f32 %v506, %v413
      %v515 = vmul.f32 %v507, %v418
      %v516 = vmul.f32 %v508, %v423
      %v517 = vmul.f32 %v509, %v428
      %v518 = vmul.f32 %v510, %v433
      %v519 = vmul.f32 %v511, %v438
      %v520 = vld [vmem:[#allocation2 + $0x10] sm:$0xff]
      %v521 = vld [vmem:[#allocation2 + $0x18] sm:$0xff]
      %v522 = vld [vmem:[#allocation2 + $0x20] sm:$0xff]
      %v523 = vld [vmem:[#allocation2 + $0x28] sm:$0xff]
      %v524 = vld [vmem:[#allocation2 + $0x30] sm:$0xff]
      %v525 = vld [vmem:[#allocation2 + $0x38] sm:$0xff]
      %v526 = vld [vmem:[#allocation2 + $0x40] sm:$0xff]
      %v527 = vld [vmem:[#allocation2 + $0x48] sm:$0xff]
      %v528 = vld [vmem:[#allocation2 + $0x11] sm:$0xff]
      %v529 = vld [vmem:[#allocation2 + $0x19] sm:$0xff]
      %v530 = vld [vmem:[#allocation2 + $0x21] sm:$0xff]
      %v531 = vld [vmem:[#allocation2 + $0x29] sm:$0xff]
      %v532 = vld [vmem:[#allocation2 + $0x31] sm:$0xff]
      %v533 = vld [vmem:[#allocation2 + $0x39] sm:$0xff]
      %v534 = vld [vmem:[#allocation2 + $0x41] sm:$0xff]
      %v535 = vld [vmem:[#allocation2 + $0x49] sm:$0xff]
      %v536 = vmul.f32 %v528, %v466
      %v537 = vmul.f32 %v529, %v470
      %v538 = vmul.f32 %v530, %v474
      %v539 = vmul.f32 %v531, %v478
      %v540 = vmul.f32 %v532, %v482
      %v541 = vmul.f32 %v533, %v486
      %v542 = vmul.f32 %v534, %v490
      %v543 = vmul.f32 %v535, %v494
      %v544 = vld [vmem:[#allocation2 + $0x4f] sm:$0xff]
      %v545 = vmul.f32 %v505, %v403
      %v546 = vmul.f32 %v506, %v408
      %v547 = vmul.f32 %v507, %v413
      %v548 = vmul.f32 %v508, %v418
      %v549 = vmul.f32 %v509, %v423
      %v550 = vmul.f32 %v510, %v428
      %v551 = vmul.f32 %v511, %v433
      %v552 = vmul.f32 %v544, %v438
      %v553 = vld [vmem:[#allocation2 + $0x50] sm:$0xff]
      %v554 = vld [vmem:[#allocation2 + $0x51] sm:$0xff]
      %v555 = vmul.f32 %v529, %v466
      %v556 = vmul.f32 %v530, %v470
      %v557 = vmul.f32 %v531, %v474
      %v558 = vmul.f32 %v532, %v478
      %v559 = vmul.f32 %v533, %v482
      %v560 = vmul.f32 %v534, %v486
      %v561 = vmul.f32 %v535, %v490
      %v562 = vmul.f32 %v554, %v494
      %571 = vrot.lane.b32.xlu0 %v448, 16
      %v572 = vpop.permute.xlu0 %571
      %573 = vrot.lane.b32.xlu0 %v449, 16
      %v574 = vpop.permute.xlu0 %573
      %575 = vrot.lane.b32.xlu0 %v450, 16
      %v576 = vpop.permute.xlu0 %575
      %577 = vrot.lane.b32.xlu0 %v451, 16
      %v578 = vpop.permute.xlu0 %577
      %579 = vrot.lane.b32.xlu0 %v452, 16
      %v580 = vpop.permute.xlu0 %579
      %581 = vrot.lane.b32.xlu0 %v453, 16
      %v582 = vpop.permute.xlu0 %581
      %583 = vrot.lane.b32.xlu0 %v454, 16
      %v584 = vpop.permute.xlu0 %583
      %585 = vrot.lane.b32.xlu0 %v455, 16
      %v586 = vpop.permute.xlu0 %585
      %603 = vrot.lane.b32.xlu0 %v496, 32
      %v604 = vpop.permute.xlu0 %603
      %605 = vrot.lane.b32.xlu0 %v497, 32
      %v606 = vpop.permute.xlu0 %605
      %607 = vrot.lane.b32.xlu0 %v498, 32
      %v608 = vpop.permute.xlu0 %607
      %609 = vrot.lane.b32.xlu0 %v499, 32
      %v610 = vpop.permute.xlu0 %609
      %611 = vrot.lane.b32.xlu0 %v500, 32
      %v612 = vpop.permute.xlu0 %611
      %613 = vrot.lane.b32.xlu0 %v501, 32
      %v614 = vpop.permute.xlu0 %613
      %615 = vrot.lane.b32.xlu0 %v502, 32
      %v616 = vpop.permute.xlu0 %615
      %617 = vrot.lane.b32.xlu0 %v503, 32
      %v618 = vpop.permute.xlu0 %617
      %635 = vrot.lane.b32.xlu0 %v512, 48
      %v636 = vpop.permute.xlu0 %635
      %637 = vrot.lane.b32.xlu0 %v513, 48
      %v638 = vpop.permute.xlu0 %637
      %639 = vrot.lane.b32.xlu0 %v514, 48
      %v640 = vpop.permute.xlu0 %639
      %641 = vrot.lane.b32.xlu0 %v515, 48
      %v642 = vpop.permute.xlu0 %641
      %643 = vrot.lane.b32.xlu0 %v516, 48
      %v644 = vpop.permute.xlu0 %643
      %645 = vrot.lane.b32.xlu0 %v517, 48
      %v646 = vpop.permute.xlu0 %645
      %647 = vrot.lane.b32.xlu0 %v518, 48
      %v648 = vpop.permute.xlu0 %647
      %649 = vrot.lane.b32.xlu0 %v519, 48
      %v650 = vpop.permute.xlu0 %649
      %667 = vrot.lane.b32.xlu0 %v520, 64
      %v668 = vpop.permute.xlu0 %667
      %669 = vrot.lane.b32.xlu0 %v521, 64
      %v670 = vpop.permute.xlu0 %669
      %671 = vrot.lane.b32.xlu0 %v522, 64
      %v672 = vpop.permute.xlu0 %671
      %673 = vrot.lane.b32.xlu0 %v523, 64
      %v674 = vpop.permute.xlu0 %673
      %675 = vrot.lane.b32.xlu0 %v524, 64
      %v676 = vpop.permute.xlu0 %675
      %677 = vrot.lane.b32.xlu0 %v525, 64
      %v678 = vpop.permute.xlu0 %677
      %679 = vrot.lane.b32.xlu0 %v526, 64
      %v680 = vpop.permute.xlu0 %679
      %681 = vrot.lane.b32.xlu0 %v527, 64
      %v682 = vpop.permute.xlu0 %681
      %699 = vrot.lane.b32.xlu0 %v536, 80
      %v700 = vpop.permute.xlu0 %699
      %701 = vrot.lane.b32.xlu0 %v537, 80
      %v702 = vpop.permute.xlu0 %701
      %703 = vrot.lane.b32.xlu0 %v538, 80
      %v704 = vpop.permute.xlu0 %703
      %705 = vrot.lane.b32.xlu0 %v539, 80
      %v706 = vpop.permute.xlu0 %705
      %707 = vrot.lane.b32.xlu0 %v540, 80
      %v708 = vpop.permute.xlu0 %707
      %709 = vrot.lane.b32.xlu0 %v541, 80
      %v710 = vpop.permute.xlu0 %709
      %711 = vrot.lane.b32.xlu0 %v542, 80
      %v712 = vpop.permute.xlu0 %711
      %713 = vrot.lane.b32.xlu0 %v543, 80
      %v714 = vpop.permute.xlu0 %713
      %731 = vrot.lane.b32.xlu0 %v545, 96
      %v732 = vpop.permute.xlu0 %731
      %733 = vrot.lane.b32.xlu0 %v546, 96
      %v734 = vpop.permute.xlu0 %733
      %735 = vrot.lane.b32.xlu0 %v547, 96
      %v736 = vpop.permute.xlu0 %735
      %737 = vrot.lane.b32.xlu0 %v548, 96
      %v738 = vpop.permute.xlu0 %737
      %739 = vrot.lane.b32.xlu0 %v549, 96
      %v740 = vpop.permute.xlu0 %739
      %741 = vrot.lane.b32.xlu0 %v550, 96
      %v742 = vpop.permute.xlu0 %741
      %743 = vrot.lane.b32.xlu0 %v551, 96
      %v744 = vpop.permute.xlu0 %743
      %745 = vrot.lane.b32.xlu0 %v552, 96
      %v746 = vpop.permute.xlu0 %745
      %756 = vrot.lane.b32.xlu0 %v521, 112
      %v757 = vpop.permute.xlu0 %756
      %758 = vrot.lane.b32.xlu0 %v522, 112
      %v759 = vpop.permute.xlu0 %758
      %760 = vrot.lane.b32.xlu0 %v523, 112
      %v761 = vpop.permute.xlu0 %760
      %762 = vrot.lane.b32.xlu0 %v524, 112
      %v763 = vpop.permute.xlu0 %762
      %764 = vrot.lane.b32.xlu0 %v525, 112
      %v765 = vpop.permute.xlu0 %764
      %766 = vrot.lane.b32.xlu0 %v526, 112
      %v767 = vpop.permute.xlu0 %766
      %768 = vrot.lane.b32.xlu0 %v527, 112
      %v769 = vpop.permute.xlu0 %768
      %770 = vrot.lane.b32.xlu0 %v553, 112
      %v771 = vpop.permute.xlu0 %770
      %v780 = vsel %vm315, %v440, %v572
      %v781 = vsel %vm315, %v441, %v574
      %v782 = vsel %vm315, %v442, %v576
      %v783 = vsel %vm315, %v443, %v578
      %v784 = vsel %vm315, %v444, %v580
      %v785 = vsel %vm315, %v445, %v582
      %v786 = vsel %vm315, %v446, %v584
      %v787 = vsel %vm315, %v447, %v586
      %vm788 = vcmask 261120
      %v789 = vsel %vm788, %v780, %v604
      %v790 = vsel %vm788, %v781, %v606
      %v791 = vsel %vm788, %v782, %v608
      %v792 = vsel %vm788, %v783, %v610
      %v793 = vsel %vm788, %v784, %v612
      %v794 = vsel %vm788, %v785, %v614
      %v795 = vsel %vm788, %v786, %v616
      %v796 = vsel %vm788, %v787, %v618
      %vm797 = vcmask 392192
      %v798 = vsel %vm797, %v789, %v636
      %v799 = vsel %vm797, %v790, %v638
      %v800 = vsel %vm797, %v791, %v640
      %v801 = vsel %vm797, %v792, %v642
      %v802 = vsel %vm797, %v793, %v644
      %v803 = vsel %vm797, %v794, %v646
      %v804 = vsel %vm797, %v795, %v648
      %v805 = vsel %vm797, %v796, %v650
      %vm806 = vcmask 523264
      %v807 = vsel %vm806, %v798, %v668
      %v808 = vsel %vm806, %v799, %v670
      %v809 = vsel %vm806, %v800, %v672
      %v810 = vsel %vm806, %v801, %v674
      %v811 = vsel %vm806, %v802, %v676
      %v812 = vsel %vm806, %v803, %v678
      %v813 = vsel %vm806, %v804, %v680
      %v814 = vsel %vm806, %v805, %v682
      %vm815 = vcmask 654336
      %v816 = vsel %vm815, %v807, %v700
      %v817 = vsel %vm815, %v808, %v702
      %v818 = vsel %vm815, %v809, %v704
      %v819 = vsel %vm815, %v810, %v706
      %v820 = vsel %vm815, %v811, %v708
      %v821 = vsel %vm815, %v812, %v710
      %v822 = vsel %vm815, %v813, %v712
      %v823 = vsel %vm815, %v814, %v714
      %vm824 = vcmask 785408
      %v825 = vsel %vm824, %v816, %v732
      %v826 = vsel %vm824, %v817, %v734
      %v827 = vsel %vm824, %v818, %v736
      %v828 = vsel %vm824, %v819, %v738
      %v829 = vsel %vm824, %v820, %v740
      %v830 = vsel %vm824, %v821, %v742
      %v831 = vsel %vm824, %v822, %v744
      %v832 = vsel %vm824, %v823, %v746
      %vm833 = vcmask 916480
      %v834 = vsel %vm833, %v825, %v757
      %v835 = vsel %vm833, %v826, %v759
      %v836 = vsel %vm833, %v827, %v761
      %v837 = vsel %vm833, %v828, %v763
      %v838 = vsel %vm833, %v829, %v765
      %v839 = vsel %vm833, %v830, %v767
      %v840 = vsel %vm833, %v831, %v769
      %v841 = vsel %vm833, %v832, %v771
      %v842 = vpack.c.bf16 %v835, %v834
      %v843 = vpack.c.bf16 %v556, %v555
      %v844 = vpack.c.bf16 %v837, %v836
      %v845 = vpack.c.bf16 %v558, %v557
      %v846 = vpack.c.bf16 %v839, %v838
      %v847 = vpack.c.bf16 %v560, %v559
      %v848 = vpack.c.bf16 %v841, %v840
      %v849 = vpack.c.bf16 %v562, %v561
      %v868 = vunpack.c.l.b16 %v374
      %v869 = vunpack.c.l.b16 %v375
      %v870 = vunpack.c.l.b16 %v376
      %v871 = vunpack.c.l.b16 %v377
      %v872 = vunpack.c.l.b16 %v378
      %v873 = vunpack.c.l.b16 %v379
      %v874 = vunpack.c.l.b16 %v380
      %v875 = vunpack.c.l.b16 %v381
      %v876 = vunpack.c.l.b16 %v382
      %v877 = vunpack.c.l.b16 %v383
      %v878 = vunpack.c.l.b16 %v384
      %v879 = vunpack.c.l.b16 %v385
      %v880 = vunpack.c.l.b16 %v386
      %v881 = vunpack.c.l.b16 %v387
      %v882 = vunpack.c.l.b16 %v388
      %v883 = vunpack.c.l.b16 %v389
      %v884 = vunpack.c.l.b16 %v390
      %v885 = vunpack.c.l.b16 %v391
      %v886 = vpack.c.b16 %v869, %v868
      %v887 = vpack.c.b16 %v871, %v870
      %v888 = vpack.c.b16 %v873, %v872
      %v889 = vpack.c.b16 %v875, %v874
      %v890 = vpack.c.b16 %v877, %v876
      %v891 = vpack.c.b16 %v879, %v878
      %v892 = vpack.c.b16 %v881, %v880
      %v893 = vpack.c.b16 %v883, %v882
      %v894 = vpack.c.b16 %v885, %v884
      %v905 = vsel %vm315, %v843, 0
      %v908 = vsel %vm315, %v845, 0
      %v911 = vsel %vm315, %v847, 0
      %v914 = vsel %vm315, %v849, 0
      %916 = vmatprep.subr.bf16.mxu0 0
      %917 = vmatpush1.bf16.msra.mxu0 %v886
      %918 = vmatprep.subr.bf16.mxu0 0
      %919 = vmatpush1.bf16.msra.mxu0 %v887
      %920 = vmatprep.subr.bf16.mxu0 0
      %921 = vmatpush1.bf16.msra.mxu0 %v888
      %922 = vmatprep.subr.bf16.mxu0 0
      %923 = vmatpush1.bf16.msra.mxu0 %v889
      %924 = vmatprep.subr.bf16.mxu0 0
      %925 = vmatpush1.bf16.msra.mxu0 %v890
      %926 = vmatprep.subr.bf16.mxu0 0
      %927 = vmatpush1.bf16.msra.mxu0 %v891
      %928 = vmatprep.subr.bf16.mxu0 0
      %929 = vmatpush1.bf16.msra.mxu0 %v892
      %930 = vmatprep.subr.bf16.mxu0 0
      %931 = vmatpush1.bf16.msra.mxu0 %v893
      %932 = vmatprep.subr.bf16.mxu0 0
      %933 = vmatpush1.bf16.msra.mxu0 %v894
      %934 = vmatprep.subr.bf16.mxu0 0
      %935 = vmatpush1.bf16.msra.mxu0 0
      %936 = vmatprep.subr.bf16.mxu0 0
      %937 = vmatpush1.bf16.msra.mxu0 0
      %938 = vmatprep.subr.bf16.mxu0 0
      %939 = vmatpush1.bf16.msra.mxu0 0
      %940 = vmatprep.subr.bf16.mxu0 0
      %941 = vmatpush1.bf16.msra.mxu0 0
      %942 = vmatprep.subr.bf16.mxu0 0
      %943 = vmatpush1.bf16.msra.mxu0 0
      %944 = vmatprep.subr.bf16.mxu0 0
      %945 = vmatpush1.bf16.msra.mxu0 0
      %946 = vmatprep.subr.bf16.mxu0 0
      %947 = vmatpush1.bf16.msra.mxu0 0
      %948 = vmatprep.mubr.bf16.mxu0 %v905
      %949 = vmatmul.mubr.bf16.gmra.mrb[0].mxu0 %v842
      %v950 = vpop.f32.mrb[0].mxu0
      %v951 = vadd.f32 0.0, %v950
      %v952 = vpop.f32.mrb[0].mxu0
      %v953 = vpop.f32.mrb[0].mxu0
      %v954 = vadd.f32 0.0, %v953
      %v955 = vpop.f32.mrb[0].mxu0
      %956 = vmatprep.mubr.bf16.mxu0 %v908
      %957 = vmatmul.mubr.bf16.gmra.mrb[0].mxu0 %v844
      %v958 = vpop.f32.mrb[0].mxu0
      %v959 = vadd.f32 0.0, %v958
      %v960 = vpop.f32.mrb[0].mxu0
      %v961 = vpop.f32.mrb[0].mxu0
      %v962 = vadd.f32 0.0, %v961
      %v963 = vpop.f32.mrb[0].mxu0
      %964 = vmatprep.mubr.bf16.mxu0 %v911
      %965 = vmatmul.mubr.bf16.gmra.mrb[0].mxu0 %v846
      %v966 = vpop.f32.mrb[0].mxu0
      %v967 = vadd.f32 0.0, %v966
      %v968 = vpop.f32.mrb[0].mxu0
      %v969 = vpop.f32.mrb[0].mxu0
      %v970 = vadd.f32 0.0, %v969
      %v971 = vpop.f32.mrb[0].mxu0
      %972 = vmatprep.mubr.bf16.mxu0 %v914
      %973 = vmatmul.mubr.bf16.gmra.mrb[0].mxu0 %v848
      %v974 = vpop.f32.mrb[0].mxu0
      %v975 = vadd.f32 0.0, %v974
      %v976 = vpop.f32.mrb[0].mxu0
      %v977 = vpop.f32.mrb[0].mxu0
      %v978 = vadd.f32 0.0, %v977
      %v979 = vpop.f32.mrb[0].mxu0
      %980 = vdwg.mxu0
      %v981 = vld [vmem:[%s5] sm:$0x1]
      %v983 = vlaneseq
      %v984 = vshrl.u32 %v983, 7
      %v985 = vsub.s32 0, %v984
      %v986 = vrot.slane %v981, %v985
      %v988 = vmul.f32 %v951, %v986
      %v989 = vmul.f32 %v954, %v986
      %v990 = vmul.f32 %v959, %v986
      %v991 = vmul.f32 %v962, %v986
      %v992 = vmul.f32 %v967, %v986
      %v993 = vmul.f32 %v970, %v986
      %v994 = vmul.f32 %v975, %v986
      %v995 = vmul.f32 %v978, %v986
      %v996 = vld [vmem:[%s6] sm:$0x1]
      %v998 = vlaneseq
      %v999 = vshrl.u32 %v998, 7
      %v1000 = vsub.s32 0, %v999
      %v1001 = vrot.slane %v996, %v1000
      %v1003 = vadd.f32 %v988, %v1001
      %v1004 = vadd.f32 %v989, %v1001
      %v1005 = vadd.f32 %v990, %v1001
      %v1006 = vadd.f32 %v991, %v1001
      %v1007 = vadd.f32 %v992, %v1001
      %v1008 = vadd.f32 %v993, %v1001
      %v1009 = vadd.f32 %v994, %v1001
      %v1010 = vadd.f32 %v995, %v1001
      %v1011 = vmax.f32 %v1003, 0.0
      %v1012 = vmax.f32 %v1004, 0.0
      %v1013 = vmax.f32 %v1005, 0.0
      %v1014 = vmax.f32 %v1006, 0.0
      %v1015 = vmax.f32 %v1007, 0.0
      %v1016 = vmax.f32 %v1008, 0.0
      %v1017 = vmax.f32 %v1009, 0.0
      %v1018 = vmax.f32 %v1010, 0.0
      %1019 = vst.msk [vmem:[#allocation2 + $0x10] sm:$0xff] %vm315, %v1011
      %1020 = vst.msk [vmem:[#allocation2 + $0x18] sm:$0xff] %vm315, %v1012
      %1021 = vst.msk [vmem:[#allocation2 + $0x20] sm:$0xff] %vm315, %v1013
      %1022 = vst.msk [vmem:[#allocation2 + $0x28] sm:$0xff] %vm315, %v1014
      %1023 = vst.msk [vmem:[#allocation2 + $0x30] sm:$0xff] %vm315, %v1015
      %1024 = vst.msk [vmem:[#allocation2 + $0x38] sm:$0xff] %vm315, %v1016
      %1025 = vst.msk [vmem:[#allocation2 + $0x40] sm:$0xff] %vm315, %v1017
      %1026 = vst.msk [vmem:[#allocation2 + $0x48] sm:$0xff] %vm315, %v1018
      %v1027 = vld [vmem:[%s2] sm:$0xf]
      %v1028 = vld [vmem:[%s2 + $0x4] sm:$0xf]
      %v1029 = vld [vmem:[%s2 + $0x8] sm:$0xf]
      %v1030 = vld [vmem:[%s2 + $0xc] sm:$0xf]
      %v1031 = vld [vmem:[%s2 + $0x10] sm:$0xf]
      %v1032 = vld [vmem:[%s2 + $0x14] sm:$0xf]
      %v1033 = vld [vmem:[%s2 + $0x18] sm:$0xf]
      %v1034 = vld [vmem:[%s2 + $0x1c] sm:$0xf]
      %v1035 = vld [vmem:[%s2 + $0x20] sm:$0xf]
      %v1036 = vld [vmem:[%s2 + $0x24] sm:$0xf]
      %v1037 = vld [vmem:[%s2 + $0x28] sm:$0xf]
      %v1038 = vld [vmem:[%s2 + $0x2c] sm:$0xf]
      %v1039 = vld [vmem:[%s2 + $0x30] sm:$0xf]
      %v1040 = vld [vmem:[%s2 + $0x34] sm:$0xf]
      %v1041 = vld [vmem:[%s2 + $0x38] sm:$0xf]
      %v1042 = vld [vmem:[%s2 + $0x3c] sm:$0xf]
      %v1043 = vld [vmem:[%s2 + $0x40] sm:$0xf]
      %v1044 = vld [vmem:[%s2 + $0x44] sm:$0xf]
      %v1045 = vld [vmem:[#allocation2 + $0x7] sm:$0xff]
      %v1046 = vld [vmem:[#allocation2 + $0xf] sm:$0xff]
      %v1047 = vld [vmem:[#allocation2 + $0x17] sm:$0xff]
      %v1048 = vld [vmem:[#allocation2 + $0x1f] sm:$0xff]
      %v1049 = vld [vmem:[#allocation2 + $0x27] sm:$0xff]
      %v1050 = vld [vmem:[#allocation2 + $0x2f] sm:$0xff]
      %v1051 = vld [vmem:[#allocation2 + $0x37] sm:$0xff]
      %v1052 = vld [vmem:[#allocation2 + $0x3f] sm:$0xff]
      %v1053 = vmul.f32 %v1045, %v403
      %v1054 = vmul.f32 %v1046, %v408
      %v1055 = vmul.f32 %v1047, %v413
      %v1056 = vmul.f32 %v1048, %v418
      %v1057 = vmul.f32 %v1049, %v423
      %v1058 = vmul.f32 %v1050, %v428
      %v1059 = vmul.f32 %v1051, %v433
      %v1060 = vmul.f32 %v1052, %v438
      %v1061 = vld [vmem:[#allocation2 + $0x8] sm:$0xff]
      %v1062 = vld [vmem:[#allocation2 + $0x10] sm:$0xff]
      %v1063 = vld [vmem:[#allocation2 + $0x18] sm:$0xff]
      %v1064 = vld [vmem:[#allocation2 + $0x20] sm:$0xff]
      %v1065 = vld [vmem:[#allocation2 + $0x28] sm:$0xff]
      %v1066 = vld [vmem:[#allocation2 + $0x30] sm:$0xff]
      %v1067 = vld [vmem:[#allocation2 + $0x38] sm:$0xff]
      %v1068 = vld [vmem:[#allocation2 + $0x40] sm:$0xff]
      %v1069 = vld [vmem:[#allocation2 + $0x9] sm:$0xff]
      %v1070 = vld [vmem:[#allocation2 + $0x11] sm:$0xff]
      %v1071 = vld [vmem:[#allocation2 + $0x19] sm:$0xff]
      %v1072 = vld [vmem:[#allocation2 + $0x21] sm:$0xff]
      %v1073 = vld [vmem:[#allocation2 + $0x29] sm:$0xff]
      %v1074 = vld [vmem:[#allocation2 + $0x31] sm:$0xff]
      %v1075 = vld [vmem:[#allocation2 + $0x39] sm:$0xff]
      %v1076 = vld [vmem:[#allocation2 + $0x41] sm:$0xff]
      %v1077 = vmul.f32 %v1069, %v466
      %v1078 = vmul.f32 %v1070, %v470
      %v1079 = vmul.f32 %v1071, %v474
      %v1080 = vmul.f32 %v1072, %v478
      %v1081 = vmul.f32 %v1073, %v482
      %v1082 = vmul.f32 %v1074, %v486
      %v1083 = vmul.f32 %v1075, %v490
      %v1084 = vmul.f32 %v1076, %v494
      %v1085 = vld [vmem:[#allocation2 + $0x47] sm:$0xff]
      %v1086 = vmul.f32 %v1046, %v403
      %v1087 = vmul.f32 %v1047, %v408
      %v1088 = vmul.f32 %v1048, %v413
      %v1089 = vmul.f32 %v1049, %v418
      %v1090 = vmul.f32 %v1050, %v423
      %v1091 = vmul.f32 %v1051, %v428
      %v1092 = vmul.f32 %v1052, %v433
      %v1093 = vmul.f32 %v1085, %v438
      %v1094 = vld [vmem:[#allocation2 + $0x48] sm:$0xff]
      %v1095 = vld [vmem:[#allocation2 + $0x49] sm:$0xff]
      %v1096 = vmul.f32 %v1070, %v466
      %v1097 = vmul.f32 %v1071, %v470
      %v1098 = vmul.f32 %v1072, %v474
      %v1099 = vmul.f32 %v1073, %v478
      %v1100 = vmul.f32 %v1074, %v482
      %v1101 = vmul.f32 %v1075, %v486
      %v1102 = vmul.f32 %v1076, %v490
      %v1103 = vmul.f32 %v1095, %v494
      %v1104 = vld [vmem:[#allocation2 + $0x4f] sm:$0xff]
      %v1105 = vmul.f32 %v1047, %v403
      %v1106 = vmul.f32 %v1048, %v408
      %v1107 = vmul.f32 %v1049, %v413
      %v1108 = vmul.f32 %v1050, %v418
      %v1109 = vmul.f32 %v1051, %v423
      %v1110 = vmul.f32 %v1052, %v428
      %v1111 = vmul.f32 %v1085, %v433
      %v1112 = vmul.f32 %v1104, %v438
      %v1113 = vld [vmem:[#allocation2 + $0x50] sm:$0xff]
      %v1114 = vld [vmem:[#allocation2 + $0x51] sm:$0xff]
      %v1115 = vmul.f32 %v1071, %v466
      %v1116 = vmul.f32 %v1072, %v470
      %v1117 = vmul.f32 %v1073, %v474
      %v1118 = vmul.f32 %v1074, %v478
      %v1119 = vmul.f32 %v1075, %v482
      %v1120 = vmul.f32 %v1076, %v486
      %v1121 = vmul.f32 %v1095, %v490
      %v1122 = vmul.f32 %v1114, %v494
      %1131 = vrot.lane.b32.xlu0 %v1061, 16
      %v1132 = vpop.permute.xlu0 %1131
      %1133 = vrot.lane.b32.xlu0 %v1062, 16
      %v1134 = vpop.permute.xlu0 %1133
      %1135 = vrot.lane.b32.xlu0 %v1063, 16
      %v1136 = vpop.permute.xlu0 %1135
      %1137 = vrot.lane.b32.xlu0 %v1064, 16
      %v1138 = vpop.permute.xlu0 %1137
      %1139 = vrot.lane.b32.xlu0 %v1065, 16
      %v1140 = vpop.permute.xlu0 %1139
      %1141 = vrot.lane.b32.xlu0 %v1066, 16
      %v1142 = vpop.permute.xlu0 %1141
      %1143 = vrot.lane.b32.xlu0 %v1067, 16
      %v1144 = vpop.permute.xlu0 %1143
      %1145 = vrot.lane.b32.xlu0 %v1068, 16
      %v1146 = vpop.permute.xlu0 %1145
      %1163 = vrot.lane.b32.xlu0 %v1077, 32
      %v1164 = vpop.permute.xlu0 %1163
      %1165 = vrot.lane.b32.xlu0 %v1078, 32
      %v1166 = vpop.permute.xlu0 %1165
      %1167 = vrot.lane.b32.xlu0 %v1079, 32
      %v1168 = vpop.permute.xlu0 %1167
      %1169 = vrot.lane.b32.xlu0 %v1080, 32
      %v1170 = vpop.permute.xlu0 %1169
      %1171 = vrot.lane.b32.xlu0 %v1081, 32
      %v1172 = vpop.permute.xlu0 %1171
      %1173 = vrot.lane.b32.xlu0 %v1082, 32
      %v1174 = vpop.permute.xlu0 %1173
      %1175 = vrot.lane.b32.xlu0 %v1083, 32
      %v1176 = vpop.permute.xlu0 %1175
      %1177 = vrot.lane.b32.xlu0 %v1084, 32
      %v1178 = vpop.permute.xlu0 %1177
      %1195 = vrot.lane.b32.xlu0 %v1086, 48
      %v1196 = vpop.permute.xlu0 %1195
      %1197 = vrot.lane.b32.xlu0 %v1087, 48
      %v1198 = vpop.permute.xlu0 %1197
      %1199 = vrot.lane.b32.xlu0 %v1088, 48
      %v1200 = vpop.permute.xlu0 %1199
      %1201 = vrot.lane.b32.xlu0 %v1089, 48
      %v1202 = vpop.permute.xlu0 %1201
      %1203 = vrot.lane.b32.xlu0 %v1090, 48
      %v1204 = vpop.permute.xlu0 %1203
      %1205 = vrot.lane.b32.xlu0 %v1091, 48
      %v1206 = vpop.permute.xlu0 %1205
      %1207 = vrot.lane.b32.xlu0 %v1092, 48
      %v1208 = vpop.permute.xlu0 %1207
      %1209 = vrot.lane.b32.xlu0 %v1093, 48
      %v1210 = vpop.permute.xlu0 %1209
      %1220 = vrot.lane.b32.xlu0 %v1062, 64
      %v1221 = vpop.permute.xlu0 %1220
      %1222 = vrot.lane.b32.xlu0 %v1063, 64
      %v1223 = vpop.permute.xlu0 %1222
      %1224 = vrot.lane.b32.xlu0 %v1064, 64
      %v1225 = vpop.permute.xlu0 %1224
      %1226 = vrot.lane.b32.xlu0 %v1065, 64
      %v1227 = vpop.permute.xlu0 %1226
      %1228 = vrot.lane.b32.xlu0 %v1066, 64
      %v1229 = vpop.permute.xlu0 %1228
      %1230 = vrot.lane.b32.xlu0 %v1067, 64
      %v1231 = vpop.permute.xlu0 %1230
      %1232 = vrot.lane.b32.xlu0 %v1068, 64
      %v1233 = vpop.permute.xlu0 %1232
      %1234 = vrot.lane.b32.xlu0 %v1094, 64
      %v1235 = vpop.permute.xlu0 %1234
      %1252 = vrot.lane.b32.xlu0 %v1096, 80
      %v1253 = vpop.permute.xlu0 %1252
      %1254 = vrot.lane.b32.xlu0 %v1097, 80
      %v1255 = vpop.permute.xlu0 %1254
      %1256 = vrot.lane.b32.xlu0 %v1098, 80
      %v1257 = vpop.permute.xlu0 %1256
      %1258 = vrot.lane.b32.xlu0 %v1099, 80
      %v1259 = vpop.permute.xlu0 %1258
      %1260 = vrot.lane.b32.xlu0 %v1100, 80
      %v1261 = vpop.permute.xlu0 %1260
      %1262 = vrot.lane.b32.xlu0 %v1101, 80
      %v1263 = vpop.permute.xlu0 %1262
      %1264 = vrot.lane.b32.xlu0 %v1102, 80
      %v1265 = vpop.permute.xlu0 %1264
      %1266 = vrot.lane.b32.xlu0 %v1103, 80
      %v1267 = vpop.permute.xlu0 %1266
      %1284 = vrot.lane.b32.xlu0 %v1105, 96
      %v1285 = vpop.permute.xlu0 %1284
      %1286 = vrot.lane.b32.xlu0 %v1106, 96
      %v1287 = vpop.permute.xlu0 %1286
      %1288 = vrot.lane.b32.xlu0 %v1107, 96
      %v1289 = vpop.permute.xlu0 %1288
      %1290 = vrot.lane.b32.xlu0 %v1108, 96
      %v1291 = vpop.permute.xlu0 %1290
      %1292 = vrot.lane.b32.xlu0 %v1109, 96
      %v1293 = vpop.permute.xlu0 %1292
      %1294 = vrot.lane.b32.xlu0 %v1110, 96
      %v1295 = vpop.permute.xlu0 %1294
      %1296 = vrot.lane.b32.xlu0 %v1111, 96
      %v1297 = vpop.permute.xlu0 %1296
      %1298 = vrot.lane.b32.xlu0 %v1112, 96
      %v1299 = vpop.permute.xlu0 %1298
      %1309 = vrot.lane.b32.xlu0 %v1063, 112
      %v1310 = vpop.permute.xlu0 %1309
      %1311 = vrot.lane.b32.xlu0 %v1064, 112
      %v1312 = vpop.permute.xlu0 %1311
      %1313 = vrot.lane.b32.xlu0 %v1065, 112
      %v1314 = vpop.permute.xlu0 %1313
      %1315 = vrot.lane.b32.xlu0 %v1066, 112
      %v1316 = vpop.permute.xlu0 %1315
      %1317 = vrot.lane.b32.xlu0 %v1067, 112
      %v1318 = vpop.permute.xlu0 %1317
      %1319 = vrot.lane.b32.xlu0 %v1068, 112
      %v1320 = vpop.permute.xlu0 %1319
      %1321 = vrot.lane.b32.xlu0 %v1094, 112
      %v1322 = vpop.permute.xlu0 %1321
      %1323 = vrot.lane.b32.xlu0 %v1113, 112
      %v1324 = vpop.permute.xlu0 %1323
      %v1333 = vsel %vm315, %v1053, %v1132
      %v1334 = vsel %vm315, %v1054, %v1134
      %v1335 = vsel %vm315, %v1055, %v1136
      %v1336 = vsel %vm315, %v1056, %v1138
      %v1337 = vsel %vm315, %v1057, %v1140
      %v1338 = vsel %vm315, %v1058, %v1142
      %v1339 = vsel %vm315, %v1059, %v1144
      %v1340 = vsel %vm315, %v1060, %v1146
      %v1341 = vsel %vm788, %v1333, %v1164
      %v1342 = vsel %vm788, %v1334, %v1166
      %v1343 = vsel %vm788, %v1335, %v1168
      %v1344 = vsel %vm788, %v1336, %v1170
      %v1345 = vsel %vm788, %v1337, %v1172
      %v1346 = vsel %vm788, %v1338, %v1174
      %v1347 = vsel %vm788, %v1339, %v1176
      %v1348 = vsel %vm788, %v1340, %v1178
      %v1349 = vsel %vm797, %v1341, %v1196
      %v1350 = vsel %vm797, %v1342, %v1198
      %v1351 = vsel %vm797, %v1343, %v1200
      %v1352 = vsel %vm797, %v1344, %v1202
      %v1353 = vsel %vm797, %v1345, %v1204
      %v1354 = vsel %vm797, %v1346, %v1206
      %v1355 = vsel %vm797, %v1347, %v1208
      %v1356 = vsel %vm797, %v1348, %v1210
      %v1357 = vsel %vm806, %v1349, %v1221
      %v1358 = vsel %vm806, %v1350, %v1223
      %v1359 = vsel %vm806, %v1351, %v1225
      %v1360 = vsel %vm806, %v1352, %v1227
      %v1361 = vsel %vm806, %v1353, %v1229
      %v1362 = vsel %vm806, %v1354, %v1231
      %v1363 = vsel %vm806, %v1355, %v1233
      %v1364 = vsel %vm806, %v1356, %v1235
      %v1365 = vsel %vm815, %v1357, %v1253
      %v1366 = vsel %vm815, %v1358, %v1255
      %v1367 = vsel %vm815, %v1359, %v1257
      %v1368 = vsel %vm815, %v1360, %v1259
      %v1369 = vsel %vm815, %v1361, %v1261
      %v1370 = vsel %vm815, %v1362, %v1263
      %v1371 = vsel %vm815, %v1363, %v1265
      %v1372 = vsel %vm815, %v1364, %v1267
      %v1373 = vsel %vm824, %v1365, %v1285
      %v1374 = vsel %vm824, %v1366, %v1287
      %v1375 = vsel %vm824, %v1367, %v1289
      %v1376 = vsel %vm824, %v1368, %v1291
      %v1377 = vsel %vm824, %v1369, %v1293
      %v1378 = vsel %vm824, %v1370, %v1295
      %v1379 = vsel %vm824, %v1371, %v1297
      %v1380 = vsel %vm824, %v1372, %v1299
      %v1381 = vsel %vm833, %v1373, %v1310
      %v1382 = vsel %vm833, %v1374, %v1312
      %v1383 = vsel %vm833, %v1375, %v1314
      %v1384 = vsel %vm833, %v1376, %v1316
      %v1385 = vsel %vm833, %v1377, %v1318
      %v1386 = vsel %vm833, %v1378, %v1320
      %v1387 = vsel %vm833, %v1379, %v1322
      %v1388 = vsel %vm833, %v1380, %v1324
      %v1389 = vpack.c.bf16 %v1382, %v1381
      %v1390 = vpack.c.bf16 %v1116, %v1115
      %v1391 = vpack.c.bf16 %v1384, %v1383
      %v1392 = vpack.c.bf16 %v1118, %v1117
      %v1393 = vpack.c.bf16 %v1386, %v1385
      %v1394 = vpack.c.bf16 %v1120, %v1119
      %v1395 = vpack.c.bf16 %v1388, %v1387
      %v1396 = vpack.c.bf16 %v1122, %v1121
      %v1415 = vunpack.c.l.b16 %v1027
      %v1416 = vunpack.c.l.b16 %v1028
      %v1417 = vunpack.c.l.b16 %v1029
      %v1418 = vunpack.c.l.b16 %v1030
      %v1419 = vunpack.c.l.b16 %v1031
      %v1420 = vunpack.c.l.b16 %v1032
      %v1421 = vunpack.c.l.b16 %v1033
      %v1422 = vunpack.c.l.b16 %v1034
      %v1423 = vunpack.c.l.b16 %v1035
      %v1424 = vunpack.c.l.b16 %v1036
      %v1425 = vunpack.c.l.b16 %v1037
      %v1426 = vunpack.c.l.b16 %v1038
      %v1427 = vunpack.c.l.b16 %v1039
      %v1428 = vunpack.c.l.b16 %v1040
      %v1429 = vunpack.c.l.b16 %v1041
      %v1430 = vunpack.c.l.b16 %v1042
      %v1431 = vunpack.c.l.b16 %v1043
      %v1432 = vunpack.c.l.b16 %v1044
      %v1433 = vpack.c.b16 %v1416, %v1415
      %v1434 = vpack.c.b16 %v1418, %v1417
      %v1435 = vpack.c.b16 %v1420, %v1419
      %v1436 = vpack.c.b16 %v1422, %v1421
      %v1437 = vpack.c.b16 %v1424, %v1423
      %v1438 = vpack.c.b16 %v1426, %v1425
      %v1439 = vpack.c.b16 %v1428, %v1427
      %v1440 = vpack.c.b16 %v1430, %v1429
      %v1441 = vpack.c.b16 %v1432, %v1431
      %v1452 = vsel %vm315, %v1390, 0
      %v1455 = vsel %vm315, %v1392, 0
      %v1458 = vsel %vm315, %v1394, 0
      %v1461 = vsel %vm315, %v1396, 0
      %1463 = vmatprep.subr.bf16.mxu0 0
      %1464 = vmatpush1.bf16.msra.mxu0 %v1433
      %1465 = vmatprep.subr.bf16.mxu0 0
      %1466 = vmatpush1.bf16.msra.mxu0 %v1434
      %1467 = vmatprep.subr.bf16.mxu0 0
      %1468 = vmatpush1.bf16.msra.mxu0 %v1435
      %1469 = vmatprep.subr.bf16.mxu0 0
      %1470 = vmatpush1.bf16.msra.mxu0 %v1436
      %1471 = vmatprep.subr.bf16.mxu0 0
      %1472 = vmatpush1.bf16.msra.mxu0 %v1437
      %1473 = vmatprep.subr.bf16.mxu0 0
      %1474 = vmatpush1.bf16.msra.mxu0 %v1438
      %1475 = vmatprep.subr.bf16.mxu0 0
      %1476 = vmatpush1.bf16.msra.mxu0 %v1439
      %1477 = vmatprep.subr.bf16.mxu0 0
      %1478 = vmatpush1.bf16.msra.mxu0 %v1440
      %1479 = vmatprep.subr.bf16.mxu0 0
      %1480 = vmatpush1.bf16.msra.mxu0 %v1441
      %1481 = vmatprep.subr.bf16.mxu0 0
      %1482 = vmatpush1.bf16.msra.mxu0 0
      %1483 = vmatprep.subr.bf16.mxu0 0
      %1484 = vmatpush1.bf16.msra.mxu0 0
      %1485 = vmatprep.subr.bf16.mxu0 0
      %1486 = vmatpush1.bf16.msra.mxu0 0
      %1487 = vmatprep.subr.bf16.mxu0 0
      %1488 = vmatpush1.bf16.msra.mxu0 0
      %1489 = vmatprep.subr.bf16.mxu0 0
      %1490 = vmatpush1.bf16.msra.mxu0 0
      %1491 = vmatprep.subr.bf16.mxu0 0
      %1492 = vmatpush1.bf16.msra.mxu0 0
      %1493 = vmatprep.subr.bf16.mxu0 0
      %1494 = vmatpush1.bf16.msra.mxu0 0
      %1495 = vmatprep.mubr.bf16.mxu0 %v1452
      %1496 = vmatmul.mubr.bf16.gmra.mrb[0].mxu0 %v1389
      %v1497 = vpop.f32.mrb[0].mxu0
      %v1498 = vadd.f32 %v320, %v1497
      %v1499 = vpop.f32.mrb[0].mxu0
      %v1500 = vpop.f32.mrb[0].mxu0
      %v1501 = vadd.f32 %v321, %v1500
      %v1502 = vpop.f32.mrb[0].mxu0
      %1503 = vmatprep.mubr.bf16.mxu0 %v1455
      %1504 = vmatmul.mubr.bf16.gmra.mrb[0].mxu0 %v1391
      %v1505 = vpop.f32.mrb[0].mxu0
      %v1506 = vadd.f32 %v322, %v1505
      %v1507 = vpop.f32.mrb[0].mxu0
      %v1508 = vpop.f32.mrb[0].mxu0
      %v1509 = vadd.f32 %v323, %v1508
      %v1510 = vpop.f32.mrb[0].mxu0
      %1511 = vmatprep.mubr.bf16.mxu0 %v1458
      %1512 = vmatmul.mubr.bf16.gmra.mrb[0].mxu0 %v1393
      %v1513 = vpop.f32.mrb[0].mxu0
      %v1514 = vadd.f32 %v324, %v1513
      %v1515 = vpop.f32.mrb[0].mxu0
      %v1516 = vpop.f32.mrb[0].mxu0
      %v1517 = vadd.f32 %v325, %v1516
      %v1518 = vpop.f32.mrb[0].mxu0
      %1519 = vmatprep.mubr.bf16.mxu0 %v1461
      %1520 = vmatmul.mubr.bf16.gmra.mrb[0].mxu0 %v1395
      %v1521 = vpop.f32.mrb[0].mxu0
      %v1522 = vadd.f32 %v326, %v1521
      %v1523 = vpop.f32.mrb[0].mxu0
      %v1524 = vpop.f32.mrb[0].mxu0
      %v1525 = vadd.f32 %v327, %v1524
      %v1526 = vpop.f32.mrb[0].mxu0
      %1527 = vdwg.mxu0
      %1528 = vst.msk [vmem:[%s305] sm:$0xff] %vm315, %v1498
      %1529 = vst.msk [vmem:[%s305 + $0x8] sm:$0xff] %vm315, %v1501
      %1530 = vst.msk [vmem:[%s305 + $0x10] sm:$0xff] %vm315, %v1506
      %1531 = vst.msk [vmem:[%s305 + $0x18] sm:$0xff] %vm315, %v1509
      %1532 = vst.msk [vmem:[%s305 + $0x20] sm:$0xff] %vm315, %v1514
      %1533 = vst.msk [vmem:[%s305 + $0x28] sm:$0xff] %vm315, %v1517
      %1534 = vst.msk [vmem:[%s305 + $0x30] sm:$0xff] %vm315, %v1522
      %1535 = vst.msk [vmem:[%s305 + $0x38] sm:$0xff] %vm315, %v1525
      %p1536 = scmp.lt.s32.totalorder %s19, 1
      %s1537 = scalar_select %p1536, %s19, 1
      %s1538 = smul.addr %s1537, 8
      %s1539 = smul.addr %s1538, 8
      %s1540 = scalar_lea.vmem %s8, %s1539
      // Predicated region
      $region53: #{uresnet_encoder_forward.13} parent=51 // pred_check
        %p1541 = pneg %p210
      $region54: #{uresnet_encoder_forward.13} parent=51 // pred_check_branch
        %1543 = sbr.rel (%p1541) target = $region56
      $region55: #{uresnet_encoder_forward.13} parent=51 // pred_region
        _
      $region56: #{uresnet_encoder_forward.13} parent=51 // pred_fallthru
        _
    $region52: #{uresnet_encoder_forward.13} parent=5 // pred_fallthru
      _
    %p1544 = scmp.le.s32.totalorder 2, %s14
    // Predicated region
    $region57: #{uresnet_encoder_forward.13} parent=5 // pred_check
      %p1545 = pneg %p1544
    $region58: #{uresnet_encoder_forward.13} parent=5 // pred_check_branch
      %1547 = sbr.rel (%p1545) target = $region60
    $region59: #{uresnet_encoder_forward.13} parent=5 // pred_region
      %s1548 = ssub.s32 %s14, 2
      // Predicated region
      $region61: #{uresnet_encoder_forward.13} parent=59 // pred_check
        %p1549 = pneg %p216
      $region62: #{uresnet_encoder_forward.13} parent=59 // pred_check_branch
        %1551 = sbr.rel (%p1549) target = $region64
      $region63: #{uresnet_encoder_forward.13} parent=59 // pred_region
        %p1552 = scmp.lt.s32.totalorder %s20, 1
        %s1553 = scalar_select %p1552, %s20, 1
        %s1554 = smul.addr %s1553, 8
        %s1555 = smul.addr %s1554, 8
        %s1556 = scalar_lea.vmem %s8, %s1555
      $region64: #{uresnet_encoder_forward.13} parent=59 // pred_fallthru
        _
    $region60: #{uresnet_encoder_forward.13} parent=5 // pred_fallthru
      _
  $region6: #{uresnet_encoder_forward.13} parent=0 // loop_footer
    %s18 = sadd.s32 1, %s14
  $region7: #{uresnet_encoder_forward.13} parent=0 // loop_footer_branch
    %13 = sbr.rel target = $region3
  $region8: #{uresnet_encoder_forward.13} parent=0 // loop_exit
    _

// kernel: uresnet_encoder_forward.15
$region0: #{uresnet_encoder_forward.15}
  #allocation0 [shape = 'u32[]', space=smem, size = 0x4, offset = 0x4, fixed_abs, tag = 'smem constant byte address 0x4 - core index']
  #allocation1 [shape = 'u32[144,128]{1,0:T(1,128)}', space=vmem, size = 0x12000, scoped, tag = 'internal scratch']
  %s0 = inlined_call_operand.vmem [shape: f32[16,4,32], index: 0, kind: input, shape index: {}]
  %s1 = inlined_call_operand.vmem [shape: bf16[64,24], index: 1, kind: input, shape index: {}]
  %s2 = inlined_call_operand.vmem [shape: f32[1,64], index: 2, kind: input, shape index: {}]
  %s3 = inlined_call_operand.vmem [shape: f32[1,64], index: 3, kind: input, shape index: {}]
  %s4 = inlined_call_operand.vmem [shape: f32[8,4,24], index: 4, kind: output, shape index: {}]
  %s5 = sld [smem:[#allocation0]]
  $region49: #{uresnet_encoder_forward.15} parent=0
    _
  %s7 = ssub.s32 1, %s5
  %s8 = scalar_select 0, %s7, %s5
  loop: start=0, step=1, limit=10
  $region2: #{uresnet_encoder_forward.15} parent=0 // loop_pre_header
    _
  $region3: #{uresnet_encoder_forward.15} parent=0 // loop_header
    %s10 = sphi 0, %s14
    %p11 = scmp.ge.s32.totalorder %s10, 10
    %s17 = sphi 0, %s29
    %s18 = sphi 0, %s25
    %s19 = sphi 0, %s17
    %s20 = sphi 0, %s18
    %s21 = sphi 0, %s19
    %s22 = sphi 0, %s20
    %s36 = sphi 0, %s38
    %s39 = sphi 0, %s36
    %s40 = sphi 0, %s39
    %s56 = sphi 0, %s40
    %s60 = sphi 0, %s60
    %s62 = sphi 0, %s60
    %s63 = sphi 0, %s62
    %s77 = sphi 0, %s63
    %s81 = sphi 0, %s81
    %s83 = sphi 0, %s81
    %s84 = sphi 0, %s83
    %s98 = sphi 0, %s84
    %s102 = sphi 0, %s102
    %s104 = sphi 0, %s102
    %s105 = sphi 0, %s104
    %s119 = sphi 0, %s105
    %s129 = sphi 0, %s131
    %s132 = sphi 0, %s129
    %s133 = sphi 0, %s132
    %s149 = sphi 0, %s133
  $region4: #{uresnet_encoder_forward.15} parent=0 // loop_header_branch
    %13 = sbr.rel (%p11) target = $region8
  $region5: #{uresnet_encoder_forward.15} parent=0 // loop_body
    %s15 = ssub.s32 %s10, 1
    %s16 = ssub.s32 %s10, 2
    %s23 = sadd.s32 1, %s18
    %p24 = scmp.ge.s32.totalorder %s23, 4
    %s25 = scalar_select %p24, 0, %s23
    %s26 = sadd.s32 1, %s17
    %s27 = scalar_select %p24, %s26, %s17
    %p28 = scmp.ge.s32.totalorder %s27, 2
    %s29 = scalar_select %p28, 0, %s27
    %s30 = smul.u32 %s17, 4
    %s31 = sadd.s32 %s30, %s18
    %s32 = smul.u32 %s29, 4
    %s33 = sadd.s32 %s32, %s25
    %s34 = ssub.s32 %s31, %s33
    %p35 = scmp.eq.s32.totalorder %s34, 0
    %s37 = sadd.s32 %s36, 1
    %s38 = scalar_select %p35, %s36, %s37
    %p41 = pneg %p35
    %p42 = scmp.eq.s32.totalorder %s10, 7
    %p43 = por %p41, %p42
    %p44 = scmp.ne.s32.totalorder %s36, %s39
    %p45 = scmp.eq.s32.totalorder %s10, 0
    %p46 = por %p44, %p45
    %p47 = scmp.ne.s32.totalorder %s36, %s39
    %p48 = scmp.eq.s32.totalorder %s15, 7
    %p49 = por %p47, %p48
    %p50 = scmp.ne.s32.totalorder %s39, %s40
    %p51 = scmp.eq.s32.totalorder %s15, 0
    %p52 = por %p50, %p51
    %p53 = scmp.ne.s32.totalorder %s39, %s40
    %p54 = scmp.eq.s32.totalorder %s16, 7
    %p55 = por %p53, %p54
    %p57 = scmp.ne.s32.totalorder %s40, %s56
    %p58 = scmp.eq.s32.totalorder %s16, 0
    %p59 = por %p57, %p58
    %s61 = sadd.s32 %s60, 1
    %p64 = scmp.eq.s32.totalorder %s10, 7
    %p65 = scmp.ne.s32.totalorder %s60, %s62
    %p66 = scmp.eq.s32.totalorder %s10, 0
    %p67 = por %p65, %p66
    %p68 = scmp.ne.s32.totalorder %s60, %s62
    %p69 = scmp.eq.s32.totalorder %s15, 7
    %p70 = por %p68, %p69
    %p71 = scmp.ne.s32.totalorder %s62, %s63
    %p72 = scmp.eq.s32.totalorder %s15, 0
    %p73 = por %p71, %p72
    %p74 = scmp.ne.s32.totalorder %s62, %s63
    %p75 = scmp.eq.s32.totalorder %s16, 7
    %p76 = por %p74, %p75
    %p78 = scmp.ne.s32.totalorder %s63, %s77
    %p79 = scmp.eq.s32.totalorder %s16, 0
    %p80 = por %p78, %p79
    %s82 = sadd.s32 %s81, 1
    %p85 = scmp.eq.s32.totalorder %s10, 7
    %p86 = scmp.ne.s32.totalorder %s81, %s83
    %p87 = scmp.eq.s32.totalorder %s10, 0
    %p88 = por %p86, %p87
    %p89 = scmp.ne.s32.totalorder %s81, %s83
    %p90 = scmp.eq.s32.totalorder %s15, 7
    %p91 = por %p89, %p90
    %p92 = scmp.ne.s32.totalorder %s83, %s84
    %p93 = scmp.eq.s32.totalorder %s15, 0
    %p94 = por %p92, %p93
    %p95 = scmp.ne.s32.totalorder %s83, %s84
    %p96 = scmp.eq.s32.totalorder %s16, 7
    %p97 = por %p95, %p96
    %p99 = scmp.ne.s32.totalorder %s84, %s98
    %p100 = scmp.eq.s32.totalorder %s16, 0
    %p101 = por %p99, %p100
    %s103 = sadd.s32 %s102, 1
    %p106 = scmp.eq.s32.totalorder %s10, 7
    %p107 = scmp.ne.s32.totalorder %s102, %s104
    %p108 = scmp.eq.s32.totalorder %s10, 0
    %p109 = por %p107, %p108
    %p110 = scmp.ne.s32.totalorder %s102, %s104
    %p111 = scmp.eq.s32.totalorder %s15, 7
    %p112 = por %p110, %p111
    %p113 = scmp.ne.s32.totalorder %s104, %s105
    %p114 = scmp.eq.s32.totalorder %s15, 0
    %p115 = por %p113, %p114
    %p116 = scmp.ne.s32.totalorder %s104, %s105
    %p117 = scmp.eq.s32.totalorder %s16, 7
    %p118 = por %p116, %p117
    %p120 = scmp.ne.s32.totalorder %s105, %s119
    %p121 = scmp.eq.s32.totalorder %s16, 0
    %p122 = por %p120, %p121
    %s123 = smul.u32 %s17, 4
    %s124 = sadd.s32 %s123, %s18
    %s125 = smul.u32 %s29, 4
    %s126 = sadd.s32 %s125, %s25
    %s127 = ssub.s32 %s124, %s126
    %p128 = scmp.eq.s32.totalorder %s127, 0
    %s130 = sadd.s32 %s129, 1
    %s131 = scalar_select %p128, %s129, %s130
    %p134 = pneg %p128
    %p135 = scmp.eq.s32.totalorder %s10, 7
    %p136 = por %p134, %p135
    %p137 = scmp.ne.s32.totalorder %s129, %s132
    %p138 = scmp.eq.s32.totalorder %s10, 0
    %p139 = por %p137, %p138
    %p140 = scmp.ne.s32.totalorder %s129, %s132
    %p141 = scmp.eq.s32.totalorder %s15, 7
    %p142 = por %p140, %p141
    %p143 = scmp.ne.s32.totalorder %s132, %s133
    %p144 = scmp.eq.s32.totalorder %s15, 0
    %p145 = por %p143, %p144
    %p146 = scmp.ne.s32.totalorder %s132, %s133
    %p147 = scmp.eq.s32.totalorder %s16, 7
    %p148 = por %p146, %p147
    %p150 = scmp.ne.s32.totalorder %s133, %s149
    %p151 = scmp.eq.s32.totalorder %s16, 0
    %p152 = por %p150, %p151
    %p153 = scmp.le.s32.totalorder 1, %s10
    %p154 = scmp.lt.s32.totalorder %s10, 9
    %p155 = pnand %p153, %p154
    %p156 = pneg %p155
    // Predicated region
    $region9: #{uresnet_encoder_forward.15} parent=5 // pred_check
      _
    $region10: #{uresnet_encoder_forward.15} parent=5 // pred_check_branch
      %158 = sbr.rel (%p155) target = $region12
    $region11: #{uresnet_encoder_forward.15} parent=5 // pred_region
      %s159 = ssub.s32 %s10, 1
      // Predicated region
      $region13: #{uresnet_encoder_forward.15} parent=11 // pred_check
        %p160 = pneg %p73
      $region14: #{uresnet_encoder_forward.15} parent=11 // pred_check_branch
        %162 = sbr.rel (%p160) target = $region16
      $region15: #{uresnet_encoder_forward.15} parent=11 // pred_region
        _
      $region16: #{uresnet_encoder_forward.15} parent=11 // pred_fallthru
        _
      // Predicated region
      $region17: #{uresnet_encoder_forward.15} parent=11 // pred_check
        %p163 = pneg %p94
      $region18: #{uresnet_encoder_forward.15} parent=11 // pred_check_branch
        %165 = sbr.rel (%p163) target = $region20
      $region19: #{uresnet_encoder_forward.15} parent=11 // pred_region
        _
      $region20: #{uresnet_encoder_forward.15} parent=11 // pred_fallthru
        _
      // Predicated region
      $region21: #{uresnet_encoder_forward.15} parent=11 // pred_check
        %p166 = pneg %p115
      $region22: #{uresnet_encoder_forward.15} parent=11 // pred_check_branch
        %168 = sbr.rel (%p166) target = $region24
      $region23: #{uresnet_encoder_forward.15} parent=11 // pred_region
        _
      $region24: #{uresnet_encoder_forward.15} parent=11 // pred_fallthru
        _
    $region12: #{uresnet_encoder_forward.15} parent=5 // pred_fallthru
      _
    %p169 = scmp.lt.s32.totalorder %s10, 8
    // Predicated region
    $region25: #{uresnet_encoder_forward.15} parent=5 // pred_check
      %p170 = pneg %p169
    $region26: #{uresnet_encoder_forward.15} parent=5 // pred_check_branch
      %172 = sbr.rel (%p170) target = $region28
    $region27: #{uresnet_encoder_forward.15} parent=5 // pred_region
      // Predicated region
      $region29: #{uresnet_encoder_forward.15} parent=27 // pred_check
        %p173 = pneg %p46
      $region30: #{uresnet_encoder_forward.15} parent=27 // pred_check_branch
        %175 = sbr.rel (%p173) target = $region32
      $region31: #{uresnet_encoder_forward.15} parent=27 // pred_region
        %s176 = smul.u32 %s17, 4
        %s177 = sadd.s32 %s176, %s18
        %s178 = smul.u32 2, %s177
        %p179 = scmp.lt.s32.totalorder %s178, 15
        %s180 = scalar_select %p179, %s178, 15
        %s181 = smul.addr %s180, 4
        %s182 = scalar_lea.vmem %s0, %s181
        %s183 = smul.u32 %s17, 4
        %s184 = sadd.s32 %s183, %s18
        %s185 = smul.u32 2, %s184
      $region32: #{uresnet_encoder_forward.15} parent=27 // pred_fallthru
        _
    $region28: #{uresnet_encoder_forward.15} parent=5 // pred_fallthru
      _
    %p186 = scmp.le.s32.totalorder 1, %s10
    %p187 = scmp.lt.s32.totalorder %s10, 9
    %p188 = pnand %p186, %p187
    %p189 = pneg %p188
    // Predicated region
    $region33: #{uresnet_encoder_forward.15} parent=5 // pred_check
      _
    $region34: #{uresnet_encoder_forward.15} parent=5 // pred_check_branch
      %191 = sbr.rel (%p188) target = $region36
    $region35: #{uresnet_encoder_forward.15} parent=5 // pred_region
      %s192 = ssub.s32 %s10, 1
      %s193 = smul.u32 %s19, 4
      %s194 = sadd.s32 %s193, %s20
      %s195 = smul.u32 2, %s194
      %p196 = scmp.lt.s32.totalorder %s195, 15
      %s197 = scalar_select %p196, %s195, 15
      %s198 = smul.addr %s197, 4
      %s199 = scalar_lea.vmem %s0, %s198
      %p200 = pneg %p52
      %p201 = pneg %p49
      %p202 = pneg %p73
      %p203 = pneg %p70
      %p204 = pneg %p94
      %p205 = pneg %p91
      %p206 = pneg %p115
      %p207 = pneg %p112
      %p208 = pneg %p145
      %p209 = pneg %p142
      %s210 = smul.u32 %s19, 4
      %s211 = sadd.s32 %s210, %s20
      %p212 = scmp.lt.s32.totalorder %s211, 7
      %s213 = scalar_select %p212, %s211, 7
      %s214 = smul.addr %s213, 4
      %s215 = scalar_lea.vmem %s4, %s214
      %s216 = smul.u32 %s19, 4
      %s217 = sadd.s32 %s216, %s20
      %s218 = smul.u32 2, %s217
      %p219 = scmp.lt.s32.totalorder %s218, 15
      %s220 = scalar_select %p219, %s218, 15
      %s221 = smul.addr %s220, 4
      %s222 = scalar_lea.vmem %s0, %s221
      %s223 = smul.u32 %s19, 4
      %s224 = sadd.s32 %s223, %s20
      %s225 = smul.u32 2, %s224
      %s226 = smul.u32 %s19, 4
      %s227 = sadd.s32 %s226, %s20
      %p228 = scmp.lt.s32.totalorder %s227, 7
      %s229 = scalar_select %p228, %s227, 7
      %s230 = smul.addr %s229, 4
      %s231 = scalar_lea.vmem %s4, %s230
      %s232 = smul.u32 %s19, 4
      %s233 = sadd.s32 %s232, %s20
      %v235 = vld [vmem:[%s222] sm:$0xf]
      %s236 = scalar_lea.vmem %s222, 4
      %v237 = vld [vmem:[%s236] sm:$0xf]
      %239 = vrot.lane.b32.xlu0 %v237, 32
      %v240 = vpop.permute.xlu0 %239
      %vm242 = vcmask 261120
      %v243 = vsel %vm242, %v235, %v240
      %v244 = vld [vmem:[%s2] sm:$0x1]
      %v246 = vlaneseq
      %v247 = vshrl.u32 %v246, 7
      %v248 = vsub.s32 0, %v247
      %v249 = vrot.slane %v244, %v248
      %v251 = vmul.f32 %v243, %v249
      %v252 = vld [vmem:[%s3] sm:$0x1]
      %v254 = vlaneseq
      %v255 = vshrl.u32 %v254, 7
      %v256 = vsub.s32 0, %v255
      %v257 = vrot.slane %v252, %v256
      %v259 = vadd.f32 %v251, %v257
      %v260 = vmax.f32 %v259, 0.0
      %v261 = vpack.c.bf16 %v260, %v260
      %v262 = vld [vmem:[%s1] sm:$0xf]
      %v263 = vld [vmem:[%s1 + $0x4] sm:$0xf]
      %v264 = vld [vmem:[%s1 + $0x8] sm:$0xf]
      %v265 = vld [vmem:[%s1 + $0xc] sm:$0xf]
      %v266 = vld [vmem:[%s1 + $0x10] sm:$0xf]
      %v267 = vld [vmem:[%s1 + $0x14] sm:$0xf]
      %v268 = vld [vmem:[%s1 + $0x18] sm:$0xf]
      %v269 = vld [vmem:[%s1 + $0x1c] sm:$0xf]
      %v278 = vunpack.c.l.b16 %v262
      %v279 = vunpack.c.l.b16 %v263
      %v280 = vunpack.c.l.b16 %v264
      %v281 = vunpack.c.l.b16 %v265
      %v282 = vunpack.c.l.b16 %v266
      %v283 = vunpack.c.l.b16 %v267
      %v284 = vunpack.c.l.b16 %v268
      %v285 = vunpack.c.l.b16 %v269
      %v286 = vpack.c.b16 %v279, %v278
      %v287 = vpack.c.b16 %v281, %v280
      %v288 = vpack.c.b16 %v283, %v282
      %v289 = vpack.c.b16 %v285, %v284
      %vm294 = vcmask 523264
      %v296 = vsel %vm294, %v261, 0
      %298 = vmatprep.subr.bf16.mxu0 0
      %299 = vmatpush1.bf16.msra.mxu0 %v286
      %300 = vmatprep.subr.bf16.mxu0 0
      %301 = vmatpush1.bf16.msra.mxu0 %v287
      %302 = vmatprep.subr.bf16.mxu0 0
      %303 = vmatpush1.bf16.msra.mxu0 %v288
      %304 = vmatprep.subr.bf16.mxu0 0
      %305 = vmatpush1.bf16.msra.mxu0 %v289
      %306 = vmatprep.subr.bf16.mxu0 0
      %307 = vmatpush1.bf16.msra.mxu0 0
      %308 = vmatprep.subr.bf16.mxu0 0
      %309 = vmatpush1.bf16.msra.mxu0 0
      %310 = vmatprep.subr.bf16.mxu0 0
      %311 = vmatpush1.bf16.msra.mxu0 0
      %312 = vmatprep.subr.bf16.mxu0 0
      %313 = vmatpush1.bf16.msra.mxu0 0
      %314 = vmatprep.subr.bf16.mxu0 0
      %315 = vmatpush1.bf16.msra.mxu0 0
      %316 = vmatprep.subr.bf16.mxu0 0
      %317 = vmatpush1.bf16.msra.mxu0 0
      %318 = vmatprep.subr.bf16.mxu0 0
      %319 = vmatpush1.bf16.msra.mxu0 0
      %320 = vmatprep.subr.bf16.mxu0 0
      %321 = vmatpush1.bf16.msra.mxu0 0
      %322 = vmatprep.subr.bf16.mxu0 0
      %323 = vmatpush1.bf16.msra.mxu0 0
      %324 = vmatprep.subr.bf16.mxu0 0
      %325 = vmatpush1.bf16.msra.mxu0 0
      %326 = vmatprep.subr.bf16.mxu0 0
      %327 = vmatpush1.bf16.msra.mxu0 0
      %328 = vmatprep.subr.bf16.mxu0 0
      %329 = vmatpush1.bf16.msra.mxu0 0
      %330 = vmatprep.mubr.bf16.mxu0 0
      %331 = vmatmul.mubr.bf16.gmra.mrb[0].mxu0 %v296
      %v332 = vpop.f32.mrb[0].mxu0
      %v333 = vadd.f32 0.0, %v332
      %v334 = vpop.f32.mrb[0].mxu0
      %v335 = vpop.f32.mrb[0].mxu0
      %v336 = vpop.f32.mrb[0].mxu0
      %337 = vdwg.mxu0
      %vm338 = vcmask 191488
      %339 = vst.msk [vmem:[%s231] sm:$0xf] %vm338, %v333
      %s340 = smul.u32 %s19, 4
      %s341 = sadd.s32 %s340, %s20
      %p342 = scmp.lt.s32.totalorder %s341, 7
      %s343 = scalar_select %p342, %s341, 7
      %s344 = smul.addr %s343, 4
      %s345 = scalar_lea.vmem %s4, %s344
      // Predicated region
      $region37: #{uresnet_encoder_forward.15} parent=35 // pred_check
        %p346 = pneg %p142
      $region38: #{uresnet_encoder_forward.15} parent=35 // pred_check_branch
        %348 = sbr.rel (%p346) target = $region40
      $region39: #{uresnet_encoder_forward.15} parent=35 // pred_region
        %s349 = smul.u32 %s19, 4
        %s350 = sadd.s32 %s349, %s20
      $region40: #{uresnet_encoder_forward.15} parent=35 // pred_fallthru
        _
    $region36: #{uresnet_encoder_forward.15} parent=5 // pred_fallthru
      _
    %p351 = scmp.le.s32.totalorder 2, %s10
    // Predicated region
    $region41: #{uresnet_encoder_forward.15} parent=5 // pred_check
      %p352 = pneg %p351
    $region42: #{uresnet_encoder_forward.15} parent=5 // pred_check_branch
      %354 = sbr.rel (%p352) target = $region44
    $region43: #{uresnet_encoder_forward.15} parent=5 // pred_region
      %s355 = ssub.s32 %s10, 2
      // Predicated region
      $region45: #{uresnet_encoder_forward.15} parent=43 // pred_check
        %p356 = pneg %p148
      $region46: #{uresnet_encoder_forward.15} parent=43 // pred_check_branch
        %358 = sbr.rel (%p356) target = $region48
      $region47: #{uresnet_encoder_forward.15} parent=43 // pred_region
        %s359 = smul.u32 %s21, 4
        %s360 = sadd.s32 %s359, %s22
        %p361 = scmp.lt.s32.totalorder %s360, 7
        %s362 = scalar_select %p361, %s360, 7
        %s363 = smul.addr %s362, 4
        %s364 = scalar_lea.vmem %s4, %s363
      $region48: #{uresnet_encoder_forward.15} parent=43 // pred_fallthru
        _
    $region44: #{uresnet_encoder_forward.15} parent=5 // pred_fallthru
      _
  $region6: #{uresnet_encoder_forward.15} parent=0 // loop_footer
    %s14 = sadd.s32 1, %s10
  $region7: #{uresnet_encoder_forward.15} parent=0 // loop_footer_branch
    %9 = sbr.rel target = $region3
  $region8: #{uresnet_encoder_forward.15} parent=0 // loop_exit
    _

// kernel: uresnet_encoder_forward.10
$region0: #{uresnet_encoder_forward.10}
  #allocation0 [shape = 'u32[]', space=smem, size = 0x4, offset = 0x4, fixed_abs, tag = 'smem constant byte address 0x4 - core index']
  #allocation1 [shape = 'u32[144,128]{1,0:T(1,128)}', space=vmem, size = 0x12000, scoped, tag = 'internal scratch']
  #allocation2 [shape = 'f32[304,8]{1,0:T(8,128)}', space=vmem, size = 0x26000, scoped, tag = 'scratch operand']
  %s0 = inlined_call_operand.vmem [shape: f32[2,256,8], index: 0, kind: input, shape index: {}]
  %s1 = inlined_call_operand.vmem [shape: bf16[72,8], index: 1, kind: input, shape index: {}]
  %s2 = inlined_call_operand.vmem [shape: bf16[72,8], index: 2, kind: input, shape index: {}]
  %s3 = inlined_call_operand.vmem [shape: f32[1,8], index: 3, kind: input, shape index: {}]
  %s4 = inlined_call_operand.vmem [shape: f32[1,8], index: 4, kind: input, shape index: {}]
  %s5 = inlined_call_operand.vmem [shape: f32[1,8], index: 5, kind: input, shape index: {}]
  %s6 = inlined_call_operand.vmem [shape: f32[1,8], index: 6, kind: input, shape index: {}]
  %s7 = inlined_call_operand.vmem [shape: f32[256,2], index: 7, kind: input, shape index: {}]
  %s8 = inlined_call_operand.vmem [shape: f32[2,256,8], index: 8, kind: output, shape index: {}]
  %s9 = sld [smem:[#allocation0]]
  $region65: #{uresnet_encoder_forward.10} parent=0
    _
  %s11 = ssub.s32 1, %s9
  %s12 = scalar_select 0, %s11, %s9
  loop: start=0, step=1, limit=4
  $region2: #{uresnet_encoder_forward.10} parent=0 // loop_pre_header
    _
  $region3: #{uresnet_encoder_forward.10} parent=0 // loop_header
    %s14 = sphi 0, %s18
    %p15 = scmp.ge.s32.totalorder %s14, 4
    %s24 = sphi 0, %s26
    %s27 = sphi 0, %s24
    %s28 = sphi 0, %s27
    %s44 = sphi 0, %s28
    %s48 = sphi 0, %s48
    %s50 = sphi 0, %s48
    %s51 = sphi 0, %s50
    %s65 = sphi 0, %s51
    %s69 = sphi 0, %s69
    %s71 = sphi 0, %s69
    %s72 = sphi 0, %s71
    %s86 = sphi 0, %s72
    %s90 = sphi 0, %s90
    %s92 = sphi 0, %s90
    %s93 = sphi 0, %s92
    %s107 = sphi 0, %s93
    %s111 = sphi 0, %s111
    %s113 = sphi 0, %s111
    %s114 = sphi 0, %s113
    %s128 = sphi 0, %s114
    %s132 = sphi 0, %s132
    %s134 = sphi 0, %s132
    %s135 = sphi 0, %s134
    %s149 = sphi 0, %s135
    %s153 = sphi 0, %s153
    %s155 = sphi 0, %s153
    %s156 = sphi 0, %s155
    %s170 = sphi 0, %s156
    %s174 = sphi 0, %s174
    %s176 = sphi 0, %s174
    %s177 = sphi 0, %s176
    %s191 = sphi 0, %s177
    %s197 = sphi 0, %s199
    %s200 = sphi 0, %s197
    %s201 = sphi 0, %s200
    %s217 = sphi 0, %s201
  $region4: #{uresnet_encoder_forward.10} parent=0 // loop_header_branch
    %17 = sbr.rel (%p15) target = $region8
  $region5: #{uresnet_encoder_forward.10} parent=0 // loop_body
    %s19 = ssub.s32 %s14, 1
    %s20 = ssub.s32 %s14, 2
    %s21 = sadd.s32 %s14, 1
    %s22 = ssub.s32 %s14, %s21
    %p23 = scmp.eq.s32.totalorder %s22, 0
    %s25 = sadd.s32 %s24, 1
    %s26 = scalar_select %p23, %s24, %s25
    %p29 = pneg %p23
    %p30 = scmp.eq.s32.totalorder %s14, 1
    %p31 = por %p29, %p30
    %p32 = scmp.ne.s32.totalorder %s24, %s27
    %p33 = scmp.eq.s32.totalorder %s14, 0
    %p34 = por %p32, %p33
    %p35 = scmp.ne.s32.totalorder %s24, %s27
    %p36 = scmp.eq.s32.totalorder %s19, 1
    %p37 = por %p35, %p36
    %p38 = scmp.ne.s32.totalorder %s27, %s28
    %p39 = scmp.eq.s32.totalorder %s19, 0
    %p40 = por %p38, %p39
    %p41 = scmp.ne.s32.totalorder %s27, %s28
    %p42 = scmp.eq.s32.totalorder %s20, 1
    %p43 = por %p41, %p42
    %p45 = scmp.ne.s32.totalorder %s28, %s44
    %p46 = scmp.eq.s32.totalorder %s20, 0
    %p47 = por %p45, %p46
    %s49 = sadd.s32 %s48, 1
    %p52 = scmp.eq.s32.totalorder %s14, 1
    %p53 = scmp.ne.s32.totalorder %s48, %s50
    %p54 = scmp.eq.s32.totalorder %s14, 0
    %p55 = por %p53, %p54
    %p56 = scmp.ne.s32.totalorder %s48, %s50
    %p57 = scmp.eq.s32.totalorder %s19, 1
    %p58 = por %p56, %p57
    %p59 = scmp.ne.s32.totalorder %s50, %s51
    %p60 = scmp.eq.s32.totalorder %s19, 0
    %p61 = por %p59, %p60
    %p62 = scmp.ne.s32.totalorder %s50, %s51
    %p63 = scmp.eq.s32.totalorder %s20, 1
    %p64 = por %p62, %p63
    %p66 = scmp.ne.s32.totalorder %s51, %s65
    %p67 = scmp.eq.s32.totalorder %s20, 0
    %p68 = por %p66, %p67
    %s70 = sadd.s32 %s69, 1
    %p73 = scmp.eq.s32.totalorder %s14, 1
    %p74 = scmp.ne.s32.totalorder %s69, %s71
    %p75 = scmp.eq.s32.totalorder %s14, 0
    %p76 = por %p74, %p75
    %p77 = scmp.ne.s32.totalorder %s69, %s71
    %p78 = scmp.eq.s32.totalorder %s19, 1
    %p79 = por %p77, %p78
    %p80 = scmp.ne.s32.totalorder %s71, %s72
    %p81 = scmp.eq.s32.totalorder %s19, 0
    %p82 = por %p80, %p81
    %p83 = scmp.ne.s32.totalorder %s71, %s72
    %p84 = scmp.eq.s32.totalorder %s20, 1
    %p85 = por %p83, %p84
    %p87 = scmp.ne.s32.totalorder %s72, %s86
    %p88 = scmp.eq.s32.totalorder %s20, 0
    %p89 = por %p87, %p88
    %s91 = sadd.s32 %s90, 1
    %p94 = scmp.eq.s32.totalorder %s14, 1
    %p95 = scmp.ne.s32.totalorder %s90, %s92
    %p96 = scmp.eq.s32.totalorder %s14, 0
    %p97 = por %p95, %p96
    %p98 = scmp.ne.s32.totalorder %s90, %s92
    %p99 = scmp.eq.s32.totalorder %s19, 1
    %p100 = por %p98, %p99
    %p101 = scmp.ne.s32.totalorder %s92, %s93
    %p102 = scmp.eq.s32.totalorder %s19, 0
    %p103 = por %p101, %p102
    %p104 = scmp.ne.s32.totalorder %s92, %s93
    %p105 = scmp.eq.s32.totalorder %s20, 1
    %p106 = por %p104, %p105
    %p108 = scmp.ne.s32.totalorder %s93, %s107
    %p109 = scmp.eq.s32.totalorder %s20, 0
    %p110 = por %p108, %p109
    %s112 = sadd.s32 %s111, 1
    %p115 = scmp.eq.s32.totalorder %s14, 1
    %p116 = scmp.ne.s32.totalorder %s111, %s113
    %p117 = scmp.eq.s32.totalorder %s14, 0
    %p118 = por %p116, %p117
    %p119 = scmp.ne.s32.totalorder %s111, %s113
    %p120 = scmp.eq.s32.totalorder %s19, 1
    %p121 = por %p119, %p120
    %p122 = scmp.ne.s32.totalorder %s113, %s114
    %p123 = scmp.eq.s32.totalorder %s19, 0
    %p124 = por %p122, %p123
    %p125 = scmp.ne.s32.totalorder %s113, %s114
    %p126 = scmp.eq.s32.totalorder %s20, 1
    %p127 = por %p125, %p126
    %p129 = scmp.ne.s32.totalorder %s114, %s128
    %p130 = scmp.eq.s32.totalorder %s20, 0
    %p131 = por %p129, %p130
    %s133 = sadd.s32 %s132, 1
    %p136 = scmp.eq.s32.totalorder %s14, 1
    %p137 = scmp.ne.s32.totalorder %s132, %s134
    %p138 = scmp.eq.s32.totalorder %s14, 0
    %p139 = por %p137, %p138
    %p140 = scmp.ne.s32.totalorder %s132, %s134
    %p141 = scmp.eq.s32.totalorder %s19, 1
    %p142 = por %p140, %p141
    %p143 = scmp.ne.s32.totalorder %s134, %s135
    %p144 = scmp.eq.s32.totalorder %s19, 0
    %p145 = por %p143, %p144
    %p146 = scmp.ne.s32.totalorder %s134, %s135
    %p147 = scmp.eq.s32.totalorder %s20, 1
    %p148 = por %p146, %p147
    %p150 = scmp.ne.s32.totalorder %s135, %s149
    %p151 = scmp.eq.s32.totalorder %s20, 0
    %p152 = por %p150, %p151
    %s154 = sadd.s32 %s153, 1
    %p157 = scmp.eq.s32.totalorder %s14, 1
    %p158 = scmp.ne.s32.totalorder %s153, %s155
    %p159 = scmp.eq.s32.totalorder %s14, 0
    %p160 = por %p158, %p159
    %p161 = scmp.ne.s32.totalorder %s153, %s155
    %p162 = scmp.eq.s32.totalorder %s19, 1
    %p163 = por %p161, %p162
    %p164 = scmp.ne.s32.totalorder %s155, %s156
    %p165 = scmp.eq.s32.totalorder %s19, 0
    %p166 = por %p164, %p165
    %p167 = scmp.ne.s32.totalorder %s155, %s156
    %p168 = scmp.eq.s32.totalorder %s20, 1
    %p169 = por %p167, %p168
    %p171 = scmp.ne.s32.totalorder %s156, %s170
    %p172 = scmp.eq.s32.totalorder %s20, 0
    %p173 = por %p171, %p172
    %s175 = sadd.s32 %s174, 1
    %p178 = scmp.eq.s32.totalorder %s14, 1
    %p179 = scmp.ne.s32.totalorder %s174, %s176
    %p180 = scmp.eq.s32.totalorder %s14, 0
    %p181 = por %p179, %p180
    %p182 = scmp.ne.s32.totalorder %s174, %s176
    %p183 = scmp.eq.s32.totalorder %s19, 1
    %p184 = por %p182, %p183
    %p185 = scmp.ne.s32.totalorder %s176, %s177
    %p186 = scmp.eq.s32.totalorder %s19, 0
    %p187 = por %p185, %p186
    %p188 = scmp.ne.s32.totalorder %s176, %s177
    %p189 = scmp.eq.s32.totalorder %s20, 1
    %p190 = por %p188, %p189
    %p192 = scmp.ne.s32.totalorder %s177, %s191
    %p193 = scmp.eq.s32.totalorder %s20, 0
    %p194 = por %p192, %p193
    %s195 = ssub.s32 %s14, %s21
    %p196 = scmp.eq.s32.totalorder %s195, 0
    %s198 = sadd.s32 %s197, 1
    %s199 = scalar_select %p196, %s197, %s198
    %p202 = pneg %p196
    %p203 = scmp.eq.s32.totalorder %s14, 1
    %p204 = por %p202, %p203
    %p205 = scmp.ne.s32.totalorder %s197, %s200
    %p206 = scmp.eq.s32.totalorder %s14, 0
    %p207 = por %p205, %p206
    %p208 = scmp.ne.s32.totalorder %s197, %s200
    %p209 = scmp.eq.s32.totalorder %s19, 1
    %p210 = por %p208, %p209
    %p211 = scmp.ne.s32.totalorder %s200, %s201
    %p212 = scmp.eq.s32.totalorder %s19, 0
    %p213 = por %p211, %p212
    %p214 = scmp.ne.s32.totalorder %s200, %s201
    %p215 = scmp.eq.s32.totalorder %s20, 1
    %p216 = por %p214, %p215
    %p218 = scmp.ne.s32.totalorder %s201, %s217
    %p219 = scmp.eq.s32.totalorder %s20, 0
    %p220 = por %p218, %p219
    %p221 = scmp.le.s32.totalorder 1, %s14
    %p222 = scmp.lt.s32.totalorder %s14, 3
    %p223 = pnand %p221, %p222
    %p224 = pneg %p223
    // Predicated region
    $region9: #{uresnet_encoder_forward.10} parent=5 // pred_check
      _
    $region10: #{uresnet_encoder_forward.10} parent=5 // pred_check_branch
      %226 = sbr.rel (%p223) target = $region12
    $region11: #{uresnet_encoder_forward.10} parent=5 // pred_region
      %s227 = ssub.s32 %s14, 1
      // Predicated region
      $region13: #{uresnet_encoder_forward.10} parent=11 // pred_check
        %p228 = pneg %p61
      $region14: #{uresnet_encoder_forward.10} parent=11 // pred_check_branch
        %230 = sbr.rel (%p228) target = $region16
      $region15: #{uresnet_encoder_forward.10} parent=11 // pred_region
        _
      $region16: #{uresnet_encoder_forward.10} parent=11 // pred_fallthru
        _
      // Predicated region
      $region17: #{uresnet_encoder_forward.10} parent=11 // pred_check
        %p231 = pneg %p82
      $region18: #{uresnet_encoder_forward.10} parent=11 // pred_check_branch
        %233 = sbr.rel (%p231) target = $region20
      $region19: #{uresnet_encoder_forward.10} parent=11 // pred_region
        _
      $region20: #{uresnet_encoder_forward.10} parent=11 // pred_fallthru
        _
      // Predicated region
      $region21: #{uresnet_encoder_forward.10} parent=11 // pred_check
        %p234 = pneg %p103
      $region22: #{uresnet_encoder_forward.10} parent=11 // pred_check_branch
        %236 = sbr.rel (%p234) target = $region24
      $region23: #{uresnet_encoder_forward.10} parent=11 // pred_region
        _
      $region24: #{uresnet_encoder_forward.10} parent=11 // pred_fallthru
        _
      // Predicated region
      $region25: #{uresnet_encoder_forward.10} parent=11 // pred_check
        %p237 = pneg %p124
      $region26: #{uresnet_encoder_forward.10} parent=11 // pred_check_branch
        %239 = sbr.rel (%p237) target = $region28
      $region27: #{uresnet_encoder_forward.10} parent=11 // pred_region
        _
      $region28: #{uresnet_encoder_forward.10} parent=11 // pred_fallthru
        _
      // Predicated region
      $region29: #{uresnet_encoder_forward.10} parent=11 // pred_check
        %p240 = pneg %p145
      $region30: #{uresnet_encoder_forward.10} parent=11 // pred_check_branch
        %242 = sbr.rel (%p240) target = $region32
      $region31: #{uresnet_encoder_forward.10} parent=11 // pred_region
        _
      $region32: #{uresnet_encoder_forward.10} parent=11 // pred_fallthru
        _
      // Predicated region
      $region33: #{uresnet_encoder_forward.10} parent=11 // pred_check
        %p243 = pneg %p166
      $region34: #{uresnet_encoder_forward.10} parent=11 // pred_check_branch
        %245 = sbr.rel (%p243) target = $region36
      $region35: #{uresnet_encoder_forward.10} parent=11 // pred_region
        _
      $region36: #{uresnet_encoder_forward.10} parent=11 // pred_fallthru
        _
      // Predicated region
      $region37: #{uresnet_encoder_forward.10} parent=11 // pred_check
        %p246 = pneg %p187
      $region38: #{uresnet_encoder_forward.10} parent=11 // pred_check_branch
        %248 = sbr.rel (%p246) target = $region40
      $region39: #{uresnet_encoder_forward.10} parent=11 // pred_region
        _
      $region40: #{uresnet_encoder_forward.10} parent=11 // pred_fallthru
        _
    $region12: #{uresnet_encoder_forward.10} parent=5 // pred_fallthru
      _
    %p249 = scmp.lt.s32.totalorder %s14, 2
    // Predicated region
    $region41: #{uresnet_encoder_forward.10} parent=5 // pred_check
      %p250 = pneg %p249
    $region42: #{uresnet_encoder_forward.10} parent=5 // pred_check_branch
      %252 = sbr.rel (%p250) target = $region44
    $region43: #{uresnet_encoder_forward.10} parent=5 // pred_region
      // Predicated region
      $region45: #{uresnet_encoder_forward.10} parent=43 // pred_check
        %p253 = pneg %p34
      $region46: #{uresnet_encoder_forward.10} parent=43 // pred_check_branch
        %255 = sbr.rel (%p253) target = $region48
      $region47: #{uresnet_encoder_forward.10} parent=43 // pred_region
        %p256 = scmp.lt.s32.totalorder %s14, 1
        %s257 = scalar_select %p256, %s14, 1
        %s258 = smul.addr %s257, 32
        %s259 = smul.addr %s258, 8
        %s260 = scalar_lea.vmem %s0, %s259
      $region48: #{uresnet_encoder_forward.10} parent=43 // pred_fallthru
        _
    $region44: #{uresnet_encoder_forward.10} parent=5 // pred_fallthru
      _
    %p261 = scmp.le.s32.totalorder 1, %s14
    %p262 = scmp.lt.s32.totalorder %s14, 3
    %p263 = pnand %p261, %p262
    %p264 = pneg %p263
    // Predicated region
    $region49: #{uresnet_encoder_forward.10} parent=5 // pred_check
      _
    $region50: #{uresnet_encoder_forward.10} parent=5 // pred_check_branch
      %266 = sbr.rel (%p263) target = $region52
    $region51: #{uresnet_encoder_forward.10} parent=5 // pred_region
      %s267 = ssub.s32 %s14, 1
      %p268 = scmp.lt.s32.totalorder %s19, 1
      %s269 = scalar_select %p268, %s19, 1
      %s270 = smul.addr %s269, 32
      %s271 = smul.addr %s270, 8
      %s272 = scalar_lea.vmem %s0, %s271
      %p273 = pneg %p40
      %p274 = pneg %p37
      %p275 = pneg %p61
      %p276 = pneg %p58
      %p277 = pneg %p82
      %p278 = pneg %p79
      %p279 = pneg %p103
      %p280 = pneg %p100
      %p281 = pneg %p124
      %p282 = pneg %p121
      %p283 = pneg %p145
      %p284 = pneg %p142
      %p285 = pneg %p166
      %p286 = pneg %p163
      %p287 = pneg %p187
      %p288 = pneg %p184
      %p289 = pneg %p213
      %p290 = pneg %p210
      %p291 = scmp.lt.s32.totalorder %s19, 1
      %s292 = scalar_select %p291, %s19, 1
      %s293 = smul.addr %s292, 32
      %s294 = smul.addr %s293, 8
      %s295 = scalar_lea.vmem %s8, %s294
      %p296 = scmp.lt.s32.totalorder %s19, 1
      %s297 = scalar_select %p296, %s19, 1
      %s298 = smul.addr %s297, 32
      %s299 = smul.addr %s298, 8
      %s300 = scalar_lea.vmem %s0, %s299
      %p301 = scmp.lt.s32.totalorder %s19, 1
      %s302 = scalar_select %p301, %s19, 1
      %s303 = smul.addr %s302, 32
      %s304 = smul.addr %s303, 8
      %s305 = scalar_lea.vmem %s8, %s304
      %v307 = vld [vmem:[%s7] sm:$0xff]
      %v308 = vld [vmem:[%s7 + $0x8] sm:$0xff]
      %v309 = vld [vmem:[%s7 + $0x10] sm:$0xff]
      %v310 = vld [vmem:[%s7 + $0x18] sm:$0xff]
      %v311 = vld [vmem:[%s7 + $0x20] sm:$0xff]
      %v312 = vld [vmem:[%s7 + $0x28] sm:$0xff]
      %v313 = vld [vmem:[%s7 + $0x30] sm:$0xff]
      %v314 = vld [vmem:[%s7 + $0x38] sm:$0xff]
      %v315 = vld [vmem:[%s7 + $0x40] sm:$0xff]
      %v316 = vld [vmem:[%s7 + $0x48] sm:$0xff]
      %v317 = vld [vmem:[%s7 + $0x50] sm:$0xff]
      %v318 = vld [vmem:[%s7 + $0x58] sm:$0xff]
      %v319 = vld [vmem:[%s7 + $0x60] sm:$0xff]
      %v320 = vld [vmem:[%s7 + $0x68] sm:$0xff]
      %v321 = vld [vmem:[%s7 + $0x70] sm:$0xff]
      %v322 = vld [vmem:[%s7 + $0x78] sm:$0xff]
      %v323 = vld [vmem:[%s7 + $0x80] sm:$0xff]
      %v324 = vld [vmem:[%s7 + $0x88] sm:$0xff]
      %v325 = vld [vmem:[%s7 + $0x90] sm:$0xff]
      %v326 = vld [vmem:[%s7 + $0x98] sm:$0xff]
      %v327 = vld [vmem:[%s7 + $0xa0] sm:$0xff]
      %v328 = vld [vmem:[%s7 + $0xa8] sm:$0xff]
      %v329 = vld [vmem:[%s7 + $0xb0] sm:$0xff]
      %v330 = vld [vmem:[%s7 + $0xb8] sm:$0xff]
      %v331 = vld [vmem:[%s7 + $0xc0] sm:$0xff]
      %v332 = vld [vmem:[%s7 + $0xc8] sm:$0xff]
      %v333 = vld [vmem:[%s7 + $0xd0] sm:$0xff]
      %v334 = vld [vmem:[%s7 + $0xd8] sm:$0xff]
      %v335 = vld [vmem:[%s7 + $0xe0] sm:$0xff]
      %v336 = vld [vmem:[%s7 + $0xe8] sm:$0xff]
      %v337 = vld [vmem:[%s7 + $0xf0] sm:$0xff]
      %v338 = vld [vmem:[%s7 + $0xf8] sm:$0xff]
      %vm339 = vcmask 64512
      %340 = vst.msk [vmem:[#allocation2] sm:$0xff] %vm339, 0.0
      %341 = vst.msk [vmem:[#allocation2 + $0x8] sm:$0xff] %vm339, 0.0
      %342 = vst.msk [vmem:[#allocation2 + $0x10] sm:$0xff] %vm339, 0.0
      %343 = vst.msk [vmem:[#allocation2 + $0x118] sm:$0xff] %vm339, 0.0
      %344 = vst.msk [vmem:[#allocation2 + $0x120] sm:$0xff] %vm339, 0.0
      %345 = vst.msk [vmem:[#allocation2 + $0x128] sm:$0xff] %vm339, 0.0
      %v346 = vld [vmem:[%s300] sm:$0xff]
      %v347 = vld [vmem:[%s300 + $0x8] sm:$0xff]
      %v348 = vld [vmem:[%s300 + $0x10] sm:$0xff]
      %v349 = vld [vmem:[%s300 + $0x18] sm:$0xff]
      %v350 = vld [vmem:[%s300 + $0x20] sm:$0xff]
      %v351 = vld [vmem:[%s300 + $0x28] sm:$0xff]
      %v352 = vld [vmem:[%s300 + $0x30] sm:$0xff]
      %v353 = vld [vmem:[%s300 + $0x38] sm:$0xff]
      %v354 = vld [vmem:[%s300 + $0x40] sm:$0xff]
      %v355 = vld [vmem:[%s300 + $0x48] sm:$0xff]
      %v356 = vld [vmem:[%s300 + $0x50] sm:$0xff]
      %v357 = vld [vmem:[%s300 + $0x58] sm:$0xff]
      %v358 = vld [vmem:[%s300 + $0x60] sm:$0xff]
      %v359 = vld [vmem:[%s300 + $0x68] sm:$0xff]
      %v360 = vld [vmem:[%s300 + $0x70] sm:$0xff]
      %v361 = vld [vmem:[%s300 + $0x78] sm:$0xff]
      %v362 = vld [vmem:[%s300 + $0x80] sm:$0xff]
      %v363 = vld [vmem:[%s300 + $0x88] sm:$0xff]
      %v364 = vld [vmem:[%s300 + $0x90] sm:$0xff]
      %v365 = vld [vmem:[%s300 + $0x98] sm:$0xff]
      %v366 = vld [vmem:[%s300 + $0xa0] sm:$0xff]
      %v367 = vld [vmem:[%s300 + $0xa8] sm:$0xff]
      %v368 = vld [vmem:[%s300 + $0xb0] sm:$0xff]
      %v369 = vld [vmem:[%s300 + $0xb8] sm:$0xff]
      %v370 = vld [vmem:[%s300 + $0xc0] sm:$0xff]
      %v371 = vld [vmem:[%s300 + $0xc8] sm:$0xff]
      %v372 = vld [vmem:[%s300 + $0xd0] sm:$0xff]
      %v373 = vld [vmem:[%s300 + $0xd8] sm:$0xff]
      %v374 = vld [vmem:[%s300 + $0xe0] sm:$0xff]
      %v375 = vld [vmem:[%s300 + $0xe8] sm:$0xff]
      %v376 = vld [vmem:[%s300 + $0xf0] sm:$0xff]
      %v377 = vld [vmem:[%s300 + $0xf8] sm:$0xff]
      %v378 = vld [vmem:[%s3] sm:$0x1]
      %v380 = vlaneseq
      %v381 = vshrl.u32 %v380, 7
      %v382 = vsub.s32 0, %v381
      %v383 = vrot.slane %v378, %v382
      %v385 = vmul.f32 %v346, %v383
      %v386 = vmul.f32 %v347, %v383
      %v387 = vmul.f32 %v348, %v383
      %v388 = vmul.f32 %v349, %v383
      %v389 = vmul.f32 %v350, %v383
      %v390 = vmul.f32 %v351, %v383
      %v391 = vmul.f32 %v352, %v383
      %v392 = vmul.f32 %v353, %v383
      %v393 = vmul.f32 %v354, %v383
      %v394 = vmul.f32 %v355, %v383
      %v395 = vmul.f32 %v356, %v383
      %v396 = vmul.f32 %v357, %v383
      %v397 = vmul.f32 %v358, %v383
      %v398 = vmul.f32 %v359, %v383
      %v399 = vmul.f32 %v360, %v383
      %v400 = vmul.f32 %v361, %v383
      %v401 = vmul.f32 %v362, %v383
      %v402 = vmul.f32 %v363, %v383
      %v403 = vmul.f32 %v364, %v383
      %v404 = vmul.f32 %v365, %v383
      %v405 = vmul.f32 %v366, %v383
      %v406 = vmul.f32 %v367, %v383
      %v407 = vmul.f32 %v368, %v383
      %v408 = vmul.f32 %v369, %v383
      %v409 = vmul.f32 %v370, %v383
      %v410 = vmul.f32 %v371, %v383
      %v411 = vmul.f32 %v372, %v383
      %v412 = vmul.f32 %v373, %v383
      %v413 = vmul.f32 %v374, %v383
      %v414 = vmul.f32 %v375, %v383
      %v415 = vmul.f32 %v376, %v383
      %v416 = vmul.f32 %v377, %v383
      %v417 = vld [vmem:[%s4] sm:$0x1]
      %v419 = vlaneseq
      %v420 = vshrl.u32 %v419, 7
      %v421 = vsub.s32 0, %v420
      %v422 = vrot.slane %v417, %v421
      %v424 = vadd.f32 %v385, %v422
      %v425 = vadd.f32 %v386, %v422
      %v426 = vadd.f32 %v387, %v422
      %v427 = vadd.f32 %v388, %v422
      %v428 = vadd.f32 %v389, %v422
      %v429 = vadd.f32 %v390, %v422
      %v430 = vadd.f32 %v391, %v422
      %v431 = vadd.f32 %v392, %v422
      %v432 = vadd.f32 %v393, %v422
      %v433 = vadd.f32 %v394, %v422
      %v434 = vadd.f32 %v395, %v422
      %v435 = vadd.f32 %v396, %v422
      %v436 = vadd.f32 %v397, %v422
      %v437 = vadd.f32 %v398, %v422
      %v438 = vadd.f32 %v399, %v422
      %v439 = vadd.f32 %v400, %v422
      %v440 = vadd.f32 %v401, %v422
      %v441 = vadd.f32 %v402, %v422
      %v442 = vadd.f32 %v403, %v422
      %v443 = vadd.f32 %v404, %v422
      %v444 = vadd.f32 %v405, %v422
      %v445 = vadd.f32 %v406, %v422
      %v446 = vadd.f32 %v407, %v422
      %v447 = vadd.f32 %v408, %v422
      %v448 = vadd.f32 %v409, %v422
      %v449 = vadd.f32 %v410, %v422
      %v450 = vadd.f32 %v411, %v422
      %v451 = vadd.f32 %v412, %v422
      %v452 = vadd.f32 %v413, %v422
      %v453 = vadd.f32 %v414, %v422
      %v454 = vadd.f32 %v415, %v422
      %v455 = vadd.f32 %v416, %v422
      %v456 = vmax.f32 %v424, 0.0
      %v457 = vmax.f32 %v425, 0.0
      %v458 = vmax.f32 %v426, 0.0
      %v459 = vmax.f32 %v427, 0.0
      %v460 = vmax.f32 %v428, 0.0
      %v461 = vmax.f32 %v429, 0.0
      %v462 = vmax.f32 %v430, 0.0
      %v463 = vmax.f32 %v431, 0.0
      %v464 = vmax.f32 %v432, 0.0
      %v465 = vmax.f32 %v433, 0.0
      %v466 = vmax.f32 %v434, 0.0
      %v467 = vmax.f32 %v435, 0.0
      %v468 = vmax.f32 %v436, 0.0
      %v469 = vmax.f32 %v437, 0.0
      %v470 = vmax.f32 %v438, 0.0
      %v471 = vmax.f32 %v439, 0.0
      %v472 = vmax.f32 %v440, 0.0
      %v473 = vmax.f32 %v441, 0.0
      %v474 = vmax.f32 %v442, 0.0
      %v475 = vmax.f32 %v443, 0.0
      %v476 = vmax.f32 %v444, 0.0
      %v477 = vmax.f32 %v445, 0.0
      %v478 = vmax.f32 %v446, 0.0
      %v479 = vmax.f32 %v447, 0.0
      %v480 = vmax.f32 %v448, 0.0
      %v481 = vmax.f32 %v449, 0.0
      %v482 = vmax.f32 %v450, 0.0
      %v483 = vmax.f32 %v451, 0.0
      %v484 = vmax.f32 %v452, 0.0
      %v485 = vmax.f32 %v453, 0.0
      %v486 = vmax.f32 %v454, 0.0
      %v487 = vmax.f32 %v455, 0.0
      %488 = vst.msk [vmem:[#allocation2 + $0x18] sm:$0xff] %vm339, %v456
      %489 = vst.msk [vmem:[#allocation2 + $0x20] sm:$0xff] %vm339, %v457
      %490 = vst.msk [vmem:[#allocation2 + $0x28] sm:$0xff] %vm339, %v458
      %491 = vst.msk [vmem:[#allocation2 + $0x30] sm:$0xff] %vm339, %v459
      %492 = vst.msk [vmem:[#allocation2 + $0x38] sm:$0xff] %vm339, %v460
      %493 = vst.msk [vmem:[#allocation2 + $0x40] sm:$0xff] %vm339, %v461
      %494 = vst.msk [vmem:[#allocation2 + $0x48] sm:$0xff] %vm339, %v462
      %495 = vst.msk [vmem:[#allocation2 + $0x50] sm:$0xff] %vm339, %v463
      %496 = vst.msk [vmem:[#allocation2 + $0x58] sm:$0xff] %vm339, %v464
      %497 = vst.msk [vmem:[#allocation2 + $0x60] sm:$0xff] %vm339, %v465
      %498 = vst.msk [vmem:[#allocation2 + $0x68] sm:$0xff] %vm339, %v466
      %499 = vst.msk [vmem:[#allocation2 + $0x70] sm:$0xff] %vm339, %v467
      %500 = vst.msk [vmem:[#allocation2 + $0x78] sm:$0xff] %vm339, %v468
      %501 = vst.msk [vmem:[#allocation2 + $0x80] sm:$0xff] %vm339, %v469
      %502 = vst.msk [vmem:[#allocation2 + $0x88] sm:$0xff] %vm339, %v470
      %503 = vst.msk [vmem:[#allocation2 + $0x90] sm:$0xff] %vm339, %v471
      %504 = vst.msk [vmem:[#allocation2 + $0x98] sm:$0xff] %vm339, %v472
      %505 = vst.msk [vmem:[#allocation2 + $0xa0] sm:$0xff] %vm339, %v473
      %506 = vst.msk [vmem:[#allocation2 + $0xa8] sm:$0xff] %vm339, %v474
      %507 = vst.msk [vmem:[#allocation2 + $0xb0] sm:$0xff] %vm339, %v475
      %508 = vst.msk [vmem:[#allocation2 + $0xb8] sm:$0xff] %vm339, %v476
      %509 = vst.msk [vmem:[#allocation2 + $0xc0] sm:$0xff] %vm339, %v477
      %510 = vst.msk [vmem:[#allocation2 + $0xc8] sm:$0xff] %vm339, %v478
      %511 = vst.msk [vmem:[#allocation2 + $0xd0] sm:$0xff] %vm339, %v479
      %512 = vst.msk [vmem:[#allocation2 + $0xd8] sm:$0xff] %vm339, %v480
      %513 = vst.msk [vmem:[#allocation2 + $0xe0] sm:$0xff] %vm339, %v481
      %514 = vst.msk [vmem:[#allocation2 + $0xe8] sm:$0xff] %vm339, %v482
      %515 = vst.msk [vmem:[#allocation2 + $0xf0] sm:$0xff] %vm339, %v483
      %516 = vst.msk [vmem:[#allocation2 + $0xf8] sm:$0xff] %vm339, %v484
      %517 = vst.msk [vmem:[#allocation2 + $0x100] sm:$0xff] %vm339, %v485
      %518 = vst.msk [vmem:[#allocation2 + $0x108] sm:$0xff] %vm339, %v486
      %519 = vst.msk [vmem:[#allocation2 + $0x110] sm:$0xff] %vm339, %v487
      %v520 = vld [vmem:[%s1] sm:$0xf]
      %v521 = vld [vmem:[%s1 + $0x4] sm:$0xf]
      %v522 = vld [vmem:[%s1 + $0x8] sm:$0xf]
      %v523 = vld [vmem:[%s1 + $0xc] sm:$0xf]
      %v524 = vld [vmem:[%s1 + $0x10] sm:$0xf]
      %v525 = vld [vmem:[%s1 + $0x14] sm:$0xf]
      %v526 = vld [vmem:[%s1 + $0x18] sm:$0xf]
      %v527 = vld [vmem:[%s1 + $0x1c] sm:$0xf]
      %v528 = vld [vmem:[%s1 + $0x20] sm:$0xf]
      %v529 = vld [vmem:[#allocation2 + $0x7] sm:$0xff]
      %v530 = vld [vmem:[#allocation2 + $0xf] sm:$0xff]
      %v531 = vld [vmem:[#allocation2 + $0x17] sm:$0xff]
      %v532 = vld [vmem:[#allocation2 + $0x1f] sm:$0xff]
      %v533 = vld [vmem:[#allocation2 + $0x27] sm:$0xff]
      %v534 = vld [vmem:[#allocation2 + $0x2f] sm:$0xff]
      %v535 = vld [vmem:[#allocation2 + $0x37] sm:$0xff]
      %v536 = vld [vmem:[#allocation2 + $0x3f] sm:$0xff]
      %v537 = vld [vmem:[#allocation2 + $0x47] sm:$0xff]
      %v538 = vld [vmem:[#allocation2 + $0x4f] sm:$0xff]
      %v539 = vld [vmem:[#allocation2 + $0x57] sm:$0xff]
      %v540 = vld [vmem:[#allocation2 + $0x5f] sm:$0xff]
      %v541 = vld [vmem:[#allocation2 + $0x67] sm:$0xff]
      %v542 = vld [vmem:[#allocation2 + $0x6f] sm:$0xff]
      %v543 = vld [vmem:[#allocation2 + $0x77] sm:$0xff]
      %v544 = vld [vmem:[#allocation2 + $0x7f] sm:$0xff]
      %v545 = vld [vmem:[#allocation2 + $0x87] sm:$0xff]
      %v546 = vld [vmem:[#allocation2 + $0x8f] sm:$0xff]
      %v547 = vld [vmem:[#allocation2 + $0x97] sm:$0xff]
      %v548 = vld [vmem:[#allocation2 + $0x9f] sm:$0xff]
      %v549 = vld [vmem:[#allocation2 + $0xa7] sm:$0xff]
      %v550 = vld [vmem:[#allocation2 + $0xaf] sm:$0xff]
      %v551 = vld [vmem:[#allocation2 + $0xb7] sm:$0xff]
      %v552 = vld [vmem:[#allocation2 + $0xbf] sm:$0xff]
      %v553 = vld [vmem:[#allocation2 + $0xc7] sm:$0xff]
      %v554 = vld [vmem:[#allocation2 + $0xcf] sm:$0xff]
      %v555 = vld [vmem:[#allocation2 + $0xd7] sm:$0xff]
      %v556 = vld [vmem:[#allocation2 + $0xdf] sm:$0xff]
      %v557 = vld [vmem:[#allocation2 + $0xe7] sm:$0xff]
      %v558 = vld [vmem:[#allocation2 + $0xef] sm:$0xff]
      %v559 = vld [vmem:[#allocation2 + $0xf7] sm:$0xff]
      %v560 = vld [vmem:[#allocation2 + $0xff] sm:$0xff]
      %562 = vset.pattern.permute.xlu0 0
      %563 = vperm.xlu0 %562, %v307
      %v564 = vpop.permute.xlu0 %563
      %567 = vset.pattern.permute.xlu0 0
      %568 = vperm.xlu0 %567, %v308
      %v569 = vpop.permute.xlu0 %568
      %572 = vset.pattern.permute.xlu0 0
      %573 = vperm.xlu0 %572, %v309
      %v574 = vpop.permute.xlu0 %573
      %577 = vset.pattern.permute.xlu0 0
      %578 = vperm.xlu0 %577, %v310
      %v579 = vpop.permute.xlu0 %578
      %582 = vset.pattern.permute.xlu0 0
      %583 = vperm.xlu0 %582, %v311
      %v584 = vpop.permute.xlu0 %583
      %587 = vset.pattern.permute.xlu0 0
      %588 = vperm.xlu0 %587, %v312
      %v589 = vpop.permute.xlu0 %588
      %592 = vset.pattern.permute.xlu0 0
      %593 = vperm.xlu0 %592, %v313
      %v594 = vpop.permute.xlu0 %593
      %597 = vset.pattern.permute.xlu0 0
      %598 = vperm.xlu0 %597, %v314
      %v599 = vpop.permute.xlu0 %598
      %602 = vset.pattern.permute.xlu0 0
      %603 = vperm.xlu0 %602, %v315
      %v604 = vpop.permute.xlu0 %603
      %607 = vset.pattern.permute.xlu0 0
      %608 = vperm.xlu0 %607, %v316
      %v609 = vpop.permute.xlu0 %608
      %612 = vset.pattern.permute.xlu0 0
      %613 = vperm.xlu0 %612, %v317
      %v614 = vpop.permute.xlu0 %613
      %617 = vset.pattern.permute.xlu0 0
      %618 = vperm.xlu0 %617, %v318
      %v619 = vpop.permute.xlu0 %618
      %622 = vset.pattern.permute.xlu0 0
      %623 = vperm.xlu0 %622, %v319
      %v624 = vpop.permute.xlu0 %623
      %627 = vset.pattern.permute.xlu0 0
      %628 = vperm.xlu0 %627, %v320
      %v629 = vpop.permute.xlu0 %628
      %632 = vset.pattern.permute.xlu0 0
      %633 = vperm.xlu0 %632, %v321
      %v634 = vpop.permute.xlu0 %633
      %637 = vset.pattern.permute.xlu0 0
      %638 = vperm.xlu0 %637, %v322
      %v639 = vpop.permute.xlu0 %638
      %642 = vset.pattern.permute.xlu0 0
      %643 = vperm.xlu0 %642, %v323
      %v644 = vpop.permute.xlu0 %643
      %647 = vset.pattern.permute.xlu0 0
      %648 = vperm.xlu0 %647, %v324
      %v649 = vpop.permute.xlu0 %648
      %652 = vset.pattern.permute.xlu0 0
      %653 = vperm.xlu0 %652, %v325
      %v654 = vpop.permute.xlu0 %653
      %657 = vset.pattern.permute.xlu0 0
      %658 = vperm.xlu0 %657, %v326
      %v659 = vpop.permute.xlu0 %658
      %662 = vset.pattern.permute.xlu0 0
      %663 = vperm.xlu0 %662, %v327
      %v664 = vpop.permute.xlu0 %663
      %667 = vset.pattern.permute.xlu0 0
      %668 = vperm.xlu0 %667, %v328
      %v669 = vpop.permute.xlu0 %668
      %672 = vset.pattern.permute.xlu0 0
      %673 = vperm.xlu0 %672, %v329
      %v674 = vpop.permute.xlu0 %673
      %677 = vset.pattern.permute.xlu0 0
      %678 = vperm.xlu0 %677, %v330
      %v679 = vpop.permute.xlu0 %678
      %682 = vset.pattern.permute.xlu0 0
      %683 = vperm.xlu0 %682, %v331
      %v684 = vpop.permute.xlu0 %683
      %687 = vset.pattern.permute.xlu0 0
      %688 = vperm.xlu0 %687, %v332
      %v689 = vpop.permute.xlu0 %688
      %692 = vset.pattern.permute.xlu0 0
      %693 = vperm.xlu0 %692, %v333
      %v694 = vpop.permute.xlu0 %693
      %697 = vset.pattern.permute.xlu0 0
      %698 = vperm.xlu0 %697, %v334
      %v699 = vpop.permute.xlu0 %698
      %702 = vset.pattern.permute.xlu0 0
      %703 = vperm.xlu0 %702, %v335
      %v704 = vpop.permute.xlu0 %703
      %707 = vset.pattern.permute.xlu0 0
      %708 = vperm.xlu0 %707, %v336
      %v709 = vpop.permute.xlu0 %708
      %712 = vset.pattern.permute.xlu0 0
      %713 = vperm.xlu0 %712, %v337
      %v714 = vpop.permute.xlu0 %713
      %717 = vset.pattern.permute.xlu0 0
      %718 = vperm.xlu0 %717, %v338
      %v719 = vpop.permute.xlu0 %718
      %v721 = vmul.f32 %v529, %v564
      %v722 = vmul.f32 %v530, %v569
      %v723 = vmul.f32 %v531, %v574
      %v724 = vmul.f32 %v532, %v579
      %v725 = vmul.f32 %v533, %v584
      %v726 = vmul.f32 %v534, %v589
      %v727 = vmul.f32 %v535, %v594
      %v728 = vmul.f32 %v536, %v599
      %v729 = vmul.f32 %v537, %v604
      %v730 = vmul.f32 %v538, %v609
      %v731 = vmul.f32 %v539, %v614
      %v732 = vmul.f32 %v540, %v619
      %v733 = vmul.f32 %v541, %v624
      %v734 = vmul.f32 %v542, %v629
      %v735 = vmul.f32 %v543, %v634
      %v736 = vmul.f32 %v544, %v639
      %v737 = vmul.f32 %v545, %v644
      %v738 = vmul.f32 %v546, %v649
      %v739 = vmul.f32 %v547, %v654
      %v740 = vmul.f32 %v548, %v659
      %v741 = vmul.f32 %v549, %v664
      %v742 = vmul.f32 %v550, %v669
      %v743 = vmul.f32 %v551, %v674
      %v744 = vmul.f32 %v552, %v679
      %v745 = vmul.f32 %v553, %v684
      %v746 = vmul.f32 %v554, %v689
      %v747 = vmul.f32 %v555, %v694
      %v748 = vmul.f32 %v556, %v699
      %v749 = vmul.f32 %v557, %v704
      %v750 = vmul.f32 %v558, %v709
      %v751 = vmul.f32 %v559, %v714
      %v752 = vmul.f32 %v560, %v719
      %v753 = vld [vmem:[#allocation2 + $0x8] sm:$0xff]
      %v754 = vld [vmem:[#allocation2 + $0x10] sm:$0xff]
      %v755 = vld [vmem:[#allocation2 + $0x18] sm:$0xff]
      %v756 = vld [vmem:[#allocation2 + $0x20] sm:$0xff]
      %v757 = vld [vmem:[#allocation2 + $0x28] sm:$0xff]
      %v758 = vld [vmem:[#allocation2 + $0x30] sm:$0xff]
      %v759 = vld [vmem:[#allocation2 + $0x38] sm:$0xff]
      %v760 = vld [vmem:[#allocation2 + $0x40] sm:$0xff]
      %v761 = vld [vmem:[#allocation2 + $0x48] sm:$0xff]
      %v762 = vld [vmem:[#allocation2 + $0x50] sm:$0xff]
      %v763 = vld [vmem:[#allocation2 + $0x58] sm:$0xff]
      %v764 = vld [vmem:[#allocation2 + $0x60] sm:$0xff]
      %v765 = vld [vmem:[#allocation2 + $0x68] sm:$0xff]
      %v766 = vld [vmem:[#allocation2 + $0x70] sm:$0xff]
      %v767 = vld [vmem:[#allocation2 + $0x78] sm:$0xff]
      %v768 = vld [vmem:[#allocation2 + $0x80] sm:$0xff]
      %v769 = vld [vmem:[#allocation2 + $0x88] sm:$0xff]
      %v770 = vld [vmem:[#allocation2 + $0x90] sm:$0xff]
      %v771 = vld [vmem:[#allocation2 + $0x98] sm:$0xff]
      %v772 = vld [vmem:[#allocation2 + $0xa0] sm:$0xff]
      %v773 = vld [vmem:[#allocation2 + $0xa8] sm:$0xff]
      %v774 = vld [vmem:[#allocation2 + $0xb0] sm:$0xff]
      %v775 = vld [vmem:[#allocation2 + $0xb8] sm:$0xff]
      %v776 = vld [vmem:[#allocation2 + $0xc0] sm:$0xff]
      %v777 = vld [vmem:[#allocation2 + $0xc8] sm:$0xff]
      %v778 = vld [vmem:[#allocation2 + $0xd0] sm:$0xff]
      %v779 = vld [vmem:[#allocation2 + $0xd8] sm:$0xff]
      %v780 = vld [vmem:[#allocation2 + $0xe0] sm:$0xff]
      %v781 = vld [vmem:[#allocation2 + $0xe8] sm:$0xff]
      %v782 = vld [vmem:[#allocation2 + $0xf0] sm:$0xff]
      %v783 = vld [vmem:[#allocation2 + $0xf8] sm:$0xff]
      %v784 = vld [vmem:[#allocation2 + $0x100] sm:$0xff]
      %v785 = vld [vmem:[#allocation2 + $0x9] sm:$0xff]
      %v786 = vld [vmem:[#allocation2 + $0x11] sm:$0xff]
      %v787 = vld [vmem:[#allocation2 + $0x19] sm:$0xff]
      %v788 = vld [vmem:[#allocation2 + $0x21] sm:$0xff]
      %v789 = vld [vmem:[#allocation2 + $0x29] sm:$0xff]
      %v790 = vld [vmem:[#allocation2 + $0x31] sm:$0xff]
      %v791 = vld [vmem:[#allocation2 + $0x39] sm:$0xff]
      %v792 = vld [vmem:[#allocation2 + $0x41] sm:$0xff]
      %v793 = vld [vmem:[#allocation2 + $0x49] sm:$0xff]
      %v794 = vld [vmem:[#allocation2 + $0x51] sm:$0xff]
      %v795 = vld [vmem:[#allocation2 + $0x59] sm:$0xff]
      %v796 = vld [vmem:[#allocation2 + $0x61] sm:$0xff]
      %v797 = vld [vmem:[#allocation2 + $0x69] sm:$0xff]
      %v798 = vld [vmem:[#allocation2 + $0x71] sm:$0xff]
      %v799 = vld [vmem:[#allocation2 + $0x79] sm:$0xff]
      %v800 = vld [vmem:[#allocation2 + $0x81] sm:$0xff]
      %v801 = vld [vmem:[#allocation2 + $0x89] sm:$0xff]
      %v802 = vld [vmem:[#allocation2 + $0x91] sm:$0xff]
      %v803 = vld [vmem:[#allocation2 + $0x99] sm:$0xff]
      %v804 = vld [vmem:[#allocation2 + $0xa1] sm:$0xff]
      %v805 = vld [vmem:[#allocation2 + $0xa9] sm:$0xff]
      %v806 = vld [vmem:[#allocation2 + $0xb1] sm:$0xff]
      %v807 = vld [vmem:[#allocation2 + $0xb9] sm:$0xff]
      %v808 = vld [vmem:[#allocation2 + $0xc1] sm:$0xff]
      %v809 = vld [vmem:[#allocation2 + $0xc9] sm:$0xff]
      %v810 = vld [vmem:[#allocation2 + $0xd1] sm:$0xff]
      %v811 = vld [vmem:[#allocation2 + $0xd9] sm:$0xff]
      %v812 = vld [vmem:[#allocation2 + $0xe1] sm:$0xff]
      %v813 = vld [vmem:[#allocation2 + $0xe9] sm:$0xff]
      %v814 = vld [vmem:[#allocation2 + $0xf1] sm:$0xff]
      %v815 = vld [vmem:[#allocation2 + $0xf9] sm:$0xff]
      %v816 = vld [vmem:[#allocation2 + $0x101] sm:$0xff]
      %817 = vset.pattern.permute.xlu0 1
      %818 = vperm.xlu0 %817, %v307
      %v819 = vpop.permute.xlu0 %818
      %821 = vset.pattern.permute.xlu0 1
      %822 = vperm.xlu0 %821, %v308
      %v823 = vpop.permute.xlu0 %822
      %825 = vset.pattern.permute.xlu0 1
      %826 = vperm.xlu0 %825, %v309
      %v827 = vpop.permute.xlu0 %826
      %829 = vset.pattern.permute.xlu0 1
      %830 = vperm.xlu0 %829, %v310
      %v831 = vpop.permute.xlu0 %830
      %833 = vset.pattern.permute.xlu0 1
      %834 = vperm.xlu0 %833, %v311
      %v835 = vpop.permute.xlu0 %834
      %837 = vset.pattern.permute.xlu0 1
      %838 = vperm.xlu0 %837, %v312
      %v839 = vpop.permute.xlu0 %838
      %841 = vset.pattern.permute.xlu0 1
      %842 = vperm.xlu0 %841, %v313
      %v843 = vpop.permute.xlu0 %842
      %845 = vset.pattern.permute.xlu0 1
      %846 = vperm.xlu0 %845, %v314
      %v847 = vpop.permute.xlu0 %846
      %849 = vset.pattern.permute.xlu0 1
      %850 = vperm.xlu0 %849, %v315
      %v851 = vpop.permute.xlu0 %850
      %853 = vset.pattern.permute.xlu0 1
      %854 = vperm.xlu0 %853, %v316
      %v855 = vpop.permute.xlu0 %854
      %857 = vset.pattern.permute.xlu0 1
      %858 = vperm.xlu0 %857, %v317
      %v859 = vpop.permute.xlu0 %858
      %861 = vset.pattern.permute.xlu0 1
      %862 = vperm.xlu0 %861, %v318
      %v863 = vpop.permute.xlu0 %862
      %865 = vset.pattern.permute.xlu0 1
      %866 = vperm.xlu0 %865, %v319
      %v867 = vpop.permute.xlu0 %866
      %869 = vset.pattern.permute.xlu0 1
      %870 = vperm.xlu0 %869, %v320
      %v871 = vpop.permute.xlu0 %870
      %873 = vset.pattern.permute.xlu0 1
      %874 = vperm.xlu0 %873, %v321
      %v875 = vpop.permute.xlu0 %874
      %877 = vset.pattern.permute.xlu0 1
      %878 = vperm.xlu0 %877, %v322
      %v879 = vpop.permute.xlu0 %878
      %881 = vset.pattern.permute.xlu0 1
      %882 = vperm.xlu0 %881, %v323
      %v883 = vpop.permute.xlu0 %882
      %885 = vset.pattern.permute.xlu0 1
      %886 = vperm.xlu0 %885, %v324
      %v887 = vpop.permute.xlu0 %886
      %889 = vset.pattern.permute.xlu0 1
      %890 = vperm.xlu0 %889, %v325
      %v891 = vpop.permute.xlu0 %890
      %893 = vset.pattern.permute.xlu0 1
      %894 = vperm.xlu0 %893, %v326
      %v895 = vpop.permute.xlu0 %894
      %897 = vset.pattern.permute.xlu0 1
      %898 = vperm.xlu0 %897, %v327
      %v899 = vpop.permute.xlu0 %898
      %901 = vset.pattern.permute.xlu0 1
      %902 = vperm.xlu0 %901, %v328
      %v903 = vpop.permute.xlu0 %902
      %905 = vset.pattern.permute.xlu0 1
      %906 = vperm.xlu0 %905, %v329
      %v907 = vpop.permute.xlu0 %906
      %909 = vset.pattern.permute.xlu0 1
      %910 = vperm.xlu0 %909, %v330
      %v911 = vpop.permute.xlu0 %910
      %913 = vset.pattern.permute.xlu0 1
      %914 = vperm.xlu0 %913, %v331
      %v915 = vpop.permute.xlu0 %914
      %917 = vset.pattern.permute.xlu0 1
      %918 = vperm.xlu0 %917, %v332
      %v919 = vpop.permute.xlu0 %918
      %921 = vset.pattern.permute.xlu0 1
      %922 = vperm.xlu0 %921, %v333
      %v923 = vpop.permute.xlu0 %922
      %925 = vset.pattern.permute.xlu0 1
      %926 = vperm.xlu0 %925, %v334
      %v927 = vpop.permute.xlu0 %926
      %929 = vset.pattern.permute.xlu0 1
      %930 = vperm.xlu0 %929, %v335
      %v931 = vpop.permute.xlu0 %930
      %933 = vset.pattern.permute.xlu0 1
      %934 = vperm.xlu0 %933, %v336
      %v935 = vpop.permute.xlu0 %934
      %937 = vset.pattern.permute.xlu0 1
      %938 = vperm.xlu0 %937, %v337
      %v939 = vpop.permute.xlu0 %938
      %941 = vset.pattern.permute.xlu0 1
      %942 = vperm.xlu0 %941, %v338
      %v943 = vpop.permute.xlu0 %942
      %v945 = vmul.f32 %v785, %v819
      %v946 = vmul.f32 %v786, %v823
      %v947 = vmul.f32 %v787, %v827
      %v948 = vmul.f32 %v788, %v831
      %v949 = vmul.f32 %v789, %v835
      %v950 = vmul.f32 %v790, %v839
      %v951 = vmul.f32 %v791, %v843
      %v952 = vmul.f32 %v792, %v847
      %v953 = vmul.f32 %v793, %v851
      %v954 = vmul.f32 %v794, %v855
      %v955 = vmul.f32 %v795, %v859
      %v956 = vmul.f32 %v796, %v863
      %v957 = vmul.f32 %v797, %v867
      %v958 = vmul.f32 %v798, %v871
      %v959 = vmul.f32 %v799, %v875
      %v960 = vmul.f32 %v800, %v879
      %v961 = vmul.f32 %v801, %v883
      %v962 = vmul.f32 %v802, %v887
      %v963 = vmul.f32 %v803, %v891
      %v964 = vmul.f32 %v804, %v895
      %v965 = vmul.f32 %v805, %v899
      %v966 = vmul.f32 %v806, %v903
      %v967 = vmul.f32 %v807, %v907
      %v968 = vmul.f32 %v808, %v911
      %v969 = vmul.f32 %v809, %v915
      %v970 = vmul.f32 %v810, %v919
      %v971 = vmul.f32 %v811, %v923
      %v972 = vmul.f32 %v812, %v927
      %v973 = vmul.f32 %v813, %v931
      %v974 = vmul.f32 %v814, %v935
      %v975 = vmul.f32 %v815, %v939
      %v976 = vmul.f32 %v816, %v943
      %v977 = vld [vmem:[#allocation2 + $0x17] sm:$0xff]
      %v978 = vld [vmem:[#allocation2 + $0x1f] sm:$0xff]
      %v979 = vld [vmem:[#allocation2 + $0x27] sm:$0xff]
      %v980 = vld [vmem:[#allocation2 + $0x2f] sm:$0xff]
      %v981 = vld [vmem:[#allocation2 + $0x37] sm:$0xff]
      %v982 = vld [vmem:[#allocation2 + $0x3f] sm:$0xff]
      %v983 = vld [vmem:[#allocation2 + $0x47] sm:$0xff]
      %v984 = vld [vmem:[#allocation2 + $0x4f] sm:$0xff]
      %v985 = vld [vmem:[#allocation2 + $0x57] sm:$0xff]
      %v986 = vld [vmem:[#allocation2 + $0x5f] sm:$0xff]
      %v987 = vld [vmem:[#allocation2 + $0x67] sm:$0xff]
      %v988 = vld [vmem:[#allocation2 + $0x6f] sm:$0xff]
      %v989 = vld [vmem:[#allocation2 + $0x77] sm:$0xff]
      %v990 = vld [vmem:[#allocation2 + $0x7f] sm:$0xff]
      %v991 = vld [vmem:[#allocation2 + $0x87] sm:$0xff]
      %v992 = vld [vmem:[#allocation2 + $0x8f] sm:$0xff]
      %v993 = vld [vmem:[#allocation2 + $0x97] sm:$0xff]
      %v994 = vld [vmem:[#allocation2 + $0x9f] sm:$0xff]
      %v995 = vld [vmem:[#allocation2 + $0xa7] sm:$0xff]
      %v996 = vld [vmem:[#allocation2 + $0xaf] sm:$0xff]
      %v997 = vld [vmem:[#allocation2 + $0xb7] sm:$0xff]
      %v998 = vld [vmem:[#allocation2 + $0xbf] sm:$0xff]
      %v999 = vld [vmem:[#allocation2 + $0xc7] sm:$0xff]
      %v1000 = vld [vmem:[#allocation2 + $0xcf] sm:$0xff]
      %v1001 = vld [vmem:[#allocation2 + $0xd7] sm:$0xff]
      %v1002 = vld [vmem:[#allocation2 + $0xdf] sm:$0xff]
      %v1003 = vld [vmem:[#allocation2 + $0xe7] sm:$0xff]
      %v1004 = vld [vmem:[#allocation2 + $0xef] sm:$0xff]
      %v1005 = vld [vmem:[#allocation2 + $0xf7] sm:$0xff]
      %v1006 = vld [vmem:[#allocation2 + $0xff] sm:$0xff]
      %v1007 = vld [vmem:[#allocation2 + $0x107] sm:$0xff]
      %v1008 = vld [vmem:[#allocation2 + $0x10f] sm:$0xff]
      %v1009 = vmul.f32 %v977, %v564
      %v1010 = vmul.f32 %v978, %v569
      %v1011 = vmul.f32 %v979, %v574
      %v1012 = vmul.f32 %v980, %v579
      %v1013 = vmul.f32 %v981, %v584
      %v1014 = vmul.f32 %v982, %v589
      %v1015 = vmul.f32 %v983, %v594
      %v1016 = vmul.f32 %v984, %v599
      %v1017 = vmul.f32 %v985, %v604
      %v1018 = vmul.f32 %v986, %v609
      %v1019 = vmul.f32 %v987, %v614
      %v1020 = vmul.f32 %v988, %v619
      %v1021 = vmul.f32 %v989, %v624
      %v1022 = vmul.f32 %v990, %v629
      %v1023 = vmul.f32 %v991, %v634
      %v1024 = vmul.f32 %v992, %v639
      %v1025 = vmul.f32 %v993, %v644
      %v1026 = vmul.f32 %v994, %v649
      %v1027 = vmul.f32 %v995, %v654
      %v1028 = vmul.f32 %v996, %v659
      %v1029 = vmul.f32 %v997, %v664
      %v1030 = vmul.f32 %v998, %v669
      %v1031 = vmul.f32 %v999, %v674
      %v1032 = vmul.f32 %v1000, %v679
      %v1033 = vmul.f32 %v1001, %v684
      %v1034 = vmul.f32 %v1002, %v689
      %v1035 = vmul.f32 %v1003, %v694
      %v1036 = vmul.f32 %v1004, %v699
      %v1037 = vmul.f32 %v1005, %v704
      %v1038 = vmul.f32 %v1006, %v709
      %v1039 = vmul.f32 %v1007, %v714
      %v1040 = vmul.f32 %v1008, %v719
      %v1041 = vld [vmem:[#allocation2 + $0x18] sm:$0xff]
      %v1042 = vld [vmem:[#allocation2 + $0x20] sm:$0xff]
      %v1043 = vld [vmem:[#allocation2 + $0x28] sm:$0xff]
      %v1044 = vld [vmem:[#allocation2 + $0x30] sm:$0xff]
      %v1045 = vld [vmem:[#allocation2 + $0x38] sm:$0xff]
      %v1046 = vld [vmem:[#allocation2 + $0x40] sm:$0xff]
      %v1047 = vld [vmem:[#allocation2 + $0x48] sm:$0xff]
      %v1048 = vld [vmem:[#allocation2 + $0x50] sm:$0xff]
      %v1049 = vld [vmem:[#allocation2 + $0x58] sm:$0xff]
      %v1050 = vld [vmem:[#allocation2 + $0x60] sm:$0xff]
      %v1051 = vld [vmem:[#allocation2 + $0x68] sm:$0xff]
      %v1052 = vld [vmem:[#allocation2 + $0x70] sm:$0xff]
      %v1053 = vld [vmem:[#allocation2 + $0x78] sm:$0xff]
      %v1054 = vld [vmem:[#allocation2 + $0x80] sm:$0xff]
      %v1055 = vld [vmem:[#allocation2 + $0x88] sm:$0xff]
      %v1056 = vld [vmem:[#allocation2 + $0x90] sm:$0xff]
      %v1057 = vld [vmem:[#allocation2 + $0x98] sm:$0xff]
      %v1058 = vld [vmem:[#allocation2 + $0xa0] sm:$0xff]
      %v1059 = vld [vmem:[#allocation2 + $0xa8] sm:$0xff]
      %v1060 = vld [vmem:[#allocation2 + $0xb0] sm:$0xff]
      %v1061 = vld [vmem:[#allocation2 + $0xb8] sm:$0xff]
      %v1062 = vld [vmem:[#allocation2 + $0xc0] sm:$0xff]
      %v1063 = vld [vmem:[#allocation2 + $0xc8] sm:$0xff]
      %v1064 = vld [vmem:[#allocation2 + $0xd0] sm:$0xff]
      %v1065 = vld [vmem:[#allocation2 + $0xd8] sm:$0xff]
      %v1066 = vld [vmem:[#allocation2 + $0xe0] sm:$0xff]
      %v1067 = vld [vmem:[#allocation2 + $0xe8] sm:$0xff]
      %v1068 = vld [vmem:[#allocation2 + $0xf0] sm:$0xff]
      %v1069 = vld [vmem:[#allocation2 + $0xf8] sm:$0xff]
      %v1070 = vld [vmem:[#allocation2 + $0x100] sm:$0xff]
      %v1071 = vld [vmem:[#allocation2 + $0x108] sm:$0xff]
      %v1072 = vld [vmem:[#allocation2 + $0x110] sm:$0xff]
      %v1073 = vld [vmem:[#allocation2 + $0x19] sm:$0xff]
      %v1074 = vld [vmem:[#allocation2 + $0x21] sm:$0xff]
      %v1075 = vld [vmem:[#allocation2 + $0x29] sm:$0xff]
      %v1076 = vld [vmem:[#allocation2 + $0x31] sm:$0xff]
      %v1077 = vld [vmem:[#allocation2 + $0x39] sm:$0xff]
      %v1078 = vld [vmem:[#allocation2 + $0x41] sm:$0xff]
      %v1079 = vld [vmem:[#allocation2 + $0x49] sm:$0xff]
      %v1080 = vld [vmem:[#allocation2 + $0x51] sm:$0xff]
      %v1081 = vld [vmem:[#allocation2 + $0x59] sm:$0xff]
      %v1082 = vld [vmem:[#allocation2 + $0x61] sm:$0xff]
      %v1083 = vld [vmem:[#allocation2 + $0x69] sm:$0xff]
      %v1084 = vld [vmem:[#allocation2 + $0x71] sm:$0xff]
      %v1085 = vld [vmem:[#allocation2 + $0x79] sm:$0xff]
      %v1086 = vld [vmem:[#allocation2 + $0x81] sm:$0xff]
      %v1087 = vld [vmem:[#allocation2 + $0x89] sm:$0xff]
      %v1088 = vld [vmem:[#allocation2 + $0x91] sm:$0xff]
      %v1089 = vld [vmem:[#allocation2 + $0x99] sm:$0xff]
      %v1090 = vld [vmem:[#allocation2 + $0xa1] sm:$0xff]
      %v1091 = vld [vmem:[#allocation2 + $0xa9] sm:$0xff]
      %v1092 = vld [vmem:[#allocation2 + $0xb1] sm:$0xff]
      %v1093 = vld [vmem:[#allocation2 + $0xb9] sm:$0xff]
      %v1094 = vld [vmem:[#allocation2 + $0xc1] sm:$0xff]
      %v1095 = vld [vmem:[#allocation2 + $0xc9] sm:$0xff]
      %v1096 = vld [vmem:[#allocation2 + $0xd1] sm:$0xff]
      %v1097 = vld [vmem:[#allocation2 + $0xd9] sm:$0xff]
      %v1098 = vld [vmem:[#allocation2 + $0xe1] sm:$0xff]
      %v1099 = vld [vmem:[#allocation2 + $0xe9] sm:$0xff]
      %v1100 = vld [vmem:[#allocation2 + $0xf1] sm:$0xff]
      %v1101 = vld [vmem:[#allocation2 + $0xf9] sm:$0xff]
      %v1102 = vld [vmem:[#allocation2 + $0x101] sm:$0xff]
      %v1103 = vld [vmem:[#allocation2 + $0x109] sm:$0xff]
      %v1104 = vld [vmem:[#allocation2 + $0x111] sm:$0xff]
      %v1105 = vmul.f32 %v1073, %v819
      %v1106 = vmul.f32 %v1074, %v823
      %v1107 = vmul.f32 %v1075, %v827
      %v1108 = vmul.f32 %v1076, %v831
      %v1109 = vmul.f32 %v1077, %v835
      %v1110 = vmul.f32 %v1078, %v839
      %v1111 = vmul.f32 %v1079, %v843
      %v1112 = vmul.f32 %v1080, %v847
      %v1113 = vmul.f32 %v1081, %v851
      %v1114 = vmul.f32 %v1082, %v855
      %v1115 = vmul.f32 %v1083, %v859
      %v1116 = vmul.f32 %v1084, %v863
      %v1117 = vmul.f32 %v1085, %v867
      %v1118 = vmul.f32 %v1086, %v871
      %v1119 = vmul.f32 %v1087, %v875
      %v1120 = vmul.f32 %v1088, %v879
      %v1121 = vmul.f32 %v1089, %v883
      %v1122 = vmul.f32 %v1090, %v887
      %v1123 = vmul.f32 %v1091, %v891
      %v1124 = vmul.f32 %v1092, %v895
      %v1125 = vmul.f32 %v1093, %v899
      %v1126 = vmul.f32 %v1094, %v903
      %v1127 = vmul.f32 %v1095, %v907
      %v1128 = vmul.f32 %v1096, %v911
      %v1129 = vmul.f32 %v1097, %v915
      %v1130 = vmul.f32 %v1098, %v919
      %v1131 = vmul.f32 %v1099, %v923
      %v1132 = vmul.f32 %v1100, %v927
      %v1133 = vmul.f32 %v1101, %v931
      %v1134 = vmul.f32 %v1102, %v935
      %v1135 = vmul.f32 %v1103, %v939
      %v1136 = vmul.f32 %v1104, %v943
      %v1137 = vld [vmem:[#allocation2 + $0x117] sm:$0xff]
      %v1138 = vld [vmem:[#allocation2 + $0x11f] sm:$0xff]
      %v1139 = vmul.f32 %v979, %v564
      %v1140 = vmul.f32 %v980, %v569
      %v1141 = vmul.f32 %v981, %v574
      %v1142 = vmul.f32 %v982, %v579
      %v1143 = vmul.f32 %v983, %v584
      %v1144 = vmul.f32 %v984, %v589
      %v1145 = vmul.f32 %v985, %v594
      %v1146 = vmul.f32 %v986, %v599
      %v1147 = vmul.f32 %v987, %v604
      %v1148 = vmul.f32 %v988, %v609
      %v1149 = vmul.f32 %v989, %v614
      %v1150 = vmul.f32 %v990, %v619
      %v1151 = vmul.f32 %v991, %v624
      %v1152 = vmul.f32 %v992, %v629
      %v1153 = vmul.f32 %v993, %v634
      %v1154 = vmul.f32 %v994, %v639
      %v1155 = vmul.f32 %v995, %v644
      %v1156 = vmul.f32 %v996, %v649
      %v1157 = vmul.f32 %v997, %v654
      %v1158 = vmul.f32 %v998, %v659
      %v1159 = vmul.f32 %v999, %v664
      %v1160 = vmul.f32 %v1000, %v669
      %v1161 = vmul.f32 %v1001, %v674
      %v1162 = vmul.f32 %v1002, %v679
      %v1163 = vmul.f32 %v1003, %v684
      %v1164 = vmul.f32 %v1004, %v689
      %v1165 = vmul.f32 %v1005, %v694
      %v1166 = vmul.f32 %v1006, %v699
      %v1167 = vmul.f32 %v1007, %v704
      %v1168 = vmul.f32 %v1008, %v709
      %v1169 = vmul.f32 %v1137, %v714
      %v1170 = vmul.f32 %v1138, %v719
      %v1171 = vld [vmem:[#allocation2 + $0x118] sm:$0xff]
      %v1172 = vld [vmem:[#allocation2 + $0x120] sm:$0xff]
      %v1173 = vld [vmem:[#allocation2 + $0x119] sm:$0xff]
      %v1174 = vld [vmem:[#allocation2 + $0x121] sm:$0xff]
      %v1175 = vmul.f32 %v1075, %v819
      %v1176 = vmul.f32 %v1076, %v823
      %v1177 = vmul.f32 %v1077, %v827
      %v1178 = vmul.f32 %v1078, %v831
      %v1179 = vmul.f32 %v1079, %v835
      %v1180 = vmul.f32 %v1080, %v839
      %v1181 = vmul.f32 %v1081, %v843
      %v1182 = vmul.f32 %v1082, %v847
      %v1183 = vmul.f32 %v1083, %v851
      %v1184 = vmul.f32 %v1084, %v855
      %v1185 = vmul.f32 %v1085, %v859
      %v1186 = vmul.f32 %v1086, %v863
      %v1187 = vmul.f32 %v1087, %v867
      %v1188 = vmul.f32 %v1088, %v871
      %v1189 = vmul.f32 %v1089, %v875
      %v1190 = vmul.f32 %v1090, %v879
      %v1191 = vmul.f32 %v1091, %v883
      %v1192 = vmul.f32 %v1092, %v887
      %v1193 = vmul.f32 %v1093, %v891
      %v1194 = vmul.f32 %v1094, %v895
      %v1195 = vmul.f32 %v1095, %v899
      %v1196 = vmul.f32 %v1096, %v903
      %v1197 = vmul.f32 %v1097, %v907
      %v1198 = vmul.f32 %v1098, %v911
      %v1199 = vmul.f32 %v1099, %v915
      %v1200 = vmul.f32 %v1100, %v919
      %v1201 = vmul.f32 %v1101, %v923
      %v1202 = vmul.f32 %v1102, %v927
      %v1203 = vmul.f32 %v1103, %v931
      %v1204 = vmul.f32 %v1104, %v935
      %v1205 = vmul.f32 %v1173, %v939
      %v1206 = vmul.f32 %v1174, %v943
      %1239 = vrot.lane.b32.xlu0 %v753, 8
      %v1240 = vpop.permute.xlu0 %1239
      %1241 = vrot.lane.b32.xlu0 %v754, 8
      %v1242 = vpop.permute.xlu0 %1241
      %1243 = vrot.lane.b32.xlu0 %v755, 8
      %v1244 = vpop.permute.xlu0 %1243
      %1245 = vrot.lane.b32.xlu0 %v756, 8
      %v1246 = vpop.permute.xlu0 %1245
      %1247 = vrot.lane.b32.xlu0 %v757, 8
      %v1248 = vpop.permute.xlu0 %1247
      %1249 = vrot.lane.b32.xlu0 %v758, 8
      %v1250 = vpop.permute.xlu0 %1249
      %1251 = vrot.lane.b32.xlu0 %v759, 8
      %v1252 = vpop.permute.xlu0 %1251
      %1253 = vrot.lane.b32.xlu0 %v760, 8
      %v1254 = vpop.permute.xlu0 %1253
      %1255 = vrot.lane.b32.xlu0 %v761, 8
      %v1256 = vpop.permute.xlu0 %1255
      %1257 = vrot.lane.b32.xlu0 %v762, 8
      %v1258 = vpop.permute.xlu0 %1257
      %1259 = vrot.lane.b32.xlu0 %v763, 8
      %v1260 = vpop.permute.xlu0 %1259
      %1261 = vrot.lane.b32.xlu0 %v764, 8
      %v1262 = vpop.permute.xlu0 %1261
      %1263 = vrot.lane.b32.xlu0 %v765, 8
      %v1264 = vpop.permute.xlu0 %1263
      %1265 = vrot.lane.b32.xlu0 %v766, 8
      %v1266 = vpop.permute.xlu0 %1265
      %1267 = vrot.lane.b32.xlu0 %v767, 8
      %v1268 = vpop.permute.xlu0 %1267
      %1269 = vrot.lane.b32.xlu0 %v768, 8
      %v1270 = vpop.permute.xlu0 %1269
      %1271 = vrot.lane.b32.xlu0 %v769, 8
      %v1272 = vpop.permute.xlu0 %1271
      %1273 = vrot.lane.b32.xlu0 %v770, 8
      %v1274 = vpop.permute.xlu0 %1273
      %1275 = vrot.lane.b32.xlu0 %v771, 8
      %v1276 = vpop.permute.xlu0 %1275
      %1277 = vrot.lane.b32.xlu0 %v772, 8
      %v1278 = vpop.permute.xlu0 %1277
      %1279 = vrot.lane.b32.xlu0 %v773, 8
      %v1280 = vpop.permute.xlu0 %1279
      %1281 = vrot.lane.b32.xlu0 %v774, 8
      %v1282 = vpop.permute.xlu0 %1281
      %1283 = vrot.lane.b32.xlu0 %v775, 8
      %v1284 = vpop.permute.xlu0 %1283
      %1285 = vrot.lane.b32.xlu0 %v776, 8
      %v1286 = vpop.permute.xlu0 %1285
      %1287 = vrot.lane.b32.xlu0 %v777, 8
      %v1288 = vpop.permute.xlu0 %1287
      %1289 = vrot.lane.b32.xlu0 %v778, 8
      %v1290 = vpop.permute.xlu0 %1289
      %1291 = vrot.lane.b32.xlu0 %v779, 8
      %v1292 = vpop.permute.xlu0 %1291
      %1293 = vrot.lane.b32.xlu0 %v780, 8
      %v1294 = vpop.permute.xlu0 %1293
      %1295 = vrot.lane.b32.xlu0 %v781, 8
      %v1296 = vpop.permute.xlu0 %1295
      %1297 = vrot.lane.b32.xlu0 %v782, 8
      %v1298 = vpop.permute.xlu0 %1297
      %1299 = vrot.lane.b32.xlu0 %v783, 8
      %v1300 = vpop.permute.xlu0 %1299
      %1301 = vrot.lane.b32.xlu0 %v784, 8
      %v1302 = vpop.permute.xlu0 %1301
      %1367 = vrot.lane.b32.xlu0 %v945, 16
      %v1368 = vpop.permute.xlu0 %1367
      %1369 = vrot.lane.b32.xlu0 %v946, 16
      %v1370 = vpop.permute.xlu0 %1369
      %1371 = vrot.lane.b32.xlu0 %v947, 16
      %v1372 = vpop.permute.xlu0 %1371
      %1373 = vrot.lane.b32.xlu0 %v948, 16
      %v1374 = vpop.permute.xlu0 %1373
      %1375 = vrot.lane.b32.xlu0 %v949, 16
      %v1376 = vpop.permute.xlu0 %1375
      %1377 = vrot.lane.b32.xlu0 %v950, 16
      %v1378 = vpop.permute.xlu0 %1377
      %1379 = vrot.lane.b32.xlu0 %v951, 16
      %v1380 = vpop.permute.xlu0 %1379
      %1381 = vrot.lane.b32.xlu0 %v952, 16
      %v1382 = vpop.permute.xlu0 %1381
      %1383 = vrot.lane.b32.xlu0 %v953, 16
      %v1384 = vpop.permute.xlu0 %1383
      %1385 = vrot.lane.b32.xlu0 %v954, 16
      %v1386 = vpop.permute.xlu0 %1385
      %1387 = vrot.lane.b32.xlu0 %v955, 16
      %v1388 = vpop.permute.xlu0 %1387
      %1389 = vrot.lane.b32.xlu0 %v956, 16
      %v1390 = vpop.permute.xlu0 %1389
      %1391 = vrot.lane.b32.xlu0 %v957, 16
      %v1392 = vpop.permute.xlu0 %1391
      %1393 = vrot.lane.b32.xlu0 %v958, 16
      %v1394 = vpop.permute.xlu0 %1393
      %1395 = vrot.lane.b32.xlu0 %v959, 16
      %v1396 = vpop.permute.xlu0 %1395
      %1397 = vrot.lane.b32.xlu0 %v960, 16
      %v1398 = vpop.permute.xlu0 %1397
      %1399 = vrot.lane.b32.xlu0 %v961, 16
      %v1400 = vpop.permute.xlu0 %1399
      %1401 = vrot.lane.b32.xlu0 %v962, 16
      %v1402 = vpop.permute.xlu0 %1401
      %1403 = vrot.lane.b32.xlu0 %v963, 16
      %v1404 = vpop.permute.xlu0 %1403
      %1405 = vrot.lane.b32.xlu0 %v964, 16
      %v1406 = vpop.permute.xlu0 %1405
      %1407 = vrot.lane.b32.xlu0 %v965, 16
      %v1408 = vpop.permute.xlu0 %1407
      %1409 = vrot.lane.b32.xlu0 %v966, 16
      %v1410 = vpop.permute.xlu0 %1409
      %1411 = vrot.lane.b32.xlu0 %v967, 16
      %v1412 = vpop.permute.xlu0 %1411
      %1413 = vrot.lane.b32.xlu0 %v968, 16
      %v1414 = vpop.permute.xlu0 %1413
      %1415 = vrot.lane.b32.xlu0 %v969, 16
      %v1416 = vpop.permute.xlu0 %1415
      %1417 = vrot.lane.b32.xlu0 %v970, 16
      %v1418 = vpop.permute.xlu0 %1417
      %1419 = vrot.lane.b32.xlu0 %v971, 16
      %v1420 = vpop.permute.xlu0 %1419
      %1421 = vrot.lane.b32.xlu0 %v972, 16
      %v1422 = vpop.permute.xlu0 %1421
      %1423 = vrot.lane.b32.xlu0 %v973, 16
      %v1424 = vpop.permute.xlu0 %1423
      %1425 = vrot.lane.b32.xlu0 %v974, 16
      %v1426 = vpop.permute.xlu0 %1425
      %1427 = vrot.lane.b32.xlu0 %v975, 16
      %v1428 = vpop.permute.xlu0 %1427
      %1429 = vrot.lane.b32.xlu0 %v976, 16
      %v1430 = vpop.permute.xlu0 %1429
      %1495 = vrot.lane.b32.xlu0 %v1009, 24
      %v1496 = vpop.permute.xlu0 %1495
      %1497 = vrot.lane.b32.xlu0 %v1010, 24
      %v1498 = vpop.permute.xlu0 %1497
      %1499 = vrot.lane.b32.xlu0 %v1011, 24
      %v1500 = vpop.permute.xlu0 %1499
      %1501 = vrot.lane.b32.xlu0 %v1012, 24
      %v1502 = vpop.permute.xlu0 %1501
      %1503 = vrot.lane.b32.xlu0 %v1013, 24
      %v1504 = vpop.permute.xlu0 %1503
      %1505 = vrot.lane.b32.xlu0 %v1014, 24
      %v1506 = vpop.permute.xlu0 %1505
      %1507 = vrot.lane.b32.xlu0 %v1015, 24
      %v1508 = vpop.permute.xlu0 %1507
      %1509 = vrot.lane.b32.xlu0 %v1016, 24
      %v1510 = vpop.permute.xlu0 %1509
      %1511 = vrot.lane.b32.xlu0 %v1017, 24
      %v1512 = vpop.permute.xlu0 %1511
      %1513 = vrot.lane.b32.xlu0 %v1018, 24
      %v1514 = vpop.permute.xlu0 %1513
      %1515 = vrot.lane.b32.xlu0 %v1019, 24
      %v1516 = vpop.permute.xlu0 %1515
      %1517 = vrot.lane.b32.xlu0 %v1020, 24
      %v1518 = vpop.permute.xlu0 %1517
      %1519 = vrot.lane.b32.xlu0 %v1021, 24
      %v1520 = vpop.permute.xlu0 %1519
      %1521 = vrot.lane.b32.xlu0 %v1022, 24
      %v1522 = vpop.permute.xlu0 %1521
      %1523 = vrot.lane.b32.xlu0 %v1023, 24
      %v1524 = vpop.permute.xlu0 %1523
      %1525 = vrot.lane.b32.xlu0 %v1024, 24
      %v1526 = vpop.permute.xlu0 %1525
      %1527 = vrot.lane.b32.xlu0 %v1025, 24
      %v1528 = vpop.permute.xlu0 %1527
      %1529 = vrot.lane.b32.xlu0 %v1026, 24
      %v1530 = vpop.permute.xlu0 %1529
      %1531 = vrot.lane.b32.xlu0 %v1027, 24
      %v1532 = vpop.permute.xlu0 %1531
      %1533 = vrot.lane.b32.xlu0 %v1028, 24
      %v1534 = vpop.permute.xlu0 %1533
      %1535 = vrot.lane.b32.xlu0 %v1029, 24
      %v1536 = vpop.permute.xlu0 %1535
      %1537 = vrot.lane.b32.xlu0 %v1030, 24
      %v1538 = vpop.permute.xlu0 %1537
      %1539 = vrot.lane.b32.xlu0 %v1031, 24
      %v1540 = vpop.permute.xlu0 %1539
      %1541 = vrot.lane.b32.xlu0 %v1032, 24
      %v1542 = vpop.permute.xlu0 %1541
      %1543 = vrot.lane.b32.xlu0 %v1033, 24
      %v1544 = vpop.permute.xlu0 %1543
      %1545 = vrot.lane.b32.xlu0 %v1034, 24
      %v1546 = vpop.permute.xlu0 %1545
      %1547 = vrot.lane.b32.xlu0 %v1035, 24
      %v1548 = vpop.permute.xlu0 %1547
      %1549 = vrot.lane.b32.xlu0 %v1036, 24
      %v1550 = vpop.permute.xlu0 %1549
      %1551 = vrot.lane.b32.xlu0 %v1037, 24
      %v1552 = vpop.permute.xlu0 %1551
      %1553 = vrot.lane.b32.xlu0 %v1038, 24
      %v1554 = vpop.permute.xlu0 %1553
      %1555 = vrot.lane.b32.xlu0 %v1039, 24
      %v1556 = vpop.permute.xlu0 %1555
      %1557 = vrot.lane.b32.xlu0 %v1040, 24
      %v1558 = vpop.permute.xlu0 %1557
      %1623 = vrot.lane.b32.xlu0 %v1041, 32
      %v1624 = vpop.permute.xlu0 %1623
      %1625 = vrot.lane.b32.xlu0 %v1042, 32
      %v1626 = vpop.permute.xlu0 %1625
      %1627 = vrot.lane.b32.xlu0 %v1043, 32
      %v1628 = vpop.permute.xlu0 %1627
      %1629 = vrot.lane.b32.xlu0 %v1044, 32
      %v1630 = vpop.permute.xlu0 %1629
      %1631 = vrot.lane.b32.xlu0 %v1045, 32
      %v1632 = vpop.permute.xlu0 %1631
      %1633 = vrot.lane.b32.xlu0 %v1046, 32
      %v1634 = vpop.permute.xlu0 %1633
      %1635 = vrot.lane.b32.xlu0 %v1047, 32
      %v1636 = vpop.permute.xlu0 %1635
      %1637 = vrot.lane.b32.xlu0 %v1048, 32
      %v1638 = vpop.permute.xlu0 %1637
      %1639 = vrot.lane.b32.xlu0 %v1049, 32
      %v1640 = vpop.permute.xlu0 %1639
      %1641 = vrot.lane.b32.xlu0 %v1050, 32
      %v1642 = vpop.permute.xlu0 %1641
      %1643 = vrot.lane.b32.xlu0 %v1051, 32
      %v1644 = vpop.permute.xlu0 %1643
      %1645 = vrot.lane.b32.xlu0 %v1052, 32
      %v1646 = vpop.permute.xlu0 %1645
      %1647 = vrot.lane.b32.xlu0 %v1053, 32
      %v1648 = vpop.permute.xlu0 %1647
      %1649 = vrot.lane.b32.xlu0 %v1054, 32
      %v1650 = vpop.permute.xlu0 %1649
      %1651 = vrot.lane.b32.xlu0 %v1055, 32
      %v1652 = vpop.permute.xlu0 %1651
      %1653 = vrot.lane.b32.xlu0 %v1056, 32
      %v1654 = vpop.permute.xlu0 %1653
      %1655 = vrot.lane.b32.xlu0 %v1057, 32
      %v1656 = vpop.permute.xlu0 %1655
      %1657 = vrot.lane.b32.xlu0 %v1058, 32
      %v1658 = vpop.permute.xlu0 %1657
      %1659 = vrot.lane.b32.xlu0 %v1059, 32
      %v1660 = vpop.permute.xlu0 %1659
      %1661 = vrot.lane.b32.xlu0 %v1060, 32
      %v1662 = vpop.permute.xlu0 %1661
      %1663 = vrot.lane.b32.xlu0 %v1061, 32
      %v1664 = vpop.permute.xlu0 %1663
      %1665 = vrot.lane.b32.xlu0 %v1062, 32
      %v1666 = vpop.permute.xlu0 %1665
      %1667 = vrot.lane.b32.xlu0 %v1063, 32
      %v1668 = vpop.permute.xlu0 %1667
      %1669 = vrot.lane.b32.xlu0 %v1064, 32
      %v1670 = vpop.permute.xlu0 %1669
      %1671 = vrot.lane.b32.xlu0 %v1065, 32
      %v1672 = vpop.permute.xlu0 %1671
      %1673 = vrot.lane.b32.xlu0 %v1066, 32
      %v1674 = vpop.permute.xlu0 %1673
      %1675 = vrot.lane.b32.xlu0 %v1067, 32
      %v1676 = vpop.permute.xlu0 %1675
      %1677 = vrot.lane.b32.xlu0 %v1068, 32
      %v1678 = vpop.permute.xlu0 %1677
      %1679 = vrot.lane.b32.xlu0 %v1069, 32
      %v1680 = vpop.permute.xlu0 %1679
      %1681 = vrot.lane.b32.xlu0 %v1070, 32
      %v1682 = vpop.permute.xlu0 %1681
      %1683 = vrot.lane.b32.xlu0 %v1071, 32
      %v1684 = vpop.permute.xlu0 %1683
      %1685 = vrot.lane.b32.xlu0 %v1072, 32
      %v1686 = vpop.permute.xlu0 %1685
      %1751 = vrot.lane.b32.xlu0 %v1105, 40
      %v1752 = vpop.permute.xlu0 %1751
      %1753 = vrot.lane.b32.xlu0 %v1106, 40
      %v1754 = vpop.permute.xlu0 %1753
      %1755 = vrot.lane.b32.xlu0 %v1107, 40
      %v1756 = vpop.permute.xlu0 %1755
      %1757 = vrot.lane.b32.xlu0 %v1108, 40
      %v1758 = vpop.permute.xlu0 %1757
      %1759 = vrot.lane.b32.xlu0 %v1109, 40
      %v1760 = vpop.permute.xlu0 %1759
      %1761 = vrot.lane.b32.xlu0 %v1110, 40
      %v1762 = vpop.permute.xlu0 %1761
      %1763 = vrot.lane.b32.xlu0 %v1111, 40
      %v1764 = vpop.permute.xlu0 %1763
      %1765 = vrot.lane.b32.xlu0 %v1112, 40
      %v1766 = vpop.permute.xlu0 %1765
      %1767 = vrot.lane.b32.xlu0 %v1113, 40
      %v1768 = vpop.permute.xlu0 %1767
      %1769 = vrot.lane.b32.xlu0 %v1114, 40
      %v1770 = vpop.permute.xlu0 %1769
      %1771 = vrot.lane.b32.xlu0 %v1115, 40
      %v1772 = vpop.permute.xlu0 %1771
      %1773 = vrot.lane.b32.xlu0 %v1116, 40
      %v1774 = vpop.permute.xlu0 %1773
      %1775 = vrot.lane.b32.xlu0 %v1117, 40
      %v1776 = vpop.permute.xlu0 %1775
      %1777 = vrot.lane.b32.xlu0 %v1118, 40
      %v1778 = vpop.permute.xlu0 %1777
      %1779 = vrot.lane.b32.xlu0 %v1119, 40
      %v1780 = vpop.permute.xlu0 %1779
      %1781 = vrot.lane.b32.xlu0 %v1120, 40
      %v1782 = vpop.permute.xlu0 %1781
      %1783 = vrot.lane.b32.xlu0 %v1121, 40
      %v1784 = vpop.permute.xlu0 %1783
      %1785 = vrot.lane.b32.xlu0 %v1122, 40
      %v1786 = vpop.permute.xlu0 %1785
      %1787 = vrot.lane.b32.xlu0 %v1123, 40
      %v1788 = vpop.permute.xlu0 %1787
      %1789 = vrot.lane.b32.xlu0 %v1124, 40
      %v1790 = vpop.permute.xlu0 %1789
      %1791 = vrot.lane.b32.xlu0 %v1125, 40
      %v1792 = vpop.permute.xlu0 %1791
      %1793 = vrot.lane.b32.xlu0 %v1126, 40
      %v1794 = vpop.permute.xlu0 %1793
      %1795 = vrot.lane.b32.xlu0 %v1127, 40
      %v1796 = vpop.permute.xlu0 %1795
      %1797 = vrot.lane.b32.xlu0 %v1128, 40
      %v1798 = vpop.permute.xlu0 %1797
      %1799 = vrot.lane.b32.xlu0 %v1129, 40
      %v1800 = vpop.permute.xlu0 %1799
      %1801 = vrot.lane.b32.xlu0 %v1130, 40
      %v1802 = vpop.permute.xlu0 %1801
      %1803 = vrot.lane.b32.xlu0 %v1131, 40
      %v1804 = vpop.permute.xlu0 %1803
      %1805 = vrot.lane.b32.xlu0 %v1132, 40
      %v1806 = vpop.permute.xlu0 %1805
      %1807 = vrot.lane.b32.xlu0 %v1133, 40
      %v1808 = vpop.permute.xlu0 %1807
      %1809 = vrot.lane.b32.xlu0 %v1134, 40
      %v1810 = vpop.permute.xlu0 %1809
      %1811 = vrot.lane.b32.xlu0 %v1135, 40
      %v1812 = vpop.permute.xlu0 %1811
      %1813 = vrot.lane.b32.xlu0 %v1136, 40
      %v1814 = vpop.permute.xlu0 %1813
      %1879 = vrot.lane.b32.xlu0 %v1139, 48
      %v1880 = vpop.permute.xlu0 %1879
      %1881 = vrot.lane.b32.xlu0 %v1140, 48
      %v1882 = vpop.permute.xlu0 %1881
      %1883 = vrot.lane.b32.xlu0 %v1141, 48
      %v1884 = vpop.permute.xlu0 %1883
      %1885 = vrot.lane.b32.xlu0 %v1142, 48
      %v1886 = vpop.permute.xlu0 %1885
      %1887 = vrot.lane.b32.xlu0 %v1143, 48
      %v1888 = vpop.permute.xlu0 %1887
      %1889 = vrot.lane.b32.xlu0 %v1144, 48
      %v1890 = vpop.permute.xlu0 %1889
      %1891 = vrot.lane.b32.xlu0 %v1145, 48
      %v1892 = vpop.permute.xlu0 %1891
      %1893 = vrot.lane.b32.xlu0 %v1146, 48
      %v1894 = vpop.permute.xlu0 %1893
      %1895 = vrot.lane.b32.xlu0 %v1147, 48
      %v1896 = vpop.permute.xlu0 %1895
      %1897 = vrot.lane.b32.xlu0 %v1148, 48
      %v1898 = vpop.permute.xlu0 %1897
      %1899 = vrot.lane.b32.xlu0 %v1149, 48
      %v1900 = vpop.permute.xlu0 %1899
      %1901 = vrot.lane.b32.xlu0 %v1150, 48
      %v1902 = vpop.permute.xlu0 %1901
      %1903 = vrot.lane.b32.xlu0 %v1151, 48
      %v1904 = vpop.permute.xlu0 %1903
      %1905 = vrot.lane.b32.xlu0 %v1152, 48
      %v1906 = vpop.permute.xlu0 %1905
      %1907 = vrot.lane.b32.xlu0 %v1153, 48
      %v1908 = vpop.permute.xlu0 %1907
      %1909 = vrot.lane.b32.xlu0 %v1154, 48
      %v1910 = vpop.permute.xlu0 %1909
      %1911 = vrot.lane.b32.xlu0 %v1155, 48
      %v1912 = vpop.permute.xlu0 %1911
      %1913 = vrot.lane.b32.xlu0 %v1156, 48
      %v1914 = vpop.permute.xlu0 %1913
      %1915 = vrot.lane.b32.xlu0 %v1157, 48
      %v1916 = vpop.permute.xlu0 %1915
      %1917 = vrot.lane.b32.xlu0 %v1158, 48
      %v1918 = vpop.permute.xlu0 %1917
      %1919 = vrot.lane.b32.xlu0 %v1159, 48
      %v1920 = vpop.permute.xlu0 %1919
      %1921 = vrot.lane.b32.xlu0 %v1160, 48
      %v1922 = vpop.permute.xlu0 %1921
      %1923 = vrot.lane.b32.xlu0 %v1161, 48
      %v1924 = vpop.permute.xlu0 %1923
      %1925 = vrot.lane.b32.xlu0 %v1162, 48
      %v1926 = vpop.permute.xlu0 %1925
      %1927 = vrot.lane.b32.xlu0 %v1163, 48
      %v1928 = vpop.permute.xlu0 %1927
      %1929 = vrot.lane.b32.xlu0 %v1164, 48
      %v1930 = vpop.permute.xlu0 %1929
      %1931 = vrot.lane.b32.xlu0 %v1165, 48
      %v1932 = vpop.permute.xlu0 %1931
      %1933 = vrot.lane.b32.xlu0 %v1166, 48
      %v1934 = vpop.permute.xlu0 %1933
      %1935 = vrot.lane.b32.xlu0 %v1167, 48
      %v1936 = vpop.permute.xlu0 %1935
      %1937 = vrot.lane.b32.xlu0 %v1168, 48
      %v1938 = vpop.permute.xlu0 %1937
      %1939 = vrot.lane.b32.xlu0 %v1169, 48
      %v1940 = vpop.permute.xlu0 %1939
      %1941 = vrot.lane.b32.xlu0 %v1170, 48
      %v1942 = vpop.permute.xlu0 %1941
      %1977 = vrot.lane.b32.xlu0 %v1043, 56
      %v1978 = vpop.permute.xlu0 %1977
      %1979 = vrot.lane.b32.xlu0 %v1044, 56
      %v1980 = vpop.permute.xlu0 %1979
      %1981 = vrot.lane.b32.xlu0 %v1045, 56
      %v1982 = vpop.permute.xlu0 %1981
      %1983 = vrot.lane.b32.xlu0 %v1046, 56
      %v1984 = vpop.permute.xlu0 %1983
      %1985 = vrot.lane.b32.xlu0 %v1047, 56
      %v1986 = vpop.permute.xlu0 %1985
      %1987 = vrot.lane.b32.xlu0 %v1048, 56
      %v1988 = vpop.permute.xlu0 %1987
      %1989 = vrot.lane.b32.xlu0 %v1049, 56
      %v1990 = vpop.permute.xlu0 %1989
      %1991 = vrot.lane.b32.xlu0 %v1050, 56
      %v1992 = vpop.permute.xlu0 %1991
      %1993 = vrot.lane.b32.xlu0 %v1051, 56
      %v1994 = vpop.permute.xlu0 %1993
      %1995 = vrot.lane.b32.xlu0 %v1052, 56
      %v1996 = vpop.permute.xlu0 %1995
      %1997 = vrot.lane.b32.xlu0 %v1053, 56
      %v1998 = vpop.permute.xlu0 %1997
      %1999 = vrot.lane.b32.xlu0 %v1054, 56
      %v2000 = vpop.permute.xlu0 %1999
      %2001 = vrot.lane.b32.xlu0 %v1055, 56
      %v2002 = vpop.permute.xlu0 %2001
      %2003 = vrot.lane.b32.xlu0 %v1056, 56
      %v2004 = vpop.permute.xlu0 %2003
      %2005 = vrot.lane.b32.xlu0 %v1057, 56
      %v2006 = vpop.permute.xlu0 %2005
      %2007 = vrot.lane.b32.xlu0 %v1058, 56
      %v2008 = vpop.permute.xlu0 %2007
      %2009 = vrot.lane.b32.xlu0 %v1059, 56
      %v2010 = vpop.permute.xlu0 %2009
      %2011 = vrot.lane.b32.xlu0 %v1060, 56
      %v2012 = vpop.permute.xlu0 %2011
      %2013 = vrot.lane.b32.xlu0 %v1061, 56
      %v2014 = vpop.permute.xlu0 %2013
      %2015 = vrot.lane.b32.xlu0 %v1062, 56
      %v2016 = vpop.permute.xlu0 %2015
      %2017 = vrot.lane.b32.xlu0 %v1063, 56
      %v2018 = vpop.permute.xlu0 %2017
      %2019 = vrot.lane.b32.xlu0 %v1064, 56
      %v2020 = vpop.permute.xlu0 %2019
      %2021 = vrot.lane.b32.xlu0 %v1065, 56
      %v2022 = vpop.permute.xlu0 %2021
      %2023 = vrot.lane.b32.xlu0 %v1066, 56
      %v2024 = vpop.permute.xlu0 %2023
      %2025 = vrot.lane.b32.xlu0 %v1067, 56
      %v2026 = vpop.permute.xlu0 %2025
      %2027 = vrot.lane.b32.xlu0 %v1068, 56
      %v2028 = vpop.permute.xlu0 %2027
      %2029 = vrot.lane.b32.xlu0 %v1069, 56
      %v2030 = vpop.permute.xlu0 %2029
      %2031 = vrot.lane.b32.xlu0 %v1070, 56
      %v2032 = vpop.permute.xlu0 %2031
      %2033 = vrot.lane.b32.xlu0 %v1071, 56
      %v2034 = vpop.permute.xlu0 %2033
      %2035 = vrot.lane.b32.xlu0 %v1072, 56
      %v2036 = vpop.permute.xlu0 %2035
      %2037 = vrot.lane.b32.xlu0 %v1171, 56
      %v2038 = vpop.permute.xlu0 %2037
      %2039 = vrot.lane.b32.xlu0 %v1172, 56
      %v2040 = vpop.permute.xlu0 %2039
      %2105 = vrot.lane.b32.xlu0 %v1175, 64
      %v2106 = vpop.permute.xlu0 %2105
      %2107 = vrot.lane.b32.xlu0 %v1176, 64
      %v2108 = vpop.permute.xlu0 %2107
      %2109 = vrot.lane.b32.xlu0 %v1177, 64
      %v2110 = vpop.permute.xlu0 %2109
      %2111 = vrot.lane.b32.xlu0 %v1178, 64
      %v2112 = vpop.permute.xlu0 %2111
      %2113 = vrot.lane.b32.xlu0 %v1179, 64
      %v2114 = vpop.permute.xlu0 %2113
      %2115 = vrot.lane.b32.xlu0 %v1180, 64
      %v2116 = vpop.permute.xlu0 %2115
      %2117 = vrot.lane.b32.xlu0 %v1181, 64
      %v2118 = vpop.permute.xlu0 %2117
      %2119 = vrot.lane.b32.xlu0 %v1182, 64
      %v2120 = vpop.permute.xlu0 %2119
      %2121 = vrot.lane.b32.xlu0 %v1183, 64
      %v2122 = vpop.permute.xlu0 %2121
      %2123 = vrot.lane.b32.xlu0 %v1184, 64
      %v2124 = vpop.permute.xlu0 %2123
      %2125 = vrot.lane.b32.xlu0 %v1185, 64
      %v2126 = vpop.permute.xlu0 %2125
      %2127 = vrot.lane.b32.xlu0 %v1186, 64
      %v2128 = vpop.permute.xlu0 %2127
      %2129 = vrot.lane.b32.xlu0 %v1187, 64
      %v2130 = vpop.permute.xlu0 %2129
      %2131 = vrot.lane.b32.xlu0 %v1188, 64
      %v2132 = vpop.permute.xlu0 %2131
      %2133 = vrot.lane.b32.xlu0 %v1189, 64
      %v2134 = vpop.permute.xlu0 %2133
      %2135 = vrot.lane.b32.xlu0 %v1190, 64
      %v2136 = vpop.permute.xlu0 %2135
      %2137 = vrot.lane.b32.xlu0 %v1191, 64
      %v2138 = vpop.permute.xlu0 %2137
      %2139 = vrot.lane.b32.xlu0 %v1192, 64
      %v2140 = vpop.permute.xlu0 %2139
      %2141 = vrot.lane.b32.xlu0 %v1193, 64
      %v2142 = vpop.permute.xlu0 %2141
      %2143 = vrot.lane.b32.xlu0 %v1194, 64
      %v2144 = vpop.permute.xlu0 %2143
      %2145 = vrot.lane.b32.xlu0 %v1195, 64
      %v2146 = vpop.permute.xlu0 %2145
      %2147 = vrot.lane.b32.xlu0 %v1196, 64
      %v2148 = vpop.permute.xlu0 %2147
      %2149 = vrot.lane.b32.xlu0 %v1197, 64
      %v2150 = vpop.permute.xlu0 %2149
      %2151 = vrot.lane.b32.xlu0 %v1198, 64
      %v2152 = vpop.permute.xlu0 %2151
      %2153 = vrot.lane.b32.xlu0 %v1199, 64
      %v2154 = vpop.permute.xlu0 %2153
      %2155 = vrot.lane.b32.xlu0 %v1200, 64
      %v2156 = vpop.permute.xlu0 %2155
      %2157 = vrot.lane.b32.xlu0 %v1201, 64
      %v2158 = vpop.permute.xlu0 %2157
      %2159 = vrot.lane.b32.xlu0 %v1202, 64
      %v2160 = vpop.permute.xlu0 %2159
      %2161 = vrot.lane.b32.xlu0 %v1203, 64
      %v2162 = vpop.permute.xlu0 %2161
      %2163 = vrot.lane.b32.xlu0 %v1204, 64
      %v2164 = vpop.permute.xlu0 %2163
      %2165 = vrot.lane.b32.xlu0 %v1205, 64
      %v2166 = vpop.permute.xlu0 %2165
      %2167 = vrot.lane.b32.xlu0 %v1206, 64
      %v2168 = vpop.permute.xlu0 %2167
      %v2201 = vsel %vm339, %v721, %v1240
      %v2202 = vsel %vm339, %v722, %v1242
      %v2203 = vsel %vm339, %v723, %v1244
      %v2204 = vsel %vm339, %v724, %v1246
      %v2205 = vsel %vm339, %v725, %v1248
      %v2206 = vsel %vm339, %v726, %v1250
      %v2207 = vsel %vm339, %v727, %v1252
      %v2208 = vsel %vm339, %v728, %v1254
      %v2209 = vsel %vm339, %v729, %v1256
      %v2210 = vsel %vm339, %v730, %v1258
      %v2211 = vsel %vm339, %v731, %v1260
      %v2212 = vsel %vm339, %v732, %v1262
      %v2213 = vsel %vm339, %v733, %v1264
      %v2214 = vsel %vm339, %v734, %v1266
      %v2215 = vsel %vm339, %v735, %v1268
      %v2216 = vsel %vm339, %v736, %v1270
      %v2217 = vsel %vm339, %v737, %v1272
      %v2218 = vsel %vm339, %v738, %v1274
      %v2219 = vsel %vm339, %v739, %v1276
      %v2220 = vsel %vm339, %v740, %v1278
      %v2221 = vsel %vm339, %v741, %v1280
      %v2222 = vsel %vm339, %v742, %v1282
      %v2223 = vsel %vm339, %v743, %v1284
      %v2224 = vsel %vm339, %v744, %v1286
      %v2225 = vsel %vm339, %v745, %v1288
      %v2226 = vsel %vm339, %v746, %v1290
      %v2227 = vsel %vm339, %v747, %v1292
      %v2228 = vsel %vm339, %v748, %v1294
      %v2229 = vsel %vm339, %v749, %v1296
      %v2230 = vsel %vm339, %v750, %v1298
      %v2231 = vsel %vm339, %v751, %v1300
      %v2232 = vsel %vm339, %v752, %v1302
      %vm2233 = vcmask 130048
      %v2234 = vsel %vm2233, %v2201, %v1368
      %v2235 = vsel %vm2233, %v2202, %v1370
      %v2236 = vsel %vm2233, %v2203, %v1372
      %v2237 = vsel %vm2233, %v2204, %v1374
      %v2238 = vsel %vm2233, %v2205, %v1376
      %v2239 = vsel %vm2233, %v2206, %v1378
      %v2240 = vsel %vm2233, %v2207, %v1380
      %v2241 = vsel %vm2233, %v2208, %v1382
      %v2242 = vsel %vm2233, %v2209, %v1384
      %v2243 = vsel %vm2233, %v2210, %v1386
      %v2244 = vsel %vm2233, %v2211, %v1388
      %v2245 = vsel %vm2233, %v2212, %v1390
      %v2246 = vsel %vm2233, %v2213, %v1392
      %v2247 = vsel %vm2233, %v2214, %v1394
      %v2248 = vsel %vm2233, %v2215, %v1396
      %v2249 = vsel %vm2233, %v2216, %v1398
      %v2250 = vsel %vm2233, %v2217, %v1400
      %v2251 = vsel %vm2233, %v2218, %v1402
      %v2252 = vsel %vm2233, %v2219, %v1404
      %v2253 = vsel %vm2233, %v2220, %v1406
      %v2254 = vsel %vm2233, %v2221, %v1408
      %v2255 = vsel %vm2233, %v2222, %v1410
      %v2256 = vsel %vm2233, %v2223, %v1412
      %v2257 = vsel %vm2233, %v2224, %v1414
      %v2258 = vsel %vm2233, %v2225, %v1416
      %v2259 = vsel %vm2233, %v2226, %v1418
      %v2260 = vsel %vm2233, %v2227, %v1420
      %v2261 = vsel %vm2233, %v2228, %v1422
      %v2262 = vsel %vm2233, %v2229, %v1424
      %v2263 = vsel %vm2233, %v2230, %v1426
      %v2264 = vsel %vm2233, %v2231, %v1428
      %v2265 = vsel %vm2233, %v2232, %v1430
      %vm2266 = vcmask 195584
      %v2267 = vsel %vm2266, %v2234, %v1496
      %v2268 = vsel %vm2266, %v2235, %v1498
      %v2269 = vsel %vm2266, %v2236, %v1500
      %v2270 = vsel %vm2266, %v2237, %v1502
      %v2271 = vsel %vm2266, %v2238, %v1504
      %v2272 = vsel %vm2266, %v2239, %v1506
      %v2273 = vsel %vm2266, %v2240, %v1508
      %v2274 = vsel %vm2266, %v2241, %v1510
      %v2275 = vsel %vm2266, %v2242, %v1512
      %v2276 = vsel %vm2266, %v2243, %v1514
      %v2277 = vsel %vm2266, %v2244, %v1516
      %v2278 = vsel %vm2266, %v2245, %v1518
      %v2279 = vsel %vm2266, %v2246, %v1520
      %v2280 = vsel %vm2266, %v2247, %v1522
      %v2281 = vsel %vm2266, %v2248, %v1524
      %v2282 = vsel %vm2266, %v2249, %v1526
      %v2283 = vsel %vm2266, %v2250, %v1528
      %v2284 = vsel %vm2266, %v2251, %v1530
      %v2285 = vsel %vm2266, %v2252, %v1532
      %v2286 = vsel %vm2266, %v2253, %v1534
      %v2287 = vsel %vm2266, %v2254, %v1536
      %v2288 = vsel %vm2266, %v2255, %v1538
      %v2289 = vsel %vm2266, %v2256, %v1540
      %v2290 = vsel %vm2266, %v2257, %v1542
      %v2291 = vsel %vm2266, %v2258, %v1544
      %v2292 = vsel %vm2266, %v2259, %v1546
      %v2293 = vsel %vm2266, %v2260, %v1548
      %v2294 = vsel %vm2266, %v2261, %v1550
      %v2295 = vsel %vm2266, %v2262, %v1552
      %v2296 = vsel %vm2266, %v2263, %v1554
      %v2297 = vsel %vm2266, %v2264, %v1556
      %v2298 = vsel %vm2266, %v2265, %v1558
      %vm2299 = vcmask 261120
      %v2300 = vsel %vm2299, %v2267, %v1624
      %v2301 = vsel %vm2299, %v2268, %v1626
      %v2302 = vsel %vm2299, %v2269, %v1628
      %v2303 = vsel %vm2299, %v2270, %v1630
      %v2304 = vsel %vm2299, %v2271, %v1632
      %v2305 = vsel %vm2299, %v2272, %v1634
      %v2306 = vsel %vm2299, %v2273, %v1636
      %v2307 = vsel %vm2299, %v2274, %v1638
      %v2308 = vsel %vm2299, %v2275, %v1640
      %v2309 = vsel %vm2299, %v2276, %v1642
      %v2310 = vsel %vm2299, %v2277, %v1644
      %v2311 = vsel %vm2299, %v2278, %v1646
      %v2312 = vsel %vm2299, %v2279, %v1648
      %v2313 = vsel %vm2299, %v2280, %v1650
      %v2314 = vsel %vm2299, %v2281, %v1652
      %v2315 = vsel %vm2299, %v2282, %v1654
      %v2316 = vsel %vm2299, %v2283, %v1656
      %v2317 = vsel %vm2299, %v2284, %v1658
      %v2318 = vsel %vm2299, %v2285, %v1660
      %v2319 = vsel %vm2299, %v2286, %v1662
      %v2320 = vsel %vm2299, %v2287, %v1664
      %v2321 = vsel %vm2299, %v2288, %v1666
      %v2322 = vsel %vm2299, %v2289, %v1668
      %v2323 = vsel %vm2299, %v2290, %v1670
      %v2324 = vsel %vm2299, %v2291, %v1672
      %v2325 = vsel %vm2299, %v2292, %v1674
      %v2326 = vsel %vm2299, %v2293, %v1676
      %v2327 = vsel %vm2299, %v2294, %v1678
      %v2328 = vsel %vm2299, %v2295, %v1680
      %v2329 = vsel %vm2299, %v2296, %v1682
      %v2330 = vsel %vm2299, %v2297, %v1684
      %v2331 = vsel %vm2299, %v2298, %v1686
      %vm2332 = vcmask 326656
      %v2333 = vsel %vm2332, %v2300, %v1752
      %v2334 = vsel %vm2332, %v2301, %v1754
      %v2335 = vsel %vm2332, %v2302, %v1756
      %v2336 = vsel %vm2332, %v2303, %v1758
      %v2337 = vsel %vm2332, %v2304, %v1760
      %v2338 = vsel %vm2332, %v2305, %v1762
      %v2339 = vsel %vm2332, %v2306, %v1764
      %v2340 = vsel %vm2332, %v2307, %v1766
      %v2341 = vsel %vm2332, %v2308, %v1768
      %v2342 = vsel %vm2332, %v2309, %v1770
      %v2343 = vsel %vm2332, %v2310, %v1772
      %v2344 = vsel %vm2332, %v2311, %v1774
      %v2345 = vsel %vm2332, %v2312, %v1776
      %v2346 = vsel %vm2332, %v2313, %v1778
      %v2347 = vsel %vm2332, %v2314, %v1780
      %v2348 = vsel %vm2332, %v2315, %v1782
      %v2349 = vsel %vm2332, %v2316, %v1784
      %v2350 = vsel %vm2332, %v2317, %v1786
      %v2351 = vsel %vm2332, %v2318, %v1788
      %v2352 = vsel %vm2332, %v2319, %v1790
      %v2353 = vsel %vm2332, %v2320, %v1792
      %v2354 = vsel %vm2332, %v2321, %v1794
      %v2355 = vsel %vm2332, %v2322, %v1796
      %v2356 = vsel %vm2332, %v2323, %v1798
      %v2357 = vsel %vm2332, %v2324, %v1800
      %v2358 = vsel %vm2332, %v2325, %v1802
      %v2359 = vsel %vm2332, %v2326, %v1804
      %v2360 = vsel %vm2332, %v2327, %v1806
      %v2361 = vsel %vm2332, %v2328, %v1808
      %v2362 = vsel %vm2332, %v2329, %v1810
      %v2363 = vsel %vm2332, %v2330, %v1812
      %v2364 = vsel %vm2332, %v2331, %v1814
      %vm2365 = vcmask 392192
      %v2366 = vsel %vm2365, %v2333, %v1880
      %v2367 = vsel %vm2365, %v2334, %v1882
      %v2368 = vsel %vm2365, %v2335, %v1884
      %v2369 = vsel %vm2365, %v2336, %v1886
      %v2370 = vsel %vm2365, %v2337, %v1888
      %v2371 = vsel %vm2365, %v2338, %v1890
      %v2372 = vsel %vm2365, %v2339, %v1892
      %v2373 = vsel %vm2365, %v2340, %v1894
      %v2374 = vsel %vm2365, %v2341, %v1896
      %v2375 = vsel %vm2365, %v2342, %v1898
      %v2376 = vsel %vm2365, %v2343, %v1900
      %v2377 = vsel %vm2365, %v2344, %v1902
      %v2378 = vsel %vm2365, %v2345, %v1904
      %v2379 = vsel %vm2365, %v2346, %v1906
      %v2380 = vsel %vm2365, %v2347, %v1908
      %v2381 = vsel %vm2365, %v2348, %v1910
      %v2382 = vsel %vm2365, %v2349, %v1912
      %v2383 = vsel %vm2365, %v2350, %v1914
      %v2384 = vsel %vm2365, %v2351, %v1916
      %v2385 = vsel %vm2365, %v2352, %v1918
      %v2386 = vsel %vm2365, %v2353, %v1920
      %v2387 = vsel %vm2365, %v2354, %v1922
      %v2388 = vsel %vm2365, %v2355, %v1924
      %v2389 = vsel %vm2365, %v2356, %v1926
      %v2390 = vsel %vm2365, %v2357, %v1928
      %v2391 = vsel %vm2365, %v2358, %v1930
      %v2392 = vsel %vm2365, %v2359, %v1932
      %v2393 = vsel %vm2365, %v2360, %v1934
      %v2394 = vsel %vm2365, %v2361, %v1936
      %v2395 = vsel %vm2365, %v2362, %v1938
      %v2396 = vsel %vm2365, %v2363, %v1940
      %v2397 = vsel %vm2365, %v2364, %v1942
      %vm2398 = vcmask 457728
      %v2399 = vsel %vm2398, %v2366, %v1978
      %v2400 = vsel %vm2398, %v2367, %v1980
      %v2401 = vsel %vm2398, %v2368, %v1982
      %v2402 = vsel %vm2398, %v2369, %v1984
      %v2403 = vsel %vm2398, %v2370, %v1986
      %v2404 = vsel %vm2398, %v2371, %v1988
      %v2405 = vsel %vm2398, %v2372, %v1990
      %v2406 = vsel %vm2398, %v2373, %v1992
      %v2407 = vsel %vm2398, %v2374, %v1994
      %v2408 = vsel %vm2398, %v2375, %v1996
      %v2409 = vsel %vm2398, %v2376, %v1998
      %v2410 = vsel %vm2398, %v2377, %v2000
      %v2411 = vsel %vm2398, %v2378, %v2002
      %v2412 = vsel %vm2398, %v2379, %v2004
      %v2413 = vsel %vm2398, %v2380, %v2006
      %v2414 = vsel %vm2398, %v2381, %v2008
      %v2415 = vsel %vm2398, %v2382, %v2010
      %v2416 = vsel %vm2398, %v2383, %v2012
      %v2417 = vsel %vm2398, %v2384, %v2014
      %v2418 = vsel %vm2398, %v2385, %v2016
      %v2419 = vsel %vm2398, %v2386, %v2018
      %v2420 = vsel %vm2398, %v2387, %v2020
      %v2421 = vsel %vm2398, %v2388, %v2022
      %v2422 = vsel %vm2398, %v2389, %v2024
      %v2423 = vsel %vm2398, %v2390, %v2026
      %v2424 = vsel %vm2398, %v2391, %v2028
      %v2425 = vsel %vm2398, %v2392, %v2030
      %v2426 = vsel %vm2398, %v2393, %v2032
      %v2427 = vsel %vm2398, %v2394, %v2034
      %v2428 = vsel %vm2398, %v2395, %v2036
      %v2429 = vsel %vm2398, %v2396, %v2038
      %v2430 = vsel %vm2398, %v2397, %v2040
      %vm2431 = vcmask 523264
      %v2432 = vsel %vm2431, %v2399, %v2106
      %v2433 = vsel %vm2431, %v2400, %v2108
      %v2434 = vsel %vm2431, %v2401, %v2110
      %v2435 = vsel %vm2431, %v2402, %v2112
      %v2436 = vsel %vm2431, %v2403, %v2114
      %v2437 = vsel %vm2431, %v2404, %v2116
      %v2438 = vsel %vm2431, %v2405, %v2118
      %v2439 = vsel %vm2431, %v2406, %v2120
      %v2440 = vsel %vm2431, %v2407, %v2122
      %v2441 = vsel %vm2431, %v2408, %v2124
      %v2442 = vsel %vm2431, %v2409, %v2126
      %v2443 = vsel %vm2431, %v2410, %v2128
      %v2444 = vsel %vm2431, %v2411, %v2130
      %v2445 = vsel %vm2431, %v2412, %v2132
      %v2446 = vsel %vm2431, %v2413, %v2134
      %v2447 = vsel %vm2431, %v2414, %v2136
      %v2448 = vsel %vm2431, %v2415, %v2138
      %v2449 = vsel %vm2431, %v2416, %v2140
      %v2450 = vsel %vm2431, %v2417, %v2142
      %v2451 = vsel %vm2431, %v2418, %v2144
      %v2452 = vsel %vm2431, %v2419, %v2146
      %v2453 = vsel %vm2431, %v2420, %v2148
      %v2454 = vsel %vm2431, %v2421, %v2150
      %v2455 = vsel %vm2431, %v2422, %v2152
      %v2456 = vsel %vm2431, %v2423, %v2154
      %v2457 = vsel %vm2431, %v2424, %v2156
      %v2458 = vsel %vm2431, %v2425, %v2158
      %v2459 = vsel %vm2431, %v2426, %v2160
      %v2460 = vsel %vm2431, %v2427, %v2162
      %v2461 = vsel %vm2431, %v2428, %v2164
      %v2462 = vsel %vm2431, %v2429, %v2166
      %v2463 = vsel %vm2431, %v2430, %v2168
      %v2464 = vpack.c.bf16 %v2433, %v2432
      %v2465 = vpack.c.bf16 %v2435, %v2434
      %v2466 = vpack.c.bf16 %v2437, %v2436
      %v2467 = vpack.c.bf16 %v2439, %v2438
      %v2468 = vpack.c.bf16 %v2441, %v2440
      %v2469 = vpack.c.bf16 %v2443, %v2442
      %v2470 = vpack.c.bf16 %v2445, %v2444
      %v2471 = vpack.c.bf16 %v2447, %v2446
      %v2472 = vpack.c.bf16 %v2449, %v2448
      %v2473 = vpack.c.bf16 %v2451, %v2450
      %v2474 = vpack.c.bf16 %v2453, %v2452
      %v2475 = vpack.c.bf16 %v2455, %v2454
      %v2476 = vpack.c.bf16 %v2457, %v2456
      %v2477 = vpack.c.bf16 %v2459, %v2458
      %v2478 = vpack.c.bf16 %v2461, %v2460
      %v2479 = vpack.c.bf16 %v2463, %v2462
      %v2489 = vunpack.c.l.b16 %v520
      %v2490 = vunpack.c.l.b16 %v521
      %v2491 = vunpack.c.l.b16 %v522
      %v2492 = vunpack.c.l.b16 %v523
      %v2493 = vunpack.c.l.b16 %v524
      %v2494 = vunpack.c.l.b16 %v525
      %v2495 = vunpack.c.l.b16 %v526
      %v2496 = vunpack.c.l.b16 %v527
      %v2497 = vunpack.c.l.b16 %v528
      %v2498 = vpack.c.b16 %v2490, %v2489
      %v2499 = vpack.c.b16 %v2492, %v2491
      %v2500 = vpack.c.b16 %v2494, %v2493
      %v2501 = vpack.c.b16 %v2496, %v2495
      %v2502 = vpack.c.b16 %v2497, %v2497
      %vm2507 = vcmask 588800
      %v2509 = vsel %vm2507, %v2464, 0
      %v2512 = vsel %vm2507, %v2465, 0
      %v2515 = vsel %vm2507, %v2466, 0
      %v2518 = vsel %vm2507, %v2467, 0
      %v2521 = vsel %vm2507, %v2468, 0
      %v2524 = vsel %vm2507, %v2469, 0
      %v2527 = vsel %vm2507, %v2470, 0
      %v2530 = vsel %vm2507, %v2471, 0
      %v2533 = vsel %vm2507, %v2472, 0
      %v2536 = vsel %vm2507, %v2473, 0
      %v2539 = vsel %vm2507, %v2474, 0
      %v2542 = vsel %vm2507, %v2475, 0
      %v2545 = vsel %vm2507, %v2476, 0
      %v2548 = vsel %vm2507, %v2477, 0
      %v2551 = vsel %vm2507, %v2478, 0
      %v2554 = vsel %vm2507, %v2479, 0
      %vm2556 = vcmask 1043456
      %v2558 = vsel %vm2556, %v2502, 0
      %2560 = vmatprep.subr.bf16.mxu0 0
      %2561 = vmatpush1.bf16.msra.mxu0 %v2498
      %2562 = vmatprep.subr.bf16.mxu0 0
      %2563 = vmatpush1.bf16.msra.mxu0 %v2499
      %2564 = vmatprep.subr.bf16.mxu0 0
      %2565 = vmatpush1.bf16.msra.mxu0 %v2500
      %2566 = vmatprep.subr.bf16.mxu0 0
      %2567 = vmatpush1.bf16.msra.mxu0 %v2501
      %2568 = vmatprep.subr.bf16.mxu0 0
      %2569 = vmatpush1.bf16.msra.mxu0 %v2558
      %2570 = vmatprep.subr.bf16.mxu0 0
      %2571 = vmatpush1.bf16.msra.mxu0 0
      %2572 = vmatprep.subr.bf16.mxu0 0
      %2573 = vmatpush1.bf16.msra.mxu0 0
      %2574 = vmatprep.subr.bf16.mxu0 0
      %2575 = vmatpush1.bf16.msra.mxu0 0
      %2576 = vmatprep.subr.bf16.mxu0 0
      %2577 = vmatpush1.bf16.msra.mxu0 0
      %2578 = vmatprep.subr.bf16.mxu0 0
      %2579 = vmatpush1.bf16.msra.mxu0 0
      %2580 = vmatprep.subr.bf16.mxu0 0
      %2581 = vmatpush1.bf16.msra.mxu0 0
      %2582 = vmatprep.subr.bf16.mxu0 0
      %2583 = vmatpush1.bf16.msra.mxu0 0
      %2584 = vmatprep.subr.bf16.mxu0 0
      %2585 = vmatpush1.bf16.msra.mxu0 0
      %2586 = vmatprep.subr.bf16.mxu0 0
      %2587 = vmatpush1.bf16.msra.mxu0 0
      %2588 = vmatprep.subr.bf16.mxu0 0
      %2589 = vmatpush1.bf16.msra.mxu0 0
      %2590 = vmatprep.subr.bf16.mxu0 0
      %2591 = vmatpush1.bf16.msra.mxu0 0
      %2592 = vmatprep.mubr.bf16.mxu0 0
      %2593 = vmatmul.mubr.bf16.gmra.mrb[0].mxu0 %v2509
      %v2594 = vpop.f32.mrb[0].mxu0
      %v2595 = vadd.f32 0.0, %v2594
      %v2596 = vpop.f32.mrb[0].mxu0
      %v2597 = vpop.f32.mrb[0].mxu0
      %v2598 = vadd.f32 0.0, %v2597
      %v2599 = vpop.f32.mrb[0].mxu0
      %2600 = vmatprep.mubr.bf16.mxu0 0
      %2601 = vmatmul.mubr.bf16.gmra.mrb[0].mxu0 %v2512
      %v2602 = vpop.f32.mrb[0].mxu0
      %v2603 = vadd.f32 0.0, %v2602
      %v2604 = vpop.f32.mrb[0].mxu0
      %v2605 = vpop.f32.mrb[0].mxu0
      %v2606 = vadd.f32 0.0, %v2605
      %v2607 = vpop.f32.mrb[0].mxu0
      %2608 = vmatprep.mubr.bf16.mxu0 0
      %2609 = vmatmul.mubr.bf16.gmra.mrb[0].mxu0 %v2515
      %v2610 = vpop.f32.mrb[0].mxu0
      %v2611 = vadd.f32 0.0, %v2610
      %v2612 = vpop.f32.mrb[0].mxu0
      %v2613 = vpop.f32.mrb[0].mxu0
      %v2614 = vadd.f32 0.0, %v2613
      %v2615 = vpop.f32.mrb[0].mxu0
      %2616 = vmatprep.mubr.bf16.mxu0 0
      %2617 = vmatmul.mubr.bf16.gmra.mrb[0].mxu0 %v2518
      %v2618 = vpop.f32.mrb[0].mxu0
      %v2619 = vadd.f32 0.0, %v2618
      %v2620 = vpop.f32.mrb[0].mxu0
      %v2621 = vpop.f32.mrb[0].mxu0
      %v2622 = vadd.f32 0.0, %v2621
      %v2623 = vpop.f32.mrb[0].mxu0
      %2624 = vmatprep.mubr.bf16.mxu0 0
      %2625 = vmatmul.mubr.bf16.gmra.mrb[0].mxu0 %v2521
      %v2626 = vpop.f32.mrb[0].mxu0
      %v2627 = vadd.f32 0.0, %v2626
      %v2628 = vpop.f32.mrb[0].mxu0
      %v2629 = vpop.f32.mrb[0].mxu0
      %v2630 = vadd.f32 0.0, %v2629
      %v2631 = vpop.f32.mrb[0].mxu0
      %2632 = vmatprep.mubr.bf16.mxu0 0
      %2633 = vmatmul.mubr.bf16.gmra.mrb[0].mxu0 %v2524
      %v2634 = vpop.f32.mrb[0].mxu0
      %v2635 = vadd.f32 0.0, %v2634
      %v2636 = vpop.f32.mrb[0].mxu0
      %v2637 = vpop.f32.mrb[0].mxu0
      %v2638 = vadd.f32 0.0, %v2637
      %v2639 = vpop.f32.mrb[0].mxu0
      %2640 = vmatprep.mubr.bf16.mxu0 0
      %2641 = vmatmul.mubr.bf16.gmra.mrb[0].mxu0 %v2527
      %v2642 = vpop.f32.mrb[0].mxu0
      %v2643 = vadd.f32 0.0, %v2642
      %v2644 = vpop.f32.mrb[0].mxu0
      %v2645 = vpop.f32.mrb[0].mxu0
      %v2646 = vadd.f32 0.0, %v2645
      %v2647 = vpop.f32.mrb[0].mxu0
      %2648 = vmatprep.mubr.bf16.mxu0 0
      %2649 = vmatmul.mubr.bf16.gmra.mrb[0].mxu0 %v2530
      %v2650 = vpop.f32.mrb[0].mxu0
      %v2651 = vadd.f32 0.0, %v2650
      %v2652 = vpop.f32.mrb[0].mxu0
      %v2653 = vpop.f32.mrb[0].mxu0
      %v2654 = vadd.f32 0.0, %v2653
      %v2655 = vpop.f32.mrb[0].mxu0
      %2656 = vmatprep.mubr.bf16.mxu0 0
      %2657 = vmatmul.mubr.bf16.gmra.mrb[0].mxu0 %v2533
      %v2658 = vpop.f32.mrb[0].mxu0
      %v2659 = vadd.f32 0.0, %v2658
      %v2660 = vpop.f32.mrb[0].mxu0
      %v2661 = vpop.f32.mrb[0].mxu0
      %v2662 = vadd.f32 0.0, %v2661
      %v2663 = vpop.f32.mrb[0].mxu0
      %2664 = vmatprep.mubr.bf16.mxu0 0
      %2665 = vmatmul.mubr.bf16.gmra.mrb[0].mxu0 %v2536
      %v2666 = vpop.f32.mrb[0].mxu0
      %v2667 = vadd.f32 0.0, %v2666
      %v2668 = vpop.f32.mrb[0].mxu0
      %v2669 = vpop.f32.mrb[0].mxu0
      %v2670 = vadd.f32 0.0, %v2669
      %v2671 = vpop.f32.mrb[0].mxu0
      %2672 = vmatprep.mubr.bf16.mxu0 0
      %2673 = vmatmul.mubr.bf16.gmra.mrb[0].mxu0 %v2539
      %v2674 = vpop.f32.mrb[0].mxu0
      %v2675 = vadd.f32 0.0, %v2674
      %v2676 = vpop.f32.mrb[0].mxu0
      %v2677 = vpop.f32.mrb[0].mxu0
      %v2678 = vadd.f32 0.0, %v2677
      %v2679 = vpop.f32.mrb[0].mxu0
      %2680 = vmatprep.mubr.bf16.mxu0 0
      %2681 = vmatmul.mubr.bf16.gmra.mrb[0].mxu0 %v2542
      %v2682 = vpop.f32.mrb[0].mxu0
      %v2683 = vadd.f32 0.0, %v2682
      %v2684 = vpop.f32.mrb[0].mxu0
      %v2685 = vpop.f32.mrb[0].mxu0
      %v2686 = vadd.f32 0.0, %v2685
      %v2687 = vpop.f32.mrb[0].mxu0
      %2688 = vmatprep.mubr.bf16.mxu0 0
      %2689 = vmatmul.mubr.bf16.gmra.mrb[0].mxu0 %v2545
      %v2690 = vpop.f32.mrb[0].mxu0
      %v2691 = vadd.f32 0.0, %v2690
      %v2692 = vpop.f32.mrb[0].mxu0
      %v2693 = vpop.f32.mrb[0].mxu0
      %v2694 = vadd.f32 0.0, %v2693
      %v2695 = vpop.f32.mrb[0].mxu0
      %2696 = vmatprep.mubr.bf16.mxu0 0
      %2697 = vmatmul.mubr.bf16.gmra.mrb[0].mxu0 %v2548
      %v2698 = vpop.f32.mrb[0].mxu0
      %v2699 = vadd.f32 0.0, %v2698
      %v2700 = vpop.f32.mrb[0].mxu0
      %v2701 = vpop.f32.mrb[0].mxu0
      %v2702 = vadd.f32 0.0, %v2701
      %v2703 = vpop.f32.mrb[0].mxu0
      %2704 = vmatprep.mubr.bf16.mxu0 0
      %2705 = vmatmul.mubr.bf16.gmra.mrb[0].mxu0 %v2551
      %v2706 = vpop.f32.mrb[0].mxu0
      %v2707 = vadd.f32 0.0, %v2706
      %v2708 = vpop.f32.mrb[0].mxu0
      %v2709 = vpop.f32.mrb[0].mxu0
      %v2710 = vadd.f32 0.0, %v2709
      %v2711 = vpop.f32.mrb[0].mxu0
      %2712 = vmatprep.mubr.bf16.mxu0 0
      %2713 = vmatmul.mubr.bf16.gmra.mrb[0].mxu0 %v2554
      %v2714 = vpop.f32.mrb[0].mxu0
      %v2715 = vadd.f32 0.0, %v2714
      %v2716 = vpop.f32.mrb[0].mxu0
      %v2717 = vpop.f32.mrb[0].mxu0
      %v2718 = vadd.f32 0.0, %v2717
      %v2719 = vpop.f32.mrb[0].mxu0
      %2720 = vdwg.mxu0
      %v2721 = vld [vmem:[%s5] sm:$0x1]
      %v2723 = vlaneseq
      %v2724 = vshrl.u32 %v2723, 7
      %v2725 = vsub.s32 0, %v2724
      %v2726 = vrot.slane %v2721, %v2725
      %v2728 = vmul.f32 %v2595, %v2726
      %v2729 = vmul.f32 %v2598, %v2726
      %v2730 = vmul.f32 %v2603, %v2726
      %v2731 = vmul.f32 %v2606, %v2726
      %v2732 = vmul.f32 %v2611, %v2726
      %v2733 = vmul.f32 %v2614, %v2726
      %v2734 = vmul.f32 %v2619, %v2726
      %v2735 = vmul.f32 %v2622, %v2726
      %v2736 = vmul.f32 %v2627, %v2726
      %v2737 = vmul.f32 %v2630, %v2726
      %v2738 = vmul.f32 %v2635, %v2726
      %v2739 = vmul.f32 %v2638, %v2726
      %v2740 = vmul.f32 %v2643, %v2726
      %v2741 = vmul.f32 %v2646, %v2726
      %v2742 = vmul.f32 %v2651, %v2726
      %v2743 = vmul.f32 %v2654, %v2726
      %v2744 = vmul.f32 %v2659, %v2726
      %v2745 = vmul.f32 %v2662, %v2726
      %v2746 = vmul.f32 %v2667, %v2726
      %v2747 = vmul.f32 %v2670, %v2726
      %v2748 = vmul.f32 %v2675, %v2726
      %v2749 = vmul.f32 %v2678, %v2726
      %v2750 = vmul.f32 %v2683, %v2726
      %v2751 = vmul.f32 %v2686, %v2726
      %v2752 = vmul.f32 %v2691, %v2726
      %v2753 = vmul.f32 %v2694, %v2726
      %v2754 = vmul.f32 %v2699, %v2726
      %v2755 = vmul.f32 %v2702, %v2726
      %v2756 = vmul.f32 %v2707, %v2726
      %v2757 = vmul.f32 %v2710, %v2726
      %v2758 = vmul.f32 %v2715, %v2726
      %v2759 = vmul.f32 %v2718, %v2726
      %v2760 = vld [vmem:[%s6] sm:$0x1]
      %v2762 = vlaneseq
      %v2763 = vshrl.u32 %v2762, 7
      %v2764 = vsub.s32 0, %v2763
      %v2765 = vrot.slane %v2760, %v2764
      %v2767 = vadd.f32 %v2728, %v2765
      %v2768 = vadd.f32 %v2729, %v2765
      %v2769 = vadd.f32 %v2730, %v2765
      %v2770 = vadd.f32 %v2731, %v2765
      %v2771 = vadd.f32 %v2732, %v2765
      %v2772 = vadd.f32 %v2733, %v2765
      %v2773 = vadd.f32 %v2734, %v2765
      %v2774 = vadd.f32 %v2735, %v2765
      %v2775 = vadd.f32 %v2736, %v2765
      %v2776 = vadd.f32 %v2737, %v2765
      %v2777 = vadd.f32 %v2738, %v2765
      %v2778 = vadd.f32 %v2739, %v2765
      %v2779 = vadd.f32 %v2740, %v2765
      %v2780 = vadd.f32 %v2741, %v2765
      %v2781 = vadd.f32 %v2742, %v2765
      %v2782 = vadd.f32 %v2743, %v2765
      %v2783 = vadd.f32 %v2744, %v2765
      %v2784 = vadd.f32 %v2745, %v2765
      %v2785 = vadd.f32 %v2746, %v2765
      %v2786 = vadd.f32 %v2747, %v2765
      %v2787 = vadd.f32 %v2748, %v2765
      %v2788 = vadd.f32 %v2749, %v2765
      %v2789 = vadd.f32 %v2750, %v2765
      %v2790 = vadd.f32 %v2751, %v2765
      %v2791 = vadd.f32 %v2752, %v2765
      %v2792 = vadd.f32 %v2753, %v2765
      %v2793 = vadd.f32 %v2754, %v2765
      %v2794 = vadd.f32 %v2755, %v2765
      %v2795 = vadd.f32 %v2756, %v2765
      %v2796 = vadd.f32 %v2757, %v2765
      %v2797 = vadd.f32 %v2758, %v2765
      %v2798 = vadd.f32 %v2759, %v2765
      %v2799 = vmax.f32 %v2767, 0.0
      %v2800 = vmax.f32 %v2768, 0.0
      %v2801 = vmax.f32 %v2769, 0.0
      %v2802 = vmax.f32 %v2770, 0.0
      %v2803 = vmax.f32 %v2771, 0.0
      %v2804 = vmax.f32 %v2772, 0.0
      %v2805 = vmax.f32 %v2773, 0.0
      %v2806 = vmax.f32 %v2774, 0.0
      %v2807 = vmax.f32 %v2775, 0.0
      %v2808 = vmax.f32 %v2776, 0.0
      %v2809 = vmax.f32 %v2777, 0.0
      %v2810 = vmax.f32 %v2778, 0.0
      %v2811 = vmax.f32 %v2779, 0.0
      %v2812 = vmax.f32 %v2780, 0.0
      %v2813 = vmax.f32 %v2781, 0.0
      %v2814 = vmax.f32 %v2782, 0.0
      %v2815 = vmax.f32 %v2783, 0.0
      %v2816 = vmax.f32 %v2784, 0.0
      %v2817 = vmax.f32 %v2785, 0.0
      %v2818 = vmax.f32 %v2786, 0.0
      %v2819 = vmax.f32 %v2787, 0.0
      %v2820 = vmax.f32 %v2788, 0.0
      %v2821 = vmax.f32 %v2789, 0.0
      %v2822 = vmax.f32 %v2790, 0.0
      %v2823 = vmax.f32 %v2791, 0.0
      %v2824 = vmax.f32 %v2792, 0.0
      %v2825 = vmax.f32 %v2793, 0.0
      %v2826 = vmax.f32 %v2794, 0.0
      %v2827 = vmax.f32 %v2795, 0.0
      %v2828 = vmax.f32 %v2796, 0.0
      %v2829 = vmax.f32 %v2797, 0.0
      %v2830 = vmax.f32 %v2798, 0.0
      %2831 = vst.msk [vmem:[#allocation2 + $0x18] sm:$0xff] %vm339, %v2799
      %2832 = vst.msk [vmem:[#allocation2 + $0x20] sm:$0xff] %vm339, %v2800
      %2833 = vst.msk [vmem:[#allocation2 + $0x28] sm:$0xff] %vm339, %v2801
      %2834 = vst.msk [vmem:[#allocation2 + $0x30] sm:$0xff] %vm339, %v2802
      %2835 = vst.msk [vmem:[#allocation2 + $0x38] sm:$0xff] %vm339, %v2803
      %2836 = vst.msk [vmem:[#allocation2 + $0x40] sm:$0xff] %vm339, %v2804
      %2837 = vst.msk [vmem:[#allocation2 + $0x48] sm:$0xff] %vm339, %v2805
      %2838 = vst.msk [vmem:[#allocation2 + $0x50] sm:$0xff] %vm339, %v2806
      %2839 = vst.msk [vmem:[#allocation2 + $0x58] sm:$0xff] %vm339, %v2807
      %2840 = vst.msk [vmem:[#allocation2 + $0x60] sm:$0xff] %vm339, %v2808
      %2841 = vst.msk [vmem:[#allocation2 + $0x68] sm:$0xff] %vm339, %v2809
      %2842 = vst.msk [vmem:[#allocation2 + $0x70] sm:$0xff] %vm339, %v2810
      %2843 = vst.msk [vmem:[#allocation2 + $0x78] sm:$0xff] %vm339, %v2811
      %2844 = vst.msk [vmem:[#allocation2 + $0x80] sm:$0xff] %vm339, %v2812
      %2845 = vst.msk [vmem:[#allocation2 + $0x88] sm:$0xff] %vm339, %v2813
      %2846 = vst.msk [vmem:[#allocation2 + $0x90] sm:$0xff] %vm339, %v2814
      %2847 = vst.msk [vmem:[#allocation2 + $0x98] sm:$0xff] %vm339, %v2815
      %2848 = vst.msk [vmem:[#allocation2 + $0xa0] sm:$0xff] %vm339, %v2816
      %2849 = vst.msk [vmem:[#allocation2 + $0xa8] sm:$0xff] %vm339, %v2817
      %2850 = vst.msk [vmem:[#allocation2 + $0xb0] sm:$0xff] %vm339, %v2818
      %2851 = vst.msk [vmem:[#allocation2 + $0xb8] sm:$0xff] %vm339, %v2819
      %2852 = vst.msk [vmem:[#allocation2 + $0xc0] sm:$0xff] %vm339, %v2820
      %2853 = vst.msk [vmem:[#allocation2 + $0xc8] sm:$0xff] %vm339, %v2821
      %2854 = vst.msk [vmem:[#allocation2 + $0xd0] sm:$0xff] %vm339, %v2822
      %2855 = vst.msk [vmem:[#allocation2 + $0xd8] sm:$0xff] %vm339, %v2823
      %2856 = vst.msk [vmem:[#allocation2 + $0xe0] sm:$0xff] %vm339, %v2824
      %2857 = vst.msk [vmem:[#allocation2 + $0xe8] sm:$0xff] %vm339, %v2825
      %2858 = vst.msk [vmem:[#allocation2 + $0xf0] sm:$0xff] %vm339, %v2826
      %2859 = vst.msk [vmem:[#allocation2 + $0xf8] sm:$0xff] %vm339, %v2827
      %2860 = vst.msk [vmem:[#allocation2 + $0x100] sm:$0xff] %vm339, %v2828
      %2861 = vst.msk [vmem:[#allocation2 + $0x108] sm:$0xff] %vm339, %v2829
      %2862 = vst.msk [vmem:[#allocation2 + $0x110] sm:$0xff] %vm339, %v2830
      %v2863 = vld [vmem:[%s2] sm:$0xf]
      %v2864 = vld [vmem:[%s2 + $0x4] sm:$0xf]
      %v2865 = vld [vmem:[%s2 + $0x8] sm:$0xf]
      %v2866 = vld [vmem:[%s2 + $0xc] sm:$0xf]
      %v2867 = vld [vmem:[%s2 + $0x10] sm:$0xf]
      %v2868 = vld [vmem:[%s2 + $0x14] sm:$0xf]
      %v2869 = vld [vmem:[%s2 + $0x18] sm:$0xf]
      %v2870 = vld [vmem:[%s2 + $0x1c] sm:$0xf]
      %v2871 = vld [vmem:[%s2 + $0x20] sm:$0xf]
      %v2872 = vld [vmem:[#allocation2 + $0x7] sm:$0xff]
      %v2873 = vld [vmem:[#allocation2 + $0xf] sm:$0xff]
      %v2874 = vld [vmem:[#allocation2 + $0x17] sm:$0xff]
      %v2875 = vld [vmem:[#allocation2 + $0x1f] sm:$0xff]
      %v2876 = vld [vmem:[#allocation2 + $0x27] sm:$0xff]
      %v2877 = vld [vmem:[#allocation2 + $0x2f] sm:$0xff]
      %v2878 = vld [vmem:[#allocation2 + $0x37] sm:$0xff]
      %v2879 = vld [vmem:[#allocation2 + $0x3f] sm:$0xff]
      %v2880 = vld [vmem:[#allocation2 + $0x47] sm:$0xff]
      %v2881 = vld [vmem:[#allocation2 + $0x4f] sm:$0xff]
      %v2882 = vld [vmem:[#allocation2 + $0x57] sm:$0xff]
      %v2883 = vld [vmem:[#allocation2 + $0x5f] sm:$0xff]
      %v2884 = vld [vmem:[#allocation2 + $0x67] sm:$0xff]
      %v2885 = vld [vmem:[#allocation2 + $0x6f] sm:$0xff]
      %v2886 = vld [vmem:[#allocation2 + $0x77] sm:$0xff]
      %v2887 = vld [vmem:[#allocation2 + $0x7f] sm:$0xff]
      %v2888 = vld [vmem:[#allocation2 + $0x87] sm:$0xff]
      %v2889 = vld [vmem:[#allocation2 + $0x8f] sm:$0xff]
      %v2890 = vld [vmem:[#allocation2 + $0x97] sm:$0xff]
      %v2891 = vld [vmem:[#allocation2 + $0x9f] sm:$0xff]
      %v2892 = vld [vmem:[#allocation2 + $0xa7] sm:$0xff]
      %v2893 = vld [vmem:[#allocation2 + $0xaf] sm:$0xff]
      %v2894 = vld [vmem:[#allocation2 + $0xb7] sm:$0xff]
      %v2895 = vld [vmem:[#allocation2 + $0xbf] sm:$0xff]
      %v2896 = vld [vmem:[#allocation2 + $0xc7] sm:$0xff]
      %v2897 = vld [vmem:[#allocation2 + $0xcf] sm:$0xff]
      %v2898 = vld [vmem:[#allocation2 + $0xd7] sm:$0xff]
      %v2899 = vld [vmem:[#allocation2 + $0xdf] sm:$0xff]
      %v2900 = vld [vmem:[#allocation2 + $0xe7] sm:$0xff]
      %v2901 = vld [vmem:[#allocation2 + $0xef] sm:$0xff]
      %v2902 = vld [vmem:[#allocation2 + $0xf7] sm:$0xff]
      %v2903 = vld [vmem:[#allocation2 + $0xff] sm:$0xff]
      %v2904 = vmul.f32 %v2872, %v564
      %v2905 = vmul.f32 %v2873, %v569
      %v2906 = vmul.f32 %v2874, %v574
      %v2907 = vmul.f32 %v2875, %v579
      %v2908 = vmul.f32 %v2876, %v584
      %v2909 = vmul.f32 %v2877, %v589
      %v2910 = vmul.f32 %v2878, %v594
      %v2911 = vmul.f32 %v2879, %v599
      %v2912 = vmul.f32 %v2880, %v604
      %v2913 = vmul.f32 %v2881, %v609
      %v2914 = vmul.f32 %v2882, %v614
      %v2915 = vmul.f32 %v2883, %v619
      %v2916 = vmul.f32 %v2884, %v624
      %v2917 = vmul.f32 %v2885, %v629
      %v2918 = vmul.f32 %v2886, %v634
      %v2919 = vmul.f32 %v2887, %v639
      %v2920 = vmul.f32 %v2888, %v644
      %v2921 = vmul.f32 %v2889, %v649
      %v2922 = vmul.f32 %v2890, %v654
      %v2923 = vmul.f32 %v2891, %v659
      %v2924 = vmul.f32 %v2892, %v664
      %v2925 = vmul.f32 %v2893, %v669
      %v2926 = vmul.f32 %v2894, %v674
      %v2927 = vmul.f32 %v2895, %v679
      %v2928 = vmul.f32 %v2896, %v684
      %v2929 = vmul.f32 %v2897, %v689
      %v2930 = vmul.f32 %v2898, %v694
      %v2931 = vmul.f32 %v2899, %v699
      %v2932 = vmul.f32 %v2900, %v704
      %v2933 = vmul.f32 %v2901, %v709
      %v2934 = vmul.f32 %v2902, %v714
      %v2935 = vmul.f32 %v2903, %v719
      %v2936 = vld [vmem:[#allocation2 + $0x8] sm:$0xff]
      %v2937 = vld [vmem:[#allocation2 + $0x10] sm:$0xff]
      %v2938 = vld [vmem:[#allocation2 + $0x18] sm:$0xff]
      %v2939 = vld [vmem:[#allocation2 + $0x20] sm:$0xff]
      %v2940 = vld [vmem:[#allocation2 + $0x28] sm:$0xff]
      %v2941 = vld [vmem:[#allocation2 + $0x30] sm:$0xff]
      %v2942 = vld [vmem:[#allocation2 + $0x38] sm:$0xff]
      %v2943 = vld [vmem:[#allocation2 + $0x40] sm:$0xff]
      %v2944 = vld [vmem:[#allocation2 + $0x48] sm:$0xff]
      %v2945 = vld [vmem:[#allocation2 + $0x50] sm:$0xff]
      %v2946 = vld [vmem:[#allocation2 + $0x58] sm:$0xff]
      %v2947 = vld [vmem:[#allocation2 + $0x60] sm:$0xff]
      %v2948 = vld [vmem:[#allocation2 + $0x68] sm:$0xff]
      %v2949 = vld [vmem:[#allocation2 + $0x70] sm:$0xff]
      %v2950 = vld [vmem:[#allocation2 + $0x78] sm:$0xff]
      %v2951 = vld [vmem:[#allocation2 + $0x80] sm:$0xff]
      %v2952 = vld [vmem:[#allocation2 + $0x88] sm:$0xff]
      %v2953 = vld [vmem:[#allocation2 + $0x90] sm:$0xff]
      %v2954 = vld [vmem:[#allocation2 + $0x98] sm:$0xff]
      %v2955 = vld [vmem:[#allocation2 + $0xa0] sm:$0xff]
      %v2956 = vld [vmem:[#allocation2 + $0xa8] sm:$0xff]
      %v2957 = vld [vmem:[#allocation2 + $0xb0] sm:$0xff]
      %v2958 = vld [vmem:[#allocation2 + $0xb8] sm:$0xff]
      %v2959 = vld [vmem:[#allocation2 + $0xc0] sm:$0xff]
      %v2960 = vld [vmem:[#allocation2 + $0xc8] sm:$0xff]
      %v2961 = vld [vmem:[#allocation2 + $0xd0] sm:$0xff]
      %v2962 = vld [vmem:[#allocation2 + $0xd8] sm:$0xff]
      %v2963 = vld [vmem:[#allocation2 + $0xe0] sm:$0xff]
      %v2964 = vld [vmem:[#allocation2 + $0xe8] sm:$0xff]
      %v2965 = vld [vmem:[#allocation2 + $0xf0] sm:$0xff]
      %v2966 = vld [vmem:[#allocation2 + $0xf8] sm:$0xff]
      %v2967 = vld [vmem:[#allocation2 + $0x100] sm:$0xff]
      %v2968 = vld [vmem:[#allocation2 + $0x9] sm:$0xff]
      %v2969 = vld [vmem:[#allocation2 + $0x11] sm:$0xff]
      %v2970 = vld [vmem:[#allocation2 + $0x19] sm:$0xff]
      %v2971 = vld [vmem:[#allocation2 + $0x21] sm:$0xff]
      %v2972 = vld [vmem:[#allocation2 + $0x29] sm:$0xff]
      %v2973 = vld [vmem:[#allocation2 + $0x31] sm:$0xff]
      %v2974 = vld [vmem:[#allocation2 + $0x39] sm:$0xff]
      %v2975 = vld [vmem:[#allocation2 + $0x41] sm:$0xff]
      %v2976 = vld [vmem:[#allocation2 + $0x49] sm:$0xff]
      %v2977 = vld [vmem:[#allocation2 + $0x51] sm:$0xff]
      %v2978 = vld [vmem:[#allocation2 + $0x59] sm:$0xff]
      %v2979 = vld [vmem:[#allocation2 + $0x61] sm:$0xff]
      %v2980 = vld [vmem:[#allocation2 + $0x69] sm:$0xff]
      %v2981 = vld [vmem:[#allocation2 + $0x71] sm:$0xff]
      %v2982 = vld [vmem:[#allocation2 + $0x79] sm:$0xff]
      %v2983 = vld [vmem:[#allocation2 + $0x81] sm:$0xff]
      %v2984 = vld [vmem:[#allocation2 + $0x89] sm:$0xff]
      %v2985 = vld [vmem:[#allocation2 + $0x91] sm:$0xff]
      %v2986 = vld [vmem:[#allocation2 + $0x99] sm:$0xff]
      %v2987 = vld [vmem:[#allocation2 + $0xa1] sm:$0xff]
      %v2988 = vld [vmem:[#allocation2 + $0xa9] sm:$0xff]
      %v2989 = vld [vmem:[#allocation2 + $0xb1] sm:$0xff]
      %v2990 = vld [vmem:[#allocation2 + $0xb9] sm:$0xff]
      %v2991 = vld [vmem:[#allocation2 + $0xc1] sm:$0xff]
      %v2992 = vld [vmem:[#allocation2 + $0xc9] sm:$0xff]
      %v2993 = vld [vmem:[#allocation2 + $0xd1] sm:$0xff]
      %v2994 = vld [vmem:[#allocation2 + $0xd9] sm:$0xff]
      %v2995 = vld [vmem:[#allocation2 + $0xe1] sm:$0xff]
      %v2996 = vld [vmem:[#allocation2 + $0xe9] sm:$0xff]
      %v2997 = vld [vmem:[#allocation2 + $0xf1] sm:$0xff]
      %v2998 = vld [vmem:[#allocation2 + $0xf9] sm:$0xff]
      %v2999 = vld [vmem:[#allocation2 + $0x101] sm:$0xff]
      %v3000 = vmul.f32 %v2968, %v819
      %v3001 = vmul.f32 %v2969, %v823
      %v3002 = vmul.f32 %v2970, %v827
      %v3003 = vmul.f32 %v2971, %v831
      %v3004 = vmul.f32 %v2972, %v835
      %v3005 = vmul.f32 %v2973, %v839
      %v3006 = vmul.f32 %v2974, %v843
      %v3007 = vmul.f32 %v2975, %v847
      %v3008 = vmul.f32 %v2976, %v851
      %v3009 = vmul.f32 %v2977, %v855
      %v3010 = vmul.f32 %v2978, %v859
      %v3011 = vmul.f32 %v2979, %v863
      %v3012 = vmul.f32 %v2980, %v867
      %v3013 = vmul.f32 %v2981, %v871
      %v3014 = vmul.f32 %v2982, %v875
      %v3015 = vmul.f32 %v2983, %v879
      %v3016 = vmul.f32 %v2984, %v883
      %v3017 = vmul.f32 %v2985, %v887
      %v3018 = vmul.f32 %v2986, %v891
      %v3019 = vmul.f32 %v2987, %v895
      %v3020 = vmul.f32 %v2988, %v899
      %v3021 = vmul.f32 %v2989, %v903
      %v3022 = vmul.f32 %v2990, %v907
      %v3023 = vmul.f32 %v2991, %v911
      %v3024 = vmul.f32 %v2992, %v915
      %v3025 = vmul.f32 %v2993, %v919
      %v3026 = vmul.f32 %v2994, %v923
      %v3027 = vmul.f32 %v2995, %v927
      %v3028 = vmul.f32 %v2996, %v931
      %v3029 = vmul.f32 %v2997, %v935
      %v3030 = vmul.f32 %v2998, %v939
      %v3031 = vmul.f32 %v2999, %v943
      %v3032 = vld [vmem:[#allocation2 + $0x107] sm:$0xff]
      %v3033 = vld [vmem:[#allocation2 + $0x10f] sm:$0xff]
      %v3034 = vmul.f32 %v2874, %v564
      %v3035 = vmul.f32 %v2875, %v569
      %v3036 = vmul.f32 %v2876, %v574
      %v3037 = vmul.f32 %v2877, %v579
      %v3038 = vmul.f32 %v2878, %v584
      %v3039 = vmul.f32 %v2879, %v589
      %v3040 = vmul.f32 %v2880, %v594
      %v3041 = vmul.f32 %v2881, %v599
      %v3042 = vmul.f32 %v2882, %v604
      %v3043 = vmul.f32 %v2883, %v609
      %v3044 = vmul.f32 %v2884, %v614
      %v3045 = vmul.f32 %v2885, %v619
      %v3046 = vmul.f32 %v2886, %v624
      %v3047 = vmul.f32 %v2887, %v629
      %v3048 = vmul.f32 %v2888, %v634
      %v3049 = vmul.f32 %v2889, %v639
      %v3050 = vmul.f32 %v2890, %v644
      %v3051 = vmul.f32 %v2891, %v649
      %v3052 = vmul.f32 %v2892, %v654
      %v3053 = vmul.f32 %v2893, %v659
      %v3054 = vmul.f32 %v2894, %v664
      %v3055 = vmul.f32 %v2895, %v669
      %v3056 = vmul.f32 %v2896, %v674
      %v3057 = vmul.f32 %v2897, %v679
      %v3058 = vmul.f32 %v2898, %v684
      %v3059 = vmul.f32 %v2899, %v689
      %v3060 = vmul.f32 %v2900, %v694
      %v3061 = vmul.f32 %v2901, %v699
      %v3062 = vmul.f32 %v2902, %v704
      %v3063 = vmul.f32 %v2903, %v709
      %v3064 = vmul.f32 %v3032, %v714
      %v3065 = vmul.f32 %v3033, %v719
      %v3066 = vld [vmem:[#allocation2 + $0x108] sm:$0xff]
      %v3067 = vld [vmem:[#allocation2 + $0x110] sm:$0xff]
      %v3068 = vld [vmem:[#allocation2 + $0x109] sm:$0xff]
      %v3069 = vld [vmem:[#allocation2 + $0x111] sm:$0xff]
      %v3070 = vmul.f32 %v2970, %v819
      %v3071 = vmul.f32 %v2971, %v823
      %v3072 = vmul.f32 %v2972, %v827
      %v3073 = vmul.f32 %v2973, %v831
      %v3074 = vmul.f32 %v2974, %v835
      %v3075 = vmul.f32 %v2975, %v839
      %v3076 = vmul.f32 %v2976, %v843
      %v3077 = vmul.f32 %v2977, %v847
      %v3078 = vmul.f32 %v2978, %v851
      %v3079 = vmul.f32 %v2979, %v855
      %v3080 = vmul.f32 %v2980, %v859
      %v3081 = vmul.f32 %v2981, %v863
      %v3082 = vmul.f32 %v2982, %v867
      %v3083 = vmul.f32 %v2983, %v871
      %v3084 = vmul.f32 %v2984, %v875
      %v3085 = vmul.f32 %v2985, %v879
      %v3086 = vmul.f32 %v2986, %v883
      %v3087 = vmul.f32 %v2987, %v887
      %v3088 = vmul.f32 %v2988, %v891
      %v3089 = vmul.f32 %v2989, %v895
      %v3090 = vmul.f32 %v2990, %v899
      %v3091 = vmul.f32 %v2991, %v903
      %v3092 = vmul.f32 %v2992, %v907
      %v3093 = vmul.f32 %v2993, %v911
      %v3094 = vmul.f32 %v2994, %v915
      %v3095 = vmul.f32 %v2995, %v919
      %v3096 = vmul.f32 %v2996, %v923
      %v3097 = vmul.f32 %v2997, %v927
      %v3098 = vmul.f32 %v2998, %v931
      %v3099 = vmul.f32 %v2999, %v935
      %v3100 = vmul.f32 %v3068, %v939
      %v3101 = vmul.f32 %v3069, %v943
      %v3102 = vld [vmem:[#allocation2 + $0x117] sm:$0xff]
      %v3103 = vld [vmem:[#allocation2 + $0x11f] sm:$0xff]
      %v3104 = vmul.f32 %v2876, %v564
      %v3105 = vmul.f32 %v2877, %v569
      %v3106 = vmul.f32 %v2878, %v574
      %v3107 = vmul.f32 %v2879, %v579
      %v3108 = vmul.f32 %v2880, %v584
      %v3109 = vmul.f32 %v2881, %v589
      %v3110 = vmul.f32 %v2882, %v594
      %v3111 = vmul.f32 %v2883, %v599
      %v3112 = vmul.f32 %v2884, %v604
      %v3113 = vmul.f32 %v2885, %v609
      %v3114 = vmul.f32 %v2886, %v614
      %v3115 = vmul.f32 %v2887, %v619
      %v3116 = vmul.f32 %v2888, %v624
      %v3117 = vmul.f32 %v2889, %v629
      %v3118 = vmul.f32 %v2890, %v634
      %v3119 = vmul.f32 %v2891, %v639
      %v3120 = vmul.f32 %v2892, %v644
      %v3121 = vmul.f32 %v2893, %v649
      %v3122 = vmul.f32 %v2894, %v654
      %v3123 = vmul.f32 %v2895, %v659
      %v3124 = vmul.f32 %v2896, %v664
      %v3125 = vmul.f32 %v2897, %v669
      %v3126 = vmul.f32 %v2898, %v674
      %v3127 = vmul.f32 %v2899, %v679
      %v3128 = vmul.f32 %v2900, %v684
      %v3129 = vmul.f32 %v2901, %v689
      %v3130 = vmul.f32 %v2902, %v694
      %v3131 = vmul.f32 %v2903, %v699
      %v3132 = vmul.f32 %v3032, %v704
      %v3133 = vmul.f32 %v3033, %v709
      %v3134 = vmul.f32 %v3102, %v714
      %v3135 = vmul.f32 %v3103, %v719
      %v3136 = vld [vmem:[#allocation2 + $0x118] sm:$0xff]
      %v3137 = vld [vmem:[#allocation2 + $0x120] sm:$0xff]
      %v3138 = vld [vmem:[#allocation2 + $0x119] sm:$0xff]
      %v3139 = vld [vmem:[#allocation2 + $0x121] sm:$0xff]
      %v3140 = vmul.f32 %v2972, %v819
      %v3141 = vmul.f32 %v2973, %v823
      %v3142 = vmul.f32 %v2974, %v827
      %v3143 = vmul.f32 %v2975, %v831
      %v3144 = vmul.f32 %v2976, %v835
      %v3145 = vmul.f32 %v2977, %v839
      %v3146 = vmul.f32 %v2978, %v843
      %v3147 = vmul.f32 %v2979, %v847
      %v3148 = vmul.f32 %v2980, %v851
      %v3149 = vmul.f32 %v2981, %v855
      %v3150 = vmul.f32 %v2982, %v859
      %v3151 = vmul.f32 %v2983, %v863
      %v3152 = vmul.f32 %v2984, %v867
      %v3153 = vmul.f32 %v2985, %v871
      %v3154 = vmul.f32 %v2986, %v875
      %v3155 = vmul.f32 %v2987, %v879
      %v3156 = vmul.f32 %v2988, %v883
      %v3157 = vmul.f32 %v2989, %v887
      %v3158 = vmul.f32 %v2990, %v891
      %v3159 = vmul.f32 %v2991, %v895
      %v3160 = vmul.f32 %v2992, %v899
      %v3161 = vmul.f32 %v2993, %v903
      %v3162 = vmul.f32 %v2994, %v907
      %v3163 = vmul.f32 %v2995, %v911
      %v3164 = vmul.f32 %v2996, %v915
      %v3165 = vmul.f32 %v2997, %v919
      %v3166 = vmul.f32 %v2998, %v923
      %v3167 = vmul.f32 %v2999, %v927
      %v3168 = vmul.f32 %v3068, %v931
      %v3169 = vmul.f32 %v3069, %v935
      %v3170 = vmul.f32 %v3138, %v939
      %v3171 = vmul.f32 %v3139, %v943
      %3204 = vrot.lane.b32.xlu0 %v2936, 8
      %v3205 = vpop.permute.xlu0 %3204
      %3206 = vrot.lane.b32.xlu0 %v2937, 8
      %v3207 = vpop.permute.xlu0 %3206
      %3208 = vrot.lane.b32.xlu0 %v2938, 8
      %v3209 = vpop.permute.xlu0 %3208
      %3210 = vrot.lane.b32.xlu0 %v2939, 8
      %v3211 = vpop.permute.xlu0 %3210
      %3212 = vrot.lane.b32.xlu0 %v2940, 8
      %v3213 = vpop.permute.xlu0 %3212
      %3214 = vrot.lane.b32.xlu0 %v2941, 8
      %v3215 = vpop.permute.xlu0 %3214
      %3216 = vrot.lane.b32.xlu0 %v2942, 8
      %v3217 = vpop.permute.xlu0 %3216
      %3218 = vrot.lane.b32.xlu0 %v2943, 8
      %v3219 = vpop.permute.xlu0 %3218
      %3220 = vrot.lane.b32.xlu0 %v2944, 8
      %v3221 = vpop.permute.xlu0 %3220
      %3222 = vrot.lane.b32.xlu0 %v2945, 8
      %v3223 = vpop.permute.xlu0 %3222
      %3224 = vrot.lane.b32.xlu0 %v2946, 8
      %v3225 = vpop.permute.xlu0 %3224
      %3226 = vrot.lane.b32.xlu0 %v2947, 8
      %v3227 = vpop.permute.xlu0 %3226
      %3228 = vrot.lane.b32.xlu0 %v2948, 8
      %v3229 = vpop.permute.xlu0 %3228
      %3230 = vrot.lane.b32.xlu0 %v2949, 8
      %v3231 = vpop.permute.xlu0 %3230
      %3232 = vrot.lane.b32.xlu0 %v2950, 8
      %v3233 = vpop.permute.xlu0 %3232
      %3234 = vrot.lane.b32.xlu0 %v2951, 8
      %v3235 = vpop.permute.xlu0 %3234
      %3236 = vrot.lane.b32.xlu0 %v2952, 8
      %v3237 = vpop.permute.xlu0 %3236
      %3238 = vrot.lane.b32.xlu0 %v2953, 8
      %v3239 = vpop.permute.xlu0 %3238
      %3240 = vrot.lane.b32.xlu0 %v2954, 8
      %v3241 = vpop.permute.xlu0 %3240
      %3242 = vrot.lane.b32.xlu0 %v2955, 8
      %v3243 = vpop.permute.xlu0 %3242
      %3244 = vrot.lane.b32.xlu0 %v2956, 8
      %v3245 = vpop.permute.xlu0 %3244
      %3246 = vrot.lane.b32.xlu0 %v2957, 8
      %v3247 = vpop.permute.xlu0 %3246
      %3248 = vrot.lane.b32.xlu0 %v2958, 8
      %v3249 = vpop.permute.xlu0 %3248
      %3250 = vrot.lane.b32.xlu0 %v2959, 8
      %v3251 = vpop.permute.xlu0 %3250
      %3252 = vrot.lane.b32.xlu0 %v2960, 8
      %v3253 = vpop.permute.xlu0 %3252
      %3254 = vrot.lane.b32.xlu0 %v2961, 8
      %v3255 = vpop.permute.xlu0 %3254
      %3256 = vrot.lane.b32.xlu0 %v2962, 8
      %v3257 = vpop.permute.xlu0 %3256
      %3258 = vrot.lane.b32.xlu0 %v2963, 8
      %v3259 = vpop.permute.xlu0 %3258
      %3260 = vrot.lane.b32.xlu0 %v2964, 8
      %v3261 = vpop.permute.xlu0 %3260
      %3262 = vrot.lane.b32.xlu0 %v2965, 8
      %v3263 = vpop.permute.xlu0 %3262
      %3264 = vrot.lane.b32.xlu0 %v2966, 8
      %v3265 = vpop.permute.xlu0 %3264
      %3266 = vrot.lane.b32.xlu0 %v2967, 8
      %v3267 = vpop.permute.xlu0 %3266
      %3332 = vrot.lane.b32.xlu0 %v3000, 16
      %v3333 = vpop.permute.xlu0 %3332
      %3334 = vrot.lane.b32.xlu0 %v3001, 16
      %v3335 = vpop.permute.xlu0 %3334
      %3336 = vrot.lane.b32.xlu0 %v3002, 16
      %v3337 = vpop.permute.xlu0 %3336
      %3338 = vrot.lane.b32.xlu0 %v3003, 16
      %v3339 = vpop.permute.xlu0 %3338
      %3340 = vrot.lane.b32.xlu0 %v3004, 16
      %v3341 = vpop.permute.xlu0 %3340
      %3342 = vrot.lane.b32.xlu0 %v3005, 16
      %v3343 = vpop.permute.xlu0 %3342
      %3344 = vrot.lane.b32.xlu0 %v3006, 16
      %v3345 = vpop.permute.xlu0 %3344
      %3346 = vrot.lane.b32.xlu0 %v3007, 16
      %v3347 = vpop.permute.xlu0 %3346
      %3348 = vrot.lane.b32.xlu0 %v3008, 16
      %v3349 = vpop.permute.xlu0 %3348
      %3350 = vrot.lane.b32.xlu0 %v3009, 16
      %v3351 = vpop.permute.xlu0 %3350
      %3352 = vrot.lane.b32.xlu0 %v3010, 16
      %v3353 = vpop.permute.xlu0 %3352
      %3354 = vrot.lane.b32.xlu0 %v3011, 16
      %v3355 = vpop.permute.xlu0 %3354
      %3356 = vrot.lane.b32.xlu0 %v3012, 16
      %v3357 = vpop.permute.xlu0 %3356
      %3358 = vrot.lane.b32.xlu0 %v3013, 16
      %v3359 = vpop.permute.xlu0 %3358
      %3360 = vrot.lane.b32.xlu0 %v3014, 16
      %v3361 = vpop.permute.xlu0 %3360
      %3362 = vrot.lane.b32.xlu0 %v3015, 16
      %v3363 = vpop.permute.xlu0 %3362
      %3364 = vrot.lane.b32.xlu0 %v3016, 16
      %v3365 = vpop.permute.xlu0 %3364
      %3366 = vrot.lane.b32.xlu0 %v3017, 16
      %v3367 = vpop.permute.xlu0 %3366
      %3368 = vrot.lane.b32.xlu0 %v3018, 16
      %v3369 = vpop.permute.xlu0 %3368
      %3370 = vrot.lane.b32.xlu0 %v3019, 16
      %v3371 = vpop.permute.xlu0 %3370
      %3372 = vrot.lane.b32.xlu0 %v3020, 16
      %v3373 = vpop.permute.xlu0 %3372
      %3374 = vrot.lane.b32.xlu0 %v3021, 16
      %v3375 = vpop.permute.xlu0 %3374
      %3376 = vrot.lane.b32.xlu0 %v3022, 16
      %v3377 = vpop.permute.xlu0 %3376
      %3378 = vrot.lane.b32.xlu0 %v3023, 16
      %v3379 = vpop.permute.xlu0 %3378
      %3380 = vrot.lane.b32.xlu0 %v3024, 16
      %v3381 = vpop.permute.xlu0 %3380
      %3382 = vrot.lane.b32.xlu0 %v3025, 16
      %v3383 = vpop.permute.xlu0 %3382
      %3384 = vrot.lane.b32.xlu0 %v3026, 16
      %v3385 = vpop.permute.xlu0 %3384
      %3386 = vrot.lane.b32.xlu0 %v3027, 16
      %v3387 = vpop.permute.xlu0 %3386
      %3388 = vrot.lane.b32.xlu0 %v3028, 16
      %v3389 = vpop.permute.xlu0 %3388
      %3390 = vrot.lane.b32.xlu0 %v3029, 16
      %v3391 = vpop.permute.xlu0 %3390
      %3392 = vrot.lane.b32.xlu0 %v3030, 16
      %v3393 = vpop.permute.xlu0 %3392
      %3394 = vrot.lane.b32.xlu0 %v3031, 16
      %v3395 = vpop.permute.xlu0 %3394
      %3460 = vrot.lane.b32.xlu0 %v3034, 24
      %v3461 = vpop.permute.xlu0 %3460
      %3462 = vrot.lane.b32.xlu0 %v3035, 24
      %v3463 = vpop.permute.xlu0 %3462
      %3464 = vrot.lane.b32.xlu0 %v3036, 24
      %v3465 = vpop.permute.xlu0 %3464
      %3466 = vrot.lane.b32.xlu0 %v3037, 24
      %v3467 = vpop.permute.xlu0 %3466
      %3468 = vrot.lane.b32.xlu0 %v3038, 24
      %v3469 = vpop.permute.xlu0 %3468
      %3470 = vrot.lane.b32.xlu0 %v3039, 24
      %v3471 = vpop.permute.xlu0 %3470
      %3472 = vrot.lane.b32.xlu0 %v3040, 24
      %v3473 = vpop.permute.xlu0 %3472
      %3474 = vrot.lane.b32.xlu0 %v3041, 24
      %v3475 = vpop.permute.xlu0 %3474
      %3476 = vrot.lane.b32.xlu0 %v3042, 24
      %v3477 = vpop.permute.xlu0 %3476
      %3478 = vrot.lane.b32.xlu0 %v3043, 24
      %v3479 = vpop.permute.xlu0 %3478
      %3480 = vrot.lane.b32.xlu0 %v3044, 24
      %v3481 = vpop.permute.xlu0 %3480
      %3482 = vrot.lane.b32.xlu0 %v3045, 24
      %v3483 = vpop.permute.xlu0 %3482
      %3484 = vrot.lane.b32.xlu0 %v3046, 24
      %v3485 = vpop.permute.xlu0 %3484
      %3486 = vrot.lane.b32.xlu0 %v3047, 24
      %v3487 = vpop.permute.xlu0 %3486
      %3488 = vrot.lane.b32.xlu0 %v3048, 24
      %v3489 = vpop.permute.xlu0 %3488
      %3490 = vrot.lane.b32.xlu0 %v3049, 24
      %v3491 = vpop.permute.xlu0 %3490
      %3492 = vrot.lane.b32.xlu0 %v3050, 24
      %v3493 = vpop.permute.xlu0 %3492
      %3494 = vrot.lane.b32.xlu0 %v3051, 24
      %v3495 = vpop.permute.xlu0 %3494
      %3496 = vrot.lane.b32.xlu0 %v3052, 24
      %v3497 = vpop.permute.xlu0 %3496
      %3498 = vrot.lane.b32.xlu0 %v3053, 24
      %v3499 = vpop.permute.xlu0 %3498
      %3500 = vrot.lane.b32.xlu0 %v3054, 24
      %v3501 = vpop.permute.xlu0 %3500
      %3502 = vrot.lane.b32.xlu0 %v3055, 24
      %v3503 = vpop.permute.xlu0 %3502
      %3504 = vrot.lane.b32.xlu0 %v3056, 24
      %v3505 = vpop.permute.xlu0 %3504
      %3506 = vrot.lane.b32.xlu0 %v3057, 24
      %v3507 = vpop.permute.xlu0 %3506
      %3508 = vrot.lane.b32.xlu0 %v3058, 24
      %v3509 = vpop.permute.xlu0 %3508
      %3510 = vrot.lane.b32.xlu0 %v3059, 24
      %v3511 = vpop.permute.xlu0 %3510
      %3512 = vrot.lane.b32.xlu0 %v3060, 24
      %v3513 = vpop.permute.xlu0 %3512
      %3514 = vrot.lane.b32.xlu0 %v3061, 24
      %v3515 = vpop.permute.xlu0 %3514
      %3516 = vrot.lane.b32.xlu0 %v3062, 24
      %v3517 = vpop.permute.xlu0 %3516
      %3518 = vrot.lane.b32.xlu0 %v3063, 24
      %v3519 = vpop.permute.xlu0 %3518
      %3520 = vrot.lane.b32.xlu0 %v3064, 24
      %v3521 = vpop.permute.xlu0 %3520
      %3522 = vrot.lane.b32.xlu0 %v3065, 24
      %v3523 = vpop.permute.xlu0 %3522
      %3558 = vrot.lane.b32.xlu0 %v2938, 32
      %v3559 = vpop.permute.xlu0 %3558
      %3560 = vrot.lane.b32.xlu0 %v2939, 32
      %v3561 = vpop.permute.xlu0 %3560
      %3562 = vrot.lane.b32.xlu0 %v2940, 32
      %v3563 = vpop.permute.xlu0 %3562
      %3564 = vrot.lane.b32.xlu0 %v2941, 32
      %v3565 = vpop.permute.xlu0 %3564
      %3566 = vrot.lane.b32.xlu0 %v2942, 32
      %v3567 = vpop.permute.xlu0 %3566
      %3568 = vrot.lane.b32.xlu0 %v2943, 32
      %v3569 = vpop.permute.xlu0 %3568
      %3570 = vrot.lane.b32.xlu0 %v2944, 32
      %v3571 = vpop.permute.xlu0 %3570
      %3572 = vrot.lane.b32.xlu0 %v2945, 32
      %v3573 = vpop.permute.xlu0 %3572
      %3574 = vrot.lane.b32.xlu0 %v2946, 32
      %v3575 = vpop.permute.xlu0 %3574
      %3576 = vrot.lane.b32.xlu0 %v2947, 32
      %v3577 = vpop.permute.xlu0 %3576
      %3578 = vrot.lane.b32.xlu0 %v2948, 32
      %v3579 = vpop.permute.xlu0 %3578
      %3580 = vrot.lane.b32.xlu0 %v2949, 32
      %v3581 = vpop.permute.xlu0 %3580
      %3582 = vrot.lane.b32.xlu0 %v2950, 32
      %v3583 = vpop.permute.xlu0 %3582
      %3584 = vrot.lane.b32.xlu0 %v2951, 32
      %v3585 = vpop.permute.xlu0 %3584
      %3586 = vrot.lane.b32.xlu0 %v2952, 32
      %v3587 = vpop.permute.xlu0 %3586
      %3588 = vrot.lane.b32.xlu0 %v2953, 32
      %v3589 = vpop.permute.xlu0 %3588
      %3590 = vrot.lane.b32.xlu0 %v2954, 32
      %v3591 = vpop.permute.xlu0 %3590
      %3592 = vrot.lane.b32.xlu0 %v2955, 32
      %v3593 = vpop.permute.xlu0 %3592
      %3594 = vrot.lane.b32.xlu0 %v2956, 32
      %v3595 = vpop.permute.xlu0 %3594
      %3596 = vrot.lane.b32.xlu0 %v2957, 32
      %v3597 = vpop.permute.xlu0 %3596
      %3598 = vrot.lane.b32.xlu0 %v2958, 32
      %v3599 = vpop.permute.xlu0 %3598
      %3600 = vrot.lane.b32.xlu0 %v2959, 32
      %v3601 = vpop.permute.xlu0 %3600
      %3602 = vrot.lane.b32.xlu0 %v2960, 32
      %v3603 = vpop.permute.xlu0 %3602
      %3604 = vrot.lane.b32.xlu0 %v2961, 32
      %v3605 = vpop.permute.xlu0 %3604
      %3606 = vrot.lane.b32.xlu0 %v2962, 32
      %v3607 = vpop.permute.xlu0 %3606
      %3608 = vrot.lane.b32.xlu0 %v2963, 32
      %v3609 = vpop.permute.xlu0 %3608
      %3610 = vrot.lane.b32.xlu0 %v2964, 32
      %v3611 = vpop.permute.xlu0 %3610
      %3612 = vrot.lane.b32.xlu0 %v2965, 32
      %v3613 = vpop.permute.xlu0 %3612
      %3614 = vrot.lane.b32.xlu0 %v2966, 32
      %v3615 = vpop.permute.xlu0 %3614
      %3616 = vrot.lane.b32.xlu0 %v2967, 32
      %v3617 = vpop.permute.xlu0 %3616
      %3618 = vrot.lane.b32.xlu0 %v3066, 32
      %v3619 = vpop.permute.xlu0 %3618
      %3620 = vrot.lane.b32.xlu0 %v3067, 32
      %v3621 = vpop.permute.xlu0 %3620
      %3686 = vrot.lane.b32.xlu0 %v3070, 40
      %v3687 = vpop.permute.xlu0 %3686
      %3688 = vrot.lane.b32.xlu0 %v3071, 40
      %v3689 = vpop.permute.xlu0 %3688
      %3690 = vrot.lane.b32.xlu0 %v3072, 40
      %v3691 = vpop.permute.xlu0 %3690
      %3692 = vrot.lane.b32.xlu0 %v3073, 40
      %v3693 = vpop.permute.xlu0 %3692
      %3694 = vrot.lane.b32.xlu0 %v3074, 40
      %v3695 = vpop.permute.xlu0 %3694
      %3696 = vrot.lane.b32.xlu0 %v3075, 40
      %v3697 = vpop.permute.xlu0 %3696
      %3698 = vrot.lane.b32.xlu0 %v3076, 40
      %v3699 = vpop.permute.xlu0 %3698
      %3700 = vrot.lane.b32.xlu0 %v3077, 40
      %v3701 = vpop.permute.xlu0 %3700
      %3702 = vrot.lane.b32.xlu0 %v3078, 40
      %v3703 = vpop.permute.xlu0 %3702
      %3704 = vrot.lane.b32.xlu0 %v3079, 40
      %v3705 = vpop.permute.xlu0 %3704
      %3706 = vrot.lane.b32.xlu0 %v3080, 40
      %v3707 = vpop.permute.xlu0 %3706
      %3708 = vrot.lane.b32.xlu0 %v3081, 40
      %v3709 = vpop.permute.xlu0 %3708
      %3710 = vrot.lane.b32.xlu0 %v3082, 40
      %v3711 = vpop.permute.xlu0 %3710
      %3712 = vrot.lane.b32.xlu0 %v3083, 40
      %v3713 = vpop.permute.xlu0 %3712
      %3714 = vrot.lane.b32.xlu0 %v3084, 40
      %v3715 = vpop.permute.xlu0 %3714
      %3716 = vrot.lane.b32.xlu0 %v3085, 40
      %v3717 = vpop.permute.xlu0 %3716
      %3718 = vrot.lane.b32.xlu0 %v3086, 40
      %v3719 = vpop.permute.xlu0 %3718
      %3720 = vrot.lane.b32.xlu0 %v3087, 40
      %v3721 = vpop.permute.xlu0 %3720
      %3722 = vrot.lane.b32.xlu0 %v3088, 40
      %v3723 = vpop.permute.xlu0 %3722
      %3724 = vrot.lane.b32.xlu0 %v3089, 40
      %v3725 = vpop.permute.xlu0 %3724
      %3726 = vrot.lane.b32.xlu0 %v3090, 40
      %v3727 = vpop.permute.xlu0 %3726
      %3728 = vrot.lane.b32.xlu0 %v3091, 40
      %v3729 = vpop.permute.xlu0 %3728
      %3730 = vrot.lane.b32.xlu0 %v3092, 40
      %v3731 = vpop.permute.xlu0 %3730
      %3732 = vrot.lane.b32.xlu0 %v3093, 40
      %v3733 = vpop.permute.xlu0 %3732
      %3734 = vrot.lane.b32.xlu0 %v3094, 40
      %v3735 = vpop.permute.xlu0 %3734
      %3736 = vrot.lane.b32.xlu0 %v3095, 40
      %v3737 = vpop.permute.xlu0 %3736
      %3738 = vrot.lane.b32.xlu0 %v3096, 40
      %v3739 = vpop.permute.xlu0 %3738
      %3740 = vrot.lane.b32.xlu0 %v3097, 40
      %v3741 = vpop.permute.xlu0 %3740
      %3742 = vrot.lane.b32.xlu0 %v3098, 40
      %v3743 = vpop.permute.xlu0 %3742
      %3744 = vrot.lane.b32.xlu0 %v3099, 40
      %v3745 = vpop.permute.xlu0 %3744
      %3746 = vrot.lane.b32.xlu0 %v3100, 40
      %v3747 = vpop.permute.xlu0 %3746
      %3748 = vrot.lane.b32.xlu0 %v3101, 40
      %v3749 = vpop.permute.xlu0 %3748
      %3814 = vrot.lane.b32.xlu0 %v3104, 48
      %v3815 = vpop.permute.xlu0 %3814
      %3816 = vrot.lane.b32.xlu0 %v3105, 48
      %v3817 = vpop.permute.xlu0 %3816
      %3818 = vrot.lane.b32.xlu0 %v3106, 48
      %v3819 = vpop.permute.xlu0 %3818
      %3820 = vrot.lane.b32.xlu0 %v3107, 48
      %v3821 = vpop.permute.xlu0 %3820
      %3822 = vrot.lane.b32.xlu0 %v3108, 48
      %v3823 = vpop.permute.xlu0 %3822
      %3824 = vrot.lane.b32.xlu0 %v3109, 48
      %v3825 = vpop.permute.xlu0 %3824
      %3826 = vrot.lane.b32.xlu0 %v3110, 48
      %v3827 = vpop.permute.xlu0 %3826
      %3828 = vrot.lane.b32.xlu0 %v3111, 48
      %v3829 = vpop.permute.xlu0 %3828
      %3830 = vrot.lane.b32.xlu0 %v3112, 48
      %v3831 = vpop.permute.xlu0 %3830
      %3832 = vrot.lane.b32.xlu0 %v3113, 48
      %v3833 = vpop.permute.xlu0 %3832
      %3834 = vrot.lane.b32.xlu0 %v3114, 48
      %v3835 = vpop.permute.xlu0 %3834
      %3836 = vrot.lane.b32.xlu0 %v3115, 48
      %v3837 = vpop.permute.xlu0 %3836
      %3838 = vrot.lane.b32.xlu0 %v3116, 48
      %v3839 = vpop.permute.xlu0 %3838
      %3840 = vrot.lane.b32.xlu0 %v3117, 48
      %v3841 = vpop.permute.xlu0 %3840
      %3842 = vrot.lane.b32.xlu0 %v3118, 48
      %v3843 = vpop.permute.xlu0 %3842
      %3844 = vrot.lane.b32.xlu0 %v3119, 48
      %v3845 = vpop.permute.xlu0 %3844
      %3846 = vrot.lane.b32.xlu0 %v3120, 48
      %v3847 = vpop.permute.xlu0 %3846
      %3848 = vrot.lane.b32.xlu0 %v3121, 48
      %v3849 = vpop.permute.xlu0 %3848
      %3850 = vrot.lane.b32.xlu0 %v3122, 48
      %v3851 = vpop.permute.xlu0 %3850
      %3852 = vrot.lane.b32.xlu0 %v3123, 48
      %v3853 = vpop.permute.xlu0 %3852
      %3854 = vrot.lane.b32.xlu0 %v3124, 48
      %v3855 = vpop.permute.xlu0 %3854
      %3856 = vrot.lane.b32.xlu0 %v3125, 48
      %v3857 = vpop.permute.xlu0 %3856
      %3858 = vrot.lane.b32.xlu0 %v3126, 48
      %v3859 = vpop.permute.xlu0 %3858
      %3860 = vrot.lane.b32.xlu0 %v3127, 48
      %v3861 = vpop.permute.xlu0 %3860
      %3862 = vrot.lane.b32.xlu0 %v3128, 48
      %v3863 = vpop.permute.xlu0 %3862
      %3864 = vrot.lane.b32.xlu0 %v3129, 48
      %v3865 = vpop.permute.xlu0 %3864
      %3866 = vrot.lane.b32.xlu0 %v3130, 48
      %v3867 = vpop.permute.xlu0 %3866
      %3868 = vrot.lane.b32.xlu0 %v3131, 48
      %v3869 = vpop.permute.xlu0 %3868
      %3870 = vrot.lane.b32.xlu0 %v3132, 48
      %v3871 = vpop.permute.xlu0 %3870
      %3872 = vrot.lane.b32.xlu0 %v3133, 48
      %v3873 = vpop.permute.xlu0 %3872
      %3874 = vrot.lane.b32.xlu0 %v3134, 48
      %v3875 = vpop.permute.xlu0 %3874
      %3876 = vrot.lane.b32.xlu0 %v3135, 48
      %v3877 = vpop.permute.xlu0 %3876
      %3912 = vrot.lane.b32.xlu0 %v2940, 56
      %v3913 = vpop.permute.xlu0 %3912
      %3914 = vrot.lane.b32.xlu0 %v2941, 56
      %v3915 = vpop.permute.xlu0 %3914
      %3916 = vrot.lane.b32.xlu0 %v2942, 56
      %v3917 = vpop.permute.xlu0 %3916
      %3918 = vrot.lane.b32.xlu0 %v2943, 56
      %v3919 = vpop.permute.xlu0 %3918
      %3920 = vrot.lane.b32.xlu0 %v2944, 56
      %v3921 = vpop.permute.xlu0 %3920
      %3922 = vrot.lane.b32.xlu0 %v2945, 56
      %v3923 = vpop.permute.xlu0 %3922
      %3924 = vrot.lane.b32.xlu0 %v2946, 56
      %v3925 = vpop.permute.xlu0 %3924
      %3926 = vrot.lane.b32.xlu0 %v2947, 56
      %v3927 = vpop.permute.xlu0 %3926
      %3928 = vrot.lane.b32.xlu0 %v2948, 56
      %v3929 = vpop.permute.xlu0 %3928
      %3930 = vrot.lane.b32.xlu0 %v2949, 56
      %v3931 = vpop.permute.xlu0 %3930
      %3932 = vrot.lane.b32.xlu0 %v2950, 56
      %v3933 = vpop.permute.xlu0 %3932
      %3934 = vrot.lane.b32.xlu0 %v2951, 56
      %v3935 = vpop.permute.xlu0 %3934
      %3936 = vrot.lane.b32.xlu0 %v2952, 56
      %v3937 = vpop.permute.xlu0 %3936
      %3938 = vrot.lane.b32.xlu0 %v2953, 56
      %v3939 = vpop.permute.xlu0 %3938
      %3940 = vrot.lane.b32.xlu0 %v2954, 56
      %v3941 = vpop.permute.xlu0 %3940
      %3942 = vrot.lane.b32.xlu0 %v2955, 56
      %v3943 = vpop.permute.xlu0 %3942
      %3944 = vrot.lane.b32.xlu0 %v2956, 56
      %v3945 = vpop.permute.xlu0 %3944
      %3946 = vrot.lane.b32.xlu0 %v2957, 56
      %v3947 = vpop.permute.xlu0 %3946
      %3948 = vrot.lane.b32.xlu0 %v2958, 56
      %v3949 = vpop.permute.xlu0 %3948
      %3950 = vrot.lane.b32.xlu0 %v2959, 56
      %v3951 = vpop.permute.xlu0 %3950
      %3952 = vrot.lane.b32.xlu0 %v2960, 56
      %v3953 = vpop.permute.xlu0 %3952
      %3954 = vrot.lane.b32.xlu0 %v2961, 56
      %v3955 = vpop.permute.xlu0 %3954
      %3956 = vrot.lane.b32.xlu0 %v2962, 56
      %v3957 = vpop.permute.xlu0 %3956
      %3958 = vrot.lane.b32.xlu0 %v2963, 56
      %v3959 = vpop.permute.xlu0 %3958
      %3960 = vrot.lane.b32.xlu0 %v2964, 56
      %v3961 = vpop.permute.xlu0 %3960
      %3962 = vrot.lane.b32.xlu0 %v2965, 56
      %v3963 = vpop.permute.xlu0 %3962
      %3964 = vrot.lane.b32.xlu0 %v2966, 56
      %v3965 = vpop.permute.xlu0 %3964
      %3966 = vrot.lane.b32.xlu0 %v2967, 56
      %v3967 = vpop.permute.xlu0 %3966
      %3968 = vrot.lane.b32.xlu0 %v3066, 56
      %v3969 = vpop.permute.xlu0 %3968
      %3970 = vrot.lane.b32.xlu0 %v3067, 56
      %v3971 = vpop.permute.xlu0 %3970
      %3972 = vrot.lane.b32.xlu0 %v3136, 56
      %v3973 = vpop.permute.xlu0 %3972
      %3974 = vrot.lane.b32.xlu0 %v3137, 56
      %v3975 = vpop.permute.xlu0 %3974
      %4040 = vrot.lane.b32.xlu0 %v3140, 64
      %v4041 = vpop.permute.xlu0 %4040
      %4042 = vrot.lane.b32.xlu0 %v3141, 64
      %v4043 = vpop.permute.xlu0 %4042
      %4044 = vrot.lane.b32.xlu0 %v3142, 64
      %v4045 = vpop.permute.xlu0 %4044
      %4046 = vrot.lane.b32.xlu0 %v3143, 64
      %v4047 = vpop.permute.xlu0 %4046
      %4048 = vrot.lane.b32.xlu0 %v3144, 64
      %v4049 = vpop.permute.xlu0 %4048
      %4050 = vrot.lane.b32.xlu0 %v3145, 64
      %v4051 = vpop.permute.xlu0 %4050
      %4052 = vrot.lane.b32.xlu0 %v3146, 64
      %v4053 = vpop.permute.xlu0 %4052
      %4054 = vrot.lane.b32.xlu0 %v3147, 64
      %v4055 = vpop.permute.xlu0 %4054
      %4056 = vrot.lane.b32.xlu0 %v3148, 64
      %v4057 = vpop.permute.xlu0 %4056
      %4058 = vrot.lane.b32.xlu0 %v3149, 64
      %v4059 = vpop.permute.xlu0 %4058
      %4060 = vrot.lane.b32.xlu0 %v3150, 64
      %v4061 = vpop.permute.xlu0 %4060
      %4062 = vrot.lane.b32.xlu0 %v3151, 64
      %v4063 = vpop.permute.xlu0 %4062
      %4064 = vrot.lane.b32.xlu0 %v3152, 64
      %v4065 = vpop.permute.xlu0 %4064
      %4066 = vrot.lane.b32.xlu0 %v3153, 64
      %v4067 = vpop.permute.xlu0 %4066
      %4068 = vrot.lane.b32.xlu0 %v3154, 64
      %v4069 = vpop.permute.xlu0 %4068
      %4070 = vrot.lane.b32.xlu0 %v3155, 64
      %v4071 = vpop.permute.xlu0 %4070
      %4072 = vrot.lane.b32.xlu0 %v3156, 64
      %v4073 = vpop.permute.xlu0 %4072
      %4074 = vrot.lane.b32.xlu0 %v3157, 64
      %v4075 = vpop.permute.xlu0 %4074
      %4076 = vrot.lane.b32.xlu0 %v3158, 64
      %v4077 = vpop.permute.xlu0 %4076
      %4078 = vrot.lane.b32.xlu0 %v3159, 64
      %v4079 = vpop.permute.xlu0 %4078
      %4080 = vrot.lane.b32.xlu0 %v3160, 64
      %v4081 = vpop.permute.xlu0 %4080
      %4082 = vrot.lane.b32.xlu0 %v3161, 64
      %v4083 = vpop.permute.xlu0 %4082
      %4084 = vrot.lane.b32.xlu0 %v3162, 64
      %v4085 = vpop.permute.xlu0 %4084
      %4086 = vrot.lane.b32.xlu0 %v3163, 64
      %v4087 = vpop.permute.xlu0 %4086
      %4088 = vrot.lane.b32.xlu0 %v3164, 64
      %v4089 = vpop.permute.xlu0 %4088
      %4090 = vrot.lane.b32.xlu0 %v3165, 64
      %v4091 = vpop.permute.xlu0 %4090
      %4092 = vrot.lane.b32.xlu0 %v3166, 64
      %v4093 = vpop.permute.xlu0 %4092
      %4094 = vrot.lane.b32.xlu0 %v3167, 64
      %v4095 = vpop.permute.xlu0 %4094
      %4096 = vrot.lane.b32.xlu0 %v3168, 64
      %v4097 = vpop.permute.xlu0 %4096
      %4098 = vrot.lane.b32.xlu0 %v3169, 64
      %v4099 = vpop.permute.xlu0 %4098
      %4100 = vrot.lane.b32.xlu0 %v3170, 64
      %v4101 = vpop.permute.xlu0 %4100
      %4102 = vrot.lane.b32.xlu0 %v3171, 64
      %v4103 = vpop.permute.xlu0 %4102
      %v4136 = vsel %vm339, %v2904, %v3205
      %v4137 = vsel %vm339, %v2905, %v3207
      %v4138 = vsel %vm339, %v2906, %v3209
      %v4139 = vsel %vm339, %v2907, %v3211
      %v4140 = vsel %vm339, %v2908, %v3213
      %v4141 = vsel %vm339, %v2909, %v3215
      %v4142 = vsel %vm339, %v2910, %v3217
      %v4143 = vsel %vm339, %v2911, %v3219
      %v4144 = vsel %vm339, %v2912, %v3221
      %v4145 = vsel %vm339, %v2913, %v3223
      %v4146 = vsel %vm339, %v2914, %v3225
      %v4147 = vsel %vm339, %v2915, %v3227
      %v4148 = vsel %vm339, %v2916, %v3229
      %v4149 = vsel %vm339, %v2917, %v3231
      %v4150 = vsel %vm339, %v2918, %v3233
      %v4151 = vsel %vm339, %v2919, %v3235
      %v4152 = vsel %vm339, %v2920, %v3237
      %v4153 = vsel %vm339, %v2921, %v3239
      %v4154 = vsel %vm339, %v2922, %v3241
      %v4155 = vsel %vm339, %v2923, %v3243
      %v4156 = vsel %vm339, %v2924, %v3245
      %v4157 = vsel %vm339, %v2925, %v3247
      %v4158 = vsel %vm339, %v2926, %v3249
      %v4159 = vsel %vm339, %v2927, %v3251
      %v4160 = vsel %vm339, %v2928, %v3253
      %v4161 = vsel %vm339, %v2929, %v3255
      %v4162 = vsel %vm339, %v2930, %v3257
      %v4163 = vsel %vm339, %v2931, %v3259
      %v4164 = vsel %vm339, %v2932, %v3261
      %v4165 = vsel %vm339, %v2933, %v3263
      %v4166 = vsel %vm339, %v2934, %v3265
      %v4167 = vsel %vm339, %v2935, %v3267
      %v4168 = vsel %vm2233, %v4136, %v3333
      %v4169 = vsel %vm2233, %v4137, %v3335
      %v4170 = vsel %vm2233, %v4138, %v3337
      %v4171 = vsel %vm2233, %v4139, %v3339
      %v4172 = vsel %vm2233, %v4140, %v3341
      %v4173 = vsel %vm2233, %v4141, %v3343
      %v4174 = vsel %vm2233, %v4142, %v3345
      %v4175 = vsel %vm2233, %v4143, %v3347
      %v4176 = vsel %vm2233, %v4144, %v3349
      %v4177 = vsel %vm2233, %v4145, %v3351
      %v4178 = vsel %vm2233, %v4146, %v3353
      %v4179 = vsel %vm2233, %v4147, %v3355
      %v4180 = vsel %vm2233, %v4148, %v3357
      %v4181 = vsel %vm2233, %v4149, %v3359
      %v4182 = vsel %vm2233, %v4150, %v3361
      %v4183 = vsel %vm2233, %v4151, %v3363
      %v4184 = vsel %vm2233, %v4152, %v3365
      %v4185 = vsel %vm2233, %v4153, %v3367
      %v4186 = vsel %vm2233, %v4154, %v3369
      %v4187 = vsel %vm2233, %v4155, %v3371
      %v4188 = vsel %vm2233, %v4156, %v3373
      %v4189 = vsel %vm2233, %v4157, %v3375
      %v4190 = vsel %vm2233, %v4158, %v3377
      %v4191 = vsel %vm2233, %v4159, %v3379
      %v4192 = vsel %vm2233, %v4160, %v3381
      %v4193 = vsel %vm2233, %v4161, %v3383
      %v4194 = vsel %vm2233, %v4162, %v3385
      %v4195 = vsel %vm2233, %v4163, %v3387
      %v4196 = vsel %vm2233, %v4164, %v3389
      %v4197 = vsel %vm2233, %v4165, %v3391
      %v4198 = vsel %vm2233, %v4166, %v3393
      %v4199 = vsel %vm2233, %v4167, %v3395
      %v4200 = vsel %vm2266, %v4168, %v3461
      %v4201 = vsel %vm2266, %v4169, %v3463
      %v4202 = vsel %vm2266, %v4170, %v3465
      %v4203 = vsel %vm2266, %v4171, %v3467
      %v4204 = vsel %vm2266, %v4172, %v3469
      %v4205 = vsel %vm2266, %v4173, %v3471
      %v4206 = vsel %vm2266, %v4174, %v3473
      %v4207 = vsel %vm2266, %v4175, %v3475
      %v4208 = vsel %vm2266, %v4176, %v3477
      %v4209 = vsel %vm2266, %v4177, %v3479
      %v4210 = vsel %vm2266, %v4178, %v3481
      %v4211 = vsel %vm2266, %v4179, %v3483
      %v4212 = vsel %vm2266, %v4180, %v3485
      %v4213 = vsel %vm2266, %v4181, %v3487
      %v4214 = vsel %vm2266, %v4182, %v3489
      %v4215 = vsel %vm2266, %v4183, %v3491
      %v4216 = vsel %vm2266, %v4184, %v3493
      %v4217 = vsel %vm2266, %v4185, %v3495
      %v4218 = vsel %vm2266, %v4186, %v3497
      %v4219 = vsel %vm2266, %v4187, %v3499
      %v4220 = vsel %vm2266, %v4188, %v3501
      %v4221 = vsel %vm2266, %v4189, %v3503
      %v4222 = vsel %vm2266, %v4190, %v3505
      %v4223 = vsel %vm2266, %v4191, %v3507
      %v4224 = vsel %vm2266, %v4192, %v3509
      %v4225 = vsel %vm2266, %v4193, %v3511
      %v4226 = vsel %vm2266, %v4194, %v3513
      %v4227 = vsel %vm2266, %v4195, %v3515
      %v4228 = vsel %vm2266, %v4196, %v3517
      %v4229 = vsel %vm2266, %v4197, %v3519
      %v4230 = vsel %vm2266, %v4198, %v3521
      %v4231 = vsel %vm2266, %v4199, %v3523
      %v4232 = vsel %vm2299, %v4200, %v3559
      %v4233 = vsel %vm2299, %v4201, %v3561
      %v4234 = vsel %vm2299, %v4202, %v3563
      %v4235 = vsel %vm2299, %v4203, %v3565
      %v4236 = vsel %vm2299, %v4204, %v3567
      %v4237 = vsel %vm2299, %v4205, %v3569
      %v4238 = vsel %vm2299, %v4206, %v3571
      %v4239 = vsel %vm2299, %v4207, %v3573
      %v4240 = vsel %vm2299, %v4208, %v3575
      %v4241 = vsel %vm2299, %v4209, %v3577
      %v4242 = vsel %vm2299, %v4210, %v3579
      %v4243 = vsel %vm2299, %v4211, %v3581
      %v4244 = vsel %vm2299, %v4212, %v3583
      %v4245 = vsel %vm2299, %v4213, %v3585
      %v4246 = vsel %vm2299, %v4214, %v3587
      %v4247 = vsel %vm2299, %v4215, %v3589
      %v4248 = vsel %vm2299, %v4216, %v3591
      %v4249 = vsel %vm2299, %v4217, %v3593
      %v4250 = vsel %vm2299, %v4218, %v3595
      %v4251 = vsel %vm2299, %v4219, %v3597
      %v4252 = vsel %vm2299, %v4220, %v3599
      %v4253 = vsel %vm2299, %v4221, %v3601
      %v4254 = vsel %vm2299, %v4222, %v3603
      %v4255 = vsel %vm2299, %v4223, %v3605
      %v4256 = vsel %vm2299, %v4224, %v3607
      %v4257 = vsel %vm2299, %v4225, %v3609
      %v4258 = vsel %vm2299, %v4226, %v3611
      %v4259 = vsel %vm2299, %v4227, %v3613
      %v4260 = vsel %vm2299, %v4228, %v3615
      %v4261 = vsel %vm2299, %v4229, %v3617
      %v4262 = vsel %vm2299, %v4230, %v3619
      %v4263 = vsel %vm2299, %v4231, %v3621
      %v4264 = vsel %vm2332, %v4232, %v3687
      %v4265 = vsel %vm2332, %v4233, %v3689
      %v4266 = vsel %vm2332, %v4234, %v3691
      %v4267 = vsel %vm2332, %v4235, %v3693
      %v4268 = vsel %vm2332, %v4236, %v3695
      %v4269 = vsel %vm2332, %v4237, %v3697
      %v4270 = vsel %vm2332, %v4238, %v3699
      %v4271 = vsel %vm2332, %v4239, %v3701
      %v4272 = vsel %vm2332, %v4240, %v3703
      %v4273 = vsel %vm2332, %v4241, %v3705
      %v4274 = vsel %vm2332, %v4242, %v3707
      %v4275 = vsel %vm2332, %v4243, %v3709
      %v4276 = vsel %vm2332, %v4244, %v3711
      %v4277 = vsel %vm2332, %v4245, %v3713
      %v4278 = vsel %vm2332, %v4246, %v3715
      %v4279 = vsel %vm2332, %v4247, %v3717
      %v4280 = vsel %vm2332, %v4248, %v3719
      %v4281 = vsel %vm2332, %v4249, %v3721
      %v4282 = vsel %vm2332, %v4250, %v3723
      %v4283 = vsel %vm2332, %v4251, %v3725
      %v4284 = vsel %vm2332, %v4252, %v3727
      %v4285 = vsel %vm2332, %v4253, %v3729
      %v4286 = vsel %vm2332, %v4254, %v3731
      %v4287 = vsel %vm2332, %v4255, %v3733
      %v4288 = vsel %vm2332, %v4256, %v3735
      %v4289 = vsel %vm2332, %v4257, %v3737
      %v4290 = vsel %vm2332, %v4258, %v3739
      %v4291 = vsel %vm2332, %v4259, %v3741
      %v4292 = vsel %vm2332, %v4260, %v3743
      %v4293 = vsel %vm2332, %v4261, %v3745
      %v4294 = vsel %vm2332, %v4262, %v3747
      %v4295 = vsel %vm2332, %v4263, %v3749
      %v4296 = vsel %vm2365, %v4264, %v3815
      %v4297 = vsel %vm2365, %v4265, %v3817
      %v4298 = vsel %vm2365, %v4266, %v3819
      %v4299 = vsel %vm2365, %v4267, %v3821
      %v4300 = vsel %vm2365, %v4268, %v3823
      %v4301 = vsel %vm2365, %v4269, %v3825
      %v4302 = vsel %vm2365, %v4270, %v3827
      %v4303 = vsel %vm2365, %v4271, %v3829
      %v4304 = vsel %vm2365, %v4272, %v3831
      %v4305 = vsel %vm2365, %v4273, %v3833
      %v4306 = vsel %vm2365, %v4274, %v3835
      %v4307 = vsel %vm2365, %v4275, %v3837
      %v4308 = vsel %vm2365, %v4276, %v3839
      %v4309 = vsel %vm2365, %v4277, %v3841
      %v4310 = vsel %vm2365, %v4278, %v3843
      %v4311 = vsel %vm2365, %v4279, %v3845
      %v4312 = vsel %vm2365, %v4280, %v3847
      %v4313 = vsel %vm2365, %v4281, %v3849
      %v4314 = vsel %vm2365, %v4282, %v3851
      %v4315 = vsel %vm2365, %v4283, %v3853
      %v4316 = vsel %vm2365, %v4284, %v3855
      %v4317 = vsel %vm2365, %v4285, %v3857
      %v4318 = vsel %vm2365, %v4286, %v3859
      %v4319 = vsel %vm2365, %v4287, %v3861
      %v4320 = vsel %vm2365, %v4288, %v3863
      %v4321 = vsel %vm2365, %v4289, %v3865
      %v4322 = vsel %vm2365, %v4290, %v3867
      %v4323 = vsel %vm2365, %v4291, %v3869
      %v4324 = vsel %vm2365, %v4292, %v3871
      %v4325 = vsel %vm2365, %v4293, %v3873
      %v4326 = vsel %vm2365, %v4294, %v3875
      %v4327 = vsel %vm2365, %v4295, %v3877
      %v4328 = vsel %vm2398, %v4296, %v3913
      %v4329 = vsel %vm2398, %v4297, %v3915
      %v4330 = vsel %vm2398, %v4298, %v3917
      %v4331 = vsel %vm2398, %v4299, %v3919
      %v4332 = vsel %vm2398, %v4300, %v3921
      %v4333 = vsel %vm2398, %v4301, %v3923
      %v4334 = vsel %vm2398, %v4302, %v3925
      %v4335 = vsel %vm2398, %v4303, %v3927
      %v4336 = vsel %vm2398, %v4304, %v3929
      %v4337 = vsel %vm2398, %v4305, %v3931
      %v4338 = vsel %vm2398, %v4306, %v3933
      %v4339 = vsel %vm2398, %v4307, %v3935
      %v4340 = vsel %vm2398, %v4308, %v3937
      %v4341 = vsel %vm2398, %v4309, %v3939
      %v4342 = vsel %vm2398, %v4310, %v3941
      %v4343 = vsel %vm2398, %v4311, %v3943
      %v4344 = vsel %vm2398, %v4312, %v3945
      %v4345 = vsel %vm2398, %v4313, %v3947
      %v4346 = vsel %vm2398, %v4314, %v3949
      %v4347 = vsel %vm2398, %v4315, %v3951
      %v4348 = vsel %vm2398, %v4316, %v3953
      %v4349 = vsel %vm2398, %v4317, %v3955
      %v4350 = vsel %vm2398, %v4318, %v3957
      %v4351 = vsel %vm2398, %v4319, %v3959
      %v4352 = vsel %vm2398, %v4320, %v3961
      %v4353 = vsel %vm2398, %v4321, %v3963
      %v4354 = vsel %vm2398, %v4322, %v3965
      %v4355 = vsel %vm2398, %v4323, %v3967
      %v4356 = vsel %vm2398, %v4324, %v3969
      %v4357 = vsel %vm2398, %v4325, %v3971
      %v4358 = vsel %vm2398, %v4326, %v3973
      %v4359 = vsel %vm2398, %v4327, %v3975
      %v4360 = vsel %vm2431, %v4328, %v4041
      %v4361 = vsel %vm2431, %v4329, %v4043
      %v4362 = vsel %vm2431, %v4330, %v4045
      %v4363 = vsel %vm2431, %v4331, %v4047
      %v4364 = vsel %vm2431, %v4332, %v4049
      %v4365 = vsel %vm2431, %v4333, %v4051
      %v4366 = vsel %vm2431, %v4334, %v4053
      %v4367 = vsel %vm2431, %v4335, %v4055
      %v4368 = vsel %vm2431, %v4336, %v4057
      %v4369 = vsel %vm2431, %v4337, %v4059
      %v4370 = vsel %vm2431, %v4338, %v4061
      %v4371 = vsel %vm2431, %v4339, %v4063
      %v4372 = vsel %vm2431, %v4340, %v4065
      %v4373 = vsel %vm2431, %v4341, %v4067
      %v4374 = vsel %vm2431, %v4342, %v4069
      %v4375 = vsel %vm2431, %v4343, %v4071
      %v4376 = vsel %vm2431, %v4344, %v4073
      %v4377 = vsel %vm2431, %v4345, %v4075
      %v4378 = vsel %vm2431, %v4346, %v4077
      %v4379 = vsel %vm2431, %v4347, %v4079
      %v4380 = vsel %vm2431, %v4348, %v4081
      %v4381 = vsel %vm2431, %v4349, %v4083
      %v4382 = vsel %vm2431, %v4350, %v4085
      %v4383 = vsel %vm2431, %v4351, %v4087
      %v4384 = vsel %vm2431, %v4352, %v4089
      %v4385 = vsel %vm2431, %v4353, %v4091
      %v4386 = vsel %vm2431, %v4354, %v4093
      %v4387 = vsel %vm2431, %v4355, %v4095
      %v4388 = vsel %vm2431, %v4356, %v4097
      %v4389 = vsel %vm2431, %v4357, %v4099
      %v4390 = vsel %vm2431, %v4358, %v4101
      %v4391 = vsel %vm2431, %v4359, %v4103
      %v4392 = vpack.c.bf16 %v4361, %v4360
      %v4393 = vpack.c.bf16 %v4363, %v4362
      %v4394 = vpack.c.bf16 %v4365, %v4364
      %v4395 = vpack.c.bf16 %v4367, %v4366
      %v4396 = vpack.c.bf16 %v4369, %v4368
      %v4397 = vpack.c.bf16 %v4371, %v4370
      %v4398 = vpack.c.bf16 %v4373, %v4372
      %v4399 = vpack.c.bf16 %v4375, %v4374
      %v4400 = vpack.c.bf16 %v4377, %v4376
      %v4401 = vpack.c.bf16 %v4379, %v4378
      %v4402 = vpack.c.bf16 %v4381, %v4380
      %v4403 = vpack.c.bf16 %v4383, %v4382
      %v4404 = vpack.c.bf16 %v4385, %v4384
      %v4405 = vpack.c.bf16 %v4387, %v4386
      %v4406 = vpack.c.bf16 %v4389, %v4388
      %v4407 = vpack.c.bf16 %v4391, %v4390
      %v4417 = vunpack.c.l.b16 %v2863
      %v4418 = vunpack.c.l.b16 %v2864
      %v4419 = vunpack.c.l.b16 %v2865
      %v4420 = vunpack.c.l.b16 %v2866
      %v4421 = vunpack.c.l.b16 %v2867
      %v4422 = vunpack.c.l.b16 %v2868
      %v4423 = vunpack.c.l.b16 %v2869
      %v4424 = vunpack.c.l.b16 %v2870
      %v4425 = vunpack.c.l.b16 %v2871
      %v4426 = vpack.c.b16 %v4418, %v4417
      %v4427 = vpack.c.b16 %v4420, %v4419
      %v4428 = vpack.c.b16 %v4422, %v4421
      %v4429 = vpack.c.b16 %v4424, %v4423
      %v4430 = vpack.c.b16 %v4425, %v4425
      %v4436 = vsel %vm2507, %v4392, 0
      %v4439 = vsel %vm2507, %v4393, 0
      %v4442 = vsel %vm2507, %v4394, 0
      %v4445 = vsel %vm2507, %v4395, 0
      %v4448 = vsel %vm2507, %v4396, 0
      %v4451 = vsel %vm2507, %v4397, 0
      %v4454 = vsel %vm2507, %v4398, 0
      %v4457 = vsel %vm2507, %v4399, 0
      %v4460 = vsel %vm2507, %v4400, 0
      %v4463 = vsel %vm2507, %v4401, 0
      %v4466 = vsel %vm2507, %v4402, 0
      %v4469 = vsel %vm2507, %v4403, 0
      %v4472 = vsel %vm2507, %v4404, 0
      %v4475 = vsel %vm2507, %v4405, 0
      %v4478 = vsel %vm2507, %v4406, 0
      %v4481 = vsel %vm2507, %v4407, 0
      %v4484 = vsel %vm2556, %v4430, 0
      %4486 = vmatprep.subr.bf16.mxu0 0
      %4487 = vmatpush1.bf16.msra.mxu0 %v4426
      %4488 = vmatprep.subr.bf16.mxu0 0
      %4489 = vmatpush1.bf16.msra.mxu0 %v4427
      %4490 = vmatprep.subr.bf16.mxu0 0
      %4491 = vmatpush1.bf16.msra.mxu0 %v4428
      %4492 = vmatprep.subr.bf16.mxu0 0
      %4493 = vmatpush1.bf16.msra.mxu0 %v4429
      %4494 = vmatprep.subr.bf16.mxu0 0
      %4495 = vmatpush1.bf16.msra.mxu0 %v4484
      %4496 = vmatprep.subr.bf16.mxu0 0
      %4497 = vmatpush1.bf16.msra.mxu0 0
      %4498 = vmatprep.subr.bf16.mxu0 0
      %4499 = vmatpush1.bf16.msra.mxu0 0
      %4500 = vmatprep.subr.bf16.mxu0 0
      %4501 = vmatpush1.bf16.msra.mxu0 0
      %4502 = vmatprep.subr.bf16.mxu0 0
      %4503 = vmatpush1.bf16.msra.mxu0 0
      %4504 = vmatprep.subr.bf16.mxu0 0
      %4505 = vmatpush1.bf16.msra.mxu0 0
      %4506 = vmatprep.subr.bf16.mxu0 0
      %4507 = vmatpush1.bf16.msra.mxu0 0
      %4508 = vmatprep.subr.bf16.mxu0 0
      %4509 = vmatpush1.bf16.msra.mxu0 0
      %4510 = vmatprep.subr.bf16.mxu0 0
      %4511 = vmatpush1.bf16.msra.mxu0 0
      %4512 = vmatprep.subr.bf16.mxu0 0
      %4513 = vmatpush1.bf16.msra.mxu0 0
      %4514 = vmatprep.subr.bf16.mxu0 0
      %4515 = vmatpush1.bf16.msra.mxu0 0
      %4516 = vmatprep.subr.bf16.mxu0 0
      %4517 = vmatpush1.bf16.msra.mxu0 0
      %4518 = vmatprep.mubr.bf16.mxu0 0
      %4519 = vmatmul.mubr.bf16.gmra.mrb[0].mxu0 %v4436
      %v4520 = vpop.f32.mrb[0].mxu0
      %v4521 = vadd.f32 %v346, %v4520
      %v4522 = vpop.f32.mrb[0].mxu0
      %v4523 = vpop.f32.mrb[0].mxu0
      %v4524 = vadd.f32 %v347, %v4523
      %v4525 = vpop.f32.mrb[0].mxu0
      %4526 = vmatprep.mubr.bf16.mxu0 0
      %4527 = vmatmul.mubr.bf16.gmra.mrb[0].mxu0 %v4439
      %v4528 = vpop.f32.mrb[0].mxu0
      %v4529 = vadd.f32 %v348, %v4528
      %v4530 = vpop.f32.mrb[0].mxu0
      %v4531 = vpop.f32.mrb[0].mxu0
      %v4532 = vadd.f32 %v349, %v4531
      %v4533 = vpop.f32.mrb[0].mxu0
      %4534 = vmatprep.mubr.bf16.mxu0 0
      %4535 = vmatmul.mubr.bf16.gmra.mrb[0].mxu0 %v4442
      %v4536 = vpop.f32.mrb[0].mxu0
      %v4537 = vadd.f32 %v350, %v4536
      %v4538 = vpop.f32.mrb[0].mxu0
      %v4539 = vpop.f32.mrb[0].mxu0
      %v4540 = vadd.f32 %v351, %v4539
      %v4541 = vpop.f32.mrb[0].mxu0
      %4542 = vmatprep.mubr.bf16.mxu0 0
      %4543 = vmatmul.mubr.bf16.gmra.mrb[0].mxu0 %v4445
      %v4544 = vpop.f32.mrb[0].mxu0
      %v4545 = vadd.f32 %v352, %v4544
      %v4546 = vpop.f32.mrb[0].mxu0
      %v4547 = vpop.f32.mrb[0].mxu0
      %v4548 = vadd.f32 %v353, %v4547
      %v4549 = vpop.f32.mrb[0].mxu0
      %4550 = vmatprep.mubr.bf16.mxu0 0
      %4551 = vmatmul.mubr.bf16.gmra.mrb[0].mxu0 %v4448
      %v4552 = vpop.f32.mrb[0].mxu0
      %v4553 = vadd.f32 %v354, %v4552
      %v4554 = vpop.f32.mrb[0].mxu0
      %v4555 = vpop.f32.mrb[0].mxu0
      %v4556 = vadd.f32 %v355, %v4555
      %v4557 = vpop.f32.mrb[0].mxu0
      %4558 = vmatprep.mubr.bf16.mxu0 0
      %4559 = vmatmul.mubr.bf16.gmra.mrb[0].mxu0 %v4451
      %v4560 = vpop.f32.mrb[0].mxu0
      %v4561 = vadd.f32 %v356, %v4560
      %v4562 = vpop.f32.mrb[0].mxu0
      %v4563 = vpop.f32.mrb[0].mxu0
      %v4564 = vadd.f32 %v357, %v4563
      %v4565 = vpop.f32.mrb[0].mxu0
      %4566 = vmatprep.mubr.bf16.mxu0 0
      %4567 = vmatmul.mubr.bf16.gmra.mrb[0].mxu0 %v4454
      %v4568 = vpop.f32.mrb[0].mxu0
      %v4569 = vadd.f32 %v358, %v4568
      %v4570 = vpop.f32.mrb[0].mxu0
      %v4571 = vpop.f32.mrb[0].mxu0
      %v4572 = vadd.f32 %v359, %v4571
      %v4573 = vpop.f32.mrb[0].mxu0
      %4574 = vmatprep.mubr.bf16.mxu0 0
      %4575 = vmatmul.mubr.bf16.gmra.mrb[0].mxu0 %v4457
      %v4576 = vpop.f32.mrb[0].mxu0
      %v4577 = vadd.f32 %v360, %v4576
      %v4578 = vpop.f32.mrb[0].mxu0
      %v4579 = vpop.f32.mrb[0].mxu0
      %v4580 = vadd.f32 %v361, %v4579
      %v4581 = vpop.f32.mrb[0].mxu0
      %4582 = vmatprep.mubr.bf16.mxu0 0
      %4583 = vmatmul.mubr.bf16.gmra.mrb[0].mxu0 %v4460
      %v4584 = vpop.f32.mrb[0].mxu0
      %v4585 = vadd.f32 %v362, %v4584
      %v4586 = vpop.f32.mrb[0].mxu0
      %v4587 = vpop.f32.mrb[0].mxu0
      %v4588 = vadd.f32 %v363, %v4587
      %v4589 = vpop.f32.mrb[0].mxu0
      %4590 = vmatprep.mubr.bf16.mxu0 0
      %4591 = vmatmul.mubr.bf16.gmra.mrb[0].mxu0 %v4463
      %v4592 = vpop.f32.mrb[0].mxu0
      %v4593 = vadd.f32 %v364, %v4592
      %v4594 = vpop.f32.mrb[0].mxu0
      %v4595 = vpop.f32.mrb[0].mxu0
      %v4596 = vadd.f32 %v365, %v4595
      %v4597 = vpop.f32.mrb[0].mxu0
      %4598 = vmatprep.mubr.bf16.mxu0 0
      %4599 = vmatmul.mubr.bf16.gmra.mrb[0].mxu0 %v4466
      %v4600 = vpop.f32.mrb[0].mxu0
      %v4601 = vadd.f32 %v366, %v4600
      %v4602 = vpop.f32.mrb[0].mxu0
      %v4603 = vpop.f32.mrb[0].mxu0
      %v4604 = vadd.f32 %v367, %v4603
      %v4605 = vpop.f32.mrb[0].mxu0
      %4606 = vmatprep.mubr.bf16.mxu0 0
      %4607 = vmatmul.mubr.bf16.gmra.mrb[0].mxu0 %v4469
      %v4608 = vpop.f32.mrb[0].mxu0
      %v4609 = vadd.f32 %v368, %v4608
      %v4610 = vpop.f32.mrb[0].mxu0
      %v4611 = vpop.f32.mrb[0].mxu0
      %v4612 = vadd.f32 %v369, %v4611
      %v4613 = vpop.f32.mrb[0].mxu0
      %4614 = vmatprep.mubr.bf16.mxu0 0
      %4615 = vmatmul.mubr.bf16.gmra.mrb[0].mxu0 %v4472
      %v4616 = vpop.f32.mrb[0].mxu0
      %v4617 = vadd.f32 %v370, %v4616
      %v4618 = vpop.f32.mrb[0].mxu0
      %v4619 = vpop.f32.mrb[0].mxu0
      %v4620 = vadd.f32 %v371, %v4619
      %v4621 = vpop.f32.mrb[0].mxu0
      %4622 = vmatprep.mubr.bf16.mxu0 0
      %4623 = vmatmul.mubr.bf16.gmra.mrb[0].mxu0 %v4475
      %v4624 = vpop.f32.mrb[0].mxu0
      %v4625 = vadd.f32 %v372, %v4624
      %v4626 = vpop.f32.mrb[0].mxu0
      %v4627 = vpop.f32.mrb[0].mxu0
      %v4628 = vadd.f32 %v373, %v4627
      %v4629 = vpop.f32.mrb[0].mxu0
      %4630 = vmatprep.mubr.bf16.mxu0 0
      %4631 = vmatmul.mubr.bf16.gmra.mrb[0].mxu0 %v4478
      %v4632 = vpop.f32.mrb[0].mxu0
      %v4633 = vadd.f32 %v374, %v4632
      %v4634 = vpop.f32.mrb[0].mxu0
      %v4635 = vpop.f32.mrb[0].mxu0
      %v4636 = vadd.f32 %v375, %v4635
      %v4637 = vpop.f32.mrb[0].mxu0
      %4638 = vmatprep.mubr.bf16.mxu0 0
      %4639 = vmatmul.mubr.bf16.gmra.mrb[0].mxu0 %v4481
      %v4640 = vpop.f32.mrb[0].mxu0
      %v4641 = vadd.f32 %v376, %v4640
      %v4642 = vpop.f32.mrb[0].mxu0
      %v4643 = vpop.f32.mrb[0].mxu0
      %v4644 = vadd.f32 %v377, %v4643
      %v4645 = vpop.f32.mrb[0].mxu0
      %4646 = vdwg.mxu0
      %4647 = vst.msk [vmem:[%s305] sm:$0xff] %vm339, %v4521
      %4648 = vst.msk [vmem:[%s305 + $0x8] sm:$0xff] %vm339, %v4524
      %4649 = vst.msk [vmem:[%s305 + $0x10] sm:$0xff] %vm339, %v4529
      %4650 = vst.msk [vmem:[%s305 + $0x18] sm:$0xff] %vm339, %v4532
      %4651 = vst.msk [vmem:[%s305 + $0x20] sm:$0xff] %vm339, %v4537
      %4652 = vst.msk [vmem:[%s305 + $0x28] sm:$0xff] %vm339, %v4540
      %4653 = vst.msk [vmem:[%s305 + $0x30] sm:$0xff] %vm339, %v4545
      %4654 = vst.msk [vmem:[%s305 + $0x38] sm:$0xff] %vm339, %v4548
      %4655 = vst.msk [vmem:[%s305 + $0x40] sm:$0xff] %vm339, %v4553
      %4656 = vst.msk [vmem:[%s305 + $0x48] sm:$0xff] %vm339, %v4556
      %4657 = vst.msk [vmem:[%s305 + $0x50] sm:$0xff] %vm339, %v4561
      %4658 = vst.msk [vmem:[%s305 + $0x58] sm:$0xff] %vm339, %v4564
      %4659 = vst.msk [vmem:[%s305 + $0x60] sm:$0xff] %vm339, %v4569
      %4660 = vst.msk [vmem:[%s305 + $0x68] sm:$0xff] %vm339, %v4572
      %4661 = vst.msk [vmem:[%s305 + $0x70] sm:$0xff] %vm339, %v4577
      %4662 = vst.msk [vmem:[%s305 + $0x78] sm:$0xff] %vm339, %v4580
      %4663 = vst.msk [vmem:[%s305 + $0x80] sm:$0xff] %vm339, %v4585
      %4664 = vst.msk [vmem:[%s305 + $0x88] sm:$0xff] %vm339, %v4588
      %4665 = vst.msk [vmem:[%s305 + $0x90] sm:$0xff] %vm339, %v4593
      %4666 = vst.msk [vmem:[%s305 + $0x98] sm:$0xff] %vm339, %v4596
      %4667 = vst.msk [vmem:[%s305 + $0xa0] sm:$0xff] %vm339, %v4601
      %4668 = vst.msk [vmem:[%s305 + $0xa8] sm:$0xff] %vm339, %v4604
      %4669 = vst.msk [vmem:[%s305 + $0xb0] sm:$0xff] %vm339, %v4609
      %4670 = vst.msk [vmem:[%s305 + $0xb8] sm:$0xff] %vm339, %v4612
      %4671 = vst.msk [vmem:[%s305 + $0xc0] sm:$0xff] %vm339, %v4617
      %4672 = vst.msk [vmem:[%s305 + $0xc8] sm:$0xff] %vm339, %v4620
      %4673 = vst.msk [vmem:[%s305 + $0xd0] sm:$0xff] %vm339, %v4625
      %4674 = vst.msk [vmem:[%s305 + $0xd8] sm:$0xff] %vm339, %v4628
      %4675 = vst.msk [vmem:[%s305 + $0xe0] sm:$0xff] %vm339, %v4633
      %4676 = vst.msk [vmem:[%s305 + $0xe8] sm:$0xff] %vm339, %v4636
      %4677 = vst.msk [vmem:[%s305 + $0xf0] sm:$0xff] %vm339, %v4641
      %4678 = vst.msk [vmem:[%s305 + $0xf8] sm:$0xff] %vm339, %v4644
      %p4679 = scmp.lt.s32.totalorder %s19, 1
      %s4680 = scalar_select %p4679, %s19, 1
      %s4681 = smul.addr %s4680, 32
      %s4682 = smul.addr %s4681, 8
      %s4683 = scalar_lea.vmem %s8, %s4682
      // Predicated region
      $region53: #{uresnet_encoder_forward.10} parent=51 // pred_check
        %p4684 = pneg %p210
      $region54: #{uresnet_encoder_forward.10} parent=51 // pred_check_branch
        %4686 = sbr.rel (%p4684) target = $region56
      $region55: #{uresnet_encoder_forward.10} parent=51 // pred_region
        _
      $region56: #{uresnet_encoder_forward.10} parent=51 // pred_fallthru
        _
    $region52: #{uresnet_encoder_forward.10} parent=5 // pred_fallthru
      _
    %p4687 = scmp.le.s32.totalorder 2, %s14
    // Predicated region
    $region57: #{uresnet_encoder_forward.10} parent=5 // pred_check
      %p4688 = pneg %p4687
    $region58: #{uresnet_encoder_forward.10} parent=5 // pred_check_branch
      %4690 = sbr.rel (%p4688) target = $region60
    $region59: #{uresnet_encoder_forward.10} parent=5 // pred_region
      %s4691 = ssub.s32 %s14, 2
      // Predicated region
      $region61: #{uresnet_encoder_forward.10} parent=59 // pred_check
        %p4692 = pneg %p216
      $region62: #{uresnet_encoder_forward.10} parent=59 // pred_check_branch
        %4694 = sbr.rel (%p4692) target = $region64
      $region63: #{uresnet_encoder_forward.10} parent=59 // pred_region
        %p4695 = scmp.lt.s32.totalorder %s20, 1
        %s4696 = scalar_select %p4695, %s20, 1
        %s4697 = smul.addr %s4696, 32
        %s4698 = smul.addr %s4697, 8
        %s4699 = scalar_lea.vmem %s8, %s4698
      $region64: #{uresnet_encoder_forward.10} parent=59 // pred_fallthru
        _
    $region60: #{uresnet_encoder_forward.10} parent=5 // pred_fallthru
      _
  $region6: #{uresnet_encoder_forward.10} parent=0 // loop_footer
    %s18 = sadd.s32 1, %s14
  $region7: #{uresnet_encoder_forward.10} parent=0 // loop_footer_branch
    %13 = sbr.rel target = $region3
  $region8: #{uresnet_encoder_forward.10} parent=0 // loop_exit
    _

// kernel: uresnet_encoder_forward.16
$region0: #{uresnet_encoder_forward.16}
  #allocation0 [shape = 'u32[]', space=smem, size = 0x4, offset = 0x4, fixed_abs, tag = 'smem constant byte address 0x4 - core index']
  #allocation1 [shape = 'u32[144,128]{1,0:T(1,128)}', space=vmem, size = 0x12000, scoped, tag = 'internal scratch']
  #allocation2 [shape = 'f32[32,24]{1,0:T(8,128)}', space=vmem, size = 0x4000, scoped, tag = 'scratch operand']
  %s0 = inlined_call_operand.vmem [shape: f32[2,16,24], index: 0, kind: input, shape index: {}]
  %s1 = inlined_call_operand.vmem [shape: bf16[216,24], index: 1, kind: input, shape index: {}]
  %s2 = inlined_call_operand.vmem [shape: bf16[216,24], index: 2, kind: input, shape index: {}]
  %s3 = inlined_call_operand.vmem [shape: f32[1,24], index: 3, kind: input, shape index: {}]
  %s4 = inlined_call_operand.vmem [shape: f32[1,24], index: 4, kind: input, shape index: {}]
  %s5 = inlined_call_operand.vmem [shape: f32[1,24], index: 5, kind: input, shape index: {}]
  %s6 = inlined_call_operand.vmem [shape: f32[1,24], index: 6, kind: input, shape index: {}]
  %s7 = inlined_call_operand.vmem [shape: f32[16,2], index: 7, kind: input, shape index: {}]
  %s8 = inlined_call_operand.vmem [shape: f32[2,16,24], index: 8, kind: output, shape index: {}]
  %s9 = sld [smem:[#allocation0]]
  $region65: #{uresnet_encoder_forward.16} parent=0
    _
  %s11 = ssub.s32 1, %s9
  %s12 = scalar_select 0, %s11, %s9
  loop: start=0, step=1, limit=4
  $region2: #{uresnet_encoder_forward.16} parent=0 // loop_pre_header
    _
  $region3: #{uresnet_encoder_forward.16} parent=0 // loop_header
    %s14 = sphi 0, %s18
    %p15 = scmp.ge.s32.totalorder %s14, 4
    %s24 = sphi 0, %s26
    %s27 = sphi 0, %s24
    %s28 = sphi 0, %s27
    %s44 = sphi 0, %s28
    %s48 = sphi 0, %s48
    %s50 = sphi 0, %s48
    %s51 = sphi 0, %s50
    %s65 = sphi 0, %s51
    %s69 = sphi 0, %s69
    %s71 = sphi 0, %s69
    %s72 = sphi 0, %s71
    %s86 = sphi 0, %s72
    %s90 = sphi 0, %s90
    %s92 = sphi 0, %s90
    %s93 = sphi 0, %s92
    %s107 = sphi 0, %s93
    %s111 = sphi 0, %s111
    %s113 = sphi 0, %s111
    %s114 = sphi 0, %s113
    %s128 = sphi 0, %s114
    %s132 = sphi 0, %s132
    %s134 = sphi 0, %s132
    %s135 = sphi 0, %s134
    %s149 = sphi 0, %s135
    %s153 = sphi 0, %s153
    %s155 = sphi 0, %s153
    %s156 = sphi 0, %s155
    %s170 = sphi 0, %s156
    %s174 = sphi 0, %s174
    %s176 = sphi 0, %s174
    %s177 = sphi 0, %s176
    %s191 = sphi 0, %s177
    %s197 = sphi 0, %s199
    %s200 = sphi 0, %s197
    %s201 = sphi 0, %s200
    %s217 = sphi 0, %s201
  $region4: #{uresnet_encoder_forward.16} parent=0 // loop_header_branch
    %17 = sbr.rel (%p15) target = $region8
  $region5: #{uresnet_encoder_forward.16} parent=0 // loop_body
    %s19 = ssub.s32 %s14, 1
    %s20 = ssub.s32 %s14, 2
    %s21 = sadd.s32 %s14, 1
    %s22 = ssub.s32 %s14, %s21
    %p23 = scmp.eq.s32.totalorder %s22, 0
    %s25 = sadd.s32 %s24, 1
    %s26 = scalar_select %p23, %s24, %s25
    %p29 = pneg %p23
    %p30 = scmp.eq.s32.totalorder %s14, 1
    %p31 = por %p29, %p30
    %p32 = scmp.ne.s32.totalorder %s24, %s27
    %p33 = scmp.eq.s32.totalorder %s14, 0
    %p34 = por %p32, %p33
    %p35 = scmp.ne.s32.totalorder %s24, %s27
    %p36 = scmp.eq.s32.totalorder %s19, 1
    %p37 = por %p35, %p36
    %p38 = scmp.ne.s32.totalorder %s27, %s28
    %p39 = scmp.eq.s32.totalorder %s19, 0
    %p40 = por %p38, %p39
    %p41 = scmp.ne.s32.totalorder %s27, %s28
    %p42 = scmp.eq.s32.totalorder %s20, 1
    %p43 = por %p41, %p42
    %p45 = scmp.ne.s32.totalorder %s28, %s44
    %p46 = scmp.eq.s32.totalorder %s20, 0
    %p47 = por %p45, %p46
    %s49 = sadd.s32 %s48, 1
    %p52 = scmp.eq.s32.totalorder %s14, 1
    %p53 = scmp.ne.s32.totalorder %s48, %s50
    %p54 = scmp.eq.s32.totalorder %s14, 0
    %p55 = por %p53, %p54
    %p56 = scmp.ne.s32.totalorder %s48, %s50
    %p57 = scmp.eq.s32.totalorder %s19, 1
    %p58 = por %p56, %p57
    %p59 = scmp.ne.s32.totalorder %s50, %s51
    %p60 = scmp.eq.s32.totalorder %s19, 0
    %p61 = por %p59, %p60
    %p62 = scmp.ne.s32.totalorder %s50, %s51
    %p63 = scmp.eq.s32.totalorder %s20, 1
    %p64 = por %p62, %p63
    %p66 = scmp.ne.s32.totalorder %s51, %s65
    %p67 = scmp.eq.s32.totalorder %s20, 0
    %p68 = por %p66, %p67
    %s70 = sadd.s32 %s69, 1
    %p73 = scmp.eq.s32.totalorder %s14, 1
    %p74 = scmp.ne.s32.totalorder %s69, %s71
    %p75 = scmp.eq.s32.totalorder %s14, 0
    %p76 = por %p74, %p75
    %p77 = scmp.ne.s32.totalorder %s69, %s71
    %p78 = scmp.eq.s32.totalorder %s19, 1
    %p79 = por %p77, %p78
    %p80 = scmp.ne.s32.totalorder %s71, %s72
    %p81 = scmp.eq.s32.totalorder %s19, 0
    %p82 = por %p80, %p81
    %p83 = scmp.ne.s32.totalorder %s71, %s72
    %p84 = scmp.eq.s32.totalorder %s20, 1
    %p85 = por %p83, %p84
    %p87 = scmp.ne.s32.totalorder %s72, %s86
    %p88 = scmp.eq.s32.totalorder %s20, 0
    %p89 = por %p87, %p88
    %s91 = sadd.s32 %s90, 1
    %p94 = scmp.eq.s32.totalorder %s14, 1
    %p95 = scmp.ne.s32.totalorder %s90, %s92
    %p96 = scmp.eq.s32.totalorder %s14, 0
    %p97 = por %p95, %p96
    %p98 = scmp.ne.s32.totalorder %s90, %s92
    %p99 = scmp.eq.s32.totalorder %s19, 1
    %p100 = por %p98, %p99
    %p101 = scmp.ne.s32.totalorder %s92, %s93
    %p102 = scmp.eq.s32.totalorder %s19, 0
    %p103 = por %p101, %p102
    %p104 = scmp.ne.s32.totalorder %s92, %s93
    %p105 = scmp.eq.s32.totalorder %s20, 1
    %p106 = por %p104, %p105
    %p108 = scmp.ne.s32.totalorder %s93, %s107
    %p109 = scmp.eq.s32.totalorder %s20, 0
    %p110 = por %p108, %p109
    %s112 = sadd.s32 %s111, 1
    %p115 = scmp.eq.s32.totalorder %s14, 1
    %p116 = scmp.ne.s32.totalorder %s111, %s113
    %p117 = scmp.eq.s32.totalorder %s14, 0
    %p118 = por %p116, %p117
    %p119 = scmp.ne.s32.totalorder %s111, %s113
    %p120 = scmp.eq.s32.totalorder %s19, 1
    %p121 = por %p119, %p120
    %p122 = scmp.ne.s32.totalorder %s113, %s114
    %p123 = scmp.eq.s32.totalorder %s19, 0
    %p124 = por %p122, %p123
    %p125 = scmp.ne.s32.totalorder %s113, %s114
    %p126 = scmp.eq.s32.totalorder %s20, 1
    %p127 = por %p125, %p126
    %p129 = scmp.ne.s32.totalorder %s114, %s128
    %p130 = scmp.eq.s32.totalorder %s20, 0
    %p131 = por %p129, %p130
    %s133 = sadd.s32 %s132, 1
    %p136 = scmp.eq.s32.totalorder %s14, 1
    %p137 = scmp.ne.s32.totalorder %s132, %s134
    %p138 = scmp.eq.s32.totalorder %s14, 0
    %p139 = por %p137, %p138
    %p140 = scmp.ne.s32.totalorder %s132, %s134
    %p141 = scmp.eq.s32.totalorder %s19, 1
    %p142 = por %p140, %p141
    %p143 = scmp.ne.s32.totalorder %s134, %s135
    %p144 = scmp.eq.s32.totalorder %s19, 0
    %p145 = por %p143, %p144
    %p146 = scmp.ne.s32.totalorder %s134, %s135
    %p147 = scmp.eq.s32.totalorder %s20, 1
    %p148 = por %p146, %p147
    %p150 = scmp.ne.s32.totalorder %s135, %s149
    %p151 = scmp.eq.s32.totalorder %s20, 0
    %p152 = por %p150, %p151
    %s154 = sadd.s32 %s153, 1
    %p157 = scmp.eq.s32.totalorder %s14, 1
    %p158 = scmp.ne.s32.totalorder %s153, %s155
    %p159 = scmp.eq.s32.totalorder %s14, 0
    %p160 = por %p158, %p159
    %p161 = scmp.ne.s32.totalorder %s153, %s155
    %p162 = scmp.eq.s32.totalorder %s19, 1
    %p163 = por %p161, %p162
    %p164 = scmp.ne.s32.totalorder %s155, %s156
    %p165 = scmp.eq.s32.totalorder %s19, 0
    %p166 = por %p164, %p165
    %p167 = scmp.ne.s32.totalorder %s155, %s156
    %p168 = scmp.eq.s32.totalorder %s20, 1
    %p169 = por %p167, %p168
    %p171 = scmp.ne.s32.totalorder %s156, %s170
    %p172 = scmp.eq.s32.totalorder %s20, 0
    %p173 = por %p171, %p172
    %s175 = sadd.s32 %s174, 1
    %p178 = scmp.eq.s32.totalorder %s14, 1
    %p179 = scmp.ne.s32.totalorder %s174, %s176
    %p180 = scmp.eq.s32.totalorder %s14, 0
    %p181 = por %p179, %p180
    %p182 = scmp.ne.s32.totalorder %s174, %s176
    %p183 = scmp.eq.s32.totalorder %s19, 1
    %p184 = por %p182, %p183
    %p185 = scmp.ne.s32.totalorder %s176, %s177
    %p186 = scmp.eq.s32.totalorder %s19, 0
    %p187 = por %p185, %p186
    %p188 = scmp.ne.s32.totalorder %s176, %s177
    %p189 = scmp.eq.s32.totalorder %s20, 1
    %p190 = por %p188, %p189
    %p192 = scmp.ne.s32.totalorder %s177, %s191
    %p193 = scmp.eq.s32.totalorder %s20, 0
    %p194 = por %p192, %p193
    %s195 = ssub.s32 %s14, %s21
    %p196 = scmp.eq.s32.totalorder %s195, 0
    %s198 = sadd.s32 %s197, 1
    %s199 = scalar_select %p196, %s197, %s198
    %p202 = pneg %p196
    %p203 = scmp.eq.s32.totalorder %s14, 1
    %p204 = por %p202, %p203
    %p205 = scmp.ne.s32.totalorder %s197, %s200
    %p206 = scmp.eq.s32.totalorder %s14, 0
    %p207 = por %p205, %p206
    %p208 = scmp.ne.s32.totalorder %s197, %s200
    %p209 = scmp.eq.s32.totalorder %s19, 1
    %p210 = por %p208, %p209
    %p211 = scmp.ne.s32.totalorder %s200, %s201
    %p212 = scmp.eq.s32.totalorder %s19, 0
    %p213 = por %p211, %p212
    %p214 = scmp.ne.s32.totalorder %s200, %s201
    %p215 = scmp.eq.s32.totalorder %s20, 1
    %p216 = por %p214, %p215
    %p218 = scmp.ne.s32.totalorder %s201, %s217
    %p219 = scmp.eq.s32.totalorder %s20, 0
    %p220 = por %p218, %p219
    %p221 = scmp.le.s32.totalorder 1, %s14
    %p222 = scmp.lt.s32.totalorder %s14, 3
    %p223 = pnand %p221, %p222
    %p224 = pneg %p223
    // Predicated region
    $region9: #{uresnet_encoder_forward.16} parent=5 // pred_check
      _
    $region10: #{uresnet_encoder_forward.16} parent=5 // pred_check_branch
      %226 = sbr.rel (%p223) target = $region12
    $region11: #{uresnet_encoder_forward.16} parent=5 // pred_region
      %s227 = ssub.s32 %s14, 1
      // Predicated region
      $region13: #{uresnet_encoder_forward.16} parent=11 // pred_check
        %p228 = pneg %p61
      $region14: #{uresnet_encoder_forward.16} parent=11 // pred_check_branch
        %230 = sbr.rel (%p228) target = $region16
      $region15: #{uresnet_encoder_forward.16} parent=11 // pred_region
        _
      $region16: #{uresnet_encoder_forward.16} parent=11 // pred_fallthru
        _
      // Predicated region
      $region17: #{uresnet_encoder_forward.16} parent=11 // pred_check
        %p231 = pneg %p82
      $region18: #{uresnet_encoder_forward.16} parent=11 // pred_check_branch
        %233 = sbr.rel (%p231) target = $region20
      $region19: #{uresnet_encoder_forward.16} parent=11 // pred_region
        _
      $region20: #{uresnet_encoder_forward.16} parent=11 // pred_fallthru
        _
      // Predicated region
      $region21: #{uresnet_encoder_forward.16} parent=11 // pred_check
        %p234 = pneg %p103
      $region22: #{uresnet_encoder_forward.16} parent=11 // pred_check_branch
        %236 = sbr.rel (%p234) target = $region24
      $region23: #{uresnet_encoder_forward.16} parent=11 // pred_region
        _
      $region24: #{uresnet_encoder_forward.16} parent=11 // pred_fallthru
        _
      // Predicated region
      $region25: #{uresnet_encoder_forward.16} parent=11 // pred_check
        %p237 = pneg %p124
      $region26: #{uresnet_encoder_forward.16} parent=11 // pred_check_branch
        %239 = sbr.rel (%p237) target = $region28
      $region27: #{uresnet_encoder_forward.16} parent=11 // pred_region
        _
      $region28: #{uresnet_encoder_forward.16} parent=11 // pred_fallthru
        _
      // Predicated region
      $region29: #{uresnet_encoder_forward.16} parent=11 // pred_check
        %p240 = pneg %p145
      $region30: #{uresnet_encoder_forward.16} parent=11 // pred_check_branch
        %242 = sbr.rel (%p240) target = $region32
      $region31: #{uresnet_encoder_forward.16} parent=11 // pred_region
        _
      $region32: #{uresnet_encoder_forward.16} parent=11 // pred_fallthru
        _
      // Predicated region
      $region33: #{uresnet_encoder_forward.16} parent=11 // pred_check
        %p243 = pneg %p166
      $region34: #{uresnet_encoder_forward.16} parent=11 // pred_check_branch
        %245 = sbr.rel (%p243) target = $region36
      $region35: #{uresnet_encoder_forward.16} parent=11 // pred_region
        _
      $region36: #{uresnet_encoder_forward.16} parent=11 // pred_fallthru
        _
      // Predicated region
      $region37: #{uresnet_encoder_forward.16} parent=11 // pred_check
        %p246 = pneg %p187
      $region38: #{uresnet_encoder_forward.16} parent=11 // pred_check_branch
        %248 = sbr.rel (%p246) target = $region40
      $region39: #{uresnet_encoder_forward.16} parent=11 // pred_region
        _
      $region40: #{uresnet_encoder_forward.16} parent=11 // pred_fallthru
        _
    $region12: #{uresnet_encoder_forward.16} parent=5 // pred_fallthru
      _
    %p249 = scmp.lt.s32.totalorder %s14, 2
    // Predicated region
    $region41: #{uresnet_encoder_forward.16} parent=5 // pred_check
      %p250 = pneg %p249
    $region42: #{uresnet_encoder_forward.16} parent=5 // pred_check_branch
      %252 = sbr.rel (%p250) target = $region44
    $region43: #{uresnet_encoder_forward.16} parent=5 // pred_region
      // Predicated region
      $region45: #{uresnet_encoder_forward.16} parent=43 // pred_check
        %p253 = pneg %p34
      $region46: #{uresnet_encoder_forward.16} parent=43 // pred_check_branch
        %255 = sbr.rel (%p253) target = $region48
      $region47: #{uresnet_encoder_forward.16} parent=43 // pred_region
        %p256 = scmp.lt.s32.totalorder %s14, 1
        %s257 = scalar_select %p256, %s14, 1
        %s258 = smul.addr %s257, 2
        %s259 = smul.addr %s258, 8
        %s260 = scalar_lea.vmem %s0, %s259
      $region48: #{uresnet_encoder_forward.16} parent=43 // pred_fallthru
        _
    $region44: #{uresnet_encoder_forward.16} parent=5 // pred_fallthru
      _
    %p261 = scmp.le.s32.totalorder 1, %s14
    %p262 = scmp.lt.s32.totalorder %s14, 3
    %p263 = pnand %p261, %p262
    %p264 = pneg %p263
    // Predicated region
    $region49: #{uresnet_encoder_forward.16} parent=5 // pred_check
      _
    $region50: #{uresnet_encoder_forward.16} parent=5 // pred_check_branch
      %266 = sbr.rel (%p263) target = $region52
    $region51: #{uresnet_encoder_forward.16} parent=5 // pred_region
      %s267 = ssub.s32 %s14, 1
      %p268 = scmp.lt.s32.totalorder %s19, 1
      %s269 = scalar_select %p268, %s19, 1
      %s270 = smul.addr %s269, 2
      %s271 = smul.addr %s270, 8
      %s272 = scalar_lea.vmem %s0, %s271
      %p273 = pneg %p40
      %p274 = pneg %p37
      %p275 = pneg %p61
      %p276 = pneg %p58
      %p277 = pneg %p82
      %p278 = pneg %p79
      %p279 = pneg %p103
      %p280 = pneg %p100
      %p281 = pneg %p124
      %p282 = pneg %p121
      %p283 = pneg %p145
      %p284 = pneg %p142
      %p285 = pneg %p166
      %p286 = pneg %p163
      %p287 = pneg %p187
      %p288 = pneg %p184
      %p289 = pneg %p213
      %p290 = pneg %p210
      %p291 = scmp.lt.s32.totalorder %s19, 1
      %s292 = scalar_select %p291, %s19, 1
      %s293 = smul.addr %s292, 2
      %s294 = smul.addr %s293, 8
      %s295 = scalar_lea.vmem %s8, %s294
      %p296 = scmp.lt.s32.totalorder %s19, 1
      %s297 = scalar_select %p296, %s19, 1
      %s298 = smul.addr %s297, 2
      %s299 = smul.addr %s298, 8
      %s300 = scalar_lea.vmem %s0, %s299
      %p301 = scmp.lt.s32.totalorder %s19, 1
      %s302 = scalar_select %p301, %s19, 1
      %s303 = smul.addr %s302, 2
      %s304 = smul.addr %s303, 8
      %s305 = scalar_lea.vmem %s8, %s304
      %v307 = vld [vmem:[%s7] sm:$0xff]
      %v308 = vld [vmem:[%s7 + $0x8] sm:$0xff]
      %vm309 = vcmask 195584
      %310 = vst.msk [vmem:[#allocation2] sm:$0xff] %vm309, 0.0
      %311 = vst.msk [vmem:[#allocation2 + $0x18] sm:$0xff] %vm309, 0.0
      %v312 = vld [vmem:[%s300] sm:$0xff]
      %v313 = vld [vmem:[%s300 + $0x8] sm:$0xff]
      %v314 = vld [vmem:[%s3] sm:$0x1]
      %v316 = vlaneseq
      %v317 = vshrl.u32 %v316, 7
      %v318 = vsub.s32 0, %v317
      %v319 = vrot.slane %v314, %v318
      %v321 = vmul.f32 %v312, %v319
      %v322 = vmul.f32 %v313, %v319
      %v323 = vld [vmem:[%s4] sm:$0x1]
      %v325 = vlaneseq
      %v326 = vshrl.u32 %v325, 7
      %v327 = vsub.s32 0, %v326
      %v328 = vrot.slane %v323, %v327
      %v330 = vadd.f32 %v321, %v328
      %v331 = vadd.f32 %v322, %v328
      %v332 = vmax.f32 %v330, 0.0
      %v333 = vmax.f32 %v331, 0.0
      %334 = vst.msk [vmem:[#allocation2 + $0x8] sm:$0xff] %vm309, %v332
      %335 = vst.msk [vmem:[#allocation2 + $0x10] sm:$0xff] %vm309, %v333
      %v336 = vld [vmem:[%s1] sm:$0xf]
      %v337 = vld [vmem:[%s1 + $0x4] sm:$0xf]
      %v338 = vld [vmem:[%s1 + $0x8] sm:$0xf]
      %v339 = vld [vmem:[%s1 + $0xc] sm:$0xf]
      %v340 = vld [vmem:[%s1 + $0x10] sm:$0xf]
      %v341 = vld [vmem:[%s1 + $0x14] sm:$0xf]
      %v342 = vld [vmem:[%s1 + $0x18] sm:$0xf]
      %v343 = vld [vmem:[%s1 + $0x1c] sm:$0xf]
      %v344 = vld [vmem:[%s1 + $0x20] sm:$0xf]
      %v345 = vld [vmem:[%s1 + $0x24] sm:$0xf]
      %v346 = vld [vmem:[%s1 + $0x28] sm:$0xf]
      %v347 = vld [vmem:[%s1 + $0x2c] sm:$0xf]
      %v348 = vld [vmem:[%s1 + $0x30] sm:$0xf]
      %v349 = vld [vmem:[%s1 + $0x34] sm:$0xf]
      %v350 = vld [vmem:[%s1 + $0x38] sm:$0xf]
      %v351 = vld [vmem:[%s1 + $0x3c] sm:$0xf]
      %v352 = vld [vmem:[%s1 + $0x40] sm:$0xf]
      %v353 = vld [vmem:[%s1 + $0x44] sm:$0xf]
      %v354 = vld [vmem:[%s1 + $0x48] sm:$0xf]
      %v355 = vld [vmem:[%s1 + $0x4c] sm:$0xf]
      %v356 = vld [vmem:[%s1 + $0x50] sm:$0xf]
      %v357 = vld [vmem:[%s1 + $0x54] sm:$0xf]
      %v358 = vld [vmem:[%s1 + $0x58] sm:$0xf]
      %v359 = vld [vmem:[%s1 + $0x5c] sm:$0xf]
      %v360 = vld [vmem:[%s1 + $0x60] sm:$0xf]
      %v361 = vld [vmem:[%s1 + $0x64] sm:$0xf]
      %v362 = vld [vmem:[%s1 + $0x68] sm:$0xf]
      %v363 = vld [vmem:[#allocation2 + $0x3] sm:$0xff]
      %v364 = vld [vmem:[#allocation2 + $0xb] sm:$0xff]
      %366 = vset.pattern.permute.xlu0 0
      %367 = vperm.xlu0 %366, %v307
      %v368 = vpop.permute.xlu0 %367
      %371 = vset.pattern.permute.xlu0 0
      %372 = vperm.xlu0 %371, %v308
      %v373 = vpop.permute.xlu0 %372
      %v375 = vmul.f32 %v363, %v368
      %v376 = vmul.f32 %v364, %v373
      %v377 = vld [vmem:[#allocation2 + $0x4] sm:$0xff]
      %v378 = vld [vmem:[#allocation2 + $0xc] sm:$0xff]
      %v379 = vld [vmem:[#allocation2 + $0x5] sm:$0xff]
      %v380 = vld [vmem:[#allocation2 + $0xd] sm:$0xff]
      %381 = vset.pattern.permute.xlu0 1
      %382 = vperm.xlu0 %381, %v307
      %v383 = vpop.permute.xlu0 %382
      %385 = vset.pattern.permute.xlu0 1
      %386 = vperm.xlu0 %385, %v308
      %v387 = vpop.permute.xlu0 %386
      %v389 = vmul.f32 %v379, %v383
      %v390 = vmul.f32 %v380, %v387
      %v391 = vld [vmem:[#allocation2 + $0x7] sm:$0xff]
      %v392 = vld [vmem:[#allocation2 + $0xf] sm:$0xff]
      %v393 = vmul.f32 %v391, %v368
      %v394 = vmul.f32 %v392, %v373
      %v395 = vld [vmem:[#allocation2 + $0x8] sm:$0xff]
      %v396 = vld [vmem:[#allocation2 + $0x10] sm:$0xff]
      %v397 = vld [vmem:[#allocation2 + $0x9] sm:$0xff]
      %v398 = vld [vmem:[#allocation2 + $0x11] sm:$0xff]
      %v399 = vmul.f32 %v397, %v383
      %v400 = vmul.f32 %v398, %v387
      %v401 = vld [vmem:[#allocation2 + $0xb] sm:$0xff]
      %v402 = vld [vmem:[#allocation2 + $0x13] sm:$0xff]
      %v403 = vmul.f32 %v401, %v368
      %v404 = vmul.f32 %v402, %v373
      %v405 = vld [vmem:[#allocation2 + $0xc] sm:$0xff]
      %v406 = vld [vmem:[#allocation2 + $0x14] sm:$0xff]
      %v407 = vld [vmem:[#allocation2 + $0xd] sm:$0xff]
      %v408 = vld [vmem:[#allocation2 + $0x15] sm:$0xff]
      %v409 = vmul.f32 %v407, %v383
      %v410 = vmul.f32 %v408, %v387
      %413 = vrot.lane.b32.xlu0 %v377, 24
      %v414 = vpop.permute.xlu0 %413
      %415 = vrot.lane.b32.xlu0 %v378, 24
      %v416 = vpop.permute.xlu0 %415
      %421 = vrot.lane.b32.xlu0 %v389, 48
      %v422 = vpop.permute.xlu0 %421
      %423 = vrot.lane.b32.xlu0 %v390, 48
      %v424 = vpop.permute.xlu0 %423
      %429 = vrot.lane.b32.xlu0 %v393, 72
      %v430 = vpop.permute.xlu0 %429
      %431 = vrot.lane.b32.xlu0 %v394, 72
      %v432 = vpop.permute.xlu0 %431
      %437 = vrot.lane.b32.xlu0 %v395, 96
      %v438 = vpop.permute.xlu0 %437
      %439 = vrot.lane.b32.xlu0 %v396, 96
      %v440 = vpop.permute.xlu0 %439
      %445 = vrot.lane.b32.xlu0 %v399, 120
      %v446 = vpop.permute.xlu0 %445
      %447 = vrot.lane.b32.xlu0 %v400, 120
      %v448 = vpop.permute.xlu0 %447
      %453 = vrot.lane.b32.xlu0 %v403, 16
      %v454 = vpop.permute.xlu0 %453
      %455 = vrot.lane.b32.xlu0 %v404, 16
      %v456 = vpop.permute.xlu0 %455
      %461 = vrot.lane.b32.xlu0 %v405, 40
      %v462 = vpop.permute.xlu0 %461
      %463 = vrot.lane.b32.xlu0 %v406, 40
      %v464 = vpop.permute.xlu0 %463
      %469 = vrot.lane.b32.xlu0 %v409, 64
      %v470 = vpop.permute.xlu0 %469
      %471 = vrot.lane.b32.xlu0 %v410, 64
      %v472 = vpop.permute.xlu0 %471
      %v475 = vsel %vm309, %v375, %v414
      %v476 = vsel %vm309, %v376, %v416
      %vm477 = vcmask 392192
      %v478 = vsel %vm477, %v475, %v422
      %v479 = vsel %vm477, %v476, %v424
      %vm480 = vcmask 588800
      %v481 = vsel %vm480, %v478, %v430
      %v482 = vsel %vm480, %v479, %v432
      %vm483 = vcmask 785408
      %v484 = vsel %vm483, %v481, %v438
      %v485 = vsel %vm483, %v482, %v440
      %vm486 = vcmask 982016
      %v487 = vsel %vm486, %v484, %v446
      %v488 = vsel %vm486, %v485, %v448
      %vm489 = vcmask 130048
      %v490 = vsel %vm489, %v446, %v454
      %v491 = vsel %vm489, %v448, %v456
      %vm492 = vcmask 326656
      %v493 = vsel %vm492, %v490, %v462
      %v494 = vsel %vm492, %v491, %v464
      %vm495 = vcmask 523264
      %v496 = vsel %vm495, %v493, %v470
      %v497 = vsel %vm495, %v494, %v472
      %v498 = vpack.c.bf16 %v488, %v487
      %v499 = vpack.c.bf16 %v497, %v496
      %v527 = vunpack.c.l.b16 %v336
      %v528 = vunpack.c.l.b16 %v337
      %v529 = vunpack.c.l.b16 %v338
      %v530 = vunpack.c.l.b16 %v339
      %v531 = vunpack.c.l.b16 %v340
      %v532 = vunpack.c.l.b16 %v341
      %v533 = vunpack.c.l.b16 %v342
      %v534 = vunpack.c.l.b16 %v343
      %v535 = vunpack.c.l.b16 %v344
      %v536 = vunpack.c.l.b16 %v345
      %v537 = vunpack.c.l.b16 %v346
      %v538 = vunpack.c.l.b16 %v347
      %v539 = vunpack.c.l.b16 %v348
      %v540 = vunpack.c.l.b16 %v349
      %v541 = vunpack.c.l.b16 %v350
      %v542 = vunpack.c.l.b16 %v351
      %v543 = vunpack.c.l.b16 %v352
      %v544 = vunpack.c.l.b16 %v353
      %v545 = vunpack.c.l.b16 %v354
      %v546 = vunpack.c.l.b16 %v355
      %v547 = vunpack.c.l.b16 %v356
      %v548 = vunpack.c.l.b16 %v357
      %v549 = vunpack.c.l.b16 %v358
      %v550 = vunpack.c.l.b16 %v359
      %v551 = vunpack.c.l.b16 %v360
      %v552 = vunpack.c.l.b16 %v361
      %v553 = vunpack.c.l.b16 %v362
      %v554 = vpack.c.b16 %v528, %v527
      %v555 = vpack.c.b16 %v530, %v529
      %v556 = vpack.c.b16 %v532, %v531
      %v557 = vpack.c.b16 %v534, %v533
      %v558 = vpack.c.b16 %v536, %v535
      %v559 = vpack.c.b16 %v538, %v537
      %v560 = vpack.c.b16 %v540, %v539
      %v561 = vpack.c.b16 %v542, %v541
      %v562 = vpack.c.b16 %v544, %v543
      %v563 = vpack.c.b16 %v546, %v545
      %v564 = vpack.c.b16 %v548, %v547
      %v565 = vpack.c.b16 %v550, %v549
      %v566 = vpack.c.b16 %v552, %v551
      %v567 = vpack.c.b16 %v553, %v553
      %vm581 = vcmask 719872
      %v583 = vsel %vm581, %v499, 0
      %vm585 = vcmask 1043456
      %v587 = vsel %vm585, %v567, 0
      %589 = vmatprep.subr.bf16.mxu0 0
      %590 = vmatpush1.bf16.msra.mxu0 %v554
      %591 = vmatprep.subr.bf16.mxu0 0
      %592 = vmatpush1.bf16.msra.mxu0 %v555
      %593 = vmatprep.subr.bf16.mxu0 0
      %594 = vmatpush1.bf16.msra.mxu0 %v556
      %595 = vmatprep.subr.bf16.mxu0 0
      %596 = vmatpush1.bf16.msra.mxu0 %v557
      %597 = vmatprep.subr.bf16.mxu0 0
      %598 = vmatpush1.bf16.msra.mxu0 %v558
      %599 = vmatprep.subr.bf16.mxu0 0
      %600 = vmatpush1.bf16.msra.mxu0 %v559
      %601 = vmatprep.subr.bf16.mxu0 0
      %602 = vmatpush1.bf16.msra.mxu0 %v560
      %603 = vmatprep.subr.bf16.mxu0 0
      %604 = vmatpush1.bf16.msra.mxu0 %v561
      %605 = vmatprep.subr.bf16.mxu0 0
      %606 = vmatpush1.bf16.msra.mxu0 %v562
      %607 = vmatprep.subr.bf16.mxu0 0
      %608 = vmatpush1.bf16.msra.mxu0 %v563
      %609 = vmatprep.subr.bf16.mxu0 0
      %610 = vmatpush1.bf16.msra.mxu0 %v564
      %611 = vmatprep.subr.bf16.mxu0 0
      %612 = vmatpush1.bf16.msra.mxu0 %v565
      %613 = vmatprep.subr.bf16.mxu0 0
      %614 = vmatpush1.bf16.msra.mxu0 %v566
      %615 = vmatprep.subr.bf16.mxu0 0
      %616 = vmatpush1.bf16.msra.mxu0 %v587
      %617 = vmatprep.subr.bf16.mxu0 0
      %618 = vmatpush1.bf16.msra.mxu0 0
      %619 = vmatprep.subr.bf16.mxu0 0
      %620 = vmatpush1.bf16.msra.mxu0 0
      %621 = vmatprep.mubr.bf16.mxu0 %v583
      %622 = vmatmul.mubr.bf16.gmra.mrb[0].mxu0 %v498
      %v623 = vpop.f32.mrb[0].mxu0
      %v624 = vadd.f32 0.0, %v623
      %v625 = vpop.f32.mrb[0].mxu0
      %v626 = vpop.f32.mrb[0].mxu0
      %v627 = vadd.f32 0.0, %v626
      %v628 = vpop.f32.mrb[0].mxu0
      %629 = vdwg.mxu0
      %v630 = vld [vmem:[%s5] sm:$0x1]
      %v632 = vlaneseq
      %v633 = vshrl.u32 %v632, 7
      %v634 = vsub.s32 0, %v633
      %v635 = vrot.slane %v630, %v634
      %v637 = vmul.f32 %v624, %v635
      %v638 = vmul.f32 %v627, %v635
      %v639 = vld [vmem:[%s6] sm:$0x1]
      %v641 = vlaneseq
      %v642 = vshrl.u32 %v641, 7
      %v643 = vsub.s32 0, %v642
      %v644 = vrot.slane %v639, %v643
      %v646 = vadd.f32 %v637, %v644
      %v647 = vadd.f32 %v638, %v644
      %v648 = vmax.f32 %v646, 0.0
      %v649 = vmax.f32 %v647, 0.0
      %650 = vst.msk [vmem:[#allocation2 + $0x8] sm:$0xff] %vm309, %v648
      %651 = vst.msk [vmem:[#allocation2 + $0x10] sm:$0xff] %vm309, %v649
      %v652 = vld [vmem:[%s2] sm:$0xf]
      %v653 = vld [vmem:[%s2 + $0x4] sm:$0xf]
      %v654 = vld [vmem:[%s2 + $0x8] sm:$0xf]
      %v655 = vld [vmem:[%s2 + $0xc] sm:$0xf]
      %v656 = vld [vmem:[%s2 + $0x10] sm:$0xf]
      %v657 = vld [vmem:[%s2 + $0x14] sm:$0xf]
      %v658 = vld [vmem:[%s2 + $0x18] sm:$0xf]
      %v659 = vld [vmem:[%s2 + $0x1c] sm:$0xf]
      %v660 = vld [vmem:[%s2 + $0x20] sm:$0xf]
      %v661 = vld [vmem:[%s2 + $0x24] sm:$0xf]
      %v662 = vld [vmem:[%s2 + $0x28] sm:$0xf]
      %v663 = vld [vmem:[%s2 + $0x2c] sm:$0xf]
      %v664 = vld [vmem:[%s2 + $0x30] sm:$0xf]
      %v665 = vld [vmem:[%s2 + $0x34] sm:$0xf]
      %v666 = vld [vmem:[%s2 + $0x38] sm:$0xf]
      %v667 = vld [vmem:[%s2 + $0x3c] sm:$0xf]
      %v668 = vld [vmem:[%s2 + $0x40] sm:$0xf]
      %v669 = vld [vmem:[%s2 + $0x44] sm:$0xf]
      %v670 = vld [vmem:[%s2 + $0x48] sm:$0xf]
      %v671 = vld [vmem:[%s2 + $0x4c] sm:$0xf]
      %v672 = vld [vmem:[%s2 + $0x50] sm:$0xf]
      %v673 = vld [vmem:[%s2 + $0x54] sm:$0xf]
      %v674 = vld [vmem:[%s2 + $0x58] sm:$0xf]
      %v675 = vld [vmem:[%s2 + $0x5c] sm:$0xf]
      %v676 = vld [vmem:[%s2 + $0x60] sm:$0xf]
      %v677 = vld [vmem:[%s2 + $0x64] sm:$0xf]
      %v678 = vld [vmem:[%s2 + $0x68] sm:$0xf]
      %v679 = vld [vmem:[#allocation2 + $0x3] sm:$0xff]
      %v680 = vld [vmem:[#allocation2 + $0xb] sm:$0xff]
      %v681 = vmul.f32 %v679, %v368
      %v682 = vmul.f32 %v680, %v373
      %v683 = vld [vmem:[#allocation2 + $0x4] sm:$0xff]
      %v684 = vld [vmem:[#allocation2 + $0xc] sm:$0xff]
      %v685 = vld [vmem:[#allocation2 + $0x5] sm:$0xff]
      %v686 = vld [vmem:[#allocation2 + $0xd] sm:$0xff]
      %v687 = vmul.f32 %v685, %v383
      %v688 = vmul.f32 %v686, %v387
      %v689 = vld [vmem:[#allocation2 + $0x7] sm:$0xff]
      %v690 = vld [vmem:[#allocation2 + $0xf] sm:$0xff]
      %v691 = vmul.f32 %v689, %v368
      %v692 = vmul.f32 %v690, %v373
      %v693 = vld [vmem:[#allocation2 + $0x8] sm:$0xff]
      %v694 = vld [vmem:[#allocation2 + $0x10] sm:$0xff]
      %v695 = vld [vmem:[#allocation2 + $0x9] sm:$0xff]
      %v696 = vld [vmem:[#allocation2 + $0x11] sm:$0xff]
      %v697 = vmul.f32 %v695, %v383
      %v698 = vmul.f32 %v696, %v387
      %v699 = vld [vmem:[#allocation2 + $0x13] sm:$0xff]
      %v700 = vmul.f32 %v680, %v368
      %v701 = vmul.f32 %v699, %v373
      %v702 = vld [vmem:[#allocation2 + $0x14] sm:$0xff]
      %v703 = vld [vmem:[#allocation2 + $0x15] sm:$0xff]
      %v704 = vmul.f32 %v686, %v383
      %v705 = vmul.f32 %v703, %v387
      %708 = vrot.lane.b32.xlu0 %v683, 24
      %v709 = vpop.permute.xlu0 %708
      %710 = vrot.lane.b32.xlu0 %v684, 24
      %v711 = vpop.permute.xlu0 %710
      %716 = vrot.lane.b32.xlu0 %v687, 48
      %v717 = vpop.permute.xlu0 %716
      %718 = vrot.lane.b32.xlu0 %v688, 48
      %v719 = vpop.permute.xlu0 %718
      %724 = vrot.lane.b32.xlu0 %v691, 72
      %v725 = vpop.permute.xlu0 %724
      %726 = vrot.lane.b32.xlu0 %v692, 72
      %v727 = vpop.permute.xlu0 %726
      %732 = vrot.lane.b32.xlu0 %v693, 96
      %v733 = vpop.permute.xlu0 %732
      %734 = vrot.lane.b32.xlu0 %v694, 96
      %v735 = vpop.permute.xlu0 %734
      %740 = vrot.lane.b32.xlu0 %v697, 120
      %v741 = vpop.permute.xlu0 %740
      %742 = vrot.lane.b32.xlu0 %v698, 120
      %v743 = vpop.permute.xlu0 %742
      %748 = vrot.lane.b32.xlu0 %v700, 16
      %v749 = vpop.permute.xlu0 %748
      %750 = vrot.lane.b32.xlu0 %v701, 16
      %v751 = vpop.permute.xlu0 %750
      %755 = vrot.lane.b32.xlu0 %v684, 40
      %v756 = vpop.permute.xlu0 %755
      %757 = vrot.lane.b32.xlu0 %v702, 40
      %v758 = vpop.permute.xlu0 %757
      %763 = vrot.lane.b32.xlu0 %v704, 64
      %v764 = vpop.permute.xlu0 %763
      %765 = vrot.lane.b32.xlu0 %v705, 64
      %v766 = vpop.permute.xlu0 %765
      %v769 = vsel %vm309, %v681, %v709
      %v770 = vsel %vm309, %v682, %v711
      %v771 = vsel %vm477, %v769, %v717
      %v772 = vsel %vm477, %v770, %v719
      %v773 = vsel %vm480, %v771, %v725
      %v774 = vsel %vm480, %v772, %v727
      %v775 = vsel %vm483, %v773, %v733
      %v776 = vsel %vm483, %v774, %v735
      %v777 = vsel %vm486, %v775, %v741
      %v778 = vsel %vm486, %v776, %v743
      %v779 = vsel %vm489, %v741, %v749
      %v780 = vsel %vm489, %v743, %v751
      %v781 = vsel %vm492, %v779, %v756
      %v782 = vsel %vm492, %v780, %v758
      %v783 = vsel %vm495, %v781, %v764
      %v784 = vsel %vm495, %v782, %v766
      %v785 = vpack.c.bf16 %v778, %v777
      %v786 = vpack.c.bf16 %v784, %v783
      %v814 = vunpack.c.l.b16 %v652
      %v815 = vunpack.c.l.b16 %v653
      %v816 = vunpack.c.l.b16 %v654
      %v817 = vunpack.c.l.b16 %v655
      %v818 = vunpack.c.l.b16 %v656
      %v819 = vunpack.c.l.b16 %v657
      %v820 = vunpack.c.l.b16 %v658
      %v821 = vunpack.c.l.b16 %v659
      %v822 = vunpack.c.l.b16 %v660
      %v823 = vunpack.c.l.b16 %v661
      %v824 = vunpack.c.l.b16 %v662
      %v825 = vunpack.c.l.b16 %v663
      %v826 = vunpack.c.l.b16 %v664
      %v827 = vunpack.c.l.b16 %v665
      %v828 = vunpack.c.l.b16 %v666
      %v829 = vunpack.c.l.b16 %v667
      %v830 = vunpack.c.l.b16 %v668
      %v831 = vunpack.c.l.b16 %v669
      %v832 = vunpack.c.l.b16 %v670
      %v833 = vunpack.c.l.b16 %v671
      %v834 = vunpack.c.l.b16 %v672
      %v835 = vunpack.c.l.b16 %v673
      %v836 = vunpack.c.l.b16 %v674
      %v837 = vunpack.c.l.b16 %v675
      %v838 = vunpack.c.l.b16 %v676
      %v839 = vunpack.c.l.b16 %v677
      %v840 = vunpack.c.l.b16 %v678
      %v841 = vpack.c.b16 %v815, %v814
      %v842 = vpack.c.b16 %v817, %v816
      %v843 = vpack.c.b16 %v819, %v818
      %v844 = vpack.c.b16 %v821, %v820
      %v845 = vpack.c.b16 %v823, %v822
      %v846 = vpack.c.b16 %v825, %v824
      %v847 = vpack.c.b16 %v827, %v826
      %v848 = vpack.c.b16 %v829, %v828
      %v849 = vpack.c.b16 %v831, %v830
      %v850 = vpack.c.b16 %v833, %v832
      %v851 = vpack.c.b16 %v835, %v834
      %v852 = vpack.c.b16 %v837, %v836
      %v853 = vpack.c.b16 %v839, %v838
      %v854 = vpack.c.b16 %v840, %v840
      %v869 = vsel %vm581, %v786, 0
      %v872 = vsel %vm585, %v854, 0
      %874 = vmatprep.subr.bf16.mxu0 0
      %875 = vmatpush1.bf16.msra.mxu0 %v841
      %876 = vmatprep.subr.bf16.mxu0 0
      %877 = vmatpush1.bf16.msra.mxu0 %v842
      %878 = vmatprep.subr.bf16.mxu0 0
      %879 = vmatpush1.bf16.msra.mxu0 %v843
      %880 = vmatprep.subr.bf16.mxu0 0
      %881 = vmatpush1.bf16.msra.mxu0 %v844
      %882 = vmatprep.subr.bf16.mxu0 0
      %883 = vmatpush1.bf16.msra.mxu0 %v845
      %884 = vmatprep.subr.bf16.mxu0 0
      %885 = vmatpush1.bf16.msra.mxu0 %v846
      %886 = vmatprep.subr.bf16.mxu0 0
      %887 = vmatpush1.bf16.msra.mxu0 %v847
      %888 = vmatprep.subr.bf16.mxu0 0
      %889 = vmatpush1.bf16.msra.mxu0 %v848
      %890 = vmatprep.subr.bf16.mxu0 0
      %891 = vmatpush1.bf16.msra.mxu0 %v849
      %892 = vmatprep.subr.bf16.mxu0 0
      %893 = vmatpush1.bf16.msra.mxu0 %v850
      %894 = vmatprep.subr.bf16.mxu0 0
      %895 = vmatpush1.bf16.msra.mxu0 %v851
      %896 = vmatprep.subr.bf16.mxu0 0
      %897 = vmatpush1.bf16.msra.mxu0 %v852
      %898 = vmatprep.subr.bf16.mxu0 0
      %899 = vmatpush1.bf16.msra.mxu0 %v853
      %900 = vmatprep.subr.bf16.mxu0 0
      %901 = vmatpush1.bf16.msra.mxu0 %v872
      %902 = vmatprep.subr.bf16.mxu0 0
      %903 = vmatpush1.bf16.msra.mxu0 0
      %904 = vmatprep.subr.bf16.mxu0 0
      %905 = vmatpush1.bf16.msra.mxu0 0
      %906 = vmatprep.mubr.bf16.mxu0 %v869
      %907 = vmatmul.mubr.bf16.gmra.mrb[0].mxu0 %v785
      %v908 = vpop.f32.mrb[0].mxu0
      %v909 = vadd.f32 %v312, %v908
      %v910 = vpop.f32.mrb[0].mxu0
      %v911 = vpop.f32.mrb[0].mxu0
      %v912 = vadd.f32 %v313, %v911
      %v913 = vpop.f32.mrb[0].mxu0
      %914 = vdwg.mxu0
      %915 = vst.msk [vmem:[%s305] sm:$0xff] %vm309, %v909
      %916 = vst.msk [vmem:[%s305 + $0x8] sm:$0xff] %vm309, %v912
      %p917 = scmp.lt.s32.totalorder %s19, 1
      %s918 = scalar_select %p917, %s19, 1
      %s919 = smul.addr %s918, 2
      %s920 = smul.addr %s919, 8
      %s921 = scalar_lea.vmem %s8, %s920
      // Predicated region
      $region53: #{uresnet_encoder_forward.16} parent=51 // pred_check
        %p922 = pneg %p210
      $region54: #{uresnet_encoder_forward.16} parent=51 // pred_check_branch
        %924 = sbr.rel (%p922) target = $region56
      $region55: #{uresnet_encoder_forward.16} parent=51 // pred_region
        _
      $region56: #{uresnet_encoder_forward.16} parent=51 // pred_fallthru
        _
    $region52: #{uresnet_encoder_forward.16} parent=5 // pred_fallthru
      _
    %p925 = scmp.le.s32.totalorder 2, %s14
    // Predicated region
    $region57: #{uresnet_encoder_forward.16} parent=5 // pred_check
      %p926 = pneg %p925
    $region58: #{uresnet_encoder_forward.16} parent=5 // pred_check_branch
      %928 = sbr.rel (%p926) target = $region60
    $region59: #{uresnet_encoder_forward.16} parent=5 // pred_region
      %s929 = ssub.s32 %s14, 2
      // Predicated region
      $region61: #{uresnet_encoder_forward.16} parent=59 // pred_check
        %p930 = pneg %p216
      $region62: #{uresnet_encoder_forward.16} parent=59 // pred_check_branch
        %932 = sbr.rel (%p930) target = $region64
      $region63: #{uresnet_encoder_forward.16} parent=59 // pred_region
        %p933 = scmp.lt.s32.totalorder %s20, 1
        %s934 = scalar_select %p933, %s20, 1
        %s935 = smul.addr %s934, 2
        %s936 = smul.addr %s935, 8
        %s937 = scalar_lea.vmem %s8, %s936
      $region64: #{uresnet_encoder_forward.16} parent=59 // pred_fallthru
        _
    $region60: #{uresnet_encoder_forward.16} parent=5 // pred_fallthru
      _
  $region6: #{uresnet_encoder_forward.16} parent=0 // loop_footer
    %s18 = sadd.s32 1, %s14
  $region7: #{uresnet_encoder_forward.16} parent=0 // loop_footer_branch
    %13 = sbr.rel target = $region3
  $region8: #{uresnet_encoder_forward.16} parent=0 // loop_exit
    _

</llo_original>
